<compile_context>
chip_gen: v6e
topology: v6e:2x2x1
jax: 0.10.0
libtpu: 0.0.40
codegen_flags: <defaults>
</compile_context>

<pallas_src>
import functools

import numpy as np
import jax
import jax.numpy as jnp
from jax.experimental import pallas as pl
from jax.experimental.pallas import tpu as pltpu

LATENT = 256
TGT = 7
GRID_H = 6            # col_dim in the reference
GRID_W = 6            # row_dim in the reference
N_IMG = 2
PCNN_ITERS = 5
EMB_SCALE = 0.1
CTX_INDEX = 1         # TODO(synk): reference draws np.random.choice([0,1,2]); fixed for determinism.


# ----------------------------------------------------------------------------
# Kernel 1: encoder + 5x PixelCNN + packed loss projections, fully VMEM-resident
# ----------------------------------------------------------------------------
def _cpc_fused_kernel(x_ref, ew_ref, eb_ref,
                      w1_ref, b1_ref, w2_ref, b2_ref, w3_ref, b3_ref,
                      w4_ref, b4_ref, wz_ref, wc_ref, ball_ref, mask_ref,
                      o_ref, *, n_iters, grid_w):
    f32, bf16 = jnp.float32, jnp.bfloat16

    def mm(a_f32, w_bf16):
        # bf16 MXU matmul, f32 accumulation.
        return jnp.dot(a_f32.astype(bf16), w_bf16, preferred_element_type=f32)

    # --- encoder stand-in (bf16 matmul) ---
    # TODO(synk): ResNet_22 is not provided; deterministic linear patch encoder stand-in.
    z = mm(x_ref[...], ew_ref[...]) + eb_ref[...]
    m = z.shape[0]

    # --- z-head (target_to_32) projection immediately; park partial result in the
    #     output VMEM block so z does not stay live across the unrolled loop. ---
    o_ref[...] = mm(z, wz_ref[...])

    # --- hoisted weight / bias / mask loads (biases stay (1,256): replicated-sublane
    #     layout makes the per-iteration broadcast add essentially free). ---
    w1, w2s, w3s, w4 = w1_ref[...], w2_ref[...], w3_ref[...], w4_ref[...]
    b1, b2, b3, b4 = b1_ref[...], b2_ref[...], b3_ref[...], b4_ref[...]
    mask_l = mask_ref[:, 0:1]   # 0 where w == 0
    mask_r = mask_ref[:, 1:2]   # 0 where w == GRID_W-1
    mask_d = mask_ref[:, 2:3]   # 0 where h == GRID_H-1

    cres = z
    for _ in range(n_iters):                       # 5 residual iterations, VMEM-resident
        # Conv (1,1) + ReLU
        h1 = jnp.maximum(mm(cres, w1) + b1, 0.0)
        # Pad(1,1,0,0) + Conv(1,3): neighbour taps as XLU rolls + boundary zero-masks.
        h1l = pltpu.roll(h1, shift=1, axis=0) * mask_l            # value at (h, w-1)
        h1r = pltpu.roll(h1, shift=m - 1, axis=0) * mask_r        # value at (h, w+1)
        h1cat = jnp.concatenate(
            [h1l.astype(bf16), h1.astype(bf16), h1r.astype(bf16)], axis=1)
        h2 = jnp.dot(h1cat, w2s, preferred_element_type=f32) + b2
        # Pad(0,0,0,1) + Conv(2,1) + ReLU
        h2d = pltpu.roll(h2, shift=m - grid_w, axis=0) * mask_d   # value at (h+1, w)
        h2cat = jnp.concatenate([h2.astype(bf16), h2d.astype(bf16)], axis=1)
        h3 = jnp.maximum(jnp.dot(h2cat, w3s, preferred_element_type=f32) + b3, 0.0)
        # Conv (1,1) + residual
        cres = cres + mm(h3, w4) + b4
    ctx = jnp.maximum(cres, 0.0)                   # final ReLU -> context C

    # Packed projections, lane-dense 32-wide output:
    #   cols 0:7 = target_to_32(Z); 8:15 / 16:23 / 24:31 = emb_scale*conv_{1,2,3}(C).
    o_ref[...] = o_ref[...] + mm(ctx, wc_ref[...]) + ball_ref[...]


def cpc_fused_projections(x_flat, params):
    net, mask = params["net"], params["mask"]
    m = x_flat.shape[0]

    def full(a):
        return pl.BlockSpec(a.shape, lambda i, nd=a.ndim: (0,) * nd)

    args = (x_flat, net["enc_w"], net["enc_b"],
            net["w1"], net["b1"], net["w2s"], net["b2"], net["w3s"], net["b3"],
            net["w4"], net["b4"], net["wz"], net["wc"], net["b_all"], mask)
    return pl.pallas_call(
        functools.partial(_cpc_fused_kernel, n_iters=PCNN_ITERS, grid_w=GRID_W),
        out_shape=jax.ShapeDtypeStruct((m, 32), jnp.float32),
        grid=(1,),
        in_specs=[full(a) for a in args],
        out_specs=pl.BlockSpec((m, 32), lambda i: (0, 0)),
        compiler_params=pltpu.CompilerParams(dimension_semantics=("arbitrary",)),
    )(*args)


# ----------------------------------------------------------------------------
# Kernel 2: fused CPC cross-entropy (single merged matmul, static one-hot labels)
# ----------------------------------------------------------------------------
def _cpc_loss_kernel(p_ref, tt_ref, oh_ref, o_ref, *, inv_rows):
    f32 = jnp.float32
    # All 3 prediction steps stacked row-wise -> ONE (36,7)@(7,72) MXU pass.
    logits = jnp.dot(p_ref[...], tt_ref[...], preferred_element_type=f32)   # (36, 72)
    mx = jnp.max(logits, axis=-1, keepdims=True)
    lse = mx + jnp.log(jnp.sum(jnp.exp(logits - mx), axis=-1, keepdims=True))
    lab = jnp.sum(logits * oh_ref[...], axis=-1, keepdims=True)             # label logit
    # torch CrossEntropyLoss(mean) summed over 3 steps == sum(lse - lab) / rows_per_step
    o_ref[...] = jnp.sum(lse - lab, axis=(0, 1), keepdims=True) * inv_rows


def pallas_cpc_loss(preds_all, targets_t, onehot):
    r, e = preds_all.shape
    t = targets_t.shape[1]
    out = pl.pallas_call(
        functools.partial(_cpc_loss_kernel, inv_rows=1.0 / (r // 3)),
        out_shape=jax.ShapeDtypeStruct((1, 1), jnp.float32),
        grid=(1,),
        in_specs=[pl.BlockSpec((r, e), lambda i: (0, 0)),
                  pl.BlockSpec((e, t), lambda i: (0, 0)),
                  pl.BlockSpec((r, t), lambda i: (0, 0))],
        out_specs=pl.BlockSpec((1, 1), lambda i: (0, 0)),
    )(preds_all, targets_t, onehot)
    return out[0, 0]


# ----------------------------------------------------------------------------
# Forward
# ----------------------------------------------------------------------------
def cpc_nce_forward(x, params):
    n, p_, cimg, ph, pw = x.shape
    assert n == N_IMG and p_ == GRID_H * GRID_W, "reshape(1,256,6,6) requires 36 patches/image"
    assert 3 * GRID_W + 2 * GRID_W + (GRID_W - 1) < GRID_H * GRID_W, "labels out of range"

    x_flat = x.reshape(n * p_, cimg * ph * pw)
    proj = cpc_fused_projections(x_flat, params)                       # (72, 32)
    proj4 = proj.reshape(n, GRID_H, GRID_W, 32)

    # PyTorch: targets (NCHW).reshape(-1, 7) -> reproduce the channel/spatial mixing exactly.
    targets = jnp.transpose(proj4[..., :TGT], (0, 3, 1, 2)).reshape(-1, TGT)   # (72, 7)
    targets_t = jnp.transpose(targets)                                          # (7, 72)

    # context[:, :, index, :]; prediction convs already applied (emb_scale folded).
    # Build all 3 steps' preds at once, step-major, in torch NCHW .reshape(-1,7) order.
    ctxp = proj4[:, CTX_INDEX, :, :]                                             # (n, 6, 32)
    preds_all = jnp.transpose(
        ctxp[:, :, 8:32].reshape(n, GRID_W, 3, 8)[..., :TGT], (2, 0, 3, 1)
    ).reshape(-1, TGT)                                                           # (36, 7)

    # TODO(synk): reference calls self.nce_loss(Z, C, self.W_list) which is inconsistent with
    # CPC_loss.forward (2048-channel convs, W_list unused); coherent interpretation used here:
    # latents=Z, context=C, 256->7 projection convs, W_list omitted.
    return pallas_cpc_loss(preds_all, targets_t, params["onehot"])


# ----------------------------------------------------------------------------
# Parameter / constant construction
# ----------------------------------------------------------------------------
def _neighbor_masks(n_img, h, w):
    """(m,3) 0/1 mask: [left-neighbour valid, right-neighbour valid, down-neighbour valid]."""
    m = n_img * h * w
    msk = np.zeros((m, 3), np.float32)
    for r in range(m):
        ww = r % w
        hh = (r // w) % h
        msk[r, 0] = 1.0 if ww > 0 else 0.0
        msk[r, 1] = 1.0 if ww < w - 1 else 0.0
        msk[r, 2] = 1.0 if hh < h - 1 else 0.0
    return jnp.asarray(msk)


def _label_onehot(n_img, h, w):
    """Static one-hot labels for the stacked (3*n_img*w, n_img*h*w) logits (reference formula)."""
    rows, classes = 3 * n_img * w, n_img * h * w
    oh = np.zeros((rows, classes), np.float32)
    for k in range(3):                       # prediction step
        for b in range(n_img):               # image
            for i in range(w):               # reshaped row within image
                oh[(k * n_img + b) * w + i, b * h * w + 3 * w + k * w + i] = 1.0
    return jnp.asarray(oh)


def init_params(key, latent=LATENT, target=TGT, patch_feat=3 * 8 * 8):
    keys = iter(jax.random.split(key, 32))
    rnd = lambda shape, s=0.05: jax.random.normal(next(keys), shape, jnp.float32) * s
    bf16 = jnp.bfloat16

    # PyTorch conv weight shapes -> per-tap matmul form, taps pre-stacked along K.
    c1 = rnd((latent, latent, 1, 1))
    c2 = rnd((latent, latent, 1, 3))
    c3 = rnd((latent, latent, 2, 1))
    c4 = rnd((latent, latent, 1, 1))
    w2s = jnp.transpose(c2[:, :, 0, :], (2, 1, 0)).reshape(3 * latent, latent)  # [left|center|right]
    w3s = jnp.transpose(c3[:, :, :, 0], (2, 1, 0)).reshape(2 * latent, latent)  # [center|down]

    # Loss projections, packed lane-dense into (256, 32): [wt | w1 | w2 | w3] at 8-col strides.
    wt, bt = rnd((latent, target)), rnd((1, target))
    heads = [(rnd((latent, target)), rnd((1, target))) for _ in range(3)]
    wz = jnp.zeros((latent, 32), jnp.float32).at[:, :target].set(wt)
    wc = jnp.zeros((latent, 32), jnp.float32)
    b_all = jnp.zeros((1, 32), jnp.float32).at[:, :target].set(bt)
    for k, (wk, bk) in enumerate(heads):
        lo = 8 * (k + 1)
        wc = wc.at[:, lo:lo + target].set(EMB_SCALE * wk)       # emb_scale folded into weights
        b_all = b_all.at[:, lo:lo + target].set(EMB_SCALE * bk)  # ... and biases

    net = {
        "enc_w": rnd((patch_feat, latent)).astype(bf16), "enc_b": rnd((1, latent)),
        "w1": jnp.transpose(c1[:, :, 0, 0]).astype(bf16), "b1": rnd((1, latent)),
        "w2s": w2s.astype(bf16), "b2": rnd((1, latent)),
        "w3s": w3s.astype(bf16), "b3": rnd((1, latent)),
        "w4": jnp.transpose(c4[:, :, 0, 0]).astype(bf16), "b4": rnd((1, latent)),
        "wz": wz.astype(bf16), "wc": wc.astype(bf16), "b_all": b_all,
    }
    # TODO(synk): W_list (5 x Linear(256,256)) from CPC_NCE.__init__ is never used coherently
    # in the reference forward; omitted.
    return {"net": net,
            "mask": _neighbor_masks(N_IMG, GRID_H, GRID_W),
            "onehot": _label_onehot(N_IMG, GRID_H, GRID_W)}


if __name__ == "__main__":
    key = jax.random.PRNGKey(0)
    pkey, xkey = jax.random.split(key)
    params = init_params(pkey)
    # x: stack of per-image patch tensors; 2 images x 36 patches of (3, 8, 8)
    x = jax.random.normal(xkey, (N_IMG, GRID_H * GRID_W, 3, 8, 8), jnp.float32)
    loss = jax.jit(lambda xx: cpc_nce_forward(xx, params))(x)
    jax.block_until_ready(loss)
    assert jnp.isfinite(loss)
    print("KERNEL_OK")
</pallas_src>

<mosaic_0001>
module attributes {stable_mosaic.version = 11 : i64} {
  func.func @_cpc_fused_kernel(%arg0: i32, %arg1: memref<72x192xf32, #tpu.memory_space<vmem>>, %arg2: memref<192x256xbf16, #tpu.memory_space<vmem>>, %arg3: memref<1x256xf32, #tpu.memory_space<vmem>>, %arg4: memref<256x256xbf16, #tpu.memory_space<vmem>>, %arg5: memref<1x256xf32, #tpu.memory_space<vmem>>, %arg6: memref<768x256xbf16, #tpu.memory_space<vmem>>, %arg7: memref<1x256xf32, #tpu.memory_space<vmem>>, %arg8: memref<512x256xbf16, #tpu.memory_space<vmem>>, %arg9: memref<1x256xf32, #tpu.memory_space<vmem>>, %arg10: memref<256x256xbf16, #tpu.memory_space<vmem>>, %arg11: memref<1x256xf32, #tpu.memory_space<vmem>>, %arg12: memref<256x32xbf16, #tpu.memory_space<vmem>>, %arg13: memref<256x32xbf16, #tpu.memory_space<vmem>>, %arg14: memref<1x32xf32, #tpu.memory_space<vmem>>, %arg15: memref<72x3xf32, #tpu.memory_space<vmem>>, %arg16: memref<72x32xf32, #tpu.memory_space<vmem>>) attributes {dimension_semantics = [#tpu.dimension_semantics<arbitrary>], iteration_bounds = array<i64: 1>, scalar_prefetch = 0 : i64, scratch_operands = 0 : i64, tpu.core_type = #tpu.core_type<tc>, window_params = [{pipeline_mode = #tpu.pipeline_mode<synchronous>, transform_indices = @transform_0, window_bounds = array<i64: 72, 192>}, {pipeline_mode = #tpu.pipeline_mode<synchronous>, transform_indices = @transform_1, window_bounds = array<i64: 192, 256>}, {pipeline_mode = #tpu.pipeline_mode<synchronous>, transform_indices = @transform_2, window_bounds = array<i64: 1, 256>}, {pipeline_mode = #tpu.pipeline_mode<synchronous>, transform_indices = @transform_3, window_bounds = array<i64: 256, 256>}, {pipeline_mode = #tpu.pipeline_mode<synchronous>, transform_indices = @transform_4, window_bounds = array<i64: 1, 256>}, {pipeline_mode = #tpu.pipeline_mode<synchronous>, transform_indices = @transform_5, window_bounds = array<i64: 768, 256>}, {pipeline_mode = #tpu.pipeline_mode<synchronous>, transform_indices = @transform_6, window_bounds = array<i64: 1, 256>}, {pipeline_mode = #tpu.pipeline_mode<synchronous>, transform_indices = @transform_7, window_bounds = array<i64: 512, 256>}, {pipeline_mode = #tpu.pipeline_mode<synchronous>, transform_indices = @transform_8, window_bounds = array<i64: 1, 256>}, {pipeline_mode = #tpu.pipeline_mode<synchronous>, transform_indices = @transform_9, window_bounds = array<i64: 256, 256>}, {pipeline_mode = #tpu.pipeline_mode<synchronous>, transform_indices = @transform_10, window_bounds = array<i64: 1, 256>}, {pipeline_mode = #tpu.pipeline_mode<synchronous>, transform_indices = @transform_11, window_bounds = array<i64: 256, 32>}, {pipeline_mode = #tpu.pipeline_mode<synchronous>, transform_indices = @transform_12, window_bounds = array<i64: 256, 32>}, {pipeline_mode = #tpu.pipeline_mode<synchronous>, transform_indices = @transform_13, window_bounds = array<i64: 1, 32>}, {pipeline_mode = #tpu.pipeline_mode<synchronous>, transform_indices = @transform_14, window_bounds = array<i64: 72, 3>}, {pipeline_mode = #tpu.pipeline_mode<synchronous>, transform_indices = @transform_15, window_bounds = array<i64: 72, 32>}]} {
    %c0 = arith.constant 0 : index
    %c0_0 = arith.constant 0 : index
    %0 = vector.load %arg1[%c0, %c0_0] : memref<72x192xf32, #tpu.memory_space<vmem>>, vector<72x192xf32>
    %c0_1 = arith.constant 0 : index
    %c0_2 = arith.constant 0 : index
    %1 = vector.load %arg2[%c0_1, %c0_2] : memref<192x256xbf16, #tpu.memory_space<vmem>>, vector<192x256xbf16>
    %2 = arith.truncf %0 : vector<72x192xf32> to vector<72x192xbf16>
    %cst = arith.constant dense<0.000000e+00> : vector<72x256xf32>
    %3 = tpu.matmul %2, %1, %cst {dimension_numbers = #tpu.dot_dimension_numbers<[1], [0], [0], [1], [0, 0, 1, 1], [], []>} : vector<72x192xbf16>, vector<192x256xbf16>, vector<72x256xf32> -> vector<72x256xf32>
    %c0_3 = arith.constant 0 : index
    %c0_4 = arith.constant 0 : index
    %4 = vector.load %arg3[%c0_3, %c0_4] : memref<1x256xf32, #tpu.memory_space<vmem>>, vector<1x256xf32>
    %5 = vector.broadcast %4 : vector<1x256xf32> to vector<72x256xf32>
    %6 = arith.addf %3, %5 : vector<72x256xf32>
    %c0_5 = arith.constant 0 : index
    %c0_6 = arith.constant 0 : index
    %7 = vector.load %arg12[%c0_5, %c0_6] : memref<256x32xbf16, #tpu.memory_space<vmem>>, vector<256x32xbf16>
    %8 = arith.truncf %6 : vector<72x256xf32> to vector<72x256xbf16>
    %cst_7 = arith.constant dense<0.000000e+00> : vector<72x32xf32>
    %9 = tpu.matmul %8, %7, %cst_7 {dimension_numbers = #tpu.dot_dimension_numbers<[1], [0], [0], [1], [0, 0, 1, 1], [], []>} : vector<72x256xbf16>, vector<256x32xbf16>, vector<72x32xf32> -> vector<72x32xf32>
    %c0_8 = arith.constant 0 : index
    %c0_9 = arith.constant 0 : index
    %10 = vector.load %arg16[%c0_8, %c0_9] : memref<72x32xf32, #tpu.memory_space<vmem>>, vector<72x32xf32>
    tpu.vector_store %arg16[%c0_8, %c0_9], %9 {strides = array<i32>} : memref<72x32xf32, #tpu.memory_space<vmem>>, vector<72x32xf32>,
    %c0_10 = arith.constant 0 : index
    %c0_11 = arith.constant 0 : index
    %11 = vector.load %arg4[%c0_10, %c0_11] : memref<256x256xbf16, #tpu.memory_space<vmem>>, vector<256x256xbf16>
    %c0_12 = arith.constant 0 : index
    %c0_13 = arith.constant 0 : index
    %12 = vector.load %arg6[%c0_12, %c0_13] : memref<768x256xbf16, #tpu.memory_space<vmem>>, vector<768x256xbf16>
    %c0_14 = arith.constant 0 : index
    %c0_15 = arith.constant 0 : index
    %13 = vector.load %arg8[%c0_14, %c0_15] : memref<512x256xbf16, #tpu.memory_space<vmem>>, vector<512x256xbf16>
    %c0_16 = arith.constant 0 : index
    %c0_17 = arith.constant 0 : index
    %14 = vector.load %arg10[%c0_16, %c0_17] : memref<256x256xbf16, #tpu.memory_space<vmem>>, vector<256x256xbf16>
    %c0_18 = arith.constant 0 : index
    %c0_19 = arith.constant 0 : index
    %15 = vector.load %arg5[%c0_18, %c0_19] : memref<1x256xf32, #tpu.memory_space<vmem>>, vector<1x256xf32>
    %c0_20 = arith.constant 0 : index
    %c0_21 = arith.constant 0 : index
    %16 = vector.load %arg7[%c0_20, %c0_21] : memref<1x256xf32, #tpu.memory_space<vmem>>, vector<1x256xf32>
    %c0_22 = arith.constant 0 : index
    %c0_23 = arith.constant 0 : index
    %17 = vector.load %arg9[%c0_22, %c0_23] : memref<1x256xf32, #tpu.memory_space<vmem>>, vector<1x256xf32>
    %c0_24 = arith.constant 0 : index
    %c0_25 = arith.constant 0 : index
    %18 = vector.load %arg11[%c0_24, %c0_25] : memref<1x256xf32, #tpu.memory_space<vmem>>, vector<1x256xf32>
    %c0_26 = arith.constant 0 : index
    %c0_27 = arith.constant 0 : index
    %19 = vector.load %arg15[%c0_26, %c0_27] : memref<72x3xf32, #tpu.memory_space<vmem>>, vector<72x1xf32>
    %c0_28 = arith.constant 0 : index
    %c1 = arith.constant 1 : index
    %20 = vector.load %arg15[%c0_28, %c1] : memref<72x3xf32, #tpu.memory_space<vmem>>, vector<72x1xf32>
    %c0_29 = arith.constant 0 : index
    %c2 = arith.constant 2 : index
    %21 = vector.load %arg15[%c0_29, %c2] : memref<72x3xf32, #tpu.memory_space<vmem>>, vector<72x1xf32>
    %22 = arith.truncf %6 : vector<72x256xf32> to vector<72x256xbf16>
    %cst_30 = arith.constant dense<0.000000e+00> : vector<72x256xf32>
    %23 = tpu.matmul %22, %11, %cst_30 {dimension_numbers = #tpu.dot_dimension_numbers<[1], [0], [0], [1], [0, 0, 1, 1], [], []>} : vector<72x256xbf16>, vector<256x256xbf16>, vector<72x256xf32> -> vector<72x256xf32>
    %24 = vector.broadcast %15 : vector<1x256xf32> to vector<72x256xf32>
    %25 = arith.addf %23, %24 : vector<72x256xf32>
    %cst_31 = arith.constant 0.000000e+00 : f32
    %26 = vector.broadcast %cst_31 : f32 to vector<72x256xf32>
    %27 = arith.maximumf %25, %26 : vector<72x256xf32>
    %c1_i32 = arith.constant 1 : i32
    %28 = tpu.dynamic_rotate %27 by %c1_i32 dim 0 : vector<72x256xf32>, i32 -> vector<72x256xf32>
    %29 = vector.broadcast %19 : vector<72x1xf32> to vector<72x256xf32>
    %30 = arith.mulf %28, %29 : vector<72x256xf32>
    %c71_i32 = arith.constant 71 : i32
    %31 = tpu.dynamic_rotate %27 by %c71_i32 dim 0 : vector<72x256xf32>, i32 -> vector<72x256xf32>
    %32 = vector.broadcast %20 : vector<72x1xf32> to vector<72x256xf32>
    %33 = arith.mulf %31, %32 : vector<72x256xf32>
    %34 = arith.truncf %30 : vector<72x256xf32> to vector<72x256xbf16>
    %35 = arith.truncf %27 : vector<72x256xf32> to vector<72x256xbf16>
    %36 = arith.truncf %33 : vector<72x256xf32> to vector<72x256xbf16>
    %37 = tpu.concatenate %34, %35, %36 in 1 : vector<72x256xbf16>, vector<72x256xbf16>, vector<72x256xbf16> -> vector<72x768xbf16>
    %cst_32 = arith.constant dense<0.000000e+00> : vector<72x256xf32>
    %38 = tpu.matmul %37, %12, %cst_32 {dimension_numbers = #tpu.dot_dimension_numbers<[1], [0], [0], [1], [0, 0, 1, 1], [], []>} : vector<72x768xbf16>, vector<768x256xbf16>, vector<72x256xf32> -> vector<72x256xf32>
    %39 = vector.broadcast %16 : vector<1x256xf32> to vector<72x256xf32>
    %40 = arith.addf %38, %39 : vector<72x256xf32>
    %c66_i32 = arith.constant 66 : i32
    %41 = tpu.dynamic_rotate %40 by %c66_i32 dim 0 : vector<72x256xf32>, i32 -> vector<72x256xf32>
    %42 = vector.broadcast %21 : vector<72x1xf32> to vector<72x256xf32>
    %43 = arith.mulf %41, %42 : vector<72x256xf32>
    %44 = arith.truncf %40 : vector<72x256xf32> to vector<72x256xbf16>
    %45 = arith.truncf %43 : vector<72x256xf32> to vector<72x256xbf16>
    %46 = tpu.concatenate %44, %45 in 1 : vector<72x256xbf16>, vector<72x256xbf16> -> vector<72x512xbf16>
    %cst_33 = arith.constant dense<0.000000e+00> : vector<72x256xf32>
    %47 = tpu.matmul %46, %13, %cst_33 {dimension_numbers = #tpu.dot_dimension_numbers<[1], [0], [0], [1], [0, 0, 1, 1], [], []>} : vector<72x512xbf16>, vector<512x256xbf16>, vector<72x256xf32> -> vector<72x256xf32>
    %48 = vector.broadcast %17 : vector<1x256xf32> to vector<72x256xf32>
    %49 = arith.addf %47, %48 : vector<72x256xf32>
    %cst_34 = arith.constant 0.000000e+00 : f32
    %50 = vector.broadcast %cst_34 : f32 to vector<72x256xf32>
    %51 = arith.maximumf %49, %50 : vector<72x256xf32>
    %52 = arith.truncf %51 : vector<72x256xf32> to vector<72x256xbf16>
    %cst_35 = arith.constant dense<0.000000e+00> : vector<72x256xf32>
    %53 = tpu.matmul %52, %14, %cst_35 {dimension_numbers = #tpu.dot_dimension_numbers<[1], [0], [0], [1], [0, 0, 1, 1], [], []>} : vector<72x256xbf16>, vector<256x256xbf16>, vector<72x256xf32> -> vector<72x256xf32>
    %54 = arith.addf %6, %53 : vector<72x256xf32>
    %55 = vector.broadcast %18 : vector<1x256xf32> to vector<72x256xf32>
    %56 = arith.addf %54, %55 : vector<72x256xf32>
    %57 = arith.truncf %56 : vector<72x256xf32> to vector<72x256xbf16>
    %cst_36 = arith.constant dense<0.000000e+00> : vector<72x256xf32>
    %58 = tpu.matmul %57, %11, %cst_36 {dimension_numbers = #tpu.dot_dimension_numbers<[1], [0], [0], [1], [0, 0, 1, 1], [], []>} : vector<72x256xbf16>, vector<256x256xbf16>, vector<72x256xf32> -> vector<72x256xf32>
    %59 = vector.broadcast %15 : vector<1x256xf32> to vector<72x256xf32>
    %60 = arith.addf %58, %59 : vector<72x256xf32>
    %cst_37 = arith.constant 0.000000e+00 : f32
    %61 = vector.broadcast %cst_37 : f32 to vector<72x256xf32>
    %62 = arith.maximumf %60, %61 : vector<72x256xf32>
    %c1_i32_38 = arith.constant 1 : i32
    %63 = tpu.dynamic_rotate %62 by %c1_i32_38 dim 0 : vector<72x256xf32>, i32 -> vector<72x256xf32>
    %64 = vector.broadcast %19 : vector<72x1xf32> to vector<72x256xf32>
    %65 = arith.mulf %63, %64 : vector<72x256xf32>
    %c71_i32_39 = arith.constant 71 : i32
    %66 = tpu.dynamic_rotate %62 by %c71_i32_39 dim 0 : vector<72x256xf32>, i32 -> vector<72x256xf32>
    %67 = vector.broadcast %20 : vector<72x1xf32> to vector<72x256xf32>
    %68 = arith.mulf %66, %67 : vector<72x256xf32>
    %69 = arith.truncf %65 : vector<72x256xf32> to vector<72x256xbf16>
    %70 = arith.truncf %62 : vector<72x256xf32> to vector<72x256xbf16>
    %71 = arith.truncf %68 : vector<72x256xf32> to vector<72x256xbf16>
    %72 = tpu.concatenate %69, %70, %71 in 1 : vector<72x256xbf16>, vector<72x256xbf16>, vector<72x256xbf16> -> vector<72x768xbf16>
    %cst_40 = arith.constant dense<0.000000e+00> : vector<72x256xf32>
    %73 = tpu.matmul %72, %12, %cst_40 {dimension_numbers = #tpu.dot_dimension_numbers<[1], [0], [0], [1], [0, 0, 1, 1], [], []>} : vector<72x768xbf16>, vector<768x256xbf16>, vector<72x256xf32> -> vector<72x256xf32>
    %74 = vector.broadcast %16 : vector<1x256xf32> to vector<72x256xf32>
    %75 = arith.addf %73, %74 : vector<72x256xf32>
    %c66_i32_41 = arith.constant 66 : i32
    %76 = tpu.dynamic_rotate %75 by %c66_i32_41 dim 0 : vector<72x256xf32>, i32 -> vector<72x256xf32>
    %77 = vector.broadcast %21 : vector<72x1xf32> to vector<72x256xf32>
    %78 = arith.mulf %76, %77 : vector<72x256xf32>
    %79 = arith.truncf %75 : vector<72x256xf32> to vector<72x256xbf16>
    %80 = arith.truncf %78 : vector<72x256xf32> to vector<72x256xbf16>
    %81 = tpu.concatenate %79, %80 in 1 : vector<72x256xbf16>, vector<72x256xbf16> -> vector<72x512xbf16>
    %cst_42 = arith.constant dense<0.000000e+00> : vector<72x256xf32>
    %82 = tpu.matmul %81, %13, %cst_42 {dimension_numbers = #tpu.dot_dimension_numbers<[1], [0], [0], [1], [0, 0, 1, 1], [], []>} : vector<72x512xbf16>, vector<512x256xbf16>, vector<72x256xf32> -> vector<72x256xf32>
    %83 = vector.broadcast %17 : vector<1x256xf32> to vector<72x256xf32>
    %84 = arith.addf %82, %83 : vector<72x256xf32>
    %cst_43 = arith.constant 0.000000e+00 : f32
    %85 = vector.broadcast %cst_43 : f32 to vector<72x256xf32>
    %86 = arith.maximumf %84, %85 : vector<72x256xf32>
    %87 = arith.truncf %86 : vector<72x256xf32> to vector<72x256xbf16>
    %cst_44 = arith.constant dense<0.000000e+00> : vector<72x256xf32>
    %88 = tpu.matmul %87, %14, %cst_44 {dimension_numbers = #tpu.dot_dimension_numbers<[1], [0], [0], [1], [0, 0, 1, 1], [], []>} : vector<72x256xbf16>, vector<256x256xbf16>, vector<72x256xf32> -> vector<72x256xf32>
    %89 = arith.addf %56, %88 : vector<72x256xf32>
    %90 = vector.broadcast %18 : vector<1x256xf32> to vector<72x256xf32>
    %91 = arith.addf %89, %90 : vector<72x256xf32>
    %92 = arith.truncf %91 : vector<72x256xf32> to vector<72x256xbf16>
    %cst_45 = arith.constant dense<0.000000e+00> : vector<72x256xf32>
    %93 = tpu.matmul %92, %11, %cst_45 {dimension_numbers = #tpu.dot_dimension_numbers<[1], [0], [0], [1], [0, 0, 1, 1], [], []>} : vector<72x256xbf16>, vector<256x256xbf16>, vector<72x256xf32> -> vector<72x256xf32>
    %94 = vector.broadcast %15 : vector<1x256xf32> to vector<72x256xf32>
    %95 = arith.addf %93, %94 : vector<72x256xf32>
    %cst_46 = arith.constant 0.000000e+00 : f32
    %96 = vector.broadcast %cst_46 : f32 to vector<72x256xf32>
    %97 = arith.maximumf %95, %96 : vector<72x256xf32>
    %c1_i32_47 = arith.constant 1 : i32
    %98 = tpu.dynamic_rotate %97 by %c1_i32_47 dim 0 : vector<72x256xf32>, i32 -> vector<72x256xf32>
    %99 = vector.broadcast %19 : vector<72x1xf32> to vector<72x256xf32>
    %100 = arith.mulf %98, %99 : vector<72x256xf32>
    %c71_i32_48 = arith.constant 71 : i32
    %101 = tpu.dynamic_rotate %97 by %c71_i32_48 dim 0 : vector<72x256xf32>, i32 -> vector<72x256xf32>
    %102 = vector.broadcast %20 : vector<72x1xf32> to vector<72x256xf32>
    %103 = arith.mulf %101, %102 : vector<72x256xf32>
    %104 = arith.truncf %100 : vector<72x256xf32> to vector<72x256xbf16>
    %105 = arith.truncf %97 : vector<72x256xf32> to vector<72x256xbf16>
    %106 = arith.truncf %103 : vector<72x256xf32> to vector<72x256xbf16>
    %107 = tpu.concatenate %104, %105, %106 in 1 : vector<72x256xbf16>, vector<72x256xbf16>, vector<72x256xbf16> -> vector<72x768xbf16>
    %cst_49 = arith.constant dense<0.000000e+00> : vector<72x256xf32>
    %108 = tpu.matmul %107, %12, %cst_49 {dimension_numbers = #tpu.dot_dimension_numbers<[1], [0], [0], [1], [0, 0, 1, 1], [], []>} : vector<72x768xbf16>, vector<768x256xbf16>, vector<72x256xf32> -> vector<72x256xf32>
    %109 = vector.broadcast %16 : vector<1x256xf32> to vector<72x256xf32>
    %110 = arith.addf %108, %109 : vector<72x256xf32>
    %c66_i32_50 = arith.constant 66 : i32
    %111 = tpu.dynamic_rotate %110 by %c66_i32_50 dim 0 : vector<72x256xf32>, i32 -> vector<72x256xf32>
    %112 = vector.broadcast %21 : vector<72x1xf32> to vector<72x256xf32>
    %113 = arith.mulf %111, %112 : vector<72x256xf32>
    %114 = arith.truncf %110 : vector<72x256xf32> to vector<72x256xbf16>
    %115 = arith.truncf %113 : vector<72x256xf32> to vector<72x256xbf16>
    %116 = tpu.concatenate %114, %115 in 1 : vector<72x256xbf16>, vector<72x256xbf16> -> vector<72x512xbf16>
    %cst_51 = arith.constant dense<0.000000e+00> : vector<72x256xf32>
    %117 = tpu.matmul %116, %13, %cst_51 {dimension_numbers = #tpu.dot_dimension_numbers<[1], [0], [0], [1], [0, 0, 1, 1], [], []>} : vector<72x512xbf16>, vector<512x256xbf16>, vector<72x256xf32> -> vector<72x256xf32>
    %118 = vector.broadcast %17 : vector<1x256xf32> to vector<72x256xf32>
    %119 = arith.addf %117, %118 : vector<72x256xf32>
    %cst_52 = arith.constant 0.000000e+00 : f32
    %120 = vector.broadcast %cst_52 : f32 to vector<72x256xf32>
    %121 = arith.maximumf %119, %120 : vector<72x256xf32>
    %122 = arith.truncf %121 : vector<72x256xf32> to vector<72x256xbf16>
    %cst_53 = arith.constant dense<0.000000e+00> : vector<72x256xf32>
    %123 = tpu.matmul %122, %14, %cst_53 {dimension_numbers = #tpu.dot_dimension_numbers<[1], [0], [0], [1], [0, 0, 1, 1], [], []>} : vector<72x256xbf16>, vector<256x256xbf16>, vector<72x256xf32> -> vector<72x256xf32>
    %124 = arith.addf %91, %123 : vector<72x256xf32>
    %125 = vector.broadcast %18 : vector<1x256xf32> to vector<72x256xf32>
    %126 = arith.addf %124, %125 : vector<72x256xf32>
    %127 = arith.truncf %126 : vector<72x256xf32> to vector<72x256xbf16>
    %cst_54 = arith.constant dense<0.000000e+00> : vector<72x256xf32>
    %128 = tpu.matmul %127, %11, %cst_54 {dimension_numbers = #tpu.dot_dimension_numbers<[1], [0], [0], [1], [0, 0, 1, 1], [], []>} : vector<72x256xbf16>, vector<256x256xbf16>, vector<72x256xf32> -> vector<72x256xf32>
    %129 = vector.broadcast %15 : vector<1x256xf32> to vector<72x256xf32>
    %130 = arith.addf %128, %129 : vector<72x256xf32>
    %cst_55 = arith.constant 0.000000e+00 : f32
    %131 = vector.broadcast %cst_55 : f32 to vector<72x256xf32>
    %132 = arith.maximumf %130, %131 : vector<72x256xf32>
    %c1_i32_56 = arith.constant 1 : i32
    %133 = tpu.dynamic_rotate %132 by %c1_i32_56 dim 0 : vector<72x256xf32>, i32 -> vector<72x256xf32>
    %134 = vector.broadcast %19 : vector<72x1xf32> to vector<72x256xf32>
    %135 = arith.mulf %133, %134 : vector<72x256xf32>
    %c71_i32_57 = arith.constant 71 : i32
    %136 = tpu.dynamic_rotate %132 by %c71_i32_57 dim 0 : vector<72x256xf32>, i32 -> vector<72x256xf32>
    %137 = vector.broadcast %20 : vector<72x1xf32> to vector<72x256xf32>
    %138 = arith.mulf %136, %137 : vector<72x256xf32>
    %139 = arith.truncf %135 : vector<72x256xf32> to vector<72x256xbf16>
    %140 = arith.truncf %132 : vector<72x256xf32> to vector<72x256xbf16>
    %141 = arith.truncf %138 : vector<72x256xf32> to vector<72x256xbf16>
    %142 = tpu.concatenate %139, %140, %141 in 1 : vector<72x256xbf16>, vector<72x256xbf16>, vector<72x256xbf16> -> vector<72x768xbf16>
    %cst_58 = arith.constant dense<0.000000e+00> : vector<72x256xf32>
    %143 = tpu.matmul %142, %12, %cst_58 {dimension_numbers = #tpu.dot_dimension_numbers<[1], [0], [0], [1], [0, 0, 1, 1], [], []>} : vector<72x768xbf16>, vector<768x256xbf16>, vector<72x256xf32> -> vector<72x256xf32>
    %144 = vector.broadcast %16 : vector<1x256xf32> to vector<72x256xf32>
    %145 = arith.addf %143, %144 : vector<72x256xf32>
    %c66_i32_59 = arith.constant 66 : i32
    %146 = tpu.dynamic_rotate %145 by %c66_i32_59 dim 0 : vector<72x256xf32>, i32 -> vector<72x256xf32>
    %147 = vector.broadcast %21 : vector<72x1xf32> to vector<72x256xf32>
    %148 = arith.mulf %146, %147 : vector<72x256xf32>
    %149 = arith.truncf %145 : vector<72x256xf32> to vector<72x256xbf16>
    %150 = arith.truncf %148 : vector<72x256xf32> to vector<72x256xbf16>
    %151 = tpu.concatenate %149, %150 in 1 : vector<72x256xbf16>, vector<72x256xbf16> -> vector<72x512xbf16>
    %cst_60 = arith.constant dense<0.000000e+00> : vector<72x256xf32>
    %152 = tpu.matmul %151, %13, %cst_60 {dimension_numbers = #tpu.dot_dimension_numbers<[1], [0], [0], [1], [0, 0, 1, 1], [], []>} : vector<72x512xbf16>, vector<512x256xbf16>, vector<72x256xf32> -> vector<72x256xf32>
    %153 = vector.broadcast %17 : vector<1x256xf32> to vector<72x256xf32>
    %154 = arith.addf %152, %153 : vector<72x256xf32>
    %cst_61 = arith.constant 0.000000e+00 : f32
    %155 = vector.broadcast %cst_61 : f32 to vector<72x256xf32>
    %156 = arith.maximumf %154, %155 : vector<72x256xf32>
    %157 = arith.truncf %156 : vector<72x256xf32> to vector<72x256xbf16>
    %cst_62 = arith.constant dense<0.000000e+00> : vector<72x256xf32>
    %158 = tpu.matmul %157, %14, %cst_62 {dimension_numbers = #tpu.dot_dimension_numbers<[1], [0], [0], [1], [0, 0, 1, 1], [], []>} : vector<72x256xbf16>, vector<256x256xbf16>, vector<72x256xf32> -> vector<72x256xf32>
    %159 = arith.addf %126, %158 : vector<72x256xf32>
    %160 = vector.broadcast %18 : vector<1x256xf32> to vector<72x256xf32>
    %161 = arith.addf %159, %160 : vector<72x256xf32>
    %162 = arith.truncf %161 : vector<72x256xf32> to vector<72x256xbf16>
    %cst_63 = arith.constant dense<0.000000e+00> : vector<72x256xf32>
    %163 = tpu.matmul %162, %11, %cst_63 {dimension_numbers = #tpu.dot_dimension_numbers<[1], [0], [0], [1], [0, 0, 1, 1], [], []>} : vector<72x256xbf16>, vector<256x256xbf16>, vector<72x256xf32> -> vector<72x256xf32>
    %164 = vector.broadcast %15 : vector<1x256xf32> to vector<72x256xf32>
    %165 = arith.addf %163, %164 : vector<72x256xf32>
    %cst_64 = arith.constant 0.000000e+00 : f32
    %166 = vector.broadcast %cst_64 : f32 to vector<72x256xf32>
    %167 = arith.maximumf %165, %166 : vector<72x256xf32>
    %c1_i32_65 = arith.constant 1 : i32
    %168 = tpu.dynamic_rotate %167 by %c1_i32_65 dim 0 : vector<72x256xf32>, i32 -> vector<72x256xf32>
    %169 = vector.broadcast %19 : vector<72x1xf32> to vector<72x256xf32>
    %170 = arith.mulf %168, %169 : vector<72x256xf32>
    %c71_i32_66 = arith.constant 71 : i32
    %171 = tpu.dynamic_rotate %167 by %c71_i32_66 dim 0 : vector<72x256xf32>, i32 -> vector<72x256xf32>
    %172 = vector.broadcast %20 : vector<72x1xf32> to vector<72x256xf32>
    %173 = arith.mulf %171, %172 : vector<72x256xf32>
    %174 = arith.truncf %170 : vector<72x256xf32> to vector<72x256xbf16>
    %175 = arith.truncf %167 : vector<72x256xf32> to vector<72x256xbf16>
    %176 = arith.truncf %173 : vector<72x256xf32> to vector<72x256xbf16>
    %177 = tpu.concatenate %174, %175, %176 in 1 : vector<72x256xbf16>, vector<72x256xbf16>, vector<72x256xbf16> -> vector<72x768xbf16>
    %cst_67 = arith.constant dense<0.000000e+00> : vector<72x256xf32>
    %178 = tpu.matmul %177, %12, %cst_67 {dimension_numbers = #tpu.dot_dimension_numbers<[1], [0], [0], [1], [0, 0, 1, 1], [], []>} : vector<72x768xbf16>, vector<768x256xbf16>, vector<72x256xf32> -> vector<72x256xf32>
    %179 = vector.broadcast %16 : vector<1x256xf32> to vector<72x256xf32>
    %180 = arith.addf %178, %179 : vector<72x256xf32>
    %c66_i32_68 = arith.constant 66 : i32
    %181 = tpu.dynamic_rotate %180 by %c66_i32_68 dim 0 : vector<72x256xf32>, i32 -> vector<72x256xf32>
    %182 = vector.broadcast %21 : vector<72x1xf32> to vector<72x256xf32>
    %183 = arith.mulf %181, %182 : vector<72x256xf32>
    %184 = arith.truncf %180 : vector<72x256xf32> to vector<72x256xbf16>
    %185 = arith.truncf %183 : vector<72x256xf32> to vector<72x256xbf16>
    %186 = tpu.concatenate %184, %185 in 1 : vector<72x256xbf16>, vector<72x256xbf16> -> vector<72x512xbf16>
    %cst_69 = arith.constant dense<0.000000e+00> : vector<72x256xf32>
    %187 = tpu.matmul %186, %13, %cst_69 {dimension_numbers = #tpu.dot_dimension_numbers<[1], [0], [0], [1], [0, 0, 1, 1], [], []>} : vector<72x512xbf16>, vector<512x256xbf16>, vector<72x256xf32> -> vector<72x256xf32>
    %188 = vector.broadcast %17 : vector<1x256xf32> to vector<72x256xf32>
    %189 = arith.addf %187, %188 : vector<72x256xf32>
    %cst_70 = arith.constant 0.000000e+00 : f32
    %190 = vector.broadcast %cst_70 : f32 to vector<72x256xf32>
    %191 = arith.maximumf %189, %190 : vector<72x256xf32>
    %192 = arith.truncf %191 : vector<72x256xf32> to vector<72x256xbf16>
    %cst_71 = arith.constant dense<0.000000e+00> : vector<72x256xf32>
    %193 = tpu.matmul %192, %14, %cst_71 {dimension_numbers = #tpu.dot_dimension_numbers<[1], [0], [0], [1], [0, 0, 1, 1], [], []>} : vector<72x256xbf16>, vector<256x256xbf16>, vector<72x256xf32> -> vector<72x256xf32>
    %194 = arith.addf %161, %193 : vector<72x256xf32>
    %195 = vector.broadcast %18 : vector<1x256xf32> to vector<72x256xf32>
    %196 = arith.addf %194, %195 : vector<72x256xf32>
    %cst_72 = arith.constant 0.000000e+00 : f32
    %197 = vector.broadcast %cst_72 : f32 to vector<72x256xf32>
    %198 = arith.maximumf %196, %197 : vector<72x256xf32>
    %c0_73 = arith.constant 0 : index
    %c0_74 = arith.constant 0 : index
    %199 = vector.load %arg16[%c0_73, %c0_74] : memref<72x32xf32, #tpu.memory_space<vmem>>, vector<72x32xf32>
    %c0_75 = arith.constant 0 : index
    %c0_76 = arith.constant 0 : index
    %200 = vector.load %arg13[%c0_75, %c0_76] : memref<256x32xbf16, #tpu.memory_space<vmem>>, vector<256x32xbf16>
    %201 = arith.truncf %198 : vector<72x256xf32> to vector<72x256xbf16>
    %cst_77 = arith.constant dense<0.000000e+00> : vector<72x32xf32>
    %202 = tpu.matmul %201, %200, %cst_77 {dimension_numbers = #tpu.dot_dimension_numbers<[1], [0], [0], [1], [0, 0, 1, 1], [], []>} : vector<72x256xbf16>, vector<256x32xbf16>, vector<72x32xf32> -> vector<72x32xf32>
    %203 = arith.addf %199, %202 : vector<72x32xf32>
    %c0_78 = arith.constant 0 : index
    %c0_79 = arith.constant 0 : index
    %204 = vector.load %arg14[%c0_78, %c0_79] : memref<1x32xf32, #tpu.memory_space<vmem>>, vector<1x32xf32>
    %205 = vector.broadcast %204 : vector<1x32xf32> to vector<72x32xf32>
    %206 = arith.addf %203, %205 : vector<72x32xf32>
    %c0_80 = arith.constant 0 : index
    %c0_81 = arith.constant 0 : index
    %207 = vector.load %arg16[%c0_80, %c0_81] : memref<72x32xf32, #tpu.memory_space<vmem>>, vector<72x32xf32>
    tpu.vector_store %arg16[%c0_80, %c0_81], %206 {strides = array<i32>} : memref<72x32xf32, #tpu.memory_space<vmem>>, vector<72x32xf32>,
    return
  }
  func.func @transform_0(%arg0: i32) -> (i32, i32) {
    %c0_i32 = arith.constant 0 : i32
    %c0_i32_0 = arith.constant 0 : i32
    %c0_i32_1 = arith.constant 0 : i32
    return %c0_i32, %c0_i32_0 : i32, i32
  }
  func.func @transform_1(%arg0: i32) -> (i32, i32) {
    %c0_i32 = arith.constant 0 : i32
    %c0_i32_0 = arith.constant 0 : i32
    %c0_i32_1 = arith.constant 0 : i32
    return %c0_i32, %c0_i32_0 : i32, i32
  }
  func.func @transform_2(%arg0: i32) -> (i32, i32) {
    %c0_i32 = arith.constant 0 : i32
    %c0_i32_0 = arith.constant 0 : i32
    %c0_i32_1 = arith.constant 0 : i32
    return %c0_i32, %c0_i32_0 : i32, i32
  }
  func.func @transform_3(%arg0: i32) -> (i32, i32) {
    %c0_i32 = arith.constant 0 : i32
    %c0_i32_0 = arith.constant 0 : i32
    %c0_i32_1 = arith.constant 0 : i32
    return %c0_i32, %c0_i32_0 : i32, i32
  }
  func.func @transform_4(%arg0: i32) -> (i32, i32) {
    %c0_i32 = arith.constant 0 : i32
    %c0_i32_0 = arith.constant 0 : i32
    %c0_i32_1 = arith.constant 0 : i32
    return %c0_i32, %c0_i32_0 : i32, i32
  }
  func.func @transform_5(%arg0: i32) -> (i32, i32) {
    %c0_i32 = arith.constant 0 : i32
    %c0_i32_0 = arith.constant 0 : i32
    %c0_i32_1 = arith.constant 0 : i32
    return %c0_i32, %c0_i32_0 : i32, i32
  }
  func.func @transform_6(%arg0: i32) -> (i32, i32) {
    %c0_i32 = arith.constant 0 : i32
    %c0_i32_0 = arith.constant 0 : i32
    %c0_i32_1 = arith.constant 0 : i32
    return %c0_i32, %c0_i32_0 : i32, i32
  }
  func.func @transform_7(%arg0: i32) -> (i32, i32) {
    %c0_i32 = arith.constant 0 : i32
    %c0_i32_0 = arith.constant 0 : i32
    %c0_i32_1 = arith.constant 0 : i32
    return %c0_i32, %c0_i32_0 : i32, i32
  }
  func.func @transform_8(%arg0: i32) -> (i32, i32) {
    %c0_i32 = arith.constant 0 : i32
    %c0_i32_0 = arith.constant 0 : i32
    %c0_i32_1 = arith.constant 0 : i32
    return %c0_i32, %c0_i32_0 : i32, i32
  }
  func.func @transform_9(%arg0: i32) -> (i32, i32) {
    %c0_i32 = arith.constant 0 : i32
    %c0_i32_0 = arith.constant 0 : i32
    %c0_i32_1 = arith.constant 0 : i32
    return %c0_i32, %c0_i32_0 : i32, i32
  }
  func.func @transform_10(%arg0: i32) -> (i32, i32) {
    %c0_i32 = arith.constant 0 : i32
    %c0_i32_0 = arith.constant 0 : i32
    %c0_i32_1 = arith.constant 0 : i32
    return %c0_i32, %c0_i32_0 : i32, i32
  }
  func.func @transform_11(%arg0: i32) -> (i32, i32) {
    %c0_i32 = arith.constant 0 : i32
    %c0_i32_0 = arith.constant 0 : i32
    %c0_i32_1 = arith.constant 0 : i32
    return %c0_i32, %c0_i32_0 : i32, i32
  }
  func.func @transform_12(%arg0: i32) -> (i32, i32) {
    %c0_i32 = arith.constant 0 : i32
    %c0_i32_0 = arith.constant 0 : i32
    %c0_i32_1 = arith.constant 0 : i32
    return %c0_i32, %c0_i32_0 : i32, i32
  }
  func.func @transform_13(%arg0: i32) -> (i32, i32) {
    %c0_i32 = arith.constant 0 : i32
    %c0_i32_0 = arith.constant 0 : i32
    %c0_i32_1 = arith.constant 0 : i32
    return %c0_i32, %c0_i32_0 : i32, i32
  }
  func.func @transform_14(%arg0: i32) -> (i32, i32) {
    %c0_i32 = arith.constant 0 : i32
    %c0_i32_0 = arith.constant 0 : i32
    %c0_i32_1 = arith.constant 0 : i32
    return %c0_i32, %c0_i32_0 : i32, i32
  }
  func.func @transform_15(%arg0: i32) -> (i32, i32) {
    %c0_i32 = arith.constant 0 : i32
    %c0_i32_0 = arith.constant 0 : i32
    %c0_i32_1 = arith.constant 0 : i32
    return %c0_i32, %c0_i32_0 : i32, i32
  }
}

module attributes {stable_mosaic.version = 11 : i64} {
  func.func @_cpc_loss_kernel(%arg0: i32, %arg1: memref<36x7xf32, #tpu.memory_space<vmem>>, %arg2: memref<7x72xf32, #tpu.memory_space<vmem>>, %arg3: memref<36x72xf32, #tpu.memory_space<vmem>>, %arg4: memref<1x1xf32, #tpu.memory_space<vmem>>) attributes {dimension_semantics = [#tpu.dimension_semantics<arbitrary>], iteration_bounds = array<i64: 1>, scalar_prefetch = 0 : i64, scratch_operands = 0 : i64, tpu.core_type = #tpu.core_type<tc>, window_params = [{pipeline_mode = #tpu.pipeline_mode<synchronous>, transform_indices = @transform_0, window_bounds = array<i64: 36, 7>}, {pipeline_mode = #tpu.pipeline_mode<synchronous>, transform_indices = @transform_1, window_bounds = array<i64: 7, 72>}, {pipeline_mode = #tpu.pipeline_mode<synchronous>, transform_indices = @transform_2, window_bounds = array<i64: 36, 72>}, {pipeline_mode = #tpu.pipeline_mode<synchronous>, transform_indices = @transform_3, window_bounds = array<i64: 1, 1>}]} {
    %c0 = arith.constant 0 : index
    %c0_0 = arith.constant 0 : index
    %0 = vector.load %arg1[%c0, %c0_0] : memref<36x7xf32, #tpu.memory_space<vmem>>, vector<36x7xf32>
    %c0_1 = arith.constant 0 : index
    %c0_2 = arith.constant 0 : index
    %1 = vector.load %arg2[%c0_1, %c0_2] : memref<7x72xf32, #tpu.memory_space<vmem>>, vector<7x72xf32>
    %cst = arith.constant dense<0.000000e+00> : vector<36x72xf32>
    %2 = tpu.matmul %0, %1, %cst {dimension_numbers = #tpu.dot_dimension_numbers<[1], [0], [0], [1], [0, 0, 1, 1], [], []>} : vector<36x7xf32>, vector<7x72xf32>, vector<36x72xf32> -> vector<36x72xf32>
    %cst_3 = arith.constant dense<0xFF800000> : vector<36xf32>
    %3 = vector.multi_reduction <maximumf>, %2, %cst_3 [1] : vector<36x72xf32> to vector<36xf32>
    %4 = vector.shape_cast %3 : vector<36xf32> to vector<36x1xf32>
    %5 = vector.broadcast %4 : vector<36x1xf32> to vector<36x72xf32>
    %6 = arith.subf %2, %5 : vector<36x72xf32>
    %7 = math.exp %6 : vector<36x72xf32>
    %cst_4 = arith.constant dense<0.000000e+00> : vector<36xf32>
    %8 = vector.multi_reduction <add>, %7, %cst_4 [1] : vector<36x72xf32> to vector<36xf32>
    %9 = vector.shape_cast %8 : vector<36xf32> to vector<36x1xf32>
    %10 = math.log %9 : vector<36x1xf32>
    %11 = arith.addf %4, %10 : vector<36x1xf32>
    %c0_5 = arith.constant 0 : index
    %c0_6 = arith.constant 0 : index
    %12 = vector.load %arg3[%c0_5, %c0_6] : memref<36x72xf32, #tpu.memory_space<vmem>>, vector<36x72xf32>
    %13 = arith.mulf %2, %12 : vector<36x72xf32>
    %cst_7 = arith.constant dense<0.000000e+00> : vector<36xf32>
    %14 = vector.multi_reduction <add>, %13, %cst_7 [1] : vector<36x72xf32> to vector<36xf32>
    %15 = vector.shape_cast %14 : vector<36xf32> to vector<36x1xf32>
    %16 = arith.subf %11, %15 : vector<36x1xf32>
    %17 = vector.shape_cast %16 : vector<36x1xf32> to vector<1x36x1xf32>
    %cst_8 = arith.constant dense<0.000000e+00> : vector<1xf32>
    %18 = vector.multi_reduction <add>, %17, %cst_8 [1, 2] : vector<1x36x1xf32> to vector<1xf32>
    %19 = vector.shape_cast %18 : vector<1xf32> to vector<1x1x1xf32>
    %20 = vector.extract %19[0, 0, 0] : f32 from vector<1x1x1xf32>
    %21 = vector.broadcast %20 : f32 to vector<1x1xf32>
    %cst_9 = arith.constant 0.0833333358 : f32
    %22 = vector.broadcast %cst_9 : f32 to vector<1x1xf32>
    %23 = arith.mulf %21, %22 : vector<1x1xf32>
    %c0_10 = arith.constant 0 : index
    %c0_11 = arith.constant 0 : index
    %24 = vector.load %arg4[%c0_10, %c0_11] : memref<1x1xf32, #tpu.memory_space<vmem>>, vector<1x1xf32>
    tpu.vector_store %arg4[%c0_10, %c0_11], %23 {strides = array<i32>} : memref<1x1xf32, #tpu.memory_space<vmem>>, vector<1x1xf32>,
    return
  }
  func.func @transform_0(%arg0: i32) -> (i32, i32) {
    %c0_i32 = arith.constant 0 : i32
    %c0_i32_0 = arith.constant 0 : i32
    %c0_i32_1 = arith.constant 0 : i32
    return %c0_i32, %c0_i32_0 : i32, i32
  }
  func.func @transform_1(%arg0: i32) -> (i32, i32) {
    %c0_i32 = arith.constant 0 : i32
    %c0_i32_0 = arith.constant 0 : i32
    %c0_i32_1 = arith.constant 0 : i32
    return %c0_i32, %c0_i32_0 : i32, i32
  }
  func.func @transform_2(%arg0: i32) -> (i32, i32) {
    %c0_i32 = arith.constant 0 : i32
    %c0_i32_0 = arith.constant 0 : i32
    %c0_i32_1 = arith.constant 0 : i32
    return %c0_i32, %c0_i32_0 : i32, i32
  }
  func.func @transform_3(%arg0: i32) -> (i32, i32) {
    %c0_i32 = arith.constant 0 : i32
    %c0_i32_0 = arith.constant 0 : i32
    %c0_i32_1 = arith.constant 0 : i32
    return %c0_i32, %c0_i32_0 : i32, i32
  }
}

</mosaic_0001>

<llo_original>
// kernel: _lambda_.3
$region0: #{_lambda_.3}
  #allocation0 [shape = 'u32[]', space=smem, size = 0x4, offset = 0x4, fixed_abs, tag = 'smem constant byte address 0x4 - core index']
  #allocation1 [shape = 'u32[144,128]{1,0:T(1,128)}', space=vmem, size = 0x12000, scoped, tag = 'internal scratch']
  %s0 = inlined_call_operand.vmem [shape: f32[36,7], index: 0, kind: input, shape index: {}]
  %s1 = inlined_call_operand.vmem [shape: f32[7,72], index: 1, kind: input, shape index: {}]
  %s2 = inlined_call_operand.vmem [shape: f32[36,72], index: 2, kind: input, shape index: {}]
  %s3 = inlined_call_operand.hbm [shape: f32[1,1], index: 3, kind: output, shape index: {}]
  %s4 = sld [smem:[#allocation0]]
  $region22: #{_lambda_.3} parent=0
    _
  %s6 = ssub.s32 1, %s4
  %s7 = scalar_select 0, %s6, %s4
  $region1: #{_lambda_.3} parent=0
    #allocation2 [shape = 'u8[512]{0}', space=vmem, size = 0x400, scoped, tag = 'output window, operand 0, single buffered']
    #allocation3 [shape = 's32[1]{0}', space=sflag, size = 0x4, scoped, tag = 'scoped memory for _lambda_.3']
    %8 = vsyncpa [#allocation3], 0
    // Predicated region
    $region2: #{_lambda_.3} parent=1 // pred_check
      _
    $region3: #{_lambda_.3} parent=1 // pred_check_branch
      %10 = sbr.rel (0) target = $region5
    $region4: #{_lambda_.3} parent=1 // pred_region
      _
    $region5: #{_lambda_.3} parent=1 // pred_fallthru
      _
    // Predicated region
    $region6: #{_lambda_.3} parent=1 // pred_check
      _
    $region7: #{_lambda_.3} parent=1 // pred_check_branch
      %12 = sbr.rel (0) target = $region9
    $region8: #{_lambda_.3} parent=1 // pred_region
      _
    $region9: #{_lambda_.3} parent=1 // pred_fallthru
      _
    // Predicated region
    $region10: #{_lambda_.3} parent=1 // pred_check
      _
    $region11: #{_lambda_.3} parent=1 // pred_check_branch
      %14 = sbr.rel (0) target = $region13
    $region12: #{_lambda_.3} parent=1 // pred_region
      _
    $region13: #{_lambda_.3} parent=1 // pred_fallthru
      _
    %v15 = vld [vmem:[%s0] sm:$0xff]
    %v16 = vld [vmem:[%s0 + $0x8] sm:$0xff]
    %v17 = vld [vmem:[%s0 + $0x10] sm:$0xff]
    %v18 = vld [vmem:[%s0 + $0x18] sm:$0xff]
    %v19 = vld [vmem:[%s0 + $0x20] sm:$0xf]
    %v20 = vld [vmem:[%s1] sm:$0x7f]
    %vm21 = vcmask 56320
    %v23 = vsel %vm21, %v15, 0
    %v26 = vsel %vm21, %v16, 0
    %v29 = vsel %vm21, %v17, 0
    %v32 = vsel %vm21, %v18, 0
    %v35 = vsel %vm21, %v19, 0
    %vm37 = vcmask 1046528
    %v39 = vsel %vm37, %v20, 0
    %41 = vmatprep.subr.mxu0 0.0
    %42 = vmatpush1.msra.mxu0 0.0
    %43 = vmatprep.subr.mxu0 0.0
    %44 = vmatpush1.msra.mxu0 0.0
    %45 = vmatprep.subr.mxu0 0.0
    %46 = vmatpush1.msra.mxu0 0.0
    %47 = vmatprep.subr.mxu0 0.0
    %48 = vmatpush1.msra.mxu0 0.0
    %49 = vmatprep.subr.mxu0 0.0
    %50 = vmatpush1.msra.mxu0 0.0
    %51 = vmatprep.subr.mxu0 0.0
    %52 = vmatpush1.msra.mxu0 0.0
    %53 = vmatprep.subr.mxu0 0.0
    %54 = vmatpush1.msra.mxu0 0.0
    %55 = vmatprep.subr.mxu0 0.0
    %56 = vmatpush1.msra.mxu0 0.0
    %57 = vmatprep.subr.mxu0 0.0
    %58 = vmatpush1.msra.mxu0 0.0
    %59 = vmatprep.subr.mxu0 0.0
    %60 = vmatpush1.msra.mxu0 0.0
    %61 = vmatprep.subr.mxu0 0.0
    %62 = vmatpush1.msra.mxu0 0.0
    %63 = vmatprep.subr.mxu0 0.0
    %64 = vmatpush1.msra.mxu0 0.0
    %65 = vmatprep.subr.mxu0 0.0
    %66 = vmatpush1.msra.mxu0 0.0
    %67 = vmatprep.subr.mxu0 0.0
    %68 = vmatpush1.msra.mxu0 0.0
    %69 = vmatprep.subr.mxu0 0.0
    %70 = vmatpush1.msra.mxu0 0.0
    %71 = vmatprep.subr.mxu0 0.0
    %72 = vmatpush1.msra.mxu0 %v39
    %73 = vmatprep.subr.mxu0 0.0
    %74 = vmatpush2.msra.mxu0 0.0
    %75 = vmatprep.subr.mxu0 0.0
    %76 = vmatpush2.msra.mxu0 0.0
    %77 = vmatprep.subr.mxu0 0.0
    %78 = vmatpush2.msra.mxu0 0.0
    %79 = vmatprep.subr.mxu0 0.0
    %80 = vmatpush2.msra.mxu0 0.0
    %81 = vmatprep.subr.mxu0 0.0
    %82 = vmatpush2.msra.mxu0 0.0
    %83 = vmatprep.subr.mxu0 0.0
    %84 = vmatpush2.msra.mxu0 0.0
    %85 = vmatprep.subr.mxu0 0.0
    %86 = vmatpush2.msra.mxu0 0.0
    %87 = vmatprep.subr.mxu0 0.0
    %88 = vmatpush2.msra.mxu0 0.0
    %89 = vmatprep.subr.mxu0 0.0
    %90 = vmatpush2.msra.mxu0 0.0
    %91 = vmatprep.subr.mxu0 0.0
    %92 = vmatpush2.msra.mxu0 0.0
    %93 = vmatprep.subr.mxu0 0.0
    %94 = vmatpush2.msra.mxu0 0.0
    %95 = vmatprep.subr.mxu0 0.0
    %96 = vmatpush2.msra.mxu0 0.0
    %97 = vmatprep.subr.mxu0 0.0
    %98 = vmatpush2.msra.mxu0 0.0
    %99 = vmatprep.subr.mxu0 0.0
    %100 = vmatpush2.msra.mxu0 0.0
    %101 = vmatprep.subr.mxu0 0.0
    %102 = vmatpush2.msra.mxu0 0.0
    %103 = vmatprep.subr.mxu0 0.0
    %104 = vmatpush2.msra.mxu0 0.0
    %105 = vmatprep.mubr.f32.mxu0 0.0
    %106 = vmatmul.mubr.f32.gmra.mxu0 %v23
    %v107 = vpop.f32.mrf.mxu0
    %v108 = vadd.f32 0.0, %v107
    %v109 = vpop.f32.mrf.mxu0
    %110 = vmatprep.mubr.f32.mxu0 0.0
    %111 = vmatmul.mubr.f32.gmra.mxu0 %v26
    %v112 = vpop.f32.mrf.mxu0
    %v113 = vadd.f32 0.0, %v112
    %v114 = vpop.f32.mrf.mxu0
    %115 = vmatprep.mubr.f32.mxu0 0.0
    %116 = vmatmul.mubr.f32.gmra.mxu0 %v29
    %v117 = vpop.f32.mrf.mxu0
    %v118 = vadd.f32 0.0, %v117
    %v119 = vpop.f32.mrf.mxu0
    %120 = vmatprep.mubr.f32.mxu0 0.0
    %121 = vmatmul.mubr.f32.gmra.mxu0 %v32
    %v122 = vpop.f32.mrf.mxu0
    %v123 = vadd.f32 0.0, %v122
    %v124 = vpop.f32.mrf.mxu0
    %125 = vmatprep.mubr.f32.mxu0 0.0
    %126 = vmatmul.mubr.f32.gmra.mxu0 %v35
    %v127 = vpop.f32.mrf.mxu0
    %v128 = vadd.f32 0.0, %v127
    %v129 = vpop.f32.mrf.mxu0
    %130 = vdwg.mxu0
    %vm131 = vcmask 588800
    %v132 = vsel %vm131, %v108, -inf
    %133 = vmax.xlane.f32.xlu0 %v132
    %v134 = vpop.xlane.xlu0 %133
    %v135 = vsel %vm131, %v113, -inf
    %136 = vmax.xlane.f32.xlu0 %v135
    %v137 = vpop.xlane.xlu0 %136
    %v138 = vsel %vm131, %v118, -inf
    %139 = vmax.xlane.f32.xlu0 %v138
    %v140 = vpop.xlane.xlu0 %139
    %v141 = vsel %vm131, %v123, -inf
    %142 = vmax.xlane.f32.xlu0 %v141
    %v143 = vpop.xlane.xlu0 %142
    %vm144 = vcmask 584704
    %v145 = vsel %vm144, %v128, -inf
    %146 = vmax.xlane.f32.xlu0 %v145
    %v147 = vpop.xlane.xlu0 %146
    %v148 = vsub.f32 %v108, %v134
    %v149 = vsub.f32 %v113, %v137
    %v150 = vsub.f32 %v118, %v140
    %v151 = vsub.f32 %v123, %v143
    %v152 = vsub.f32 %v128, %v147
    %v153 = vmul.f32 %v148, 1.442695
    %v154 = vpow.pop %v153
    %v155 = vmul.f32 %v149, 1.442695
    %v156 = vpow.pop %v155
    %v157 = vmul.f32 %v150, 1.442695
    %v158 = vpow.pop %v157
    %v159 = vmul.f32 %v151, 1.442695
    %v160 = vpow.pop %v159
    %v161 = vmul.f32 %v152, 1.442695
    %v162 = vpow.pop %v161
    %v163 = vsel %vm131, %v154, 0.0
    %164 = vadd.xlane.f32.xlu0 %v163
    %v165 = vpop.xlane.xlu0 %164
    %v166 = vsel %vm131, %v156, 0.0
    %167 = vadd.xlane.f32.xlu0 %v166
    %v168 = vpop.xlane.xlu0 %167
    %v169 = vsel %vm131, %v158, 0.0
    %170 = vadd.xlane.f32.xlu0 %v169
    %v171 = vpop.xlane.xlu0 %170
    %v172 = vsel %vm131, %v160, 0.0
    %173 = vadd.xlane.f32.xlu0 %v172
    %v174 = vpop.xlane.xlu0 %173
    %v175 = vsel %vm144, %v162, 0.0
    %176 = vadd.xlane.f32.xlu0 %v175
    %v177 = vpop.xlane.xlu0 %176
    %v178 = vlog2.pop %v165
    %v179 = vmul.f32 %v178, 0.6931472
    %v180 = vlog2.pop %v168
    %v181 = vmul.f32 %v180, 0.6931472
    %v182 = vlog2.pop %v171
    %v183 = vmul.f32 %v182, 0.6931472
    %v184 = vlog2.pop %v174
    %v185 = vmul.f32 %v184, 0.6931472
    %v186 = vlog2.pop %v177
    %v187 = vmul.f32 %v186, 0.6931472
    %v188 = vadd.f32 %v134, %v179
    %v189 = vadd.f32 %v137, %v181
    %v190 = vadd.f32 %v140, %v183
    %v191 = vadd.f32 %v143, %v185
    %v192 = vadd.f32 %v147, %v187
    %v193 = vld [vmem:[%s2] sm:$0xff]
    %v194 = vld [vmem:[%s2 + $0x8] sm:$0xff]
    %v195 = vld [vmem:[%s2 + $0x10] sm:$0xff]
    %v196 = vld [vmem:[%s2 + $0x18] sm:$0xff]
    %v197 = vld [vmem:[%s2 + $0x20] sm:$0xf]
    %v198 = vmul.f32 %v108, %v193
    %v199 = vmul.f32 %v113, %v194
    %v200 = vmul.f32 %v118, %v195
    %v201 = vmul.f32 %v123, %v196
    %v202 = vmul.f32 %v128, %v197
    %v203 = vsel %vm131, %v198, 0.0
    %204 = vadd.xlane.f32.xlu0 %v203
    %v205 = vpop.xlane.xlu0 %204
    %v206 = vsel %vm131, %v199, 0.0
    %207 = vadd.xlane.f32.xlu0 %v206
    %v208 = vpop.xlane.xlu0 %207
    %v209 = vsel %vm131, %v200, 0.0
    %210 = vadd.xlane.f32.xlu0 %v209
    %v211 = vpop.xlane.xlu0 %210
    %v212 = vsel %vm131, %v201, 0.0
    %213 = vadd.xlane.f32.xlu0 %v212
    %v214 = vpop.xlane.xlu0 %213
    %v215 = vsel %vm144, %v202, 0.0
    %216 = vadd.xlane.f32.xlu0 %v215
    %v217 = vpop.xlane.xlu0 %216
    %v218 = vsub.f32 %v188, %v205
    %v219 = vsub.f32 %v189, %v208
    %v220 = vsub.f32 %v190, %v211
    %v221 = vsub.f32 %v191, %v214
    %v222 = vsub.f32 %v192, %v217
    %vm223 = vcmask 7168
    %v224 = vsel %vm223, %v218, 0.0
    %v225 = vsel %vm223, %v219, 0.0
    %v226 = vadd.f32 %v224, %v225
    %v227 = vsel %vm223, %v220, 0.0
    %v228 = vadd.f32 %v226, %v227
    %v229 = vsel %vm223, %v221, 0.0
    %v230 = vadd.f32 %v228, %v229
    %vm231 = vcmask 3072
    %v232 = vsel %vm231, %v222, 0.0
    %v233 = vadd.f32 %v230, %v232
    %234 = vadd.xlane.f32.xlu0 %v233
    %v235 = vpop.xlane.xlu0 %234
    %v236 = vrot.slane %v235, 4
    %v237 = vadd.f32 %v235, %v236
    %v238 = vrot.slane %v237, 2
    %v239 = vadd.f32 %v237, %v238
    %v240 = vrot.slane %v239, 1
    %v241 = vadd.f32 %v239, %v240
    %s242 = vtos %v241
    %v243 = vstv %s242
    %v244 = vmul.f32 %v243, 0.083333336
    %vm245 = vcmask 0
    %246 = vst.msk [vmem:[#allocation2] sm:$0x1] %vm245, %v244
    // Predicated region
    $region14: #{_lambda_.3} parent=1 // pred_check
      _
    $region15: #{_lambda_.3} parent=1 // pred_check_branch
      %248 = sbr.rel (0) target = $region17
    $region16: #{_lambda_.3} parent=1 // pred_region
      %s250 = ssub.s32 16, 16
      %251 = vsyncadd [#allocation3], %s250
      %s253 = sshll.u32 [#allocation2], 4
      %s254 = int_to_ptr.vmem [resolvable:$true] %s253
      %256 = dma.vmem_to_hbm [thread:$0]  %s254, 16, %s3, [#allocation3]
    $region17: #{_lambda_.3} parent=1 // pred_fallthru
      _
    // Predicated region
    $region18: #{_lambda_.3} parent=1 // pred_check
      _
    $region19: #{_lambda_.3} parent=1 // pred_check_branch
      %258 = sbr.rel (0) target = $region21
    $region20: #{_lambda_.3} parent=1 // pred_region
      %259 = dma.done [#allocation3], 16
    $region21: #{_lambda_.3} parent=1 // pred_fallthru
      _
    %260 = vsyncpa [#allocation3], 1

// kernel: _lambda_.2
$region0: #{_lambda_.2}
  #allocation0 [shape = 'u32[]', space=smem, size = 0x4, offset = 0x4, fixed_abs, tag = 'smem constant byte address 0x4 - core index']
  #allocation1 [shape = 'u32[144,128]{1,0:T(1,128)}', space=vmem, size = 0x12000, scoped, tag = 'internal scratch']
  %s0 = inlined_call_operand.vmem [shape: f32[72,192], index: 0, kind: input, shape index: {}]
  %s1 = inlined_call_operand.hbm [shape: bf16[192,256], index: 1, kind: input, shape index: {}]
  %s2 = inlined_call_operand.vmem [shape: f32[1,256], index: 2, kind: input, shape index: {}]
  %s3 = inlined_call_operand.hbm [shape: bf16[256,256], index: 3, kind: input, shape index: {}]
  %s4 = inlined_call_operand.vmem [shape: f32[1,256], index: 4, kind: input, shape index: {}]
  %s5 = inlined_call_operand.vmem [shape: bf16[768,256], index: 5, kind: input, shape index: {}]
  %s6 = inlined_call_operand.vmem [shape: f32[1,256], index: 6, kind: input, shape index: {}]
  %s7 = inlined_call_operand.vmem [shape: bf16[512,256], index: 7, kind: input, shape index: {}]
  %s8 = inlined_call_operand.vmem [shape: f32[1,256], index: 8, kind: input, shape index: {}]
  %s9 = inlined_call_operand.vmem [shape: bf16[256,256], index: 9, kind: input, shape index: {}]
  %s10 = inlined_call_operand.vmem [shape: f32[1,256], index: 10, kind: input, shape index: {}]
  %s11 = inlined_call_operand.hbm [shape: bf16[256,32], index: 11, kind: input, shape index: {}]
  %s12 = inlined_call_operand.vmem [shape: bf16[256,32], index: 12, kind: input, shape index: {}]
  %s13 = inlined_call_operand.vmem [shape: f32[1,32], index: 13, kind: input, shape index: {}]
  %s14 = inlined_call_operand.hbm [shape: f32[72,3], index: 14, kind: input, shape index: {}]
  %s15 = inlined_call_operand.vmem [shape: f32[72,32], index: 15, kind: output, shape index: {}]
  %s16 = sld [smem:[#allocation0]]
  $region86: #{_lambda_.2} parent=0
    _
  %s18 = ssub.s32 1, %s16
  %s19 = scalar_select 0, %s18, %s16
  $region1: #{_lambda_.2} parent=0
    #allocation2 [shape = 'u8[98304]{0}', space=vmem, size = 0x18000, scoped, tag = 'input window, operand 1, single buffered']
    #allocation3 [shape = 's32[1]{0}', space=sflag, size = 0x4, scoped, tag = 'scoped memory for _lambda_.2']
    #allocation4 [shape = 'u8[131072]{0}', space=vmem, size = 0x20000, scoped, tag = 'input window, operand 3, single buffered']
    #allocation5 [shape = 's32[1]{0}', space=sflag, size = 0x4, scoped, tag = 'scoped memory for _lambda_.2']
    #allocation6 [shape = 'u8[65536]{0}', space=vmem, size = 0x10000, scoped, tag = 'input window, operand 11, single buffered']
    #allocation7 [shape = 'u8[36864]{0}', space=vmem, size = 0x9000, scoped, tag = 'input window, operand 14, single buffered']
    #allocation8 [shape = 's32[1]{0}', space=sflag, size = 0x4, scoped, tag = 'scoped memory for _lambda_.2']
    %20 = vsyncpa [#allocation3], 0
    %21 = vsyncpa [#allocation5], 0
    %22 = vsyncpa [#allocation8], 0
    // Predicated region
    $region2: #{_lambda_.2} parent=1 // pred_check
      _
    $region3: #{_lambda_.2} parent=1 // pred_check_branch
      %24 = sbr.rel (0) target = $region5
    $region4: #{_lambda_.2} parent=1 // pred_region
      _
    $region5: #{_lambda_.2} parent=1 // pred_fallthru
      _
    // Predicated region
    $region6: #{_lambda_.2} parent=1 // pred_check
      _
    $region7: #{_lambda_.2} parent=1 // pred_check_branch
      %26 = sbr.rel (0) target = $region9
    $region8: #{_lambda_.2} parent=1 // pred_region
      %s28 = ssub.s32 3072, 3072
      %29 = vsyncadd [#allocation3], %s28
      %s30 = sshll.u32 [#allocation2], 4
      %s31 = int_to_ptr.vmem [resolvable:$true] %s30
      %36 = dma.hbm_to_vmem [thread:$0]  %s1, 3072, %s31, [#allocation3], 128, 128, 8
    $region9: #{_lambda_.2} parent=1 // pred_fallthru
      _
    // Predicated region
    $region10: #{_lambda_.2} parent=1 // pred_check
      _
    $region11: #{_lambda_.2} parent=1 // pred_check_branch
      %38 = sbr.rel (0) target = $region13
    $region12: #{_lambda_.2} parent=1 // pred_region
      _
    $region13: #{_lambda_.2} parent=1 // pred_fallthru
      _
    // Predicated region
    $region14: #{_lambda_.2} parent=1 // pred_check
      _
    $region15: #{_lambda_.2} parent=1 // pred_check_branch
      %40 = sbr.rel (0) target = $region17
    $region16: #{_lambda_.2} parent=1 // pred_region
      %s42 = ssub.s32 4096, 4096
      %43 = vsyncadd [#allocation5], %s42
      %s44 = sshll.u32 [#allocation4], 4
      %s45 = int_to_ptr.vmem [resolvable:$true] %s44
      %50 = dma.hbm_to_vmem [thread:$0]  %s3, 4096, %s45, [#allocation5], 128, 128, 8
    $region17: #{_lambda_.2} parent=1 // pred_fallthru
      _
    // Predicated region
    $region18: #{_lambda_.2} parent=1 // pred_check
      _
    $region19: #{_lambda_.2} parent=1 // pred_check_branch
      %52 = sbr.rel (0) target = $region21
    $region20: #{_lambda_.2} parent=1 // pred_region
      _
    $region21: #{_lambda_.2} parent=1 // pred_fallthru
      _
    // Predicated region
    $region22: #{_lambda_.2} parent=1 // pred_check
      _
    $region23: #{_lambda_.2} parent=1 // pred_check_branch
      %54 = sbr.rel (0) target = $region25
    $region24: #{_lambda_.2} parent=1 // pred_region
      _
    $region25: #{_lambda_.2} parent=1 // pred_fallthru
      _
    // Predicated region
    $region26: #{_lambda_.2} parent=1 // pred_check
      _
    $region27: #{_lambda_.2} parent=1 // pred_check_branch
      %56 = sbr.rel (0) target = $region29
    $region28: #{_lambda_.2} parent=1 // pred_region
      _
    $region29: #{_lambda_.2} parent=1 // pred_fallthru
      _
    // Predicated region
    $region30: #{_lambda_.2} parent=1 // pred_check
      _
    $region31: #{_lambda_.2} parent=1 // pred_check_branch
      %58 = sbr.rel (0) target = $region33
    $region32: #{_lambda_.2} parent=1 // pred_region
      _
    $region33: #{_lambda_.2} parent=1 // pred_fallthru
      _
    // Predicated region
    $region34: #{_lambda_.2} parent=1 // pred_check
      _
    $region35: #{_lambda_.2} parent=1 // pred_check_branch
      %60 = sbr.rel (0) target = $region37
    $region36: #{_lambda_.2} parent=1 // pred_region
      _
    $region37: #{_lambda_.2} parent=1 // pred_fallthru
      _
    // Predicated region
    $region38: #{_lambda_.2} parent=1 // pred_check
      _
    $region39: #{_lambda_.2} parent=1 // pred_check_branch
      %62 = sbr.rel (0) target = $region41
    $region40: #{_lambda_.2} parent=1 // pred_region
      _
    $region41: #{_lambda_.2} parent=1 // pred_fallthru
      _
    // Predicated region
    $region42: #{_lambda_.2} parent=1 // pred_check
      _
    $region43: #{_lambda_.2} parent=1 // pred_check_branch
      %64 = sbr.rel (0) target = $region45
    $region44: #{_lambda_.2} parent=1 // pred_region
      _
    $region45: #{_lambda_.2} parent=1 // pred_fallthru
      _
    // Predicated region
    $region46: #{_lambda_.2} parent=1 // pred_check
      _
    $region47: #{_lambda_.2} parent=1 // pred_check_branch
      %66 = sbr.rel (0) target = $region49
    $region48: #{_lambda_.2} parent=1 // pred_region
      %s68 = ssub.s32 2048, 2048
      %69 = vsyncadd [#allocation5], %s68
      %s70 = sshll.u32 [#allocation6], 4
      %s71 = int_to_ptr.vmem [resolvable:$true] %s70
      %76 = dma.hbm_to_vmem [thread:$0]  %s11, 2048, %s71, [#allocation5], 64, 64, 4
    $region49: #{_lambda_.2} parent=1 // pred_fallthru
      _
    // Predicated region
    $region50: #{_lambda_.2} parent=1 // pred_check
      _
    $region51: #{_lambda_.2} parent=1 // pred_check_branch
      %78 = sbr.rel (0) target = $region53
    $region52: #{_lambda_.2} parent=1 // pred_region
      _
    $region53: #{_lambda_.2} parent=1 // pred_fallthru
      _
    // Predicated region
    $region54: #{_lambda_.2} parent=1 // pred_check
      _
    $region55: #{_lambda_.2} parent=1 // pred_check_branch
      %80 = sbr.rel (0) target = $region57
    $region56: #{_lambda_.2} parent=1 // pred_region
      _
    $region57: #{_lambda_.2} parent=1 // pred_fallthru
      _
    // Predicated region
    $region58: #{_lambda_.2} parent=1 // pred_check
      _
    $region59: #{_lambda_.2} parent=1 // pred_check_branch
      %82 = sbr.rel (0) target = $region61
    $region60: #{_lambda_.2} parent=1 // pred_region
      %s84 = ssub.s32 1152, 1152
      %85 = vsyncadd [#allocation8], %s84
      %s86 = sshll.u32 [#allocation7], 4
      %s87 = int_to_ptr.vmem [resolvable:$true] %s86
      %92 = dma.hbm_to_vmem [thread:$0]  %s14, 1152, %s87, [#allocation8], 128, 128, 8
    $region61: #{_lambda_.2} parent=1 // pred_fallthru
      _
    // Predicated region
    $region62: #{_lambda_.2} parent=1 // pred_check
      _
    $region63: #{_lambda_.2} parent=1 // pred_check_branch
      %94 = sbr.rel (0) target = $region65
    $region64: #{_lambda_.2} parent=1 // pred_region
      %95 = dma.done [#allocation3], 3072
    $region65: #{_lambda_.2} parent=1 // pred_fallthru
      _
    // Predicated region
    $region66: #{_lambda_.2} parent=1 // pred_check
      _
    $region67: #{_lambda_.2} parent=1 // pred_check_branch
      %97 = sbr.rel (0) target = $region69
    $region68: #{_lambda_.2} parent=1 // pred_region
      %98 = dma.done [#allocation5], 4096
    $region69: #{_lambda_.2} parent=1 // pred_fallthru
      _
    // Predicated region
    $region70: #{_lambda_.2} parent=1 // pred_check
      _
    $region71: #{_lambda_.2} parent=1 // pred_check_branch
      %100 = sbr.rel (0) target = $region73
    $region72: #{_lambda_.2} parent=1 // pred_region
      %101 = dma.done [#allocation5], 2048
    $region73: #{_lambda_.2} parent=1 // pred_fallthru
      _
    // Predicated region
    $region74: #{_lambda_.2} parent=1 // pred_check
      _
    $region75: #{_lambda_.2} parent=1 // pred_check_branch
      %103 = sbr.rel (0) target = $region77
    $region76: #{_lambda_.2} parent=1 // pred_region
      %104 = dma.done [#allocation8], 1152
    $region77: #{_lambda_.2} parent=1 // pred_fallthru
      _
    %v106 = vld [vmem:[%s0] sm:$0xff]
    %v107 = vld [vmem:[%s0 + $0x8] sm:$0xff]
    %v108 = vld [vmem:[%s0 + $0x10] sm:$0xff]
    %v109 = vld [vmem:[%s0 + $0x18] sm:$0xff]
    %v110 = vld [vmem:[%s0 + $0x20] sm:$0xff]
    %v111 = vld [vmem:[%s0 + $0x28] sm:$0xff]
    %v112 = vld [vmem:[%s0 + $0x30] sm:$0xff]
    %v113 = vld [vmem:[%s0 + $0x38] sm:$0xff]
    %v114 = vld [vmem:[%s0 + $0x40] sm:$0xff]
    %v115 = vld [vmem:[%s0 + $0x48] sm:$0xff]
    %v116 = vld [vmem:[%s0 + $0x50] sm:$0xff]
    %v117 = vld [vmem:[%s0 + $0x58] sm:$0xff]
    %v118 = vld [vmem:[%s0 + $0x60] sm:$0xff]
    %v119 = vld [vmem:[%s0 + $0x68] sm:$0xff]
    %v120 = vld [vmem:[%s0 + $0x70] sm:$0xff]
    %v121 = vld [vmem:[%s0 + $0x78] sm:$0xff]
    %v122 = vld [vmem:[%s0 + $0x80] sm:$0xff]
    %v123 = vld [vmem:[%s0 + $0x88] sm:$0xff]
    %v124 = vld [vmem:[#allocation2] sm:$0xff]
    %v125 = vld [vmem:[#allocation2 + $0x8] sm:$0xff]
    %v126 = vld [vmem:[#allocation2 + $0x10] sm:$0xff]
    %v127 = vld [vmem:[#allocation2 + $0x18] sm:$0xff]
    %v128 = vld [vmem:[#allocation2 + $0x20] sm:$0xff]
    %v129 = vld [vmem:[#allocation2 + $0x28] sm:$0xff]
    %v130 = vld [vmem:[#allocation2 + $0x30] sm:$0xff]
    %v131 = vld [vmem:[#allocation2 + $0x38] sm:$0xff]
    %v132 = vld [vmem:[#allocation2 + $0x40] sm:$0xff]
    %v133 = vld [vmem:[#allocation2 + $0x48] sm:$0xff]
    %v134 = vld [vmem:[#allocation2 + $0x50] sm:$0xff]
    %v135 = vld [vmem:[#allocation2 + $0x58] sm:$0xff]
    %v136 = vld [vmem:[#allocation2 + $0x60] sm:$0xff]
    %v137 = vld [vmem:[#allocation2 + $0x68] sm:$0xff]
    %v138 = vld [vmem:[#allocation2 + $0x70] sm:$0xff]
    %v139 = vld [vmem:[#allocation2 + $0x78] sm:$0xff]
    %v140 = vld [vmem:[#allocation2 + $0x80] sm:$0xff]
    %v141 = vld [vmem:[#allocation2 + $0x88] sm:$0xff]
    %v142 = vld [vmem:[#allocation2 + $0x90] sm:$0xff]
    %v143 = vld [vmem:[#allocation2 + $0x98] sm:$0xff]
    %v144 = vld [vmem:[#allocation2 + $0xa0] sm:$0xff]
    %v145 = vld [vmem:[#allocation2 + $0xa8] sm:$0xff]
    %v146 = vld [vmem:[#allocation2 + $0xb0] sm:$0xff]
    %v147 = vld [vmem:[#allocation2 + $0xb8] sm:$0xff]
    %v148 = vpack.c.bf16 %v108, %v106
    %v149 = vpack.c.bf16 %v109, %v107
    %v150 = vpack.c.bf16 %v112, %v110
    %v151 = vpack.c.bf16 %v113, %v111
    %v152 = vpack.c.bf16 %v116, %v114
    %v153 = vpack.c.bf16 %v117, %v115
    %v154 = vpack.c.bf16 %v120, %v118
    %v155 = vpack.c.bf16 %v121, %v119
    %v156 = vpack.c.bf16 %v122, %v122
    %v157 = vpack.c.bf16 %v123, %v123
    %v158 = vld [vmem:[%s2] sm:$0x3]
    %v160 = vlaneseq
    %v161 = vshrl.u32 %v160, 7
    %v162 = vsub.s32 0, %v161
    %v163 = vrot.slane %v158, %v162
    %v164 = vlaneseq
    %v165 = vshrl.u32 %v164, 7
    %v166 = vsub.s32 1, %v165
    %v167 = vrot.slane %v158, %v166
    %v194 = vunpack.c.l.b16 %v124
    %v195 = vunpack.c.h.b16 %v124
    %v196 = vunpack.c.l.b16 %v125
    %v197 = vunpack.c.h.b16 %v125
    %v198 = vunpack.c.l.b16 %v126
    %v199 = vunpack.c.h.b16 %v126
    %v200 = vunpack.c.l.b16 %v127
    %v201 = vunpack.c.h.b16 %v127
    %v202 = vunpack.c.l.b16 %v128
    %v203 = vunpack.c.h.b16 %v128
    %v204 = vunpack.c.l.b16 %v129
    %v205 = vunpack.c.h.b16 %v129
    %v206 = vunpack.c.l.b16 %v130
    %v207 = vunpack.c.h.b16 %v130
    %v208 = vunpack.c.l.b16 %v131
    %v209 = vunpack.c.h.b16 %v131
    %v210 = vunpack.c.l.b16 %v132
    %v211 = vunpack.c.h.b16 %v132
    %v212 = vunpack.c.l.b16 %v133
    %v213 = vunpack.c.h.b16 %v133
    %v214 = vunpack.c.l.b16 %v134
    %v215 = vunpack.c.h.b16 %v134
    %v216 = vunpack.c.l.b16 %v135
    %v217 = vunpack.c.h.b16 %v135
    %v218 = vunpack.c.l.b16 %v136
    %v219 = vunpack.c.h.b16 %v136
    %v220 = vunpack.c.l.b16 %v137
    %v221 = vunpack.c.h.b16 %v137
    %v222 = vunpack.c.l.b16 %v138
    %v223 = vunpack.c.h.b16 %v138
    %v224 = vunpack.c.l.b16 %v139
    %v225 = vunpack.c.h.b16 %v139
    %v226 = vunpack.c.l.b16 %v140
    %v227 = vunpack.c.h.b16 %v140
    %v228 = vunpack.c.l.b16 %v141
    %v229 = vunpack.c.h.b16 %v141
    %v230 = vunpack.c.l.b16 %v142
    %v231 = vunpack.c.h.b16 %v142
    %v232 = vunpack.c.l.b16 %v143
    %v233 = vunpack.c.h.b16 %v143
    %v234 = vunpack.c.l.b16 %v144
    %v235 = vunpack.c.h.b16 %v144
    %v236 = vunpack.c.l.b16 %v145
    %v237 = vunpack.c.h.b16 %v145
    %v238 = vunpack.c.l.b16 %v146
    %v239 = vunpack.c.h.b16 %v146
    %v240 = vunpack.c.l.b16 %v147
    %v241 = vunpack.c.h.b16 %v147
    %v242 = vpack.c.b16 %v196, %v194
    %v243 = vpack.c.b16 %v197, %v195
    %v244 = vpack.c.b16 %v200, %v198
    %v245 = vpack.c.b16 %v201, %v199
    %v246 = vpack.c.b16 %v204, %v202
    %v247 = vpack.c.b16 %v205, %v203
    %v248 = vpack.c.b16 %v208, %v206
    %v249 = vpack.c.b16 %v209, %v207
    %v250 = vpack.c.b16 %v212, %v210
    %v251 = vpack.c.b16 %v213, %v211
    %v252 = vpack.c.b16 %v216, %v214
    %v253 = vpack.c.b16 %v217, %v215
    %v254 = vpack.c.b16 %v220, %v218
    %v255 = vpack.c.b16 %v221, %v219
    %v256 = vpack.c.b16 %v224, %v222
    %v257 = vpack.c.b16 %v225, %v223
    %v258 = vpack.c.b16 %v228, %v226
    %v259 = vpack.c.b16 %v229, %v227
    %v260 = vpack.c.b16 %v232, %v230
    %v261 = vpack.c.b16 %v233, %v231
    %v262 = vpack.c.b16 %v236, %v234
    %v263 = vpack.c.b16 %v237, %v235
    %v264 = vpack.c.b16 %v240, %v238
    %v265 = vpack.c.b16 %v241, %v239
    %vm290 = vcmask 523264
    %v292 = vsel %vm290, %v149, 0
    %v295 = vsel %vm290, %v151, 0
    %v298 = vsel %vm290, %v153, 0
    %v301 = vsel %vm290, %v155, 0
    %v304 = vsel %vm290, %v157, 0
    %306 = vmatprep.subr.bf16.mxu0 %v257
    %307 = vmatpush1.bf16.msra.mxu0 %v256
    %308 = vmatprep.subr.bf16.mxu0 %v255
    %309 = vmatpush1.bf16.msra.mxu0 %v254
    %310 = vmatprep.subr.bf16.mxu0 %v253
    %311 = vmatpush1.bf16.msra.mxu0 %v252
    %312 = vmatprep.subr.bf16.mxu0 %v251
    %313 = vmatpush1.bf16.msra.mxu0 %v250
    %314 = vmatprep.subr.bf16.mxu0 %v249
    %315 = vmatpush1.bf16.msra.mxu0 %v248
    %316 = vmatprep.subr.bf16.mxu0 %v247
    %317 = vmatpush1.bf16.msra.mxu0 %v246
    %318 = vmatprep.subr.bf16.mxu0 %v245
    %319 = vmatpush1.bf16.msra.mxu0 %v244
    %320 = vmatprep.subr.bf16.mxu0 %v243
    %321 = vmatpush1.bf16.msra.mxu0 %v242
    %322 = vmatprep.subr.bf16.mxu0 0
    %323 = vmatpush2.bf16.msra.mxu0 0
    %324 = vmatprep.subr.bf16.mxu0 0
    %325 = vmatpush2.bf16.msra.mxu0 0
    %326 = vmatprep.subr.bf16.mxu0 0
    %327 = vmatpush2.bf16.msra.mxu0 0
    %328 = vmatprep.subr.bf16.mxu0 0
    %329 = vmatpush2.bf16.msra.mxu0 0
    %330 = vmatprep.subr.bf16.mxu0 %v265
    %331 = vmatpush2.bf16.msra.mxu0 %v264
    %332 = vmatprep.subr.bf16.mxu0 %v263
    %333 = vmatpush2.bf16.msra.mxu0 %v262
    %334 = vmatprep.subr.bf16.mxu0 %v261
    %335 = vmatpush2.bf16.msra.mxu0 %v260
    %336 = vmatprep.subr.bf16.mxu0 %v259
    %337 = vmatpush2.bf16.msra.mxu0 %v258
    %338 = vmatprep.mubr.bf16.mxu0 %v292
    %339 = vmatmul.mubr.bf16.gmra.mxu0 %v148
    %v340 = vpop.f32.mrf.mxu0
    %v341 = vadd.f32 %v163, %v340
    %v342 = vpop.f32.mrf.mxu0
    %v343 = vadd.f32 %v167, %v342
    %v344 = vpop.f32.mrf.mxu0
    %v345 = vadd.f32 %v163, %v344
    %v346 = vpop.f32.mrf.mxu0
    %v347 = vadd.f32 %v167, %v346
    %348 = vmatprep.mubr.bf16.mxu0 %v295
    %349 = vmatmul.mubr.bf16.gmra.mxu0 %v150
    %v350 = vpop.f32.mrf.mxu0
    %v351 = vadd.f32 %v163, %v350
    %v352 = vpop.f32.mrf.mxu0
    %v353 = vadd.f32 %v167, %v352
    %v354 = vpop.f32.mrf.mxu0
    %v355 = vadd.f32 %v163, %v354
    %v356 = vpop.f32.mrf.mxu0
    %v357 = vadd.f32 %v167, %v356
    %358 = vmatprep.mubr.bf16.mxu0 %v298
    %359 = vmatmul.mubr.bf16.gmra.mxu0 %v152
    %v360 = vpop.f32.mrf.mxu0
    %v361 = vadd.f32 %v163, %v360
    %v362 = vpop.f32.mrf.mxu0
    %v363 = vadd.f32 %v167, %v362
    %v364 = vpop.f32.mrf.mxu0
    %v365 = vadd.f32 %v163, %v364
    %v366 = vpop.f32.mrf.mxu0
    %v367 = vadd.f32 %v167, %v366
    %368 = vmatprep.mubr.bf16.mxu0 %v301
    %369 = vmatmul.mubr.bf16.gmra.mxu0 %v154
    %v370 = vpop.f32.mrf.mxu0
    %v371 = vadd.f32 %v163, %v370
    %v372 = vpop.f32.mrf.mxu0
    %v373 = vadd.f32 %v167, %v372
    %v374 = vpop.f32.mrf.mxu0
    %v375 = vadd.f32 %v163, %v374
    %v376 = vpop.f32.mrf.mxu0
    %v377 = vadd.f32 %v167, %v376
    %378 = vmatprep.mubr.bf16.mxu0 %v304
    %379 = vmatmul.mubr.bf16.gmra.mxu0 %v156
    %v380 = vpop.f32.mrf.mxu0
    %v381 = vadd.f32 %v163, %v380
    %v382 = vpop.f32.mrf.mxu0
    %v383 = vadd.f32 %v167, %v382
    %v384 = vpop.f32.mrf.mxu0
    %v385 = vpop.f32.mrf.mxu0
    %386 = vdwg.mxu0
    %v387 = vld [vmem:[#allocation6] sm:$0xf]
    %v388 = vld [vmem:[#allocation6 + $0x4] sm:$0xf]
    %v389 = vld [vmem:[#allocation6 + $0x8] sm:$0xf]
    %v390 = vld [vmem:[#allocation6 + $0xc] sm:$0xf]
    %v391 = vld [vmem:[#allocation6 + $0x10] sm:$0xf]
    %v392 = vld [vmem:[#allocation6 + $0x14] sm:$0xf]
    %v393 = vld [vmem:[#allocation6 + $0x18] sm:$0xf]
    %v394 = vld [vmem:[#allocation6 + $0x1c] sm:$0xf]
    %v395 = vld [vmem:[#allocation6 + $0x20] sm:$0xf]
    %v396 = vld [vmem:[#allocation6 + $0x24] sm:$0xf]
    %v397 = vld [vmem:[#allocation6 + $0x28] sm:$0xf]
    %v398 = vld [vmem:[#allocation6 + $0x2c] sm:$0xf]
    %v399 = vld [vmem:[#allocation6 + $0x30] sm:$0xf]
    %v400 = vld [vmem:[#allocation6 + $0x34] sm:$0xf]
    %v401 = vld [vmem:[#allocation6 + $0x38] sm:$0xf]
    %v402 = vld [vmem:[#allocation6 + $0x3c] sm:$0xf]
    %v403 = vld [vmem:[#allocation6 + $0x40] sm:$0xf]
    %v404 = vld [vmem:[#allocation6 + $0x44] sm:$0xf]
    %v405 = vld [vmem:[#allocation6 + $0x48] sm:$0xf]
    %v406 = vld [vmem:[#allocation6 + $0x4c] sm:$0xf]
    %v407 = vld [vmem:[#allocation6 + $0x50] sm:$0xf]
    %v408 = vld [vmem:[#allocation6 + $0x54] sm:$0xf]
    %v409 = vld [vmem:[#allocation6 + $0x58] sm:$0xf]
    %v410 = vld [vmem:[#allocation6 + $0x5c] sm:$0xf]
    %v411 = vld [vmem:[#allocation6 + $0x60] sm:$0xf]
    %v412 = vld [vmem:[#allocation6 + $0x64] sm:$0xf]
    %v413 = vld [vmem:[#allocation6 + $0x68] sm:$0xf]
    %v414 = vld [vmem:[#allocation6 + $0x6c] sm:$0xf]
    %v415 = vld [vmem:[#allocation6 + $0x70] sm:$0xf]
    %v416 = vld [vmem:[#allocation6 + $0x74] sm:$0xf]
    %v417 = vld [vmem:[#allocation6 + $0x78] sm:$0xf]
    %v418 = vld [vmem:[#allocation6 + $0x7c] sm:$0xf]
    %v419 = vpack.c.bf16 %v345, %v341
    %v420 = vpack.c.bf16 %v347, %v343
    %v421 = vpack.c.bf16 %v355, %v351
    %v422 = vpack.c.bf16 %v357, %v353
    %v423 = vpack.c.bf16 %v365, %v361
    %v424 = vpack.c.bf16 %v367, %v363
    %v425 = vpack.c.bf16 %v375, %v371
    %v426 = vpack.c.bf16 %v377, %v373
    %v427 = vpack.c.bf16 %v381, %v381
    %v428 = vpack.c.bf16 %v383, %v383
    %v461 = vunpack.c.l.b16 %v387
    %v462 = vunpack.c.l.b16 %v388
    %v463 = vunpack.c.l.b16 %v389
    %v464 = vunpack.c.l.b16 %v390
    %v465 = vunpack.c.l.b16 %v391
    %v466 = vunpack.c.l.b16 %v392
    %v467 = vunpack.c.l.b16 %v393
    %v468 = vunpack.c.l.b16 %v394
    %v469 = vunpack.c.l.b16 %v395
    %v470 = vunpack.c.l.b16 %v396
    %v471 = vunpack.c.l.b16 %v397
    %v472 = vunpack.c.l.b16 %v398
    %v473 = vunpack.c.l.b16 %v399
    %v474 = vunpack.c.l.b16 %v400
    %v475 = vunpack.c.l.b16 %v401
    %v476 = vunpack.c.l.b16 %v402
    %v477 = vunpack.c.l.b16 %v403
    %v478 = vunpack.c.l.b16 %v404
    %v479 = vunpack.c.l.b16 %v405
    %v480 = vunpack.c.l.b16 %v406
    %v481 = vunpack.c.l.b16 %v407
    %v482 = vunpack.c.l.b16 %v408
    %v483 = vunpack.c.l.b16 %v409
    %v484 = vunpack.c.l.b16 %v410
    %v485 = vunpack.c.l.b16 %v411
    %v486 = vunpack.c.l.b16 %v412
    %v487 = vunpack.c.l.b16 %v413
    %v488 = vunpack.c.l.b16 %v414
    %v489 = vunpack.c.l.b16 %v415
    %v490 = vunpack.c.l.b16 %v416
    %v491 = vunpack.c.l.b16 %v417
    %v492 = vunpack.c.l.b16 %v418
    %v493 = vpack.c.b16 %v462, %v461
    %v494 = vpack.c.b16 %v464, %v463
    %v495 = vpack.c.b16 %v466, %v465
    %v496 = vpack.c.b16 %v468, %v467
    %v497 = vpack.c.b16 %v470, %v469
    %v498 = vpack.c.b16 %v472, %v471
    %v499 = vpack.c.b16 %v474, %v473
    %v500 = vpack.c.b16 %v476, %v475
    %v501 = vpack.c.b16 %v478, %v477
    %v502 = vpack.c.b16 %v480, %v479
    %v503 = vpack.c.b16 %v482, %v481
    %v504 = vpack.c.b16 %v484, %v483
    %v505 = vpack.c.b16 %v486, %v485
    %v506 = vpack.c.b16 %v488, %v487
    %v507 = vpack.c.b16 %v490, %v489
    %v508 = vpack.c.b16 %v492, %v491
    %525 = vmatprep.subr.bf16.mxu0 0
    %526 = vmatpush1.bf16.msra.mxu0 %v500
    %527 = vmatprep.subr.bf16.mxu0 0
    %528 = vmatpush1.bf16.msra.mxu0 %v499
    %529 = vmatprep.subr.bf16.mxu0 0
    %530 = vmatpush1.bf16.msra.mxu0 %v498
    %531 = vmatprep.subr.bf16.mxu0 0
    %532 = vmatpush1.bf16.msra.mxu0 %v497
    %533 = vmatprep.subr.bf16.mxu0 0
    %534 = vmatpush1.bf16.msra.mxu0 %v496
    %535 = vmatprep.subr.bf16.mxu0 0
    %536 = vmatpush1.bf16.msra.mxu0 %v495
    %537 = vmatprep.subr.bf16.mxu0 0
    %538 = vmatpush1.bf16.msra.mxu0 %v494
    %539 = vmatprep.subr.bf16.mxu0 0
    %540 = vmatpush1.bf16.msra.mxu0 %v493
    %541 = vmatprep.subr.bf16.mxu0 0
    %542 = vmatpush2.bf16.msra.mxu0 %v508
    %543 = vmatprep.subr.bf16.mxu0 0
    %544 = vmatpush2.bf16.msra.mxu0 %v507
    %545 = vmatprep.subr.bf16.mxu0 0
    %546 = vmatpush2.bf16.msra.mxu0 %v506
    %547 = vmatprep.subr.bf16.mxu0 0
    %548 = vmatpush2.bf16.msra.mxu0 %v505
    %549 = vmatprep.subr.bf16.mxu0 0
    %550 = vmatpush2.bf16.msra.mxu0 %v504
    %551 = vmatprep.subr.bf16.mxu0 0
    %552 = vmatpush2.bf16.msra.mxu0 %v503
    %553 = vmatprep.subr.bf16.mxu0 0
    %554 = vmatpush2.bf16.msra.mxu0 %v502
    %555 = vmatprep.subr.bf16.mxu0 0
    %556 = vmatpush2.bf16.msra.mxu0 %v501
    %557 = vmatprep.mubr.bf16.mxu0 %v420
    %558 = vmatmul.mubr.bf16.gmra.mxu0 %v419
    %v559 = vpop.f32.mrf.mxu0
    %v560 = vadd.f32 0.0, %v559
    %v561 = vpop.f32.mrf.mxu0
    %v562 = vpop.f32.mrf.mxu0
    %v563 = vadd.f32 0.0, %v562
    %v564 = vpop.f32.mrf.mxu0
    %565 = vmatprep.mubr.bf16.mxu0 %v422
    %566 = vmatmul.mubr.bf16.gmra.mxu0 %v421
    %v567 = vpop.f32.mrf.mxu0
    %v568 = vadd.f32 0.0, %v567
    %v569 = vpop.f32.mrf.mxu0
    %v570 = vpop.f32.mrf.mxu0
    %v571 = vadd.f32 0.0, %v570
    %v572 = vpop.f32.mrf.mxu0
    %573 = vmatprep.mubr.bf16.mxu0 %v424
    %574 = vmatmul.mubr.bf16.gmra.mxu0 %v423
    %v575 = vpop.f32.mrf.mxu0
    %v576 = vadd.f32 0.0, %v575
    %v577 = vpop.f32.mrf.mxu0
    %v578 = vpop.f32.mrf.mxu0
    %v579 = vadd.f32 0.0, %v578
    %v580 = vpop.f32.mrf.mxu0
    %581 = vmatprep.mubr.bf16.mxu0 %v426
    %582 = vmatmul.mubr.bf16.gmra.mxu0 %v425
    %v583 = vpop.f32.mrf.mxu0
    %v584 = vadd.f32 0.0, %v583
    %v585 = vpop.f32.mrf.mxu0
    %v586 = vpop.f32.mrf.mxu0
    %v587 = vadd.f32 0.0, %v586
    %v588 = vpop.f32.mrf.mxu0
    %589 = vmatprep.mubr.bf16.mxu0 %v428
    %590 = vmatmul.mubr.bf16.gmra.mxu0 %v427
    %v591 = vpop.f32.mrf.mxu0
    %v592 = vadd.f32 0.0, %v591
    %v593 = vpop.f32.mrf.mxu0
    %v594 = vpop.f32.mrf.mxu0
    %v595 = vpop.f32.mrf.mxu0
    %596 = vdwg.mxu0
    %vm597 = vcmask 261120
    %598 = vst.msk [vmem:[%s15] sm:$0xff] %vm597, %v560
    %599 = vst.msk [vmem:[%s15 + $0x8] sm:$0xff] %vm597, %v563
    %600 = vst.msk [vmem:[%s15 + $0x10] sm:$0xff] %vm597, %v568
    %601 = vst.msk [vmem:[%s15 + $0x18] sm:$0xff] %vm597, %v571
    %602 = vst.msk [vmem:[%s15 + $0x20] sm:$0xff] %vm597, %v576
    %603 = vst.msk [vmem:[%s15 + $0x28] sm:$0xff] %vm597, %v579
    %604 = vst.msk [vmem:[%s15 + $0x30] sm:$0xff] %vm597, %v584
    %605 = vst.msk [vmem:[%s15 + $0x38] sm:$0xff] %vm597, %v587
    %606 = vst.msk [vmem:[%s15 + $0x40] sm:$0xff] %vm597, %v592
    %v607 = vld [vmem:[#allocation4] sm:$0xff]
    %v608 = vld [vmem:[#allocation4 + $0x8] sm:$0xff]
    %v609 = vld [vmem:[#allocation4 + $0x10] sm:$0xff]
    %v610 = vld [vmem:[#allocation4 + $0x18] sm:$0xff]
    %v611 = vld [vmem:[#allocation4 + $0x20] sm:$0xff]
    %v612 = vld [vmem:[#allocation4 + $0x28] sm:$0xff]
    %v613 = vld [vmem:[#allocation4 + $0x30] sm:$0xff]
    %v614 = vld [vmem:[#allocation4 + $0x38] sm:$0xff]
    %v615 = vld [vmem:[#allocation4 + $0x40] sm:$0xff]
    %v616 = vld [vmem:[#allocation4 + $0x48] sm:$0xff]
    %v617 = vld [vmem:[#allocation4 + $0x50] sm:$0xff]
    %v618 = vld [vmem:[#allocation4 + $0x58] sm:$0xff]
    %v619 = vld [vmem:[#allocation4 + $0x60] sm:$0xff]
    %v620 = vld [vmem:[#allocation4 + $0x68] sm:$0xff]
    %v621 = vld [vmem:[#allocation4 + $0x70] sm:$0xff]
    %v622 = vld [vmem:[#allocation4 + $0x78] sm:$0xff]
    %v623 = vld [vmem:[#allocation4 + $0x80] sm:$0xff]
    %v624 = vld [vmem:[#allocation4 + $0x88] sm:$0xff]
    %v625 = vld [vmem:[#allocation4 + $0x90] sm:$0xff]
    %v626 = vld [vmem:[#allocation4 + $0x98] sm:$0xff]
    %v627 = vld [vmem:[#allocation4 + $0xa0] sm:$0xff]
    %v628 = vld [vmem:[#allocation4 + $0xa8] sm:$0xff]
    %v629 = vld [vmem:[#allocation4 + $0xb0] sm:$0xff]
    %v630 = vld [vmem:[#allocation4 + $0xb8] sm:$0xff]
    %v631 = vld [vmem:[#allocation4 + $0xc0] sm:$0xff]
    %v632 = vld [vmem:[#allocation4 + $0xc8] sm:$0xff]
    %v633 = vld [vmem:[#allocation4 + $0xd0] sm:$0xff]
    %v634 = vld [vmem:[#allocation4 + $0xd8] sm:$0xff]
    %v635 = vld [vmem:[#allocation4 + $0xe0] sm:$0xff]
    %v636 = vld [vmem:[#allocation4 + $0xe8] sm:$0xff]
    %v637 = vld [vmem:[#allocation4 + $0xf0] sm:$0xff]
    %v638 = vld [vmem:[#allocation4 + $0xf8] sm:$0xff]
    %v639 = vld [vmem:[%s5] sm:$0xff]
    %v640 = vld [vmem:[%s5 + $0x8] sm:$0xff]
    %v641 = vld [vmem:[%s5 + $0x10] sm:$0xff]
    %v642 = vld [vmem:[%s5 + $0x18] sm:$0xff]
    %v643 = vld [vmem:[%s5 + $0x20] sm:$0xff]
    %v644 = vld [vmem:[%s5 + $0x28] sm:$0xff]
    %v645 = vld [vmem:[%s5 + $0x30] sm:$0xff]
    %v646 = vld [vmem:[%s5 + $0x38] sm:$0xff]
    %v647 = vld [vmem:[%s5 + $0x40] sm:$0xff]
    %v648 = vld [vmem:[%s5 + $0x48] sm:$0xff]
    %v649 = vld [vmem:[%s5 + $0x50] sm:$0xff]
    %v650 = vld [vmem:[%s5 + $0x58] sm:$0xff]
    %v651 = vld [vmem:[%s5 + $0x60] sm:$0xff]
    %v652 = vld [vmem:[%s5 + $0x68] sm:$0xff]
    %v653 = vld [vmem:[%s5 + $0x70] sm:$0xff]
    %v654 = vld [vmem:[%s5 + $0x78] sm:$0xff]
    %v655 = vld [vmem:[%s5 + $0x80] sm:$0xff]
    %v656 = vld [vmem:[%s5 + $0x88] sm:$0xff]
    %v657 = vld [vmem:[%s5 + $0x90] sm:$0xff]
    %v658 = vld [vmem:[%s5 + $0x98] sm:$0xff]
    %v659 = vld [vmem:[%s5 + $0xa0] sm:$0xff]
    %v660 = vld [vmem:[%s5 + $0xa8] sm:$0xff]
    %v661 = vld [vmem:[%s5 + $0xb0] sm:$0xff]
    %v662 = vld [vmem:[%s5 + $0xb8] sm:$0xff]
    %v663 = vld [vmem:[%s5 + $0xc0] sm:$0xff]
    %v664 = vld [vmem:[%s5 + $0xc8] sm:$0xff]
    %v665 = vld [vmem:[%s5 + $0xd0] sm:$0xff]
    %v666 = vld [vmem:[%s5 + $0xd8] sm:$0xff]
    %v667 = vld [vmem:[%s5 + $0xe0] sm:$0xff]
    %v668 = vld [vmem:[%s5 + $0xe8] sm:$0xff]
    %v669 = vld [vmem:[%s5 + $0xf0] sm:$0xff]
    %v670 = vld [vmem:[%s5 + $0xf8] sm:$0xff]
    %v671 = vld [vmem:[%s5 + $0x100] sm:$0xff]
    %v672 = vld [vmem:[%s5 + $0x108] sm:$0xff]
    %v673 = vld [vmem:[%s5 + $0x110] sm:$0xff]
    %v674 = vld [vmem:[%s5 + $0x118] sm:$0xff]
    %v675 = vld [vmem:[%s5 + $0x120] sm:$0xff]
    %v676 = vld [vmem:[%s5 + $0x128] sm:$0xff]
    %v677 = vld [vmem:[%s5 + $0x130] sm:$0xff]
    %v678 = vld [vmem:[%s5 + $0x138] sm:$0xff]
    %v679 = vld [vmem:[%s5 + $0x140] sm:$0xff]
    %v680 = vld [vmem:[%s5 + $0x148] sm:$0xff]
    %v681 = vld [vmem:[%s5 + $0x150] sm:$0xff]
    %v682 = vld [vmem:[%s5 + $0x158] sm:$0xff]
    %v683 = vld [vmem:[%s5 + $0x160] sm:$0xff]
    %v684 = vld [vmem:[%s5 + $0x168] sm:$0xff]
    %v685 = vld [vmem:[%s5 + $0x170] sm:$0xff]
    %v686 = vld [vmem:[%s5 + $0x178] sm:$0xff]
    %v687 = vld [vmem:[%s5 + $0x180] sm:$0xff]
    %v688 = vld [vmem:[%s5 + $0x188] sm:$0xff]
    %v689 = vld [vmem:[%s5 + $0x190] sm:$0xff]
    %v690 = vld [vmem:[%s5 + $0x198] sm:$0xff]
    %v691 = vld [vmem:[%s5 + $0x1a0] sm:$0xff]
    %v692 = vld [vmem:[%s5 + $0x1a8] sm:$0xff]
    %v693 = vld [vmem:[%s5 + $0x1b0] sm:$0xff]
    %v694 = vld [vmem:[%s5 + $0x1b8] sm:$0xff]
    %v695 = vld [vmem:[%s5 + $0x1c0] sm:$0xff]
    %v696 = vld [vmem:[%s5 + $0x1c8] sm:$0xff]
    %v697 = vld [vmem:[%s5 + $0x1d0] sm:$0xff]
    %v698 = vld [vmem:[%s5 + $0x1d8] sm:$0xff]
    %v699 = vld [vmem:[%s5 + $0x1e0] sm:$0xff]
    %v700 = vld [vmem:[%s5 + $0x1e8] sm:$0xff]
    %v701 = vld [vmem:[%s5 + $0x1f0] sm:$0xff]
    %v702 = vld [vmem:[%s5 + $0x1f8] sm:$0xff]
    %v703 = vld [vmem:[%s5 + $0x200] sm:$0xff]
    %v704 = vld [vmem:[%s5 + $0x208] sm:$0xff]
    %v705 = vld [vmem:[%s5 + $0x210] sm:$0xff]
    %v706 = vld [vmem:[%s5 + $0x218] sm:$0xff]
    %v707 = vld [vmem:[%s5 + $0x220] sm:$0xff]
    %v708 = vld [vmem:[%s5 + $0x228] sm:$0xff]
    %v709 = vld [vmem:[%s5 + $0x230] sm:$0xff]
    %v710 = vld [vmem:[%s5 + $0x238] sm:$0xff]
    %v711 = vld [vmem:[%s5 + $0x240] sm:$0xff]
    %v712 = vld [vmem:[%s5 + $0x248] sm:$0xff]
    %v713 = vld [vmem:[%s5 + $0x250] sm:$0xff]
    %v714 = vld [vmem:[%s5 + $0x258] sm:$0xff]
    %v715 = vld [vmem:[%s5 + $0x260] sm:$0xff]
    %v716 = vld [vmem:[%s5 + $0x268] sm:$0xff]
    %v717 = vld [vmem:[%s5 + $0x270] sm:$0xff]
    %v718 = vld [vmem:[%s5 + $0x278] sm:$0xff]
    %v719 = vld [vmem:[%s5 + $0x280] sm:$0xff]
    %v720 = vld [vmem:[%s5 + $0x288] sm:$0xff]
    %v721 = vld [vmem:[%s5 + $0x290] sm:$0xff]
    %v722 = vld [vmem:[%s5 + $0x298] sm:$0xff]
    %v723 = vld [vmem:[%s5 + $0x2a0] sm:$0xff]
    %v724 = vld [vmem:[%s5 + $0x2a8] sm:$0xff]
    %v725 = vld [vmem:[%s5 + $0x2b0] sm:$0xff]
    %v726 = vld [vmem:[%s5 + $0x2b8] sm:$0xff]
    %v727 = vld [vmem:[%s5 + $0x2c0] sm:$0xff]
    %v728 = vld [vmem:[%s5 + $0x2c8] sm:$0xff]
    %v729 = vld [vmem:[%s5 + $0x2d0] sm:$0xff]
    %v730 = vld [vmem:[%s5 + $0x2d8] sm:$0xff]
    %v731 = vld [vmem:[%s5 + $0x2e0] sm:$0xff]
    %v732 = vld [vmem:[%s5 + $0x2e8] sm:$0xff]
    %v733 = vld [vmem:[%s5 + $0x2f0] sm:$0xff]
    %v734 = vld [vmem:[%s5 + $0x2f8] sm:$0xff]
    %v735 = vld [vmem:[%s7] sm:$0xff]
    %v736 = vld [vmem:[%s7 + $0x8] sm:$0xff]
    %v737 = vld [vmem:[%s7 + $0x10] sm:$0xff]
    %v738 = vld [vmem:[%s7 + $0x18] sm:$0xff]
    %v739 = vld [vmem:[%s7 + $0x20] sm:$0xff]
    %v740 = vld [vmem:[%s7 + $0x28] sm:$0xff]
    %v741 = vld [vmem:[%s7 + $0x30] sm:$0xff]
    %v742 = vld [vmem:[%s7 + $0x38] sm:$0xff]
    %v743 = vld [vmem:[%s7 + $0x40] sm:$0xff]
    %v744 = vld [vmem:[%s7 + $0x48] sm:$0xff]
    %v745 = vld [vmem:[%s7 + $0x50] sm:$0xff]
    %v746 = vld [vmem:[%s7 + $0x58] sm:$0xff]
    %v747 = vld [vmem:[%s7 + $0x60] sm:$0xff]
    %v748 = vld [vmem:[%s7 + $0x68] sm:$0xff]
    %v749 = vld [vmem:[%s7 + $0x70] sm:$0xff]
    %v750 = vld [vmem:[%s7 + $0x78] sm:$0xff]
    %v751 = vld [vmem:[%s7 + $0x80] sm:$0xff]
    %v752 = vld [vmem:[%s7 + $0x88] sm:$0xff]
    %v753 = vld [vmem:[%s7 + $0x90] sm:$0xff]
    %v754 = vld [vmem:[%s7 + $0x98] sm:$0xff]
    %v755 = vld [vmem:[%s7 + $0xa0] sm:$0xff]
    %v756 = vld [vmem:[%s7 + $0xa8] sm:$0xff]
    %v757 = vld [vmem:[%s7 + $0xb0] sm:$0xff]
    %v758 = vld [vmem:[%s7 + $0xb8] sm:$0xff]
    %v759 = vld [vmem:[%s7 + $0xc0] sm:$0xff]
    %v760 = vld [vmem:[%s7 + $0xc8] sm:$0xff]
    %v761 = vld [vmem:[%s7 + $0xd0] sm:$0xff]
    %v762 = vld [vmem:[%s7 + $0xd8] sm:$0xff]
    %v763 = vld [vmem:[%s7 + $0xe0] sm:$0xff]
    %v764 = vld [vmem:[%s7 + $0xe8] sm:$0xff]
    %v765 = vld [vmem:[%s7 + $0xf0] sm:$0xff]
    %v766 = vld [vmem:[%s7 + $0xf8] sm:$0xff]
    %v767 = vld [vmem:[%s7 + $0x100] sm:$0xff]
    %v768 = vld [vmem:[%s7 + $0x108] sm:$0xff]
    %v769 = vld [vmem:[%s7 + $0x110] sm:$0xff]
    %v770 = vld [vmem:[%s7 + $0x118] sm:$0xff]
    %v771 = vld [vmem:[%s7 + $0x120] sm:$0xff]
    %v772 = vld [vmem:[%s7 + $0x128] sm:$0xff]
    %v773 = vld [vmem:[%s7 + $0x130] sm:$0xff]
    %v774 = vld [vmem:[%s7 + $0x138] sm:$0xff]
    %v775 = vld [vmem:[%s7 + $0x140] sm:$0xff]
    %v776 = vld [vmem:[%s7 + $0x148] sm:$0xff]
    %v777 = vld [vmem:[%s7 + $0x150] sm:$0xff]
    %v778 = vld [vmem:[%s7 + $0x158] sm:$0xff]
    %v779 = vld [vmem:[%s7 + $0x160] sm:$0xff]
    %v780 = vld [vmem:[%s7 + $0x168] sm:$0xff]
    %v781 = vld [vmem:[%s7 + $0x170] sm:$0xff]
    %v782 = vld [vmem:[%s7 + $0x178] sm:$0xff]
    %v783 = vld [vmem:[%s7 + $0x180] sm:$0xff]
    %v784 = vld [vmem:[%s7 + $0x188] sm:$0xff]
    %v785 = vld [vmem:[%s7 + $0x190] sm:$0xff]
    %v786 = vld [vmem:[%s7 + $0x198] sm:$0xff]
    %v787 = vld [vmem:[%s7 + $0x1a0] sm:$0xff]
    %v788 = vld [vmem:[%s7 + $0x1a8] sm:$0xff]
    %v789 = vld [vmem:[%s7 + $0x1b0] sm:$0xff]
    %v790 = vld [vmem:[%s7 + $0x1b8] sm:$0xff]
    %v791 = vld [vmem:[%s7 + $0x1c0] sm:$0xff]
    %v792 = vld [vmem:[%s7 + $0x1c8] sm:$0xff]
    %v793 = vld [vmem:[%s7 + $0x1d0] sm:$0xff]
    %v794 = vld [vmem:[%s7 + $0x1d8] sm:$0xff]
    %v795 = vld [vmem:[%s7 + $0x1e0] sm:$0xff]
    %v796 = vld [vmem:[%s7 + $0x1e8] sm:$0xff]
    %v797 = vld [vmem:[%s7 + $0x1f0] sm:$0xff]
    %v798 = vld [vmem:[%s7 + $0x1f8] sm:$0xff]
    %v799 = vld [vmem:[%s9] sm:$0xff]
    %v800 = vld [vmem:[%s9 + $0x8] sm:$0xff]
    %v801 = vld [vmem:[%s9 + $0x10] sm:$0xff]
    %v802 = vld [vmem:[%s9 + $0x18] sm:$0xff]
    %v803 = vld [vmem:[%s9 + $0x20] sm:$0xff]
    %v804 = vld [vmem:[%s9 + $0x28] sm:$0xff]
    %v805 = vld [vmem:[%s9 + $0x30] sm:$0xff]
    %v806 = vld [vmem:[%s9 + $0x38] sm:$0xff]
    %v807 = vld [vmem:[%s9 + $0x40] sm:$0xff]
    %v808 = vld [vmem:[%s9 + $0x48] sm:$0xff]
    %v809 = vld [vmem:[%s9 + $0x50] sm:$0xff]
    %v810 = vld [vmem:[%s9 + $0x58] sm:$0xff]
    %v811 = vld [vmem:[%s9 + $0x60] sm:$0xff]
    %v812 = vld [vmem:[%s9 + $0x68] sm:$0xff]
    %v813 = vld [vmem:[%s9 + $0x70] sm:$0xff]
    %v814 = vld [vmem:[%s9 + $0x78] sm:$0xff]
    %v815 = vld [vmem:[%s9 + $0x80] sm:$0xff]
    %v816 = vld [vmem:[%s9 + $0x88] sm:$0xff]
    %v817 = vld [vmem:[%s9 + $0x90] sm:$0xff]
    %v818 = vld [vmem:[%s9 + $0x98] sm:$0xff]
    %v819 = vld [vmem:[%s9 + $0xa0] sm:$0xff]
    %v820 = vld [vmem:[%s9 + $0xa8] sm:$0xff]
    %v821 = vld [vmem:[%s9 + $0xb0] sm:$0xff]
    %v822 = vld [vmem:[%s9 + $0xb8] sm:$0xff]
    %v823 = vld [vmem:[%s9 + $0xc0] sm:$0xff]
    %v824 = vld [vmem:[%s9 + $0xc8] sm:$0xff]
    %v825 = vld [vmem:[%s9 + $0xd0] sm:$0xff]
    %v826 = vld [vmem:[%s9 + $0xd8] sm:$0xff]
    %v827 = vld [vmem:[%s9 + $0xe0] sm:$0xff]
    %v828 = vld [vmem:[%s9 + $0xe8] sm:$0xff]
    %v829 = vld [vmem:[%s9 + $0xf0] sm:$0xff]
    %v830 = vld [vmem:[%s9 + $0xf8] sm:$0xff]
    %v831 = vld [vmem:[%s4] sm:$0x3]
    %v832 = vld [vmem:[%s6] sm:$0x3]
    %v833 = vld [vmem:[%s8] sm:$0x3]
    %v834 = vld [vmem:[%s10] sm:$0x3]
    %v835 = vld [vmem:[#allocation7] sm:$0xff]
    %v836 = vld [vmem:[#allocation7 + $0x8] sm:$0xff]
    %v837 = vld [vmem:[#allocation7 + $0x10] sm:$0xff]
    %v838 = vld [vmem:[#allocation7 + $0x18] sm:$0xff]
    %v839 = vld [vmem:[#allocation7 + $0x20] sm:$0xff]
    %v840 = vld [vmem:[#allocation7 + $0x28] sm:$0xff]
    %v841 = vld [vmem:[#allocation7 + $0x30] sm:$0xff]
    %v842 = vld [vmem:[#allocation7 + $0x38] sm:$0xff]
    %v843 = vld [vmem:[#allocation7 + $0x40] sm:$0xff]
    %v845 = vlaneseq
    %v846 = vshrl.u32 %v845, 7
    %v847 = vsub.s32 0, %v846
    %v848 = vrot.slane %v831, %v847
    %v849 = vlaneseq
    %v850 = vshrl.u32 %v849, 7
    %v851 = vsub.s32 1, %v850
    %v852 = vrot.slane %v831, %v851
    %v887 = vunpack.c.l.b16 %v607
    %v888 = vunpack.c.h.b16 %v607
    %v889 = vunpack.c.l.b16 %v608
    %v890 = vunpack.c.h.b16 %v608
    %v891 = vunpack.c.l.b16 %v609
    %v892 = vunpack.c.h.b16 %v609
    %v893 = vunpack.c.l.b16 %v610
    %v894 = vunpack.c.h.b16 %v610
    %v895 = vunpack.c.l.b16 %v611
    %v896 = vunpack.c.h.b16 %v611
    %v897 = vunpack.c.l.b16 %v612
    %v898 = vunpack.c.h.b16 %v612
    %v899 = vunpack.c.l.b16 %v613
    %v900 = vunpack.c.h.b16 %v613
    %v901 = vunpack.c.l.b16 %v614
    %v902 = vunpack.c.h.b16 %v614
    %v903 = vunpack.c.l.b16 %v615
    %v904 = vunpack.c.h.b16 %v615
    %v905 = vunpack.c.l.b16 %v616
    %v906 = vunpack.c.h.b16 %v616
    %v907 = vunpack.c.l.b16 %v617
    %v908 = vunpack.c.h.b16 %v617
    %v909 = vunpack.c.l.b16 %v618
    %v910 = vunpack.c.h.b16 %v618
    %v911 = vunpack.c.l.b16 %v619
    %v912 = vunpack.c.h.b16 %v619
    %v913 = vunpack.c.l.b16 %v620
    %v914 = vunpack.c.h.b16 %v620
    %v915 = vunpack.c.l.b16 %v621
    %v916 = vunpack.c.h.b16 %v621
    %v917 = vunpack.c.l.b16 %v622
    %v918 = vunpack.c.h.b16 %v622
    %v919 = vunpack.c.l.b16 %v623
    %v920 = vunpack.c.h.b16 %v623
    %v921 = vunpack.c.l.b16 %v624
    %v922 = vunpack.c.h.b16 %v624
    %v923 = vunpack.c.l.b16 %v625
    %v924 = vunpack.c.h.b16 %v625
    %v925 = vunpack.c.l.b16 %v626
    %v926 = vunpack.c.h.b16 %v626
    %v927 = vunpack.c.l.b16 %v627
    %v928 = vunpack.c.h.b16 %v627
    %v929 = vunpack.c.l.b16 %v628
    %v930 = vunpack.c.h.b16 %v628
    %v931 = vunpack.c.l.b16 %v629
    %v932 = vunpack.c.h.b16 %v629
    %v933 = vunpack.c.l.b16 %v630
    %v934 = vunpack.c.h.b16 %v630
    %v935 = vunpack.c.l.b16 %v631
    %v936 = vunpack.c.h.b16 %v631
    %v937 = vunpack.c.l.b16 %v632
    %v938 = vunpack.c.h.b16 %v632
    %v939 = vunpack.c.l.b16 %v633
    %v940 = vunpack.c.h.b16 %v633
    %v941 = vunpack.c.l.b16 %v634
    %v942 = vunpack.c.h.b16 %v634
    %v943 = vunpack.c.l.b16 %v635
    %v944 = vunpack.c.h.b16 %v635
    %v945 = vunpack.c.l.b16 %v636
    %v946 = vunpack.c.h.b16 %v636
    %v947 = vunpack.c.l.b16 %v637
    %v948 = vunpack.c.h.b16 %v637
    %v949 = vunpack.c.l.b16 %v638
    %v950 = vunpack.c.h.b16 %v638
    %v951 = vpack.c.b16 %v889, %v887
    %v952 = vpack.c.b16 %v890, %v888
    %v953 = vpack.c.b16 %v893, %v891
    %v954 = vpack.c.b16 %v894, %v892
    %v955 = vpack.c.b16 %v897, %v895
    %v956 = vpack.c.b16 %v898, %v896
    %v957 = vpack.c.b16 %v901, %v899
    %v958 = vpack.c.b16 %v902, %v900
    %v959 = vpack.c.b16 %v905, %v903
    %v960 = vpack.c.b16 %v906, %v904
    %v961 = vpack.c.b16 %v909, %v907
    %v962 = vpack.c.b16 %v910, %v908
    %v963 = vpack.c.b16 %v913, %v911
    %v964 = vpack.c.b16 %v914, %v912
    %v965 = vpack.c.b16 %v917, %v915
    %v966 = vpack.c.b16 %v918, %v916
    %v967 = vpack.c.b16 %v921, %v919
    %v968 = vpack.c.b16 %v922, %v920
    %v969 = vpack.c.b16 %v925, %v923
    %v970 = vpack.c.b16 %v926, %v924
    %v971 = vpack.c.b16 %v929, %v927
    %v972 = vpack.c.b16 %v930, %v928
    %v973 = vpack.c.b16 %v933, %v931
    %v974 = vpack.c.b16 %v934, %v932
    %v975 = vpack.c.b16 %v937, %v935
    %v976 = vpack.c.b16 %v938, %v936
    %v977 = vpack.c.b16 %v941, %v939
    %v978 = vpack.c.b16 %v942, %v940
    %v979 = vpack.c.b16 %v945, %v943
    %v980 = vpack.c.b16 %v946, %v944
    %v981 = vpack.c.b16 %v949, %v947
    %v982 = vpack.c.b16 %v950, %v948
    %1015 = vmatprep.subr.bf16.mxu0 %v966
    %1016 = vmatpush1.bf16.msra.mxu0 %v965
    %1017 = vmatprep.subr.bf16.mxu0 %v964
    %1018 = vmatpush1.bf16.msra.mxu0 %v963
    %1019 = vmatprep.subr.bf16.mxu0 %v962
    %1020 = vmatpush1.bf16.msra.mxu0 %v961
    %1021 = vmatprep.subr.bf16.mxu0 %v960
    %1022 = vmatpush1.bf16.msra.mxu0 %v959
    %1023 = vmatprep.subr.bf16.mxu0 %v958
    %1024 = vmatpush1.bf16.msra.mxu0 %v957
    %1025 = vmatprep.subr.bf16.mxu0 %v956
    %1026 = vmatpush1.bf16.msra.mxu0 %v955
    %1027 = vmatprep.subr.bf16.mxu0 %v954
    %1028 = vmatpush1.bf16.msra.mxu0 %v953
    %1029 = vmatprep.subr.bf16.mxu0 %v952
    %1030 = vmatpush1.bf16.msra.mxu0 %v951
    %1031 = vmatprep.subr.bf16.mxu0 %v982
    %1032 = vmatpush2.bf16.msra.mxu0 %v981
    %1033 = vmatprep.subr.bf16.mxu0 %v980
    %1034 = vmatpush2.bf16.msra.mxu0 %v979
    %1035 = vmatprep.subr.bf16.mxu0 %v978
    %1036 = vmatpush2.bf16.msra.mxu0 %v977
    %1037 = vmatprep.subr.bf16.mxu0 %v976
    %1038 = vmatpush2.bf16.msra.mxu0 %v975
    %1039 = vmatprep.subr.bf16.mxu0 %v974
    %1040 = vmatpush2.bf16.msra.mxu0 %v973
    %1041 = vmatprep.subr.bf16.mxu0 %v972
    %1042 = vmatpush2.bf16.msra.mxu0 %v971
    %1043 = vmatprep.subr.bf16.mxu0 %v970
    %1044 = vmatpush2.bf16.msra.mxu0 %v969
    %1045 = vmatprep.subr.bf16.mxu0 %v968
    %1046 = vmatpush2.bf16.msra.mxu0 %v967
    %1047 = vmatprep.mubr.bf16.mxu0 %v420
    %1048 = vmatmul.mubr.bf16.gmra.mxu0 %v419
    %v1049 = vpop.f32.mrf.mxu0
    %v1050 = vadd.f32 %v848, %v1049
    %v1051 = vpop.f32.mrf.mxu0
    %v1052 = vadd.f32 %v852, %v1051
    %v1053 = vpop.f32.mrf.mxu0
    %v1054 = vadd.f32 %v848, %v1053
    %v1055 = vpop.f32.mrf.mxu0
    %v1056 = vadd.f32 %v852, %v1055
    %1057 = vmatprep.mubr.bf16.mxu0 %v422
    %1058 = vmatmul.mubr.bf16.gmra.mxu0 %v421
    %v1059 = vpop.f32.mrf.mxu0
    %v1060 = vadd.f32 %v848, %v1059
    %v1061 = vpop.f32.mrf.mxu0
    %v1062 = vadd.f32 %v852, %v1061
    %v1063 = vpop.f32.mrf.mxu0
    %v1064 = vadd.f32 %v848, %v1063
    %v1065 = vpop.f32.mrf.mxu0
    %v1066 = vadd.f32 %v852, %v1065
    %1067 = vmatprep.mubr.bf16.mxu0 %v424
    %1068 = vmatmul.mubr.bf16.gmra.mxu0 %v423
    %v1069 = vpop.f32.mrf.mxu0
    %v1070 = vadd.f32 %v848, %v1069
    %v1071 = vpop.f32.mrf.mxu0
    %v1072 = vadd.f32 %v852, %v1071
    %v1073 = vpop.f32.mrf.mxu0
    %v1074 = vadd.f32 %v848, %v1073
    %v1075 = vpop.f32.mrf.mxu0
    %v1076 = vadd.f32 %v852, %v1075
    %1077 = vmatprep.mubr.bf16.mxu0 %v426
    %1078 = vmatmul.mubr.bf16.gmra.mxu0 %v425
    %v1079 = vpop.f32.mrf.mxu0
    %v1080 = vadd.f32 %v848, %v1079
    %v1081 = vpop.f32.mrf.mxu0
    %v1082 = vadd.f32 %v852, %v1081
    %v1083 = vpop.f32.mrf.mxu0
    %v1084 = vadd.f32 %v848, %v1083
    %v1085 = vpop.f32.mrf.mxu0
    %v1086 = vadd.f32 %v852, %v1085
    %1087 = vmatprep.mubr.bf16.mxu0 %v428
    %1088 = vmatmul.mubr.bf16.gmra.mxu0 %v427
    %v1089 = vpop.f32.mrf.mxu0
    %v1090 = vadd.f32 %v848, %v1089
    %v1091 = vpop.f32.mrf.mxu0
    %v1092 = vadd.f32 %v852, %v1091
    %v1093 = vpop.f32.mrf.mxu0
    %v1094 = vpop.f32.mrf.mxu0
    %1095 = vdwg.mxu0
    %v1096 = vmax.f32 %v1050, 0.0
    %v1097 = vmax.f32 %v1052, 0.0
    %v1098 = vmax.f32 %v1054, 0.0
    %v1099 = vmax.f32 %v1056, 0.0
    %v1100 = vmax.f32 %v1060, 0.0
    %v1101 = vmax.f32 %v1062, 0.0
    %v1102 = vmax.f32 %v1064, 0.0
    %v1103 = vmax.f32 %v1066, 0.0
    %v1104 = vmax.f32 %v1070, 0.0
    %v1105 = vmax.f32 %v1072, 0.0
    %v1106 = vmax.f32 %v1074, 0.0
    %v1107 = vmax.f32 %v1076, 0.0
    %v1108 = vmax.f32 %v1080, 0.0
    %v1109 = vmax.f32 %v1082, 0.0
    %v1110 = vmax.f32 %v1084, 0.0
    %v1111 = vmax.f32 %v1086, 0.0
    %v1112 = vmax.f32 %v1090, 0.0
    %v1113 = vmax.f32 %v1092, 0.0
    %v1114 = vrot.slane %v1096, 7
    %v1115 = vrot.slane %v1097, 7
    %v1116 = vrot.slane %v1098, 7
    %v1117 = vrot.slane %v1099, 7
    %v1118 = vrot.slane %v1100, 7
    %v1119 = vrot.slane %v1101, 7
    %v1120 = vrot.slane %v1102, 7
    %v1121 = vrot.slane %v1103, 7
    %v1122 = vrot.slane %v1104, 7
    %v1123 = vrot.slane %v1105, 7
    %v1124 = vrot.slane %v1106, 7
    %v1125 = vrot.slane %v1107, 7
    %v1126 = vrot.slane %v1108, 7
    %v1127 = vrot.slane %v1109, 7
    %v1128 = vrot.slane %v1110, 7
    %v1129 = vrot.slane %v1111, 7
    %v1130 = vrot.slane %v1112, 7
    %v1131 = vrot.slane %v1113, 7
    %v1132 = vlaneseq
    %v1133 = vshrl.u32 %v1132, 7
    %vm1134 = vcmp.lt.s32.totalorder %v1133, 1
    %v1135 = vsel %vm1134, %v1128, %v1130
    %v1136 = vsel %vm1134, %v1129, %v1131
    %v1137 = vsel %vm1134, %v1126, %v1128
    %v1138 = vsel %vm1134, %v1127, %v1129
    %v1139 = vsel %vm1134, %v1124, %v1126
    %v1140 = vsel %vm1134, %v1125, %v1127
    %v1141 = vsel %vm1134, %v1122, %v1124
    %v1142 = vsel %vm1134, %v1123, %v1125
    %v1143 = vsel %vm1134, %v1120, %v1122
    %v1144 = vsel %vm1134, %v1121, %v1123
    %v1145 = vsel %vm1134, %v1118, %v1120
    %v1146 = vsel %vm1134, %v1119, %v1121
    %v1147 = vsel %vm1134, %v1116, %v1118
    %v1148 = vsel %vm1134, %v1117, %v1119
    %v1149 = vsel %vm1134, %v1114, %v1116
    %v1150 = vsel %vm1134, %v1115, %v1117
    %v1151 = vsel %vm1134, %v1130, %v1114
    %v1152 = vsel %vm1134, %v1131, %v1115
    %1154 = vset.pattern.permute.xlu0 0
    %1155 = vperm.xlu0 %1154, %v835
    %v1156 = vpop.permute.xlu0 %1155
    %1159 = vset.pattern.permute.xlu0 0
    %1160 = vperm.xlu0 %1159, %v836
    %v1161 = vpop.permute.xlu0 %1160
    %1164 = vset.pattern.permute.xlu0 0
    %1165 = vperm.xlu0 %1164, %v837
    %v1166 = vpop.permute.xlu0 %1165
    %1169 = vset.pattern.permute.xlu0 0
    %1170 = vperm.xlu0 %1169, %v838
    %v1171 = vpop.permute.xlu0 %1170
    %1174 = vset.pattern.permute.xlu0 0
    %1175 = vperm.xlu0 %1174, %v839
    %v1176 = vpop.permute.xlu0 %1175
    %1179 = vset.pattern.permute.xlu0 0
    %1180 = vperm.xlu0 %1179, %v840
    %v1181 = vpop.permute.xlu0 %1180
    %1184 = vset.pattern.permute.xlu0 0
    %1185 = vperm.xlu0 %1184, %v841
    %v1186 = vpop.permute.xlu0 %1185
    %1189 = vset.pattern.permute.xlu0 0
    %1190 = vperm.xlu0 %1189, %v842
    %v1191 = vpop.permute.xlu0 %1190
    %1194 = vset.pattern.permute.xlu0 0
    %1195 = vperm.xlu0 %1194, %v843
    %v1196 = vpop.permute.xlu0 %1195
    %v1198 = vmul.f32 %v1151, %v1156
    %v1199 = vmul.f32 %v1152, %v1156
    %v1200 = vmul.f32 %v1149, %v1161
    %v1201 = vmul.f32 %v1150, %v1161
    %v1202 = vmul.f32 %v1147, %v1166
    %v1203 = vmul.f32 %v1148, %v1166
    %v1204 = vmul.f32 %v1145, %v1171
    %v1205 = vmul.f32 %v1146, %v1171
    %v1206 = vmul.f32 %v1143, %v1176
    %v1207 = vmul.f32 %v1144, %v1176
    %v1208 = vmul.f32 %v1141, %v1181
    %v1209 = vmul.f32 %v1142, %v1181
    %v1210 = vmul.f32 %v1139, %v1186
    %v1211 = vmul.f32 %v1140, %v1186
    %v1212 = vmul.f32 %v1137, %v1191
    %v1213 = vmul.f32 %v1138, %v1191
    %v1214 = vmul.f32 %v1135, %v1196
    %v1215 = vmul.f32 %v1136, %v1196
    %v1216 = vrot.slane %v1096, 1
    %v1217 = vrot.slane %v1097, 1
    %v1218 = vrot.slane %v1098, 1
    %v1219 = vrot.slane %v1099, 1
    %v1220 = vrot.slane %v1100, 1
    %v1221 = vrot.slane %v1101, 1
    %v1222 = vrot.slane %v1102, 1
    %v1223 = vrot.slane %v1103, 1
    %v1224 = vrot.slane %v1104, 1
    %v1225 = vrot.slane %v1105, 1
    %v1226 = vrot.slane %v1106, 1
    %v1227 = vrot.slane %v1107, 1
    %v1228 = vrot.slane %v1108, 1
    %v1229 = vrot.slane %v1109, 1
    %v1230 = vrot.slane %v1110, 1
    %v1231 = vrot.slane %v1111, 1
    %v1232 = vrot.slane %v1112, 1
    %v1233 = vrot.slane %v1113, 1
    %vm1234 = vcmp.lt.s32.totalorder %v1133, 7
    %v1235 = vsel %vm1234, %v1230, %v1232
    %v1236 = vsel %vm1234, %v1231, %v1233
    %v1237 = vsel %vm1234, %v1228, %v1230
    %v1238 = vsel %vm1234, %v1229, %v1231
    %v1239 = vsel %vm1234, %v1226, %v1228
    %v1240 = vsel %vm1234, %v1227, %v1229
    %v1241 = vsel %vm1234, %v1224, %v1226
    %v1242 = vsel %vm1234, %v1225, %v1227
    %v1243 = vsel %vm1234, %v1222, %v1224
    %v1244 = vsel %vm1234, %v1223, %v1225
    %v1245 = vsel %vm1234, %v1220, %v1222
    %v1246 = vsel %vm1234, %v1221, %v1223
    %v1247 = vsel %vm1234, %v1218, %v1220
    %v1248 = vsel %vm1234, %v1219, %v1221
    %v1249 = vsel %vm1234, %v1216, %v1218
    %v1250 = vsel %vm1234, %v1217, %v1219
    %v1251 = vsel %vm1234, %v1232, %v1216
    %v1252 = vsel %vm1234, %v1233, %v1217
    %1253 = vset.pattern.permute.xlu0 1
    %1254 = vperm.xlu0 %1253, %v835
    %v1255 = vpop.permute.xlu0 %1254
    %1257 = vset.pattern.permute.xlu0 1
    %1258 = vperm.xlu0 %1257, %v836
    %v1259 = vpop.permute.xlu0 %1258
    %1261 = vset.pattern.permute.xlu0 1
    %1262 = vperm.xlu0 %1261, %v837
    %v1263 = vpop.permute.xlu0 %1262
    %1265 = vset.pattern.permute.xlu0 1
    %1266 = vperm.xlu0 %1265, %v838
    %v1267 = vpop.permute.xlu0 %1266
    %1269 = vset.pattern.permute.xlu0 1
    %1270 = vperm.xlu0 %1269, %v839
    %v1271 = vpop.permute.xlu0 %1270
    %1273 = vset.pattern.permute.xlu0 1
    %1274 = vperm.xlu0 %1273, %v840
    %v1275 = vpop.permute.xlu0 %1274
    %1277 = vset.pattern.permute.xlu0 1
    %1278 = vperm.xlu0 %1277, %v841
    %v1279 = vpop.permute.xlu0 %1278
    %1281 = vset.pattern.permute.xlu0 1
    %1282 = vperm.xlu0 %1281, %v842
    %v1283 = vpop.permute.xlu0 %1282
    %1285 = vset.pattern.permute.xlu0 1
    %1286 = vperm.xlu0 %1285, %v843
    %v1287 = vpop.permute.xlu0 %1286
    %v1289 = vmul.f32 %v1249, %v1255
    %v1290 = vmul.f32 %v1250, %v1255
    %v1291 = vmul.f32 %v1247, %v1259
    %v1292 = vmul.f32 %v1248, %v1259
    %v1293 = vmul.f32 %v1245, %v1263
    %v1294 = vmul.f32 %v1246, %v1263
    %v1295 = vmul.f32 %v1243, %v1267
    %v1296 = vmul.f32 %v1244, %v1267
    %v1297 = vmul.f32 %v1241, %v1271
    %v1298 = vmul.f32 %v1242, %v1271
    %v1299 = vmul.f32 %v1239, %v1275
    %v1300 = vmul.f32 %v1240, %v1275
    %v1301 = vmul.f32 %v1237, %v1279
    %v1302 = vmul.f32 %v1238, %v1279
    %v1303 = vmul.f32 %v1235, %v1283
    %v1304 = vmul.f32 %v1236, %v1283
    %v1305 = vmul.f32 %v1251, %v1287
    %v1306 = vmul.f32 %v1252, %v1287
    %v1307 = vpack.c.bf16 %v1200, %v1198
    %v1308 = vpack.c.bf16 %v1201, %v1199
    %v1309 = vpack.c.bf16 %v1204, %v1202
    %v1310 = vpack.c.bf16 %v1205, %v1203
    %v1311 = vpack.c.bf16 %v1208, %v1206
    %v1312 = vpack.c.bf16 %v1209, %v1207
    %v1313 = vpack.c.bf16 %v1212, %v1210
    %v1314 = vpack.c.bf16 %v1213, %v1211
    %v1315 = vpack.c.bf16 %v1214, %v1214
    %v1316 = vpack.c.bf16 %v1215, %v1215
    %v1317 = vpack.c.bf16 %v1098, %v1096
    %v1318 = vpack.c.bf16 %v1099, %v1097
    %v1319 = vpack.c.bf16 %v1102, %v1100
    %v1320 = vpack.c.bf16 %v1103, %v1101
    %v1321 = vpack.c.bf16 %v1106, %v1104
    %v1322 = vpack.c.bf16 %v1107, %v1105
    %v1323 = vpack.c.bf16 %v1110, %v1108
    %v1324 = vpack.c.bf16 %v1111, %v1109
    %v1325 = vpack.c.bf16 %v1112, %v1112
    %v1326 = vpack.c.bf16 %v1113, %v1113
    %v1327 = vpack.c.bf16 %v1291, %v1289
    %v1328 = vpack.c.bf16 %v1292, %v1290
    %v1329 = vpack.c.bf16 %v1295, %v1293
    %v1330 = vpack.c.bf16 %v1296, %v1294
    %v1331 = vpack.c.bf16 %v1299, %v1297
    %v1332 = vpack.c.bf16 %v1300, %v1298
    %v1333 = vpack.c.bf16 %v1303, %v1301
    %v1334 = vpack.c.bf16 %v1304, %v1302
    %v1335 = vpack.c.bf16 %v1305, %v1305
    %v1336 = vpack.c.bf16 %v1306, %v1306
    %v1338 = vlaneseq
    %v1339 = vshrl.u32 %v1338, 7
    %v1340 = vsub.s32 0, %v1339
    %v1341 = vrot.slane %v832, %v1340
    %v1342 = vlaneseq
    %v1343 = vshrl.u32 %v1342, 7
    %v1344 = vsub.s32 1, %v1343
    %v1345 = vrot.slane %v832, %v1344
    %v1444 = vunpack.c.l.b16 %v639
    %v1445 = vunpack.c.h.b16 %v639
    %v1446 = vunpack.c.l.b16 %v640
    %v1447 = vunpack.c.h.b16 %v640
    %v1448 = vunpack.c.l.b16 %v641
    %v1449 = vunpack.c.h.b16 %v641
    %v1450 = vunpack.c.l.b16 %v642
    %v1451 = vunpack.c.h.b16 %v642
    %v1452 = vunpack.c.l.b16 %v643
    %v1453 = vunpack.c.h.b16 %v643
    %v1454 = vunpack.c.l.b16 %v644
    %v1455 = vunpack.c.h.b16 %v644
    %v1456 = vunpack.c.l.b16 %v645
    %v1457 = vunpack.c.h.b16 %v645
    %v1458 = vunpack.c.l.b16 %v646
    %v1459 = vunpack.c.h.b16 %v646
    %v1460 = vunpack.c.l.b16 %v647
    %v1461 = vunpack.c.h.b16 %v647
    %v1462 = vunpack.c.l.b16 %v648
    %v1463 = vunpack.c.h.b16 %v648
    %v1464 = vunpack.c.l.b16 %v649
    %v1465 = vunpack.c.h.b16 %v649
    %v1466 = vunpack.c.l.b16 %v650
    %v1467 = vunpack.c.h.b16 %v650
    %v1468 = vunpack.c.l.b16 %v651
    %v1469 = vunpack.c.h.b16 %v651
    %v1470 = vunpack.c.l.b16 %v652
    %v1471 = vunpack.c.h.b16 %v652
    %v1472 = vunpack.c.l.b16 %v653
    %v1473 = vunpack.c.h.b16 %v653
    %v1474 = vunpack.c.l.b16 %v654
    %v1475 = vunpack.c.h.b16 %v654
    %v1476 = vunpack.c.l.b16 %v655
    %v1477 = vunpack.c.h.b16 %v655
    %v1478 = vunpack.c.l.b16 %v656
    %v1479 = vunpack.c.h.b16 %v656
    %v1480 = vunpack.c.l.b16 %v657
    %v1481 = vunpack.c.h.b16 %v657
    %v1482 = vunpack.c.l.b16 %v658
    %v1483 = vunpack.c.h.b16 %v658
    %v1484 = vunpack.c.l.b16 %v659
    %v1485 = vunpack.c.h.b16 %v659
    %v1486 = vunpack.c.l.b16 %v660
    %v1487 = vunpack.c.h.b16 %v660
    %v1488 = vunpack.c.l.b16 %v661
    %v1489 = vunpack.c.h.b16 %v661
    %v1490 = vunpack.c.l.b16 %v662
    %v1491 = vunpack.c.h.b16 %v662
    %v1492 = vunpack.c.l.b16 %v663
    %v1493 = vunpack.c.h.b16 %v663
    %v1494 = vunpack.c.l.b16 %v664
    %v1495 = vunpack.c.h.b16 %v664
    %v1496 = vunpack.c.l.b16 %v665
    %v1497 = vunpack.c.h.b16 %v665
    %v1498 = vunpack.c.l.b16 %v666
    %v1499 = vunpack.c.h.b16 %v666
    %v1500 = vunpack.c.l.b16 %v667
    %v1501 = vunpack.c.h.b16 %v667
    %v1502 = vunpack.c.l.b16 %v668
    %v1503 = vunpack.c.h.b16 %v668
    %v1504 = vunpack.c.l.b16 %v669
    %v1505 = vunpack.c.h.b16 %v669
    %v1506 = vunpack.c.l.b16 %v670
    %v1507 = vunpack.c.h.b16 %v670
    %v1508 = vunpack.c.l.b16 %v671
    %v1509 = vunpack.c.h.b16 %v671
    %v1510 = vunpack.c.l.b16 %v672
    %v1511 = vunpack.c.h.b16 %v672
    %v1512 = vunpack.c.l.b16 %v673
    %v1513 = vunpack.c.h.b16 %v673
    %v1514 = vunpack.c.l.b16 %v674
    %v1515 = vunpack.c.h.b16 %v674
    %v1516 = vunpack.c.l.b16 %v675
    %v1517 = vunpack.c.h.b16 %v675
    %v1518 = vunpack.c.l.b16 %v676
    %v1519 = vunpack.c.h.b16 %v676
    %v1520 = vunpack.c.l.b16 %v677
    %v1521 = vunpack.c.h.b16 %v677
    %v1522 = vunpack.c.l.b16 %v678
    %v1523 = vunpack.c.h.b16 %v678
    %v1524 = vunpack.c.l.b16 %v679
    %v1525 = vunpack.c.h.b16 %v679
    %v1526 = vunpack.c.l.b16 %v680
    %v1527 = vunpack.c.h.b16 %v680
    %v1528 = vunpack.c.l.b16 %v681
    %v1529 = vunpack.c.h.b16 %v681
    %v1530 = vunpack.c.l.b16 %v682
    %v1531 = vunpack.c.h.b16 %v682
    %v1532 = vunpack.c.l.b16 %v683
    %v1533 = vunpack.c.h.b16 %v683
    %v1534 = vunpack.c.l.b16 %v684
    %v1535 = vunpack.c.h.b16 %v684
    %v1536 = vunpack.c.l.b16 %v685
    %v1537 = vunpack.c.h.b16 %v685
    %v1538 = vunpack.c.l.b16 %v686
    %v1539 = vunpack.c.h.b16 %v686
    %v1540 = vunpack.c.l.b16 %v687
    %v1541 = vunpack.c.h.b16 %v687
    %v1542 = vunpack.c.l.b16 %v688
    %v1543 = vunpack.c.h.b16 %v688
    %v1544 = vunpack.c.l.b16 %v689
    %v1545 = vunpack.c.h.b16 %v689
    %v1546 = vunpack.c.l.b16 %v690
    %v1547 = vunpack.c.h.b16 %v690
    %v1548 = vunpack.c.l.b16 %v691
    %v1549 = vunpack.c.h.b16 %v691
    %v1550 = vunpack.c.l.b16 %v692
    %v1551 = vunpack.c.h.b16 %v692
    %v1552 = vunpack.c.l.b16 %v693
    %v1553 = vunpack.c.h.b16 %v693
    %v1554 = vunpack.c.l.b16 %v694
    %v1555 = vunpack.c.h.b16 %v694
    %v1556 = vunpack.c.l.b16 %v695
    %v1557 = vunpack.c.h.b16 %v695
    %v1558 = vunpack.c.l.b16 %v696
    %v1559 = vunpack.c.h.b16 %v696
    %v1560 = vunpack.c.l.b16 %v697
    %v1561 = vunpack.c.h.b16 %v697
    %v1562 = vunpack.c.l.b16 %v698
    %v1563 = vunpack.c.h.b16 %v698
    %v1564 = vunpack.c.l.b16 %v699
    %v1565 = vunpack.c.h.b16 %v699
    %v1566 = vunpack.c.l.b16 %v700
    %v1567 = vunpack.c.h.b16 %v700
    %v1568 = vunpack.c.l.b16 %v701
    %v1569 = vunpack.c.h.b16 %v701
    %v1570 = vunpack.c.l.b16 %v702
    %v1571 = vunpack.c.h.b16 %v702
    %v1572 = vunpack.c.l.b16 %v703
    %v1573 = vunpack.c.h.b16 %v703
    %v1574 = vunpack.c.l.b16 %v704
    %v1575 = vunpack.c.h.b16 %v704
    %v1576 = vunpack.c.l.b16 %v705
    %v1577 = vunpack.c.h.b16 %v705
    %v1578 = vunpack.c.l.b16 %v706
    %v1579 = vunpack.c.h.b16 %v706
    %v1580 = vunpack.c.l.b16 %v707
    %v1581 = vunpack.c.h.b16 %v707
    %v1582 = vunpack.c.l.b16 %v708
    %v1583 = vunpack.c.h.b16 %v708
    %v1584 = vunpack.c.l.b16 %v709
    %v1585 = vunpack.c.h.b16 %v709
    %v1586 = vunpack.c.l.b16 %v710
    %v1587 = vunpack.c.h.b16 %v710
    %v1588 = vunpack.c.l.b16 %v711
    %v1589 = vunpack.c.h.b16 %v711
    %v1590 = vunpack.c.l.b16 %v712
    %v1591 = vunpack.c.h.b16 %v712
    %v1592 = vunpack.c.l.b16 %v713
    %v1593 = vunpack.c.h.b16 %v713
    %v1594 = vunpack.c.l.b16 %v714
    %v1595 = vunpack.c.h.b16 %v714
    %v1596 = vunpack.c.l.b16 %v715
    %v1597 = vunpack.c.h.b16 %v715
    %v1598 = vunpack.c.l.b16 %v716
    %v1599 = vunpack.c.h.b16 %v716
    %v1600 = vunpack.c.l.b16 %v717
    %v1601 = vunpack.c.h.b16 %v717
    %v1602 = vunpack.c.l.b16 %v718
    %v1603 = vunpack.c.h.b16 %v718
    %v1604 = vunpack.c.l.b16 %v719
    %v1605 = vunpack.c.h.b16 %v719
    %v1606 = vunpack.c.l.b16 %v720
    %v1607 = vunpack.c.h.b16 %v720
    %v1608 = vunpack.c.l.b16 %v721
    %v1609 = vunpack.c.h.b16 %v721
    %v1610 = vunpack.c.l.b16 %v722
    %v1611 = vunpack.c.h.b16 %v722
    %v1612 = vunpack.c.l.b16 %v723
    %v1613 = vunpack.c.h.b16 %v723
    %v1614 = vunpack.c.l.b16 %v724
    %v1615 = vunpack.c.h.b16 %v724
    %v1616 = vunpack.c.l.b16 %v725
    %v1617 = vunpack.c.h.b16 %v725
    %v1618 = vunpack.c.l.b16 %v726
    %v1619 = vunpack.c.h.b16 %v726
    %v1620 = vunpack.c.l.b16 %v727
    %v1621 = vunpack.c.h.b16 %v727
    %v1622 = vunpack.c.l.b16 %v728
    %v1623 = vunpack.c.h.b16 %v728
    %v1624 = vunpack.c.l.b16 %v729
    %v1625 = vunpack.c.h.b16 %v729
    %v1626 = vunpack.c.l.b16 %v730
    %v1627 = vunpack.c.h.b16 %v730
    %v1628 = vunpack.c.l.b16 %v731
    %v1629 = vunpack.c.h.b16 %v731
    %v1630 = vunpack.c.l.b16 %v732
    %v1631 = vunpack.c.h.b16 %v732
    %v1632 = vunpack.c.l.b16 %v733
    %v1633 = vunpack.c.h.b16 %v733
    %v1634 = vunpack.c.l.b16 %v734
    %v1635 = vunpack.c.h.b16 %v734
    %v1636 = vpack.c.b16 %v1446, %v1444
    %v1637 = vpack.c.b16 %v1447, %v1445
    %v1638 = vpack.c.b16 %v1450, %v1448
    %v1639 = vpack.c.b16 %v1451, %v1449
    %v1640 = vpack.c.b16 %v1454, %v1452
    %v1641 = vpack.c.b16 %v1455, %v1453
    %v1642 = vpack.c.b16 %v1458, %v1456
    %v1643 = vpack.c.b16 %v1459, %v1457
    %v1644 = vpack.c.b16 %v1462, %v1460
    %v1645 = vpack.c.b16 %v1463, %v1461
    %v1646 = vpack.c.b16 %v1466, %v1464
    %v1647 = vpack.c.b16 %v1467, %v1465
    %v1648 = vpack.c.b16 %v1470, %v1468
    %v1649 = vpack.c.b16 %v1471, %v1469
    %v1650 = vpack.c.b16 %v1474, %v1472
    %v1651 = vpack.c.b16 %v1475, %v1473
    %v1652 = vpack.c.b16 %v1478, %v1476
    %v1653 = vpack.c.b16 %v1479, %v1477
    %v1654 = vpack.c.b16 %v1482, %v1480
    %v1655 = vpack.c.b16 %v1483, %v1481
    %v1656 = vpack.c.b16 %v1486, %v1484
    %v1657 = vpack.c.b16 %v1487, %v1485
    %v1658 = vpack.c.b16 %v1490, %v1488
    %v1659 = vpack.c.b16 %v1491, %v1489
    %v1660 = vpack.c.b16 %v1494, %v1492
    %v1661 = vpack.c.b16 %v1495, %v1493
    %v1662 = vpack.c.b16 %v1498, %v1496
    %v1663 = vpack.c.b16 %v1499, %v1497
    %v1664 = vpack.c.b16 %v1502, %v1500
    %v1665 = vpack.c.b16 %v1503, %v1501
    %v1666 = vpack.c.b16 %v1506, %v1504
    %v1667 = vpack.c.b16 %v1507, %v1505
    %v1668 = vpack.c.b16 %v1510, %v1508
    %v1669 = vpack.c.b16 %v1511, %v1509
    %v1670 = vpack.c.b16 %v1514, %v1512
    %v1671 = vpack.c.b16 %v1515, %v1513
    %v1672 = vpack.c.b16 %v1518, %v1516
    %v1673 = vpack.c.b16 %v1519, %v1517
    %v1674 = vpack.c.b16 %v1522, %v1520
    %v1675 = vpack.c.b16 %v1523, %v1521
    %v1676 = vpack.c.b16 %v1526, %v1524
    %v1677 = vpack.c.b16 %v1527, %v1525
    %v1678 = vpack.c.b16 %v1530, %v1528
    %v1679 = vpack.c.b16 %v1531, %v1529
    %v1680 = vpack.c.b16 %v1534, %v1532
    %v1681 = vpack.c.b16 %v1535, %v1533
    %v1682 = vpack.c.b16 %v1538, %v1536
    %v1683 = vpack.c.b16 %v1539, %v1537
    %v1684 = vpack.c.b16 %v1542, %v1540
    %v1685 = vpack.c.b16 %v1543, %v1541
    %v1686 = vpack.c.b16 %v1546, %v1544
    %v1687 = vpack.c.b16 %v1547, %v1545
    %v1688 = vpack.c.b16 %v1550, %v1548
    %v1689 = vpack.c.b16 %v1551, %v1549
    %v1690 = vpack.c.b16 %v1554, %v1552
    %v1691 = vpack.c.b16 %v1555, %v1553
    %v1692 = vpack.c.b16 %v1558, %v1556
    %v1693 = vpack.c.b16 %v1559, %v1557
    %v1694 = vpack.c.b16 %v1562, %v1560
    %v1695 = vpack.c.b16 %v1563, %v1561
    %v1696 = vpack.c.b16 %v1566, %v1564
    %v1697 = vpack.c.b16 %v1567, %v1565
    %v1698 = vpack.c.b16 %v1570, %v1568
    %v1699 = vpack.c.b16 %v1571, %v1569
    %v1700 = vpack.c.b16 %v1574, %v1572
    %v1701 = vpack.c.b16 %v1575, %v1573
    %v1702 = vpack.c.b16 %v1578, %v1576
    %v1703 = vpack.c.b16 %v1579, %v1577
    %v1704 = vpack.c.b16 %v1582, %v1580
    %v1705 = vpack.c.b16 %v1583, %v1581
    %v1706 = vpack.c.b16 %v1586, %v1584
    %v1707 = vpack.c.b16 %v1587, %v1585
    %v1708 = vpack.c.b16 %v1590, %v1588
    %v1709 = vpack.c.b16 %v1591, %v1589
    %v1710 = vpack.c.b16 %v1594, %v1592
    %v1711 = vpack.c.b16 %v1595, %v1593
    %v1712 = vpack.c.b16 %v1598, %v1596
    %v1713 = vpack.c.b16 %v1599, %v1597
    %v1714 = vpack.c.b16 %v1602, %v1600
    %v1715 = vpack.c.b16 %v1603, %v1601
    %v1716 = vpack.c.b16 %v1606, %v1604
    %v1717 = vpack.c.b16 %v1607, %v1605
    %v1718 = vpack.c.b16 %v1610, %v1608
    %v1719 = vpack.c.b16 %v1611, %v1609
    %v1720 = vpack.c.b16 %v1614, %v1612
    %v1721 = vpack.c.b16 %v1615, %v1613
    %v1722 = vpack.c.b16 %v1618, %v1616
    %v1723 = vpack.c.b16 %v1619, %v1617
    %v1724 = vpack.c.b16 %v1622, %v1620
    %v1725 = vpack.c.b16 %v1623, %v1621
    %v1726 = vpack.c.b16 %v1626, %v1624
    %v1727 = vpack.c.b16 %v1627, %v1625
    %v1728 = vpack.c.b16 %v1630, %v1628
    %v1729 = vpack.c.b16 %v1631, %v1629
    %v1730 = vpack.c.b16 %v1634, %v1632
    %v1731 = vpack.c.b16 %v1635, %v1633
    %1828 = vmatprep.subr.bf16.mxu0 %v1651
    %1829 = vmatpush1.bf16.msra.mxu0 %v1650
    %1830 = vmatprep.subr.bf16.mxu0 %v1649
    %1831 = vmatpush1.bf16.msra.mxu0 %v1648
    %1832 = vmatprep.subr.bf16.mxu0 %v1647
    %1833 = vmatpush1.bf16.msra.mxu0 %v1646
    %1834 = vmatprep.subr.bf16.mxu0 %v1645
    %1835 = vmatpush1.bf16.msra.mxu0 %v1644
    %1836 = vmatprep.subr.bf16.mxu0 %v1643
    %1837 = vmatpush1.bf16.msra.mxu0 %v1642
    %1838 = vmatprep.subr.bf16.mxu0 %v1641
    %1839 = vmatpush1.bf16.msra.mxu0 %v1640
    %1840 = vmatprep.subr.bf16.mxu0 %v1639
    %1841 = vmatpush1.bf16.msra.mxu0 %v1638
    %1842 = vmatprep.subr.bf16.mxu0 %v1637
    %1843 = vmatpush1.bf16.msra.mxu0 %v1636
    %1844 = vmatprep.subr.bf16.mxu0 %v1667
    %1845 = vmatpush2.bf16.msra.mxu0 %v1666
    %1846 = vmatprep.subr.bf16.mxu0 %v1665
    %1847 = vmatpush2.bf16.msra.mxu0 %v1664
    %1848 = vmatprep.subr.bf16.mxu0 %v1663
    %1849 = vmatpush2.bf16.msra.mxu0 %v1662
    %1850 = vmatprep.subr.bf16.mxu0 %v1661
    %1851 = vmatpush2.bf16.msra.mxu0 %v1660
    %1852 = vmatprep.subr.bf16.mxu0 %v1659
    %1853 = vmatpush2.bf16.msra.mxu0 %v1658
    %1854 = vmatprep.subr.bf16.mxu0 %v1657
    %1855 = vmatpush2.bf16.msra.mxu0 %v1656
    %1856 = vmatprep.subr.bf16.mxu0 %v1655
    %1857 = vmatpush2.bf16.msra.mxu0 %v1654
    %1858 = vmatprep.subr.bf16.mxu0 %v1653
    %1859 = vmatpush2.bf16.msra.mxu0 %v1652
    %1860 = vmatprep.mubr.bf16.mxu0 %v1308
    %1861 = vmatmul.mubr.bf16.gmra.mxu0 %v1307
    %v1862 = vpop.f32.mrf.mxu0
    %v1863 = vadd.f32 %v1341, %v1862
    %v1864 = vpop.f32.mrf.mxu0
    %v1865 = vadd.f32 %v1345, %v1864
    %v1866 = vpop.f32.mrf.mxu0
    %v1867 = vadd.f32 %v1341, %v1866
    %v1868 = vpop.f32.mrf.mxu0
    %v1869 = vadd.f32 %v1345, %v1868
    %1870 = vmatprep.mubr.bf16.mxu0 %v1310
    %1871 = vmatmul.mubr.bf16.gmra.mxu0 %v1309
    %v1872 = vpop.f32.mrf.mxu0
    %v1873 = vadd.f32 %v1341, %v1872
    %v1874 = vpop.f32.mrf.mxu0
    %v1875 = vadd.f32 %v1345, %v1874
    %v1876 = vpop.f32.mrf.mxu0
    %v1877 = vadd.f32 %v1341, %v1876
    %v1878 = vpop.f32.mrf.mxu0
    %v1879 = vadd.f32 %v1345, %v1878
    %1880 = vmatprep.mubr.bf16.mxu0 %v1312
    %1881 = vmatmul.mubr.bf16.gmra.mxu0 %v1311
    %v1882 = vpop.f32.mrf.mxu0
    %v1883 = vadd.f32 %v1341, %v1882
    %v1884 = vpop.f32.mrf.mxu0
    %v1885 = vadd.f32 %v1345, %v1884
    %v1886 = vpop.f32.mrf.mxu0
    %v1887 = vadd.f32 %v1341, %v1886
    %v1888 = vpop.f32.mrf.mxu0
    %v1889 = vadd.f32 %v1345, %v1888
    %1890 = vmatprep.mubr.bf16.mxu0 %v1314
    %1891 = vmatmul.mubr.bf16.gmra.mxu0 %v1313
    %v1892 = vpop.f32.mrf.mxu0
    %v1893 = vadd.f32 %v1341, %v1892
    %v1894 = vpop.f32.mrf.mxu0
    %v1895 = vadd.f32 %v1345, %v1894
    %v1896 = vpop.f32.mrf.mxu0
    %v1897 = vadd.f32 %v1341, %v1896
    %v1898 = vpop.f32.mrf.mxu0
    %v1899 = vadd.f32 %v1345, %v1898
    %1900 = vmatprep.mubr.bf16.mxu0 %v1316
    %1901 = vmatmul.mubr.bf16.gmra.mxu0 %v1315
    %v1902 = vpop.f32.mrf.mxu0
    %v1903 = vadd.f32 %v1341, %v1902
    %v1904 = vpop.f32.mrf.mxu0
    %v1905 = vadd.f32 %v1345, %v1904
    %v1906 = vpop.f32.mrf.mxu0
    %v1907 = vpop.f32.mrf.mxu0
    %1908 = vdwg.mxu0
    %1909 = vmatprep.subr.bf16.mxu0 %v1683
    %1910 = vmatpush1.bf16.msra.mxu0 %v1682
    %1911 = vmatprep.subr.bf16.mxu0 %v1681
    %1912 = vmatpush1.bf16.msra.mxu0 %v1680
    %1913 = vmatprep.subr.bf16.mxu0 %v1679
    %1914 = vmatpush1.bf16.msra.mxu0 %v1678
    %1915 = vmatprep.subr.bf16.mxu0 %v1677
    %1916 = vmatpush1.bf16.msra.mxu0 %v1676
    %1917 = vmatprep.subr.bf16.mxu0 %v1675
    %1918 = vmatpush1.bf16.msra.mxu0 %v1674
    %1919 = vmatprep.subr.bf16.mxu0 %v1673
    %1920 = vmatpush1.bf16.msra.mxu0 %v1672
    %1921 = vmatprep.subr.bf16.mxu0 %v1671
    %1922 = vmatpush1.bf16.msra.mxu0 %v1670
    %1923 = vmatprep.subr.bf16.mxu0 %v1669
    %1924 = vmatpush1.bf16.msra.mxu0 %v1668
    %1925 = vmatprep.subr.bf16.mxu0 %v1699
    %1926 = vmatpush2.bf16.msra.mxu0 %v1698
    %1927 = vmatprep.subr.bf16.mxu0 %v1697
    %1928 = vmatpush2.bf16.msra.mxu0 %v1696
    %1929 = vmatprep.subr.bf16.mxu0 %v1695
    %1930 = vmatpush2.bf16.msra.mxu0 %v1694
    %1931 = vmatprep.subr.bf16.mxu0 %v1693
    %1932 = vmatpush2.bf16.msra.mxu0 %v1692
    %1933 = vmatprep.subr.bf16.mxu0 %v1691
    %1934 = vmatpush2.bf16.msra.mxu0 %v1690
    %1935 = vmatprep.subr.bf16.mxu0 %v1689
    %1936 = vmatpush2.bf16.msra.mxu0 %v1688
    %1937 = vmatprep.subr.bf16.mxu0 %v1687
    %1938 = vmatpush2.bf16.msra.mxu0 %v1686
    %1939 = vmatprep.subr.bf16.mxu0 %v1685
    %1940 = vmatpush2.bf16.msra.mxu0 %v1684
    %1941 = vmatprep.mubr.bf16.mxu0 %v1318
    %1942 = vmatmul.mubr.bf16.gmra.mxu0 %v1317
    %v1943 = vpop.f32.mrf.mxu0
    %v1944 = vadd.f32 %v1863, %v1943
    %v1945 = vpop.f32.mrf.mxu0
    %v1946 = vadd.f32 %v1865, %v1945
    %v1947 = vpop.f32.mrf.mxu0
    %v1948 = vadd.f32 %v1867, %v1947
    %v1949 = vpop.f32.mrf.mxu0
    %v1950 = vadd.f32 %v1869, %v1949
    %1951 = vmatprep.mubr.bf16.mxu0 %v1320
    %1952 = vmatmul.mubr.bf16.gmra.mxu0 %v1319
    %v1953 = vpop.f32.mrf.mxu0
    %v1954 = vadd.f32 %v1873, %v1953
    %v1955 = vpop.f32.mrf.mxu0
    %v1956 = vadd.f32 %v1875, %v1955
    %v1957 = vpop.f32.mrf.mxu0
    %v1958 = vadd.f32 %v1877, %v1957
    %v1959 = vpop.f32.mrf.mxu0
    %v1960 = vadd.f32 %v1879, %v1959
    %1961 = vmatprep.mubr.bf16.mxu0 %v1322
    %1962 = vmatmul.mubr.bf16.gmra.mxu0 %v1321
    %v1963 = vpop.f32.mrf.mxu0
    %v1964 = vadd.f32 %v1883, %v1963
    %v1965 = vpop.f32.mrf.mxu0
    %v1966 = vadd.f32 %v1885, %v1965
    %v1967 = vpop.f32.mrf.mxu0
    %v1968 = vadd.f32 %v1887, %v1967
    %v1969 = vpop.f32.mrf.mxu0
    %v1970 = vadd.f32 %v1889, %v1969
    %1971 = vmatprep.mubr.bf16.mxu0 %v1324
    %1972 = vmatmul.mubr.bf16.gmra.mxu0 %v1323
    %v1973 = vpop.f32.mrf.mxu0
    %v1974 = vadd.f32 %v1893, %v1973
    %v1975 = vpop.f32.mrf.mxu0
    %v1976 = vadd.f32 %v1895, %v1975
    %v1977 = vpop.f32.mrf.mxu0
    %v1978 = vadd.f32 %v1897, %v1977
    %v1979 = vpop.f32.mrf.mxu0
    %v1980 = vadd.f32 %v1899, %v1979
    %1981 = vmatprep.mubr.bf16.mxu0 %v1326
    %1982 = vmatmul.mubr.bf16.gmra.mxu0 %v1325
    %v1983 = vpop.f32.mrf.mxu0
    %v1984 = vadd.f32 %v1903, %v1983
    %v1985 = vpop.f32.mrf.mxu0
    %v1986 = vadd.f32 %v1905, %v1985
    %v1987 = vpop.f32.mrf.mxu0
    %v1988 = vpop.f32.mrf.mxu0
    %1989 = vdwg.mxu0
    %1990 = vmatprep.subr.bf16.mxu0 %v1715
    %1991 = vmatpush1.bf16.msra.mxu0 %v1714
    %1992 = vmatprep.subr.bf16.mxu0 %v1713
    %1993 = vmatpush1.bf16.msra.mxu0 %v1712
    %1994 = vmatprep.subr.bf16.mxu0 %v1711
    %1995 = vmatpush1.bf16.msra.mxu0 %v1710
    %1996 = vmatprep.subr.bf16.mxu0 %v1709
    %1997 = vmatpush1.bf16.msra.mxu0 %v1708
    %1998 = vmatprep.subr.bf16.mxu0 %v1707
    %1999 = vmatpush1.bf16.msra.mxu0 %v1706
    %2000 = vmatprep.subr.bf16.mxu0 %v1705
    %2001 = vmatpush1.bf16.msra.mxu0 %v1704
    %2002 = vmatprep.subr.bf16.mxu0 %v1703
    %2003 = vmatpush1.bf16.msra.mxu0 %v1702
    %2004 = vmatprep.subr.bf16.mxu0 %v1701
    %2005 = vmatpush1.bf16.msra.mxu0 %v1700
    %2006 = vmatprep.subr.bf16.mxu0 %v1731
    %2007 = vmatpush2.bf16.msra.mxu0 %v1730
    %2008 = vmatprep.subr.bf16.mxu0 %v1729
    %2009 = vmatpush2.bf16.msra.mxu0 %v1728
    %2010 = vmatprep.subr.bf16.mxu0 %v1727
    %2011 = vmatpush2.bf16.msra.mxu0 %v1726
    %2012 = vmatprep.subr.bf16.mxu0 %v1725
    %2013 = vmatpush2.bf16.msra.mxu0 %v1724
    %2014 = vmatprep.subr.bf16.mxu0 %v1723
    %2015 = vmatpush2.bf16.msra.mxu0 %v1722
    %2016 = vmatprep.subr.bf16.mxu0 %v1721
    %2017 = vmatpush2.bf16.msra.mxu0 %v1720
    %2018 = vmatprep.subr.bf16.mxu0 %v1719
    %2019 = vmatpush2.bf16.msra.mxu0 %v1718
    %2020 = vmatprep.subr.bf16.mxu0 %v1717
    %2021 = vmatpush2.bf16.msra.mxu0 %v1716
    %2022 = vmatprep.mubr.bf16.mxu0 %v1328
    %2023 = vmatmul.mubr.bf16.gmra.mxu0 %v1327
    %v2024 = vpop.f32.mrf.mxu0
    %v2025 = vadd.f32 %v1944, %v2024
    %v2026 = vpop.f32.mrf.mxu0
    %v2027 = vadd.f32 %v1946, %v2026
    %v2028 = vpop.f32.mrf.mxu0
    %v2029 = vadd.f32 %v1948, %v2028
    %v2030 = vpop.f32.mrf.mxu0
    %v2031 = vadd.f32 %v1950, %v2030
    %2032 = vmatprep.mubr.bf16.mxu0 %v1330
    %2033 = vmatmul.mubr.bf16.gmra.mxu0 %v1329
    %v2034 = vpop.f32.mrf.mxu0
    %v2035 = vadd.f32 %v1954, %v2034
    %v2036 = vpop.f32.mrf.mxu0
    %v2037 = vadd.f32 %v1956, %v2036
    %v2038 = vpop.f32.mrf.mxu0
    %v2039 = vadd.f32 %v1958, %v2038
    %v2040 = vpop.f32.mrf.mxu0
    %v2041 = vadd.f32 %v1960, %v2040
    %2042 = vmatprep.mubr.bf16.mxu0 %v1332
    %2043 = vmatmul.mubr.bf16.gmra.mxu0 %v1331
    %v2044 = vpop.f32.mrf.mxu0
    %v2045 = vadd.f32 %v1964, %v2044
    %v2046 = vpop.f32.mrf.mxu0
    %v2047 = vadd.f32 %v1966, %v2046
    %v2048 = vpop.f32.mrf.mxu0
    %v2049 = vadd.f32 %v1968, %v2048
    %v2050 = vpop.f32.mrf.mxu0
    %v2051 = vadd.f32 %v1970, %v2050
    %2052 = vmatprep.mubr.bf16.mxu0 %v1334
    %2053 = vmatmul.mubr.bf16.gmra.mxu0 %v1333
    %v2054 = vpop.f32.mrf.mxu0
    %v2055 = vadd.f32 %v1974, %v2054
    %v2056 = vpop.f32.mrf.mxu0
    %v2057 = vadd.f32 %v1976, %v2056
    %v2058 = vpop.f32.mrf.mxu0
    %v2059 = vadd.f32 %v1978, %v2058
    %v2060 = vpop.f32.mrf.mxu0
    %v2061 = vadd.f32 %v1980, %v2060
    %2062 = vmatprep.mubr.bf16.mxu0 %v1336
    %2063 = vmatmul.mubr.bf16.gmra.mxu0 %v1335
    %v2064 = vpop.f32.mrf.mxu0
    %v2065 = vadd.f32 %v1984, %v2064
    %v2066 = vpop.f32.mrf.mxu0
    %v2067 = vadd.f32 %v1986, %v2066
    %v2068 = vpop.f32.mrf.mxu0
    %v2069 = vpop.f32.mrf.mxu0
    %2070 = vdwg.mxu0
    %v2071 = vrot.slane %v2025, 6
    %v2072 = vrot.slane %v2027, 6
    %v2073 = vrot.slane %v2029, 6
    %v2074 = vrot.slane %v2031, 6
    %v2075 = vrot.slane %v2035, 6
    %v2076 = vrot.slane %v2037, 6
    %v2077 = vrot.slane %v2039, 6
    %v2078 = vrot.slane %v2041, 6
    %v2079 = vrot.slane %v2045, 6
    %v2080 = vrot.slane %v2047, 6
    %v2081 = vrot.slane %v2049, 6
    %v2082 = vrot.slane %v2051, 6
    %v2083 = vrot.slane %v2055, 6
    %v2084 = vrot.slane %v2057, 6
    %v2085 = vrot.slane %v2059, 6
    %v2086 = vrot.slane %v2061, 6
    %v2087 = vrot.slane %v2065, 6
    %v2088 = vrot.slane %v2067, 6
    %vm2089 = vcmp.lt.s32.totalorder %v1133, 2
    %v2090 = vsel %vm2089, %v2085, %v2087
    %v2091 = vsel %vm2089, %v2086, %v2088
    %v2092 = vsel %vm2089, %v2083, %v2085
    %v2093 = vsel %vm2089, %v2084, %v2086
    %v2094 = vsel %vm2089, %v2081, %v2083
    %v2095 = vsel %vm2089, %v2082, %v2084
    %v2096 = vsel %vm2089, %v2079, %v2081
    %v2097 = vsel %vm2089, %v2080, %v2082
    %v2098 = vsel %vm2089, %v2077, %v2079
    %v2099 = vsel %vm2089, %v2078, %v2080
    %v2100 = vsel %vm2089, %v2075, %v2077
    %v2101 = vsel %vm2089, %v2076, %v2078
    %v2102 = vsel %vm2089, %v2073, %v2075
    %v2103 = vsel %vm2089, %v2074, %v2076
    %v2104 = vsel %vm2089, %v2071, %v2073
    %v2105 = vsel %vm2089, %v2072, %v2074
    %v2106 = vsel %vm2089, %v2087, %v2071
    %v2107 = vsel %vm2089, %v2088, %v2072
    %2108 = vset.pattern.permute.xlu0 2
    %2109 = vperm.xlu0 %2108, %v835
    %v2110 = vpop.permute.xlu0 %2109
    %2112 = vset.pattern.permute.xlu0 2
    %2113 = vperm.xlu0 %2112, %v836
    %v2114 = vpop.permute.xlu0 %2113
    %2116 = vset.pattern.permute.xlu0 2
    %2117 = vperm.xlu0 %2116, %v837
    %v2118 = vpop.permute.xlu0 %2117
    %2120 = vset.pattern.permute.xlu0 2
    %2121 = vperm.xlu0 %2120, %v838
    %v2122 = vpop.permute.xlu0 %2121
    %2124 = vset.pattern.permute.xlu0 2
    %2125 = vperm.xlu0 %2124, %v839
    %v2126 = vpop.permute.xlu0 %2125
    %2128 = vset.pattern.permute.xlu0 2
    %2129 = vperm.xlu0 %2128, %v840
    %v2130 = vpop.permute.xlu0 %2129
    %2132 = vset.pattern.permute.xlu0 2
    %2133 = vperm.xlu0 %2132, %v841
    %v2134 = vpop.permute.xlu0 %2133
    %2136 = vset.pattern.permute.xlu0 2
    %2137 = vperm.xlu0 %2136, %v842
    %v2138 = vpop.permute.xlu0 %2137
    %2140 = vset.pattern.permute.xlu0 2
    %2141 = vperm.xlu0 %2140, %v843
    %v2142 = vpop.permute.xlu0 %2141
    %v2144 = vmul.f32 %v2104, %v2110
    %v2145 = vmul.f32 %v2105, %v2110
    %v2146 = vmul.f32 %v2102, %v2114
    %v2147 = vmul.f32 %v2103, %v2114
    %v2148 = vmul.f32 %v2100, %v2118
    %v2149 = vmul.f32 %v2101, %v2118
    %v2150 = vmul.f32 %v2098, %v2122
    %v2151 = vmul.f32 %v2099, %v2122
    %v2152 = vmul.f32 %v2096, %v2126
    %v2153 = vmul.f32 %v2097, %v2126
    %v2154 = vmul.f32 %v2094, %v2130
    %v2155 = vmul.f32 %v2095, %v2130
    %v2156 = vmul.f32 %v2092, %v2134
    %v2157 = vmul.f32 %v2093, %v2134
    %v2158 = vmul.f32 %v2090, %v2138
    %v2159 = vmul.f32 %v2091, %v2138
    %v2160 = vmul.f32 %v2106, %v2142
    %v2161 = vmul.f32 %v2107, %v2142
    %v2162 = vpack.c.bf16 %v2029, %v2025
    %v2163 = vpack.c.bf16 %v2031, %v2027
    %v2164 = vpack.c.bf16 %v2039, %v2035
    %v2165 = vpack.c.bf16 %v2041, %v2037
    %v2166 = vpack.c.bf16 %v2049, %v2045
    %v2167 = vpack.c.bf16 %v2051, %v2047
    %v2168 = vpack.c.bf16 %v2059, %v2055
    %v2169 = vpack.c.bf16 %v2061, %v2057
    %v2170 = vpack.c.bf16 %v2065, %v2065
    %v2171 = vpack.c.bf16 %v2067, %v2067
    %v2172 = vpack.c.bf16 %v2146, %v2144
    %v2173 = vpack.c.bf16 %v2147, %v2145
    %v2174 = vpack.c.bf16 %v2150, %v2148
    %v2175 = vpack.c.bf16 %v2151, %v2149
    %v2176 = vpack.c.bf16 %v2154, %v2152
    %v2177 = vpack.c.bf16 %v2155, %v2153
    %v2178 = vpack.c.bf16 %v2158, %v2156
    %v2179 = vpack.c.bf16 %v2159, %v2157
    %v2180 = vpack.c.bf16 %v2160, %v2160
    %v2181 = vpack.c.bf16 %v2161, %v2161
    %v2183 = vlaneseq
    %v2184 = vshrl.u32 %v2183, 7
    %v2185 = vsub.s32 0, %v2184
    %v2186 = vrot.slane %v833, %v2185
    %v2187 = vlaneseq
    %v2188 = vshrl.u32 %v2187, 7
    %v2189 = vsub.s32 1, %v2188
    %v2190 = vrot.slane %v833, %v2189
    %v2257 = vunpack.c.l.b16 %v735
    %v2258 = vunpack.c.h.b16 %v735
    %v2259 = vunpack.c.l.b16 %v736
    %v2260 = vunpack.c.h.b16 %v736
    %v2261 = vunpack.c.l.b16 %v737
    %v2262 = vunpack.c.h.b16 %v737
    %v2263 = vunpack.c.l.b16 %v738
    %v2264 = vunpack.c.h.b16 %v738
    %v2265 = vunpack.c.l.b16 %v739
    %v2266 = vunpack.c.h.b16 %v739
    %v2267 = vunpack.c.l.b16 %v740
    %v2268 = vunpack.c.h.b16 %v740
    %v2269 = vunpack.c.l.b16 %v741
    %v2270 = vunpack.c.h.b16 %v741
    %v2271 = vunpack.c.l.b16 %v742
    %v2272 = vunpack.c.h.b16 %v742
    %v2273 = vunpack.c.l.b16 %v743
    %v2274 = vunpack.c.h.b16 %v743
    %v2275 = vunpack.c.l.b16 %v744
    %v2276 = vunpack.c.h.b16 %v744
    %v2277 = vunpack.c.l.b16 %v745
    %v2278 = vunpack.c.h.b16 %v745
    %v2279 = vunpack.c.l.b16 %v746
    %v2280 = vunpack.c.h.b16 %v746
    %v2281 = vunpack.c.l.b16 %v747
    %v2282 = vunpack.c.h.b16 %v747
    %v2283 = vunpack.c.l.b16 %v748
    %v2284 = vunpack.c.h.b16 %v748
    %v2285 = vunpack.c.l.b16 %v749
    %v2286 = vunpack.c.h.b16 %v749
    %v2287 = vunpack.c.l.b16 %v750
    %v2288 = vunpack.c.h.b16 %v750
    %v2289 = vunpack.c.l.b16 %v751
    %v2290 = vunpack.c.h.b16 %v751
    %v2291 = vunpack.c.l.b16 %v752
    %v2292 = vunpack.c.h.b16 %v752
    %v2293 = vunpack.c.l.b16 %v753
    %v2294 = vunpack.c.h.b16 %v753
    %v2295 = vunpack.c.l.b16 %v754
    %v2296 = vunpack.c.h.b16 %v754
    %v2297 = vunpack.c.l.b16 %v755
    %v2298 = vunpack.c.h.b16 %v755
    %v2299 = vunpack.c.l.b16 %v756
    %v2300 = vunpack.c.h.b16 %v756
    %v2301 = vunpack.c.l.b16 %v757
    %v2302 = vunpack.c.h.b16 %v757
    %v2303 = vunpack.c.l.b16 %v758
    %v2304 = vunpack.c.h.b16 %v758
    %v2305 = vunpack.c.l.b16 %v759
    %v2306 = vunpack.c.h.b16 %v759
    %v2307 = vunpack.c.l.b16 %v760
    %v2308 = vunpack.c.h.b16 %v760
    %v2309 = vunpack.c.l.b16 %v761
    %v2310 = vunpack.c.h.b16 %v761
    %v2311 = vunpack.c.l.b16 %v762
    %v2312 = vunpack.c.h.b16 %v762
    %v2313 = vunpack.c.l.b16 %v763
    %v2314 = vunpack.c.h.b16 %v763
    %v2315 = vunpack.c.l.b16 %v764
    %v2316 = vunpack.c.h.b16 %v764
    %v2317 = vunpack.c.l.b16 %v765
    %v2318 = vunpack.c.h.b16 %v765
    %v2319 = vunpack.c.l.b16 %v766
    %v2320 = vunpack.c.h.b16 %v766
    %v2321 = vunpack.c.l.b16 %v767
    %v2322 = vunpack.c.h.b16 %v767
    %v2323 = vunpack.c.l.b16 %v768
    %v2324 = vunpack.c.h.b16 %v768
    %v2325 = vunpack.c.l.b16 %v769
    %v2326 = vunpack.c.h.b16 %v769
    %v2327 = vunpack.c.l.b16 %v770
    %v2328 = vunpack.c.h.b16 %v770
    %v2329 = vunpack.c.l.b16 %v771
    %v2330 = vunpack.c.h.b16 %v771
    %v2331 = vunpack.c.l.b16 %v772
    %v2332 = vunpack.c.h.b16 %v772
    %v2333 = vunpack.c.l.b16 %v773
    %v2334 = vunpack.c.h.b16 %v773
    %v2335 = vunpack.c.l.b16 %v774
    %v2336 = vunpack.c.h.b16 %v774
    %v2337 = vunpack.c.l.b16 %v775
    %v2338 = vunpack.c.h.b16 %v775
    %v2339 = vunpack.c.l.b16 %v776
    %v2340 = vunpack.c.h.b16 %v776
    %v2341 = vunpack.c.l.b16 %v777
    %v2342 = vunpack.c.h.b16 %v777
    %v2343 = vunpack.c.l.b16 %v778
    %v2344 = vunpack.c.h.b16 %v778
    %v2345 = vunpack.c.l.b16 %v779
    %v2346 = vunpack.c.h.b16 %v779
    %v2347 = vunpack.c.l.b16 %v780
    %v2348 = vunpack.c.h.b16 %v780
    %v2349 = vunpack.c.l.b16 %v781
    %v2350 = vunpack.c.h.b16 %v781
    %v2351 = vunpack.c.l.b16 %v782
    %v2352 = vunpack.c.h.b16 %v782
    %v2353 = vunpack.c.l.b16 %v783
    %v2354 = vunpack.c.h.b16 %v783
    %v2355 = vunpack.c.l.b16 %v784
    %v2356 = vunpack.c.h.b16 %v784
    %v2357 = vunpack.c.l.b16 %v785
    %v2358 = vunpack.c.h.b16 %v785
    %v2359 = vunpack.c.l.b16 %v786
    %v2360 = vunpack.c.h.b16 %v786
    %v2361 = vunpack.c.l.b16 %v787
    %v2362 = vunpack.c.h.b16 %v787
    %v2363 = vunpack.c.l.b16 %v788
    %v2364 = vunpack.c.h.b16 %v788
    %v2365 = vunpack.c.l.b16 %v789
    %v2366 = vunpack.c.h.b16 %v789
    %v2367 = vunpack.c.l.b16 %v790
    %v2368 = vunpack.c.h.b16 %v790
    %v2369 = vunpack.c.l.b16 %v791
    %v2370 = vunpack.c.h.b16 %v791
    %v2371 = vunpack.c.l.b16 %v792
    %v2372 = vunpack.c.h.b16 %v792
    %v2373 = vunpack.c.l.b16 %v793
    %v2374 = vunpack.c.h.b16 %v793
    %v2375 = vunpack.c.l.b16 %v794
    %v2376 = vunpack.c.h.b16 %v794
    %v2377 = vunpack.c.l.b16 %v795
    %v2378 = vunpack.c.h.b16 %v795
    %v2379 = vunpack.c.l.b16 %v796
    %v2380 = vunpack.c.h.b16 %v796
    %v2381 = vunpack.c.l.b16 %v797
    %v2382 = vunpack.c.h.b16 %v797
    %v2383 = vunpack.c.l.b16 %v798
    %v2384 = vunpack.c.h.b16 %v798
    %v2385 = vpack.c.b16 %v2259, %v2257
    %v2386 = vpack.c.b16 %v2260, %v2258
    %v2387 = vpack.c.b16 %v2263, %v2261
    %v2388 = vpack.c.b16 %v2264, %v2262
    %v2389 = vpack.c.b16 %v2267, %v2265
    %v2390 = vpack.c.b16 %v2268, %v2266
    %v2391 = vpack.c.b16 %v2271, %v2269
    %v2392 = vpack.c.b16 %v2272, %v2270
    %v2393 = vpack.c.b16 %v2275, %v2273
    %v2394 = vpack.c.b16 %v2276, %v2274
    %v2395 = vpack.c.b16 %v2279, %v2277
    %v2396 = vpack.c.b16 %v2280, %v2278
    %v2397 = vpack.c.b16 %v2283, %v2281
    %v2398 = vpack.c.b16 %v2284, %v2282
    %v2399 = vpack.c.b16 %v2287, %v2285
    %v2400 = vpack.c.b16 %v2288, %v2286
    %v2401 = vpack.c.b16 %v2291, %v2289
    %v2402 = vpack.c.b16 %v2292, %v2290
    %v2403 = vpack.c.b16 %v2295, %v2293
    %v2404 = vpack.c.b16 %v2296, %v2294
    %v2405 = vpack.c.b16 %v2299, %v2297
    %v2406 = vpack.c.b16 %v2300, %v2298
    %v2407 = vpack.c.b16 %v2303, %v2301
    %v2408 = vpack.c.b16 %v2304, %v2302
    %v2409 = vpack.c.b16 %v2307, %v2305
    %v2410 = vpack.c.b16 %v2308, %v2306
    %v2411 = vpack.c.b16 %v2311, %v2309
    %v2412 = vpack.c.b16 %v2312, %v2310
    %v2413 = vpack.c.b16 %v2315, %v2313
    %v2414 = vpack.c.b16 %v2316, %v2314
    %v2415 = vpack.c.b16 %v2319, %v2317
    %v2416 = vpack.c.b16 %v2320, %v2318
    %v2417 = vpack.c.b16 %v2323, %v2321
    %v2418 = vpack.c.b16 %v2324, %v2322
    %v2419 = vpack.c.b16 %v2327, %v2325
    %v2420 = vpack.c.b16 %v2328, %v2326
    %v2421 = vpack.c.b16 %v2331, %v2329
    %v2422 = vpack.c.b16 %v2332, %v2330
    %v2423 = vpack.c.b16 %v2335, %v2333
    %v2424 = vpack.c.b16 %v2336, %v2334
    %v2425 = vpack.c.b16 %v2339, %v2337
    %v2426 = vpack.c.b16 %v2340, %v2338
    %v2427 = vpack.c.b16 %v2343, %v2341
    %v2428 = vpack.c.b16 %v2344, %v2342
    %v2429 = vpack.c.b16 %v2347, %v2345
    %v2430 = vpack.c.b16 %v2348, %v2346
    %v2431 = vpack.c.b16 %v2351, %v2349
    %v2432 = vpack.c.b16 %v2352, %v2350
    %v2433 = vpack.c.b16 %v2355, %v2353
    %v2434 = vpack.c.b16 %v2356, %v2354
    %v2435 = vpack.c.b16 %v2359, %v2357
    %v2436 = vpack.c.b16 %v2360, %v2358
    %v2437 = vpack.c.b16 %v2363, %v2361
    %v2438 = vpack.c.b16 %v2364, %v2362
    %v2439 = vpack.c.b16 %v2367, %v2365
    %v2440 = vpack.c.b16 %v2368, %v2366
    %v2441 = vpack.c.b16 %v2371, %v2369
    %v2442 = vpack.c.b16 %v2372, %v2370
    %v2443 = vpack.c.b16 %v2375, %v2373
    %v2444 = vpack.c.b16 %v2376, %v2374
    %v2445 = vpack.c.b16 %v2379, %v2377
    %v2446 = vpack.c.b16 %v2380, %v2378
    %v2447 = vpack.c.b16 %v2383, %v2381
    %v2448 = vpack.c.b16 %v2384, %v2382
    %2513 = vmatprep.subr.bf16.mxu0 %v2400
    %2514 = vmatpush1.bf16.msra.mxu0 %v2399
    %2515 = vmatprep.subr.bf16.mxu0 %v2398
    %2516 = vmatpush1.bf16.msra.mxu0 %v2397
    %2517 = vmatprep.subr.bf16.mxu0 %v2396
    %2518 = vmatpush1.bf16.msra.mxu0 %v2395
    %2519 = vmatprep.subr.bf16.mxu0 %v2394
    %2520 = vmatpush1.bf16.msra.mxu0 %v2393
    %2521 = vmatprep.subr.bf16.mxu0 %v2392
    %2522 = vmatpush1.bf16.msra.mxu0 %v2391
    %2523 = vmatprep.subr.bf16.mxu0 %v2390
    %2524 = vmatpush1.bf16.msra.mxu0 %v2389
    %2525 = vmatprep.subr.bf16.mxu0 %v2388
    %2526 = vmatpush1.bf16.msra.mxu0 %v2387
    %2527 = vmatprep.subr.bf16.mxu0 %v2386
    %2528 = vmatpush1.bf16.msra.mxu0 %v2385
    %2529 = vmatprep.subr.bf16.mxu0 %v2416
    %2530 = vmatpush2.bf16.msra.mxu0 %v2415
    %2531 = vmatprep.subr.bf16.mxu0 %v2414
    %2532 = vmatpush2.bf16.msra.mxu0 %v2413
    %2533 = vmatprep.subr.bf16.mxu0 %v2412
    %2534 = vmatpush2.bf16.msra.mxu0 %v2411
    %2535 = vmatprep.subr.bf16.mxu0 %v2410
    %2536 = vmatpush2.bf16.msra.mxu0 %v2409
    %2537 = vmatprep.subr.bf16.mxu0 %v2408
    %2538 = vmatpush2.bf16.msra.mxu0 %v2407
    %2539 = vmatprep.subr.bf16.mxu0 %v2406
    %2540 = vmatpush2.bf16.msra.mxu0 %v2405
    %2541 = vmatprep.subr.bf16.mxu0 %v2404
    %2542 = vmatpush2.bf16.msra.mxu0 %v2403
    %2543 = vmatprep.subr.bf16.mxu0 %v2402
    %2544 = vmatpush2.bf16.msra.mxu0 %v2401
    %2545 = vmatprep.mubr.bf16.mxu0 %v2163
    %2546 = vmatmul.mubr.bf16.gmra.mxu0 %v2162
    %v2547 = vpop.f32.mrf.mxu0
    %v2548 = vadd.f32 %v2186, %v2547
    %v2549 = vpop.f32.mrf.mxu0
    %v2550 = vadd.f32 %v2190, %v2549
    %v2551 = vpop.f32.mrf.mxu0
    %v2552 = vadd.f32 %v2186, %v2551
    %v2553 = vpop.f32.mrf.mxu0
    %v2554 = vadd.f32 %v2190, %v2553
    %2555 = vmatprep.mubr.bf16.mxu0 %v2165
    %2556 = vmatmul.mubr.bf16.gmra.mxu0 %v2164
    %v2557 = vpop.f32.mrf.mxu0
    %v2558 = vadd.f32 %v2186, %v2557
    %v2559 = vpop.f32.mrf.mxu0
    %v2560 = vadd.f32 %v2190, %v2559
    %v2561 = vpop.f32.mrf.mxu0
    %v2562 = vadd.f32 %v2186, %v2561
    %v2563 = vpop.f32.mrf.mxu0
    %v2564 = vadd.f32 %v2190, %v2563
    %2565 = vmatprep.mubr.bf16.mxu0 %v2167
    %2566 = vmatmul.mubr.bf16.gmra.mxu0 %v2166
    %v2567 = vpop.f32.mrf.mxu0
    %v2568 = vadd.f32 %v2186, %v2567
    %v2569 = vpop.f32.mrf.mxu0
    %v2570 = vadd.f32 %v2190, %v2569
    %v2571 = vpop.f32.mrf.mxu0
    %v2572 = vadd.f32 %v2186, %v2571
    %v2573 = vpop.f32.mrf.mxu0
    %v2574 = vadd.f32 %v2190, %v2573
    %2575 = vmatprep.mubr.bf16.mxu0 %v2169
    %2576 = vmatmul.mubr.bf16.gmra.mxu0 %v2168
    %v2577 = vpop.f32.mrf.mxu0
    %v2578 = vadd.f32 %v2186, %v2577
    %v2579 = vpop.f32.mrf.mxu0
    %v2580 = vadd.f32 %v2190, %v2579
    %v2581 = vpop.f32.mrf.mxu0
    %v2582 = vadd.f32 %v2186, %v2581
    %v2583 = vpop.f32.mrf.mxu0
    %v2584 = vadd.f32 %v2190, %v2583
    %2585 = vmatprep.mubr.bf16.mxu0 %v2171
    %2586 = vmatmul.mubr.bf16.gmra.mxu0 %v2170
    %v2587 = vpop.f32.mrf.mxu0
    %v2588 = vadd.f32 %v2186, %v2587
    %v2589 = vpop.f32.mrf.mxu0
    %v2590 = vadd.f32 %v2190, %v2589
    %v2591 = vpop.f32.mrf.mxu0
    %v2592 = vpop.f32.mrf.mxu0
    %2593 = vdwg.mxu0
    %2594 = vmatprep.subr.bf16.mxu0 %v2432
    %2595 = vmatpush1.bf16.msra.mxu0 %v2431
    %2596 = vmatprep.subr.bf16.mxu0 %v2430
    %2597 = vmatpush1.bf16.msra.mxu0 %v2429
    %2598 = vmatprep.subr.bf16.mxu0 %v2428
    %2599 = vmatpush1.bf16.msra.mxu0 %v2427
    %2600 = vmatprep.subr.bf16.mxu0 %v2426
    %2601 = vmatpush1.bf16.msra.mxu0 %v2425
    %2602 = vmatprep.subr.bf16.mxu0 %v2424
    %2603 = vmatpush1.bf16.msra.mxu0 %v2423
    %2604 = vmatprep.subr.bf16.mxu0 %v2422
    %2605 = vmatpush1.bf16.msra.mxu0 %v2421
    %2606 = vmatprep.subr.bf16.mxu0 %v2420
    %2607 = vmatpush1.bf16.msra.mxu0 %v2419
    %2608 = vmatprep.subr.bf16.mxu0 %v2418
    %2609 = vmatpush1.bf16.msra.mxu0 %v2417
    %2610 = vmatprep.subr.bf16.mxu0 %v2448
    %2611 = vmatpush2.bf16.msra.mxu0 %v2447
    %2612 = vmatprep.subr.bf16.mxu0 %v2446
    %2613 = vmatpush2.bf16.msra.mxu0 %v2445
    %2614 = vmatprep.subr.bf16.mxu0 %v2444
    %2615 = vmatpush2.bf16.msra.mxu0 %v2443
    %2616 = vmatprep.subr.bf16.mxu0 %v2442
    %2617 = vmatpush2.bf16.msra.mxu0 %v2441
    %2618 = vmatprep.subr.bf16.mxu0 %v2440
    %2619 = vmatpush2.bf16.msra.mxu0 %v2439
    %2620 = vmatprep.subr.bf16.mxu0 %v2438
    %2621 = vmatpush2.bf16.msra.mxu0 %v2437
    %2622 = vmatprep.subr.bf16.mxu0 %v2436
    %2623 = vmatpush2.bf16.msra.mxu0 %v2435
    %2624 = vmatprep.subr.bf16.mxu0 %v2434
    %2625 = vmatpush2.bf16.msra.mxu0 %v2433
    %2626 = vmatprep.mubr.bf16.mxu0 %v2173
    %2627 = vmatmul.mubr.bf16.gmra.mxu0 %v2172
    %v2628 = vpop.f32.mrf.mxu0
    %v2629 = vadd.f32 %v2548, %v2628
    %v2630 = vpop.f32.mrf.mxu0
    %v2631 = vadd.f32 %v2550, %v2630
    %v2632 = vpop.f32.mrf.mxu0
    %v2633 = vadd.f32 %v2552, %v2632
    %v2634 = vpop.f32.mrf.mxu0
    %v2635 = vadd.f32 %v2554, %v2634
    %2636 = vmatprep.mubr.bf16.mxu0 %v2175
    %2637 = vmatmul.mubr.bf16.gmra.mxu0 %v2174
    %v2638 = vpop.f32.mrf.mxu0
    %v2639 = vadd.f32 %v2558, %v2638
    %v2640 = vpop.f32.mrf.mxu0
    %v2641 = vadd.f32 %v2560, %v2640
    %v2642 = vpop.f32.mrf.mxu0
    %v2643 = vadd.f32 %v2562, %v2642
    %v2644 = vpop.f32.mrf.mxu0
    %v2645 = vadd.f32 %v2564, %v2644
    %2646 = vmatprep.mubr.bf16.mxu0 %v2177
    %2647 = vmatmul.mubr.bf16.gmra.mxu0 %v2176
    %v2648 = vpop.f32.mrf.mxu0
    %v2649 = vadd.f32 %v2568, %v2648
    %v2650 = vpop.f32.mrf.mxu0
    %v2651 = vadd.f32 %v2570, %v2650
    %v2652 = vpop.f32.mrf.mxu0
    %v2653 = vadd.f32 %v2572, %v2652
    %v2654 = vpop.f32.mrf.mxu0
    %v2655 = vadd.f32 %v2574, %v2654
    %2656 = vmatprep.mubr.bf16.mxu0 %v2179
    %2657 = vmatmul.mubr.bf16.gmra.mxu0 %v2178
    %v2658 = vpop.f32.mrf.mxu0
    %v2659 = vadd.f32 %v2578, %v2658
    %v2660 = vpop.f32.mrf.mxu0
    %v2661 = vadd.f32 %v2580, %v2660
    %v2662 = vpop.f32.mrf.mxu0
    %v2663 = vadd.f32 %v2582, %v2662
    %v2664 = vpop.f32.mrf.mxu0
    %v2665 = vadd.f32 %v2584, %v2664
    %2666 = vmatprep.mubr.bf16.mxu0 %v2181
    %2667 = vmatmul.mubr.bf16.gmra.mxu0 %v2180
    %v2668 = vpop.f32.mrf.mxu0
    %v2669 = vadd.f32 %v2588, %v2668
    %v2670 = vpop.f32.mrf.mxu0
    %v2671 = vadd.f32 %v2590, %v2670
    %v2672 = vpop.f32.mrf.mxu0
    %v2673 = vpop.f32.mrf.mxu0
    %2674 = vdwg.mxu0
    %v2675 = vmax.f32 %v2629, 0.0
    %v2676 = vmax.f32 %v2631, 0.0
    %v2677 = vmax.f32 %v2633, 0.0
    %v2678 = vmax.f32 %v2635, 0.0
    %v2679 = vmax.f32 %v2639, 0.0
    %v2680 = vmax.f32 %v2641, 0.0
    %v2681 = vmax.f32 %v2643, 0.0
    %v2682 = vmax.f32 %v2645, 0.0
    %v2683 = vmax.f32 %v2649, 0.0
    %v2684 = vmax.f32 %v2651, 0.0
    %v2685 = vmax.f32 %v2653, 0.0
    %v2686 = vmax.f32 %v2655, 0.0
    %v2687 = vmax.f32 %v2659, 0.0
    %v2688 = vmax.f32 %v2661, 0.0
    %v2689 = vmax.f32 %v2663, 0.0
    %v2690 = vmax.f32 %v2665, 0.0
    %v2691 = vmax.f32 %v2669, 0.0
    %v2692 = vmax.f32 %v2671, 0.0
    %v2693 = vpack.c.bf16 %v2677, %v2675
    %v2694 = vpack.c.bf16 %v2678, %v2676
    %v2695 = vpack.c.bf16 %v2681, %v2679
    %v2696 = vpack.c.bf16 %v2682, %v2680
    %v2697 = vpack.c.bf16 %v2685, %v2683
    %v2698 = vpack.c.bf16 %v2686, %v2684
    %v2699 = vpack.c.bf16 %v2689, %v2687
    %v2700 = vpack.c.bf16 %v2690, %v2688
    %v2701 = vpack.c.bf16 %v2691, %v2691
    %v2702 = vpack.c.bf16 %v2692, %v2692
    %v2735 = vunpack.c.l.b16 %v799
    %v2736 = vunpack.c.h.b16 %v799
    %v2737 = vunpack.c.l.b16 %v800
    %v2738 = vunpack.c.h.b16 %v800
    %v2739 = vunpack.c.l.b16 %v801
    %v2740 = vunpack.c.h.b16 %v801
    %v2741 = vunpack.c.l.b16 %v802
    %v2742 = vunpack.c.h.b16 %v802
    %v2743 = vunpack.c.l.b16 %v803
    %v2744 = vunpack.c.h.b16 %v803
    %v2745 = vunpack.c.l.b16 %v804
    %v2746 = vunpack.c.h.b16 %v804
    %v2747 = vunpack.c.l.b16 %v805
    %v2748 = vunpack.c.h.b16 %v805
    %v2749 = vunpack.c.l.b16 %v806
    %v2750 = vunpack.c.h.b16 %v806
    %v2751 = vunpack.c.l.b16 %v807
    %v2752 = vunpack.c.h.b16 %v807
    %v2753 = vunpack.c.l.b16 %v808
    %v2754 = vunpack.c.h.b16 %v808
    %v2755 = vunpack.c.l.b16 %v809
    %v2756 = vunpack.c.h.b16 %v809
    %v2757 = vunpack.c.l.b16 %v810
    %v2758 = vunpack.c.h.b16 %v810
    %v2759 = vunpack.c.l.b16 %v811
    %v2760 = vunpack.c.h.b16 %v811
    %v2761 = vunpack.c.l.b16 %v812
    %v2762 = vunpack.c.h.b16 %v812
    %v2763 = vunpack.c.l.b16 %v813
    %v2764 = vunpack.c.h.b16 %v813
    %v2765 = vunpack.c.l.b16 %v814
    %v2766 = vunpack.c.h.b16 %v814
    %v2767 = vunpack.c.l.b16 %v815
    %v2768 = vunpack.c.h.b16 %v815
    %v2769 = vunpack.c.l.b16 %v816
    %v2770 = vunpack.c.h.b16 %v816
    %v2771 = vunpack.c.l.b16 %v817
    %v2772 = vunpack.c.h.b16 %v817
    %v2773 = vunpack.c.l.b16 %v818
    %v2774 = vunpack.c.h.b16 %v818
    %v2775 = vunpack.c.l.b16 %v819
    %v2776 = vunpack.c.h.b16 %v819
    %v2777 = vunpack.c.l.b16 %v820
    %v2778 = vunpack.c.h.b16 %v820
    %v2779 = vunpack.c.l.b16 %v821
    %v2780 = vunpack.c.h.b16 %v821
    %v2781 = vunpack.c.l.b16 %v822
    %v2782 = vunpack.c.h.b16 %v822
    %v2783 = vunpack.c.l.b16 %v823
    %v2784 = vunpack.c.h.b16 %v823
    %v2785 = vunpack.c.l.b16 %v824
    %v2786 = vunpack.c.h.b16 %v824
    %v2787 = vunpack.c.l.b16 %v825
    %v2788 = vunpack.c.h.b16 %v825
    %v2789 = vunpack.c.l.b16 %v826
    %v2790 = vunpack.c.h.b16 %v826
    %v2791 = vunpack.c.l.b16 %v827
    %v2792 = vunpack.c.h.b16 %v827
    %v2793 = vunpack.c.l.b16 %v828
    %v2794 = vunpack.c.h.b16 %v828
    %v2795 = vunpack.c.l.b16 %v829
    %v2796 = vunpack.c.h.b16 %v829
    %v2797 = vunpack.c.l.b16 %v830
    %v2798 = vunpack.c.h.b16 %v830
    %v2799 = vpack.c.b16 %v2737, %v2735
    %v2800 = vpack.c.b16 %v2738, %v2736
    %v2801 = vpack.c.b16 %v2741, %v2739
    %v2802 = vpack.c.b16 %v2742, %v2740
    %v2803 = vpack.c.b16 %v2745, %v2743
    %v2804 = vpack.c.b16 %v2746, %v2744
    %v2805 = vpack.c.b16 %v2749, %v2747
    %v2806 = vpack.c.b16 %v2750, %v2748
    %v2807 = vpack.c.b16 %v2753, %v2751
    %v2808 = vpack.c.b16 %v2754, %v2752
    %v2809 = vpack.c.b16 %v2757, %v2755
    %v2810 = vpack.c.b16 %v2758, %v2756
    %v2811 = vpack.c.b16 %v2761, %v2759
    %v2812 = vpack.c.b16 %v2762, %v2760
    %v2813 = vpack.c.b16 %v2765, %v2763
    %v2814 = vpack.c.b16 %v2766, %v2764
    %v2815 = vpack.c.b16 %v2769, %v2767
    %v2816 = vpack.c.b16 %v2770, %v2768
    %v2817 = vpack.c.b16 %v2773, %v2771
    %v2818 = vpack.c.b16 %v2774, %v2772
    %v2819 = vpack.c.b16 %v2777, %v2775
    %v2820 = vpack.c.b16 %v2778, %v2776
    %v2821 = vpack.c.b16 %v2781, %v2779
    %v2822 = vpack.c.b16 %v2782, %v2780
    %v2823 = vpack.c.b16 %v2785, %v2783
    %v2824 = vpack.c.b16 %v2786, %v2784
    %v2825 = vpack.c.b16 %v2789, %v2787
    %v2826 = vpack.c.b16 %v2790, %v2788
    %v2827 = vpack.c.b16 %v2793, %v2791
    %v2828 = vpack.c.b16 %v2794, %v2792
    %v2829 = vpack.c.b16 %v2797, %v2795
    %v2830 = vpack.c.b16 %v2798, %v2796
    %2863 = vmatprep.subr.bf16.mxu0 %v2814
    %2864 = vmatpush1.bf16.msra.mxu0 %v2813
    %2865 = vmatprep.subr.bf16.mxu0 %v2812
    %2866 = vmatpush1.bf16.msra.mxu0 %v2811
    %2867 = vmatprep.subr.bf16.mxu0 %v2810
    %2868 = vmatpush1.bf16.msra.mxu0 %v2809
    %2869 = vmatprep.subr.bf16.mxu0 %v2808
    %2870 = vmatpush1.bf16.msra.mxu0 %v2807
    %2871 = vmatprep.subr.bf16.mxu0 %v2806
    %2872 = vmatpush1.bf16.msra.mxu0 %v2805
    %2873 = vmatprep.subr.bf16.mxu0 %v2804
    %2874 = vmatpush1.bf16.msra.mxu0 %v2803
    %2875 = vmatprep.subr.bf16.mxu0 %v2802
    %2876 = vmatpush1.bf16.msra.mxu0 %v2801
    %2877 = vmatprep.subr.bf16.mxu0 %v2800
    %2878 = vmatpush1.bf16.msra.mxu0 %v2799
    %2879 = vmatprep.subr.bf16.mxu0 %v2830
    %2880 = vmatpush2.bf16.msra.mxu0 %v2829
    %2881 = vmatprep.subr.bf16.mxu0 %v2828
    %2882 = vmatpush2.bf16.msra.mxu0 %v2827
    %2883 = vmatprep.subr.bf16.mxu0 %v2826
    %2884 = vmatpush2.bf16.msra.mxu0 %v2825
    %2885 = vmatprep.subr.bf16.mxu0 %v2824
    %2886 = vmatpush2.bf16.msra.mxu0 %v2823
    %2887 = vmatprep.subr.bf16.mxu0 %v2822
    %2888 = vmatpush2.bf16.msra.mxu0 %v2821
    %2889 = vmatprep.subr.bf16.mxu0 %v2820
    %2890 = vmatpush2.bf16.msra.mxu0 %v2819
    %2891 = vmatprep.subr.bf16.mxu0 %v2818
    %2892 = vmatpush2.bf16.msra.mxu0 %v2817
    %2893 = vmatprep.subr.bf16.mxu0 %v2816
    %2894 = vmatpush2.bf16.msra.mxu0 %v2815
    %2895 = vmatprep.mubr.bf16.mxu0 %v2694
    %2896 = vmatmul.mubr.bf16.gmra.mxu0 %v2693
    %v2897 = vpop.f32.mrf.mxu0
    %v2898 = vadd.f32 0.0, %v2897
    %v2899 = vpop.f32.mrf.mxu0
    %v2900 = vadd.f32 0.0, %v2899
    %v2901 = vpop.f32.mrf.mxu0
    %v2902 = vadd.f32 0.0, %v2901
    %v2903 = vpop.f32.mrf.mxu0
    %v2904 = vadd.f32 0.0, %v2903
    %2905 = vmatprep.mubr.bf16.mxu0 %v2696
    %2906 = vmatmul.mubr.bf16.gmra.mxu0 %v2695
    %v2907 = vpop.f32.mrf.mxu0
    %v2908 = vadd.f32 0.0, %v2907
    %v2909 = vpop.f32.mrf.mxu0
    %v2910 = vadd.f32 0.0, %v2909
    %v2911 = vpop.f32.mrf.mxu0
    %v2912 = vadd.f32 0.0, %v2911
    %v2913 = vpop.f32.mrf.mxu0
    %v2914 = vadd.f32 0.0, %v2913
    %2915 = vmatprep.mubr.bf16.mxu0 %v2698
    %2916 = vmatmul.mubr.bf16.gmra.mxu0 %v2697
    %v2917 = vpop.f32.mrf.mxu0
    %v2918 = vadd.f32 0.0, %v2917
    %v2919 = vpop.f32.mrf.mxu0
    %v2920 = vadd.f32 0.0, %v2919
    %v2921 = vpop.f32.mrf.mxu0
    %v2922 = vadd.f32 0.0, %v2921
    %v2923 = vpop.f32.mrf.mxu0
    %v2924 = vadd.f32 0.0, %v2923
    %2925 = vmatprep.mubr.bf16.mxu0 %v2700
    %2926 = vmatmul.mubr.bf16.gmra.mxu0 %v2699
    %v2927 = vpop.f32.mrf.mxu0
    %v2928 = vadd.f32 0.0, %v2927
    %v2929 = vpop.f32.mrf.mxu0
    %v2930 = vadd.f32 0.0, %v2929
    %v2931 = vpop.f32.mrf.mxu0
    %v2932 = vadd.f32 0.0, %v2931
    %v2933 = vpop.f32.mrf.mxu0
    %v2934 = vadd.f32 0.0, %v2933
    %2935 = vmatprep.mubr.bf16.mxu0 %v2702
    %2936 = vmatmul.mubr.bf16.gmra.mxu0 %v2701
    %v2937 = vpop.f32.mrf.mxu0
    %v2938 = vadd.f32 0.0, %v2937
    %v2939 = vpop.f32.mrf.mxu0
    %v2940 = vadd.f32 0.0, %v2939
    %v2941 = vpop.f32.mrf.mxu0
    %v2942 = vpop.f32.mrf.mxu0
    %2943 = vdwg.mxu0
    %v2944 = vadd.f32 %v341, %v2898
    %v2945 = vadd.f32 %v343, %v2900
    %v2946 = vadd.f32 %v345, %v2902
    %v2947 = vadd.f32 %v347, %v2904
    %v2948 = vadd.f32 %v351, %v2908
    %v2949 = vadd.f32 %v353, %v2910
    %v2950 = vadd.f32 %v355, %v2912
    %v2951 = vadd.f32 %v357, %v2914
    %v2952 = vadd.f32 %v361, %v2918
    %v2953 = vadd.f32 %v363, %v2920
    %v2954 = vadd.f32 %v365, %v2922
    %v2955 = vadd.f32 %v367, %v2924
    %v2956 = vadd.f32 %v371, %v2928
    %v2957 = vadd.f32 %v373, %v2930
    %v2958 = vadd.f32 %v375, %v2932
    %v2959 = vadd.f32 %v377, %v2934
    %v2960 = vadd.f32 %v381, %v2938
    %v2961 = vadd.f32 %v383, %v2940
    %v2963 = vlaneseq
    %v2964 = vshrl.u32 %v2963, 7
    %v2965 = vsub.s32 0, %v2964
    %v2966 = vrot.slane %v834, %v2965
    %v2967 = vlaneseq
    %v2968 = vshrl.u32 %v2967, 7
    %v2969 = vsub.s32 1, %v2968
    %v2970 = vrot.slane %v834, %v2969
    %v2973 = vadd.f32 %v2944, %v2966
    %v2974 = vadd.f32 %v2945, %v2970
    %v2975 = vadd.f32 %v2946, %v2966
    %v2976 = vadd.f32 %v2947, %v2970
    %v2977 = vadd.f32 %v2948, %v2966
    %v2978 = vadd.f32 %v2949, %v2970
    %v2979 = vadd.f32 %v2950, %v2966
    %v2980 = vadd.f32 %v2951, %v2970
    %v2981 = vadd.f32 %v2952, %v2966
    %v2982 = vadd.f32 %v2953, %v2970
    %v2983 = vadd.f32 %v2954, %v2966
    %v2984 = vadd.f32 %v2955, %v2970
    %v2985 = vadd.f32 %v2956, %v2966
    %v2986 = vadd.f32 %v2957, %v2970
    %v2987 = vadd.f32 %v2958, %v2966
    %v2988 = vadd.f32 %v2959, %v2970
    %v2989 = vadd.f32 %v2960, %v2966
    %v2990 = vadd.f32 %v2961, %v2970
    %v2991 = vpack.c.bf16 %v2975, %v2973
    %v2992 = vpack.c.bf16 %v2976, %v2974
    %v2993 = vpack.c.bf16 %v2979, %v2977
    %v2994 = vpack.c.bf16 %v2980, %v2978
    %v2995 = vpack.c.bf16 %v2983, %v2981
    %v2996 = vpack.c.bf16 %v2984, %v2982
    %v2997 = vpack.c.bf16 %v2987, %v2985
    %v2998 = vpack.c.bf16 %v2988, %v2986
    %v2999 = vpack.c.bf16 %v2989, %v2989
    %v3000 = vpack.c.bf16 %v2990, %v2990
    %3001 = vmatprep.subr.bf16.mxu0 %v966
    %3002 = vmatpush1.bf16.msra.mxu0 %v965
    %3003 = vmatprep.subr.bf16.mxu0 %v964
    %3004 = vmatpush1.bf16.msra.mxu0 %v963
    %3005 = vmatprep.subr.bf16.mxu0 %v962
    %3006 = vmatpush1.bf16.msra.mxu0 %v961
    %3007 = vmatprep.subr.bf16.mxu0 %v960
    %3008 = vmatpush1.bf16.msra.mxu0 %v959
    %3009 = vmatprep.subr.bf16.mxu0 %v958
    %3010 = vmatpush1.bf16.msra.mxu0 %v957
    %3011 = vmatprep.subr.bf16.mxu0 %v956
    %3012 = vmatpush1.bf16.msra.mxu0 %v955
    %3013 = vmatprep.subr.bf16.mxu0 %v954
    %3014 = vmatpush1.bf16.msra.mxu0 %v953
    %3015 = vmatprep.subr.bf16.mxu0 %v952
    %3016 = vmatpush1.bf16.msra.mxu0 %v951
    %3017 = vmatprep.subr.bf16.mxu0 %v982
    %3018 = vmatpush2.bf16.msra.mxu0 %v981
    %3019 = vmatprep.subr.bf16.mxu0 %v980
    %3020 = vmatpush2.bf16.msra.mxu0 %v979
    %3021 = vmatprep.subr.bf16.mxu0 %v978
    %3022 = vmatpush2.bf16.msra.mxu0 %v977
    %3023 = vmatprep.subr.bf16.mxu0 %v976
    %3024 = vmatpush2.bf16.msra.mxu0 %v975
    %3025 = vmatprep.subr.bf16.mxu0 %v974
    %3026 = vmatpush2.bf16.msra.mxu0 %v973
    %3027 = vmatprep.subr.bf16.mxu0 %v972
    %3028 = vmatpush2.bf16.msra.mxu0 %v971
    %3029 = vmatprep.subr.bf16.mxu0 %v970
    %3030 = vmatpush2.bf16.msra.mxu0 %v969
    %3031 = vmatprep.subr.bf16.mxu0 %v968
    %3032 = vmatpush2.bf16.msra.mxu0 %v967
    %3033 = vmatprep.mubr.bf16.mxu0 %v2992
    %3034 = vmatmul.mubr.bf16.gmra.mxu0 %v2991
    %v3035 = vpop.f32.mrf.mxu0
    %v3036 = vadd.f32 %v848, %v3035
    %v3037 = vpop.f32.mrf.mxu0
    %v3038 = vadd.f32 %v852, %v3037
    %v3039 = vpop.f32.mrf.mxu0
    %v3040 = vadd.f32 %v848, %v3039
    %v3041 = vpop.f32.mrf.mxu0
    %v3042 = vadd.f32 %v852, %v3041
    %3043 = vmatprep.mubr.bf16.mxu0 %v2994
    %3044 = vmatmul.mubr.bf16.gmra.mxu0 %v2993
    %v3045 = vpop.f32.mrf.mxu0
    %v3046 = vadd.f32 %v848, %v3045
    %v3047 = vpop.f32.mrf.mxu0
    %v3048 = vadd.f32 %v852, %v3047
    %v3049 = vpop.f32.mrf.mxu0
    %v3050 = vadd.f32 %v848, %v3049
    %v3051 = vpop.f32.mrf.mxu0
    %v3052 = vadd.f32 %v852, %v3051
    %3053 = vmatprep.mubr.bf16.mxu0 %v2996
    %3054 = vmatmul.mubr.bf16.gmra.mxu0 %v2995
    %v3055 = vpop.f32.mrf.mxu0
    %v3056 = vadd.f32 %v848, %v3055
    %v3057 = vpop.f32.mrf.mxu0
    %v3058 = vadd.f32 %v852, %v3057
    %v3059 = vpop.f32.mrf.mxu0
    %v3060 = vadd.f32 %v848, %v3059
    %v3061 = vpop.f32.mrf.mxu0
    %v3062 = vadd.f32 %v852, %v3061
    %3063 = vmatprep.mubr.bf16.mxu0 %v2998
    %3064 = vmatmul.mubr.bf16.gmra.mxu0 %v2997
    %v3065 = vpop.f32.mrf.mxu0
    %v3066 = vadd.f32 %v848, %v3065
    %v3067 = vpop.f32.mrf.mxu0
    %v3068 = vadd.f32 %v852, %v3067
    %v3069 = vpop.f32.mrf.mxu0
    %v3070 = vadd.f32 %v848, %v3069
    %v3071 = vpop.f32.mrf.mxu0
    %v3072 = vadd.f32 %v852, %v3071
    %3073 = vmatprep.mubr.bf16.mxu0 %v3000
    %3074 = vmatmul.mubr.bf16.gmra.mxu0 %v2999
    %v3075 = vpop.f32.mrf.mxu0
    %v3076 = vadd.f32 %v848, %v3075
    %v3077 = vpop.f32.mrf.mxu0
    %v3078 = vadd.f32 %v852, %v3077
    %v3079 = vpop.f32.mrf.mxu0
    %v3080 = vpop.f32.mrf.mxu0
    %3081 = vdwg.mxu0
    %v3082 = vmax.f32 %v3036, 0.0
    %v3083 = vmax.f32 %v3038, 0.0
    %v3084 = vmax.f32 %v3040, 0.0
    %v3085 = vmax.f32 %v3042, 0.0
    %v3086 = vmax.f32 %v3046, 0.0
    %v3087 = vmax.f32 %v3048, 0.0
    %v3088 = vmax.f32 %v3050, 0.0
    %v3089 = vmax.f32 %v3052, 0.0
    %v3090 = vmax.f32 %v3056, 0.0
    %v3091 = vmax.f32 %v3058, 0.0
    %v3092 = vmax.f32 %v3060, 0.0
    %v3093 = vmax.f32 %v3062, 0.0
    %v3094 = vmax.f32 %v3066, 0.0
    %v3095 = vmax.f32 %v3068, 0.0
    %v3096 = vmax.f32 %v3070, 0.0
    %v3097 = vmax.f32 %v3072, 0.0
    %v3098 = vmax.f32 %v3076, 0.0
    %v3099 = vmax.f32 %v3078, 0.0
    %v3100 = vrot.slane %v3082, 7
    %v3101 = vrot.slane %v3083, 7
    %v3102 = vrot.slane %v3084, 7
    %v3103 = vrot.slane %v3085, 7
    %v3104 = vrot.slane %v3086, 7
    %v3105 = vrot.slane %v3087, 7
    %v3106 = vrot.slane %v3088, 7
    %v3107 = vrot.slane %v3089, 7
    %v3108 = vrot.slane %v3090, 7
    %v3109 = vrot.slane %v3091, 7
    %v3110 = vrot.slane %v3092, 7
    %v3111 = vrot.slane %v3093, 7
    %v3112 = vrot.slane %v3094, 7
    %v3113 = vrot.slane %v3095, 7
    %v3114 = vrot.slane %v3096, 7
    %v3115 = vrot.slane %v3097, 7
    %v3116 = vrot.slane %v3098, 7
    %v3117 = vrot.slane %v3099, 7
    %v3118 = vsel %vm1134, %v3114, %v3116
    %v3119 = vsel %vm1134, %v3115, %v3117
    %v3120 = vsel %vm1134, %v3112, %v3114
    %v3121 = vsel %vm1134, %v3113, %v3115
    %v3122 = vsel %vm1134, %v3110, %v3112
    %v3123 = vsel %vm1134, %v3111, %v3113
    %v3124 = vsel %vm1134, %v3108, %v3110
    %v3125 = vsel %vm1134, %v3109, %v3111
    %v3126 = vsel %vm1134, %v3106, %v3108
    %v3127 = vsel %vm1134, %v3107, %v3109
    %v3128 = vsel %vm1134, %v3104, %v3106
    %v3129 = vsel %vm1134, %v3105, %v3107
    %v3130 = vsel %vm1134, %v3102, %v3104
    %v3131 = vsel %vm1134, %v3103, %v3105
    %v3132 = vsel %vm1134, %v3100, %v3102
    %v3133 = vsel %vm1134, %v3101, %v3103
    %v3134 = vsel %vm1134, %v3116, %v3100
    %v3135 = vsel %vm1134, %v3117, %v3101
    %v3136 = vmul.f32 %v3134, %v1156
    %v3137 = vmul.f32 %v3135, %v1156
    %v3138 = vmul.f32 %v3132, %v1161
    %v3139 = vmul.f32 %v3133, %v1161
    %v3140 = vmul.f32 %v3130, %v1166
    %v3141 = vmul.f32 %v3131, %v1166
    %v3142 = vmul.f32 %v3128, %v1171
    %v3143 = vmul.f32 %v3129, %v1171
    %v3144 = vmul.f32 %v3126, %v1176
    %v3145 = vmul.f32 %v3127, %v1176
    %v3146 = vmul.f32 %v3124, %v1181
    %v3147 = vmul.f32 %v3125, %v1181
    %v3148 = vmul.f32 %v3122, %v1186
    %v3149 = vmul.f32 %v3123, %v1186
    %v3150 = vmul.f32 %v3120, %v1191
    %v3151 = vmul.f32 %v3121, %v1191
    %v3152 = vmul.f32 %v3118, %v1196
    %v3153 = vmul.f32 %v3119, %v1196
    %v3154 = vrot.slane %v3082, 1
    %v3155 = vrot.slane %v3083, 1
    %v3156 = vrot.slane %v3084, 1
    %v3157 = vrot.slane %v3085, 1
    %v3158 = vrot.slane %v3086, 1
    %v3159 = vrot.slane %v3087, 1
    %v3160 = vrot.slane %v3088, 1
    %v3161 = vrot.slane %v3089, 1
    %v3162 = vrot.slane %v3090, 1
    %v3163 = vrot.slane %v3091, 1
    %v3164 = vrot.slane %v3092, 1
    %v3165 = vrot.slane %v3093, 1
    %v3166 = vrot.slane %v3094, 1
    %v3167 = vrot.slane %v3095, 1
    %v3168 = vrot.slane %v3096, 1
    %v3169 = vrot.slane %v3097, 1
    %v3170 = vrot.slane %v3098, 1
    %v3171 = vrot.slane %v3099, 1
    %v3172 = vsel %vm1234, %v3168, %v3170
    %v3173 = vsel %vm1234, %v3169, %v3171
    %v3174 = vsel %vm1234, %v3166, %v3168
    %v3175 = vsel %vm1234, %v3167, %v3169
    %v3176 = vsel %vm1234, %v3164, %v3166
    %v3177 = vsel %vm1234, %v3165, %v3167
    %v3178 = vsel %vm1234, %v3162, %v3164
    %v3179 = vsel %vm1234, %v3163, %v3165
    %v3180 = vsel %vm1234, %v3160, %v3162
    %v3181 = vsel %vm1234, %v3161, %v3163
    %v3182 = vsel %vm1234, %v3158, %v3160
    %v3183 = vsel %vm1234, %v3159, %v3161
    %v3184 = vsel %vm1234, %v3156, %v3158
    %v3185 = vsel %vm1234, %v3157, %v3159
    %v3186 = vsel %vm1234, %v3154, %v3156
    %v3187 = vsel %vm1234, %v3155, %v3157
    %v3188 = vsel %vm1234, %v3170, %v3154
    %v3189 = vsel %vm1234, %v3171, %v3155
    %v3190 = vmul.f32 %v3186, %v1255
    %v3191 = vmul.f32 %v3187, %v1255
    %v3192 = vmul.f32 %v3184, %v1259
    %v3193 = vmul.f32 %v3185, %v1259
    %v3194 = vmul.f32 %v3182, %v1263
    %v3195 = vmul.f32 %v3183, %v1263
    %v3196 = vmul.f32 %v3180, %v1267
    %v3197 = vmul.f32 %v3181, %v1267
    %v3198 = vmul.f32 %v3178, %v1271
    %v3199 = vmul.f32 %v3179, %v1271
    %v3200 = vmul.f32 %v3176, %v1275
    %v3201 = vmul.f32 %v3177, %v1275
    %v3202 = vmul.f32 %v3174, %v1279
    %v3203 = vmul.f32 %v3175, %v1279
    %v3204 = vmul.f32 %v3172, %v1283
    %v3205 = vmul.f32 %v3173, %v1283
    %v3206 = vmul.f32 %v3188, %v1287
    %v3207 = vmul.f32 %v3189, %v1287
    %v3208 = vpack.c.bf16 %v3138, %v3136
    %v3209 = vpack.c.bf16 %v3139, %v3137
    %v3210 = vpack.c.bf16 %v3142, %v3140
    %v3211 = vpack.c.bf16 %v3143, %v3141
    %v3212 = vpack.c.bf16 %v3146, %v3144
    %v3213 = vpack.c.bf16 %v3147, %v3145
    %v3214 = vpack.c.bf16 %v3150, %v3148
    %v3215 = vpack.c.bf16 %v3151, %v3149
    %v3216 = vpack.c.bf16 %v3152, %v3152
    %v3217 = vpack.c.bf16 %v3153, %v3153
    %v3218 = vpack.c.bf16 %v3084, %v3082
    %v3219 = vpack.c.bf16 %v3085, %v3083
    %v3220 = vpack.c.bf16 %v3088, %v3086
    %v3221 = vpack.c.bf16 %v3089, %v3087
    %v3222 = vpack.c.bf16 %v3092, %v3090
    %v3223 = vpack.c.bf16 %v3093, %v3091
    %v3224 = vpack.c.bf16 %v3096, %v3094
    %v3225 = vpack.c.bf16 %v3097, %v3095
    %v3226 = vpack.c.bf16 %v3098, %v3098
    %v3227 = vpack.c.bf16 %v3099, %v3099
    %v3228 = vpack.c.bf16 %v3192, %v3190
    %v3229 = vpack.c.bf16 %v3193, %v3191
    %v3230 = vpack.c.bf16 %v3196, %v3194
    %v3231 = vpack.c.bf16 %v3197, %v3195
    %v3232 = vpack.c.bf16 %v3200, %v3198
    %v3233 = vpack.c.bf16 %v3201, %v3199
    %v3234 = vpack.c.bf16 %v3204, %v3202
    %v3235 = vpack.c.bf16 %v3205, %v3203
    %v3236 = vpack.c.bf16 %v3206, %v3206
    %v3237 = vpack.c.bf16 %v3207, %v3207
    %3238 = vmatprep.subr.bf16.mxu0 %v1651
    %3239 = vmatpush1.bf16.msra.mxu0 %v1650
    %3240 = vmatprep.subr.bf16.mxu0 %v1649
    %3241 = vmatpush1.bf16.msra.mxu0 %v1648
    %3242 = vmatprep.subr.bf16.mxu0 %v1647
    %3243 = vmatpush1.bf16.msra.mxu0 %v1646
    %3244 = vmatprep.subr.bf16.mxu0 %v1645
    %3245 = vmatpush1.bf16.msra.mxu0 %v1644
    %3246 = vmatprep.subr.bf16.mxu0 %v1643
    %3247 = vmatpush1.bf16.msra.mxu0 %v1642
    %3248 = vmatprep.subr.bf16.mxu0 %v1641
    %3249 = vmatpush1.bf16.msra.mxu0 %v1640
    %3250 = vmatprep.subr.bf16.mxu0 %v1639
    %3251 = vmatpush1.bf16.msra.mxu0 %v1638
    %3252 = vmatprep.subr.bf16.mxu0 %v1637
    %3253 = vmatpush1.bf16.msra.mxu0 %v1636
    %3254 = vmatprep.subr.bf16.mxu0 %v1667
    %3255 = vmatpush2.bf16.msra.mxu0 %v1666
    %3256 = vmatprep.subr.bf16.mxu0 %v1665
    %3257 = vmatpush2.bf16.msra.mxu0 %v1664
    %3258 = vmatprep.subr.bf16.mxu0 %v1663
    %3259 = vmatpush2.bf16.msra.mxu0 %v1662
    %3260 = vmatprep.subr.bf16.mxu0 %v1661
    %3261 = vmatpush2.bf16.msra.mxu0 %v1660
    %3262 = vmatprep.subr.bf16.mxu0 %v1659
    %3263 = vmatpush2.bf16.msra.mxu0 %v1658
    %3264 = vmatprep.subr.bf16.mxu0 %v1657
    %3265 = vmatpush2.bf16.msra.mxu0 %v1656
    %3266 = vmatprep.subr.bf16.mxu0 %v1655
    %3267 = vmatpush2.bf16.msra.mxu0 %v1654
    %3268 = vmatprep.subr.bf16.mxu0 %v1653
    %3269 = vmatpush2.bf16.msra.mxu0 %v1652
    %3270 = vmatprep.mubr.bf16.mxu0 %v3209
    %3271 = vmatmul.mubr.bf16.gmra.mxu0 %v3208
    %v3272 = vpop.f32.mrf.mxu0
    %v3273 = vadd.f32 %v1341, %v3272
    %v3274 = vpop.f32.mrf.mxu0
    %v3275 = vadd.f32 %v1345, %v3274
    %v3276 = vpop.f32.mrf.mxu0
    %v3277 = vadd.f32 %v1341, %v3276
    %v3278 = vpop.f32.mrf.mxu0
    %v3279 = vadd.f32 %v1345, %v3278
    %3280 = vmatprep.mubr.bf16.mxu0 %v3211
    %3281 = vmatmul.mubr.bf16.gmra.mxu0 %v3210
    %v3282 = vpop.f32.mrf.mxu0
    %v3283 = vadd.f32 %v1341, %v3282
    %v3284 = vpop.f32.mrf.mxu0
    %v3285 = vadd.f32 %v1345, %v3284
    %v3286 = vpop.f32.mrf.mxu0
    %v3287 = vadd.f32 %v1341, %v3286
    %v3288 = vpop.f32.mrf.mxu0
    %v3289 = vadd.f32 %v1345, %v3288
    %3290 = vmatprep.mubr.bf16.mxu0 %v3213
    %3291 = vmatmul.mubr.bf16.gmra.mxu0 %v3212
    %v3292 = vpop.f32.mrf.mxu0
    %v3293 = vadd.f32 %v1341, %v3292
    %v3294 = vpop.f32.mrf.mxu0
    %v3295 = vadd.f32 %v1345, %v3294
    %v3296 = vpop.f32.mrf.mxu0
    %v3297 = vadd.f32 %v1341, %v3296
    %v3298 = vpop.f32.mrf.mxu0
    %v3299 = vadd.f32 %v1345, %v3298
    %3300 = vmatprep.mubr.bf16.mxu0 %v3215
    %3301 = vmatmul.mubr.bf16.gmra.mxu0 %v3214
    %v3302 = vpop.f32.mrf.mxu0
    %v3303 = vadd.f32 %v1341, %v3302
    %v3304 = vpop.f32.mrf.mxu0
    %v3305 = vadd.f32 %v1345, %v3304
    %v3306 = vpop.f32.mrf.mxu0
    %v3307 = vadd.f32 %v1341, %v3306
    %v3308 = vpop.f32.mrf.mxu0
    %v3309 = vadd.f32 %v1345, %v3308
    %3310 = vmatprep.mubr.bf16.mxu0 %v3217
    %3311 = vmatmul.mubr.bf16.gmra.mxu0 %v3216
    %v3312 = vpop.f32.mrf.mxu0
    %v3313 = vadd.f32 %v1341, %v3312
    %v3314 = vpop.f32.mrf.mxu0
    %v3315 = vadd.f32 %v1345, %v3314
    %v3316 = vpop.f32.mrf.mxu0
    %v3317 = vpop.f32.mrf.mxu0
    %3318 = vdwg.mxu0
    %3319 = vmatprep.subr.bf16.mxu0 %v1683
    %3320 = vmatpush1.bf16.msra.mxu0 %v1682
    %3321 = vmatprep.subr.bf16.mxu0 %v1681
    %3322 = vmatpush1.bf16.msra.mxu0 %v1680
    %3323 = vmatprep.subr.bf16.mxu0 %v1679
    %3324 = vmatpush1.bf16.msra.mxu0 %v1678
    %3325 = vmatprep.subr.bf16.mxu0 %v1677
    %3326 = vmatpush1.bf16.msra.mxu0 %v1676
    %3327 = vmatprep.subr.bf16.mxu0 %v1675
    %3328 = vmatpush1.bf16.msra.mxu0 %v1674
    %3329 = vmatprep.subr.bf16.mxu0 %v1673
    %3330 = vmatpush1.bf16.msra.mxu0 %v1672
    %3331 = vmatprep.subr.bf16.mxu0 %v1671
    %3332 = vmatpush1.bf16.msra.mxu0 %v1670
    %3333 = vmatprep.subr.bf16.mxu0 %v1669
    %3334 = vmatpush1.bf16.msra.mxu0 %v1668
    %3335 = vmatprep.subr.bf16.mxu0 %v1699
    %3336 = vmatpush2.bf16.msra.mxu0 %v1698
    %3337 = vmatprep.subr.bf16.mxu0 %v1697
    %3338 = vmatpush2.bf16.msra.mxu0 %v1696
    %3339 = vmatprep.subr.bf16.mxu0 %v1695
    %3340 = vmatpush2.bf16.msra.mxu0 %v1694
    %3341 = vmatprep.subr.bf16.mxu0 %v1693
    %3342 = vmatpush2.bf16.msra.mxu0 %v1692
    %3343 = vmatprep.subr.bf16.mxu0 %v1691
    %3344 = vmatpush2.bf16.msra.mxu0 %v1690
    %3345 = vmatprep.subr.bf16.mxu0 %v1689
    %3346 = vmatpush2.bf16.msra.mxu0 %v1688
    %3347 = vmatprep.subr.bf16.mxu0 %v1687
    %3348 = vmatpush2.bf16.msra.mxu0 %v1686
    %3349 = vmatprep.subr.bf16.mxu0 %v1685
    %3350 = vmatpush2.bf16.msra.mxu0 %v1684
    %3351 = vmatprep.mubr.bf16.mxu0 %v3219
    %3352 = vmatmul.mubr.bf16.gmra.mxu0 %v3218
    %v3353 = vpop.f32.mrf.mxu0
    %v3354 = vadd.f32 %v3273, %v3353
    %v3355 = vpop.f32.mrf.mxu0
    %v3356 = vadd.f32 %v3275, %v3355
    %v3357 = vpop.f32.mrf.mxu0
    %v3358 = vadd.f32 %v3277, %v3357
    %v3359 = vpop.f32.mrf.mxu0
    %v3360 = vadd.f32 %v3279, %v3359
    %3361 = vmatprep.mubr.bf16.mxu0 %v3221
    %3362 = vmatmul.mubr.bf16.gmra.mxu0 %v3220
    %v3363 = vpop.f32.mrf.mxu0
    %v3364 = vadd.f32 %v3283, %v3363
    %v3365 = vpop.f32.mrf.mxu0
    %v3366 = vadd.f32 %v3285, %v3365
    %v3367 = vpop.f32.mrf.mxu0
    %v3368 = vadd.f32 %v3287, %v3367
    %v3369 = vpop.f32.mrf.mxu0
    %v3370 = vadd.f32 %v3289, %v3369
    %3371 = vmatprep.mubr.bf16.mxu0 %v3223
    %3372 = vmatmul.mubr.bf16.gmra.mxu0 %v3222
    %v3373 = vpop.f32.mrf.mxu0
    %v3374 = vadd.f32 %v3293, %v3373
    %v3375 = vpop.f32.mrf.mxu0
    %v3376 = vadd.f32 %v3295, %v3375
    %v3377 = vpop.f32.mrf.mxu0
    %v3378 = vadd.f32 %v3297, %v3377
    %v3379 = vpop.f32.mrf.mxu0
    %v3380 = vadd.f32 %v3299, %v3379
    %3381 = vmatprep.mubr.bf16.mxu0 %v3225
    %3382 = vmatmul.mubr.bf16.gmra.mxu0 %v3224
    %v3383 = vpop.f32.mrf.mxu0
    %v3384 = vadd.f32 %v3303, %v3383
    %v3385 = vpop.f32.mrf.mxu0
    %v3386 = vadd.f32 %v3305, %v3385
    %v3387 = vpop.f32.mrf.mxu0
    %v3388 = vadd.f32 %v3307, %v3387
    %v3389 = vpop.f32.mrf.mxu0
    %v3390 = vadd.f32 %v3309, %v3389
    %3391 = vmatprep.mubr.bf16.mxu0 %v3227
    %3392 = vmatmul.mubr.bf16.gmra.mxu0 %v3226
    %v3393 = vpop.f32.mrf.mxu0
    %v3394 = vadd.f32 %v3313, %v3393
    %v3395 = vpop.f32.mrf.mxu0
    %v3396 = vadd.f32 %v3315, %v3395
    %v3397 = vpop.f32.mrf.mxu0
    %v3398 = vpop.f32.mrf.mxu0
    %3399 = vdwg.mxu0
    %3400 = vmatprep.subr.bf16.mxu0 %v1715
    %3401 = vmatpush1.bf16.msra.mxu0 %v1714
    %3402 = vmatprep.subr.bf16.mxu0 %v1713
    %3403 = vmatpush1.bf16.msra.mxu0 %v1712
    %3404 = vmatprep.subr.bf16.mxu0 %v1711
    %3405 = vmatpush1.bf16.msra.mxu0 %v1710
    %3406 = vmatprep.subr.bf16.mxu0 %v1709
    %3407 = vmatpush1.bf16.msra.mxu0 %v1708
    %3408 = vmatprep.subr.bf16.mxu0 %v1707
    %3409 = vmatpush1.bf16.msra.mxu0 %v1706
    %3410 = vmatprep.subr.bf16.mxu0 %v1705
    %3411 = vmatpush1.bf16.msra.mxu0 %v1704
    %3412 = vmatprep.subr.bf16.mxu0 %v1703
    %3413 = vmatpush1.bf16.msra.mxu0 %v1702
    %3414 = vmatprep.subr.bf16.mxu0 %v1701
    %3415 = vmatpush1.bf16.msra.mxu0 %v1700
    %3416 = vmatprep.subr.bf16.mxu0 %v1731
    %3417 = vmatpush2.bf16.msra.mxu0 %v1730
    %3418 = vmatprep.subr.bf16.mxu0 %v1729
    %3419 = vmatpush2.bf16.msra.mxu0 %v1728
    %3420 = vmatprep.subr.bf16.mxu0 %v1727
    %3421 = vmatpush2.bf16.msra.mxu0 %v1726
    %3422 = vmatprep.subr.bf16.mxu0 %v1725
    %3423 = vmatpush2.bf16.msra.mxu0 %v1724
    %3424 = vmatprep.subr.bf16.mxu0 %v1723
    %3425 = vmatpush2.bf16.msra.mxu0 %v1722
    %3426 = vmatprep.subr.bf16.mxu0 %v1721
    %3427 = vmatpush2.bf16.msra.mxu0 %v1720
    %3428 = vmatprep.subr.bf16.mxu0 %v1719
    %3429 = vmatpush2.bf16.msra.mxu0 %v1718
    %3430 = vmatprep.subr.bf16.mxu0 %v1717
    %3431 = vmatpush2.bf16.msra.mxu0 %v1716
    %3432 = vmatprep.mubr.bf16.mxu0 %v3229
    %3433 = vmatmul.mubr.bf16.gmra.mxu0 %v3228
    %v3434 = vpop.f32.mrf.mxu0
    %v3435 = vadd.f32 %v3354, %v3434
    %v3436 = vpop.f32.mrf.mxu0
    %v3437 = vadd.f32 %v3356, %v3436
    %v3438 = vpop.f32.mrf.mxu0
    %v3439 = vadd.f32 %v3358, %v3438
    %v3440 = vpop.f32.mrf.mxu0
    %v3441 = vadd.f32 %v3360, %v3440
    %3442 = vmatprep.mubr.bf16.mxu0 %v3231
    %3443 = vmatmul.mubr.bf16.gmra.mxu0 %v3230
    %v3444 = vpop.f32.mrf.mxu0
    %v3445 = vadd.f32 %v3364, %v3444
    %v3446 = vpop.f32.mrf.mxu0
    %v3447 = vadd.f32 %v3366, %v3446
    %v3448 = vpop.f32.mrf.mxu0
    %v3449 = vadd.f32 %v3368, %v3448
    %v3450 = vpop.f32.mrf.mxu0
    %v3451 = vadd.f32 %v3370, %v3450
    %3452 = vmatprep.mubr.bf16.mxu0 %v3233
    %3453 = vmatmul.mubr.bf16.gmra.mxu0 %v3232
    %v3454 = vpop.f32.mrf.mxu0
    %v3455 = vadd.f32 %v3374, %v3454
    %v3456 = vpop.f32.mrf.mxu0
    %v3457 = vadd.f32 %v3376, %v3456
    %v3458 = vpop.f32.mrf.mxu0
    %v3459 = vadd.f32 %v3378, %v3458
    %v3460 = vpop.f32.mrf.mxu0
    %v3461 = vadd.f32 %v3380, %v3460
    %3462 = vmatprep.mubr.bf16.mxu0 %v3235
    %3463 = vmatmul.mubr.bf16.gmra.mxu0 %v3234
    %v3464 = vpop.f32.mrf.mxu0
    %v3465 = vadd.f32 %v3384, %v3464
    %v3466 = vpop.f32.mrf.mxu0
    %v3467 = vadd.f32 %v3386, %v3466
    %v3468 = vpop.f32.mrf.mxu0
    %v3469 = vadd.f32 %v3388, %v3468
    %v3470 = vpop.f32.mrf.mxu0
    %v3471 = vadd.f32 %v3390, %v3470
    %3472 = vmatprep.mubr.bf16.mxu0 %v3237
    %3473 = vmatmul.mubr.bf16.gmra.mxu0 %v3236
    %v3474 = vpop.f32.mrf.mxu0
    %v3475 = vadd.f32 %v3394, %v3474
    %v3476 = vpop.f32.mrf.mxu0
    %v3477 = vadd.f32 %v3396, %v3476
    %v3478 = vpop.f32.mrf.mxu0
    %v3479 = vpop.f32.mrf.mxu0
    %3480 = vdwg.mxu0
    %v3481 = vrot.slane %v3435, 6
    %v3482 = vrot.slane %v3437, 6
    %v3483 = vrot.slane %v3439, 6
    %v3484 = vrot.slane %v3441, 6
    %v3485 = vrot.slane %v3445, 6
    %v3486 = vrot.slane %v3447, 6
    %v3487 = vrot.slane %v3449, 6
    %v3488 = vrot.slane %v3451, 6
    %v3489 = vrot.slane %v3455, 6
    %v3490 = vrot.slane %v3457, 6
    %v3491 = vrot.slane %v3459, 6
    %v3492 = vrot.slane %v3461, 6
    %v3493 = vrot.slane %v3465, 6
    %v3494 = vrot.slane %v3467, 6
    %v3495 = vrot.slane %v3469, 6
    %v3496 = vrot.slane %v3471, 6
    %v3497 = vrot.slane %v3475, 6
    %v3498 = vrot.slane %v3477, 6
    %v3499 = vsel %vm2089, %v3495, %v3497
    %v3500 = vsel %vm2089, %v3496, %v3498
    %v3501 = vsel %vm2089, %v3493, %v3495
    %v3502 = vsel %vm2089, %v3494, %v3496
    %v3503 = vsel %vm2089, %v3491, %v3493
    %v3504 = vsel %vm2089, %v3492, %v3494
    %v3505 = vsel %vm2089, %v3489, %v3491
    %v3506 = vsel %vm2089, %v3490, %v3492
    %v3507 = vsel %vm2089, %v3487, %v3489
    %v3508 = vsel %vm2089, %v3488, %v3490
    %v3509 = vsel %vm2089, %v3485, %v3487
    %v3510 = vsel %vm2089, %v3486, %v3488
    %v3511 = vsel %vm2089, %v3483, %v3485
    %v3512 = vsel %vm2089, %v3484, %v3486
    %v3513 = vsel %vm2089, %v3481, %v3483
    %v3514 = vsel %vm2089, %v3482, %v3484
    %v3515 = vsel %vm2089, %v3497, %v3481
    %v3516 = vsel %vm2089, %v3498, %v3482
    %v3517 = vmul.f32 %v3513, %v2110
    %v3518 = vmul.f32 %v3514, %v2110
    %v3519 = vmul.f32 %v3511, %v2114
    %v3520 = vmul.f32 %v3512, %v2114
    %v3521 = vmul.f32 %v3509, %v2118
    %v3522 = vmul.f32 %v3510, %v2118
    %v3523 = vmul.f32 %v3507, %v2122
    %v3524 = vmul.f32 %v3508, %v2122
    %v3525 = vmul.f32 %v3505, %v2126
    %v3526 = vmul.f32 %v3506, %v2126
    %v3527 = vmul.f32 %v3503, %v2130
    %v3528 = vmul.f32 %v3504, %v2130
    %v3529 = vmul.f32 %v3501, %v2134
    %v3530 = vmul.f32 %v3502, %v2134
    %v3531 = vmul.f32 %v3499, %v2138
    %v3532 = vmul.f32 %v3500, %v2138
    %v3533 = vmul.f32 %v3515, %v2142
    %v3534 = vmul.f32 %v3516, %v2142
    %v3535 = vpack.c.bf16 %v3439, %v3435
    %v3536 = vpack.c.bf16 %v3441, %v3437
    %v3537 = vpack.c.bf16 %v3449, %v3445
    %v3538 = vpack.c.bf16 %v3451, %v3447
    %v3539 = vpack.c.bf16 %v3459, %v3455
    %v3540 = vpack.c.bf16 %v3461, %v3457
    %v3541 = vpack.c.bf16 %v3469, %v3465
    %v3542 = vpack.c.bf16 %v3471, %v3467
    %v3543 = vpack.c.bf16 %v3475, %v3475
    %v3544 = vpack.c.bf16 %v3477, %v3477
    %v3545 = vpack.c.bf16 %v3519, %v3517
    %v3546 = vpack.c.bf16 %v3520, %v3518
    %v3547 = vpack.c.bf16 %v3523, %v3521
    %v3548 = vpack.c.bf16 %v3524, %v3522
    %v3549 = vpack.c.bf16 %v3527, %v3525
    %v3550 = vpack.c.bf16 %v3528, %v3526
    %v3551 = vpack.c.bf16 %v3531, %v3529
    %v3552 = vpack.c.bf16 %v3532, %v3530
    %v3553 = vpack.c.bf16 %v3533, %v3533
    %v3554 = vpack.c.bf16 %v3534, %v3534
    %3555 = vmatprep.subr.bf16.mxu0 %v2400
    %3556 = vmatpush1.bf16.msra.mxu0 %v2399
    %3557 = vmatprep.subr.bf16.mxu0 %v2398
    %3558 = vmatpush1.bf16.msra.mxu0 %v2397
    %3559 = vmatprep.subr.bf16.mxu0 %v2396
    %3560 = vmatpush1.bf16.msra.mxu0 %v2395
    %3561 = vmatprep.subr.bf16.mxu0 %v2394
    %3562 = vmatpush1.bf16.msra.mxu0 %v2393
    %3563 = vmatprep.subr.bf16.mxu0 %v2392
    %3564 = vmatpush1.bf16.msra.mxu0 %v2391
    %3565 = vmatprep.subr.bf16.mxu0 %v2390
    %3566 = vmatpush1.bf16.msra.mxu0 %v2389
    %3567 = vmatprep.subr.bf16.mxu0 %v2388
    %3568 = vmatpush1.bf16.msra.mxu0 %v2387
    %3569 = vmatprep.subr.bf16.mxu0 %v2386
    %3570 = vmatpush1.bf16.msra.mxu0 %v2385
    %3571 = vmatprep.subr.bf16.mxu0 %v2416
    %3572 = vmatpush2.bf16.msra.mxu0 %v2415
    %3573 = vmatprep.subr.bf16.mxu0 %v2414
    %3574 = vmatpush2.bf16.msra.mxu0 %v2413
    %3575 = vmatprep.subr.bf16.mxu0 %v2412
    %3576 = vmatpush2.bf16.msra.mxu0 %v2411
    %3577 = vmatprep.subr.bf16.mxu0 %v2410
    %3578 = vmatpush2.bf16.msra.mxu0 %v2409
    %3579 = vmatprep.subr.bf16.mxu0 %v2408
    %3580 = vmatpush2.bf16.msra.mxu0 %v2407
    %3581 = vmatprep.subr.bf16.mxu0 %v2406
    %3582 = vmatpush2.bf16.msra.mxu0 %v2405
    %3583 = vmatprep.subr.bf16.mxu0 %v2404
    %3584 = vmatpush2.bf16.msra.mxu0 %v2403
    %3585 = vmatprep.subr.bf16.mxu0 %v2402
    %3586 = vmatpush2.bf16.msra.mxu0 %v2401
    %3587 = vmatprep.mubr.bf16.mxu0 %v3536
    %3588 = vmatmul.mubr.bf16.gmra.mxu0 %v3535
    %v3589 = vpop.f32.mrf.mxu0
    %v3590 = vadd.f32 %v2186, %v3589
    %v3591 = vpop.f32.mrf.mxu0
    %v3592 = vadd.f32 %v2190, %v3591
    %v3593 = vpop.f32.mrf.mxu0
    %v3594 = vadd.f32 %v2186, %v3593
    %v3595 = vpop.f32.mrf.mxu0
    %v3596 = vadd.f32 %v2190, %v3595
    %3597 = vmatprep.mubr.bf16.mxu0 %v3538
    %3598 = vmatmul.mubr.bf16.gmra.mxu0 %v3537
    %v3599 = vpop.f32.mrf.mxu0
    %v3600 = vadd.f32 %v2186, %v3599
    %v3601 = vpop.f32.mrf.mxu0
    %v3602 = vadd.f32 %v2190, %v3601
    %v3603 = vpop.f32.mrf.mxu0
    %v3604 = vadd.f32 %v2186, %v3603
    %v3605 = vpop.f32.mrf.mxu0
    %v3606 = vadd.f32 %v2190, %v3605
    %3607 = vmatprep.mubr.bf16.mxu0 %v3540
    %3608 = vmatmul.mubr.bf16.gmra.mxu0 %v3539
    %v3609 = vpop.f32.mrf.mxu0
    %v3610 = vadd.f32 %v2186, %v3609
    %v3611 = vpop.f32.mrf.mxu0
    %v3612 = vadd.f32 %v2190, %v3611
    %v3613 = vpop.f32.mrf.mxu0
    %v3614 = vadd.f32 %v2186, %v3613
    %v3615 = vpop.f32.mrf.mxu0
    %v3616 = vadd.f32 %v2190, %v3615
    %3617 = vmatprep.mubr.bf16.mxu0 %v3542
    %3618 = vmatmul.mubr.bf16.gmra.mxu0 %v3541
    %v3619 = vpop.f32.mrf.mxu0
    %v3620 = vadd.f32 %v2186, %v3619
    %v3621 = vpop.f32.mrf.mxu0
    %v3622 = vadd.f32 %v2190, %v3621
    %v3623 = vpop.f32.mrf.mxu0
    %v3624 = vadd.f32 %v2186, %v3623
    %v3625 = vpop.f32.mrf.mxu0
    %v3626 = vadd.f32 %v2190, %v3625
    %3627 = vmatprep.mubr.bf16.mxu0 %v3544
    %3628 = vmatmul.mubr.bf16.gmra.mxu0 %v3543
    %v3629 = vpop.f32.mrf.mxu0
    %v3630 = vadd.f32 %v2186, %v3629
    %v3631 = vpop.f32.mrf.mxu0
    %v3632 = vadd.f32 %v2190, %v3631
    %v3633 = vpop.f32.mrf.mxu0
    %v3634 = vpop.f32.mrf.mxu0
    %3635 = vdwg.mxu0
    %3636 = vmatprep.subr.bf16.mxu0 %v2432
    %3637 = vmatpush1.bf16.msra.mxu0 %v2431
    %3638 = vmatprep.subr.bf16.mxu0 %v2430
    %3639 = vmatpush1.bf16.msra.mxu0 %v2429
    %3640 = vmatprep.subr.bf16.mxu0 %v2428
    %3641 = vmatpush1.bf16.msra.mxu0 %v2427
    %3642 = vmatprep.subr.bf16.mxu0 %v2426
    %3643 = vmatpush1.bf16.msra.mxu0 %v2425
    %3644 = vmatprep.subr.bf16.mxu0 %v2424
    %3645 = vmatpush1.bf16.msra.mxu0 %v2423
    %3646 = vmatprep.subr.bf16.mxu0 %v2422
    %3647 = vmatpush1.bf16.msra.mxu0 %v2421
    %3648 = vmatprep.subr.bf16.mxu0 %v2420
    %3649 = vmatpush1.bf16.msra.mxu0 %v2419
    %3650 = vmatprep.subr.bf16.mxu0 %v2418
    %3651 = vmatpush1.bf16.msra.mxu0 %v2417
    %3652 = vmatprep.subr.bf16.mxu0 %v2448
    %3653 = vmatpush2.bf16.msra.mxu0 %v2447
    %3654 = vmatprep.subr.bf16.mxu0 %v2446
    %3655 = vmatpush2.bf16.msra.mxu0 %v2445
    %3656 = vmatprep.subr.bf16.mxu0 %v2444
    %3657 = vmatpush2.bf16.msra.mxu0 %v2443
    %3658 = vmatprep.subr.bf16.mxu0 %v2442
    %3659 = vmatpush2.bf16.msra.mxu0 %v2441
    %3660 = vmatprep.subr.bf16.mxu0 %v2440
    %3661 = vmatpush2.bf16.msra.mxu0 %v2439
    %3662 = vmatprep.subr.bf16.mxu0 %v2438
    %3663 = vmatpush2.bf16.msra.mxu0 %v2437
    %3664 = vmatprep.subr.bf16.mxu0 %v2436
    %3665 = vmatpush2.bf16.msra.mxu0 %v2435
    %3666 = vmatprep.subr.bf16.mxu0 %v2434
    %3667 = vmatpush2.bf16.msra.mxu0 %v2433
    %3668 = vmatprep.mubr.bf16.mxu0 %v3546
    %3669 = vmatmul.mubr.bf16.gmra.mxu0 %v3545
    %v3670 = vpop.f32.mrf.mxu0
    %v3671 = vadd.f32 %v3590, %v3670
    %v3672 = vpop.f32.mrf.mxu0
    %v3673 = vadd.f32 %v3592, %v3672
    %v3674 = vpop.f32.mrf.mxu0
    %v3675 = vadd.f32 %v3594, %v3674
    %v3676 = vpop.f32.mrf.mxu0
    %v3677 = vadd.f32 %v3596, %v3676
    %3678 = vmatprep.mubr.bf16.mxu0 %v3548
    %3679 = vmatmul.mubr.bf16.gmra.mxu0 %v3547
    %v3680 = vpop.f32.mrf.mxu0
    %v3681 = vadd.f32 %v3600, %v3680
    %v3682 = vpop.f32.mrf.mxu0
    %v3683 = vadd.f32 %v3602, %v3682
    %v3684 = vpop.f32.mrf.mxu0
    %v3685 = vadd.f32 %v3604, %v3684
    %v3686 = vpop.f32.mrf.mxu0
    %v3687 = vadd.f32 %v3606, %v3686
    %3688 = vmatprep.mubr.bf16.mxu0 %v3550
    %3689 = vmatmul.mubr.bf16.gmra.mxu0 %v3549
    %v3690 = vpop.f32.mrf.mxu0
    %v3691 = vadd.f32 %v3610, %v3690
    %v3692 = vpop.f32.mrf.mxu0
    %v3693 = vadd.f32 %v3612, %v3692
    %v3694 = vpop.f32.mrf.mxu0
    %v3695 = vadd.f32 %v3614, %v3694
    %v3696 = vpop.f32.mrf.mxu0
    %v3697 = vadd.f32 %v3616, %v3696
    %3698 = vmatprep.mubr.bf16.mxu0 %v3552
    %3699 = vmatmul.mubr.bf16.gmra.mxu0 %v3551
    %v3700 = vpop.f32.mrf.mxu0
    %v3701 = vadd.f32 %v3620, %v3700
    %v3702 = vpop.f32.mrf.mxu0
    %v3703 = vadd.f32 %v3622, %v3702
    %v3704 = vpop.f32.mrf.mxu0
    %v3705 = vadd.f32 %v3624, %v3704
    %v3706 = vpop.f32.mrf.mxu0
    %v3707 = vadd.f32 %v3626, %v3706
    %3708 = vmatprep.mubr.bf16.mxu0 %v3554
    %3709 = vmatmul.mubr.bf16.gmra.mxu0 %v3553
    %v3710 = vpop.f32.mrf.mxu0
    %v3711 = vadd.f32 %v3630, %v3710
    %v3712 = vpop.f32.mrf.mxu0
    %v3713 = vadd.f32 %v3632, %v3712
    %v3714 = vpop.f32.mrf.mxu0
    %v3715 = vpop.f32.mrf.mxu0
    %3716 = vdwg.mxu0
    %v3717 = vmax.f32 %v3671, 0.0
    %v3718 = vmax.f32 %v3673, 0.0
    %v3719 = vmax.f32 %v3675, 0.0
    %v3720 = vmax.f32 %v3677, 0.0
    %v3721 = vmax.f32 %v3681, 0.0
    %v3722 = vmax.f32 %v3683, 0.0
    %v3723 = vmax.f32 %v3685, 0.0
    %v3724 = vmax.f32 %v3687, 0.0
    %v3725 = vmax.f32 %v3691, 0.0
    %v3726 = vmax.f32 %v3693, 0.0
    %v3727 = vmax.f32 %v3695, 0.0
    %v3728 = vmax.f32 %v3697, 0.0
    %v3729 = vmax.f32 %v3701, 0.0
    %v3730 = vmax.f32 %v3703, 0.0
    %v3731 = vmax.f32 %v3705, 0.0
    %v3732 = vmax.f32 %v3707, 0.0
    %v3733 = vmax.f32 %v3711, 0.0
    %v3734 = vmax.f32 %v3713, 0.0
    %v3735 = vpack.c.bf16 %v3719, %v3717
    %v3736 = vpack.c.bf16 %v3720, %v3718
    %v3737 = vpack.c.bf16 %v3723, %v3721
    %v3738 = vpack.c.bf16 %v3724, %v3722
    %v3739 = vpack.c.bf16 %v3727, %v3725
    %v3740 = vpack.c.bf16 %v3728, %v3726
    %v3741 = vpack.c.bf16 %v3731, %v3729
    %v3742 = vpack.c.bf16 %v3732, %v3730
    %v3743 = vpack.c.bf16 %v3733, %v3733
    %v3744 = vpack.c.bf16 %v3734, %v3734
    %3745 = vmatprep.subr.bf16.mxu0 %v2814
    %3746 = vmatpush1.bf16.msra.mxu0 %v2813
    %3747 = vmatprep.subr.bf16.mxu0 %v2812
    %3748 = vmatpush1.bf16.msra.mxu0 %v2811
    %3749 = vmatprep.subr.bf16.mxu0 %v2810
    %3750 = vmatpush1.bf16.msra.mxu0 %v2809
    %3751 = vmatprep.subr.bf16.mxu0 %v2808
    %3752 = vmatpush1.bf16.msra.mxu0 %v2807
    %3753 = vmatprep.subr.bf16.mxu0 %v2806
    %3754 = vmatpush1.bf16.msra.mxu0 %v2805
    %3755 = vmatprep.subr.bf16.mxu0 %v2804
    %3756 = vmatpush1.bf16.msra.mxu0 %v2803
    %3757 = vmatprep.subr.bf16.mxu0 %v2802
    %3758 = vmatpush1.bf16.msra.mxu0 %v2801
    %3759 = vmatprep.subr.bf16.mxu0 %v2800
    %3760 = vmatpush1.bf16.msra.mxu0 %v2799
    %3761 = vmatprep.subr.bf16.mxu0 %v2830
    %3762 = vmatpush2.bf16.msra.mxu0 %v2829
    %3763 = vmatprep.subr.bf16.mxu0 %v2828
    %3764 = vmatpush2.bf16.msra.mxu0 %v2827
    %3765 = vmatprep.subr.bf16.mxu0 %v2826
    %3766 = vmatpush2.bf16.msra.mxu0 %v2825
    %3767 = vmatprep.subr.bf16.mxu0 %v2824
    %3768 = vmatpush2.bf16.msra.mxu0 %v2823
    %3769 = vmatprep.subr.bf16.mxu0 %v2822
    %3770 = vmatpush2.bf16.msra.mxu0 %v2821
    %3771 = vmatprep.subr.bf16.mxu0 %v2820
    %3772 = vmatpush2.bf16.msra.mxu0 %v2819
    %3773 = vmatprep.subr.bf16.mxu0 %v2818
    %3774 = vmatpush2.bf16.msra.mxu0 %v2817
    %3775 = vmatprep.subr.bf16.mxu0 %v2816
    %3776 = vmatpush2.bf16.msra.mxu0 %v2815
    %3777 = vmatprep.mubr.bf16.mxu0 %v3736
    %3778 = vmatmul.mubr.bf16.gmra.mxu0 %v3735
    %v3779 = vpop.f32.mrf.mxu0
    %v3780 = vadd.f32 0.0, %v3779
    %v3781 = vpop.f32.mrf.mxu0
    %v3782 = vadd.f32 0.0, %v3781
    %v3783 = vpop.f32.mrf.mxu0
    %v3784 = vadd.f32 0.0, %v3783
    %v3785 = vpop.f32.mrf.mxu0
    %v3786 = vadd.f32 0.0, %v3785
    %3787 = vmatprep.mubr.bf16.mxu0 %v3738
    %3788 = vmatmul.mubr.bf16.gmra.mxu0 %v3737
    %v3789 = vpop.f32.mrf.mxu0
    %v3790 = vadd.f32 0.0, %v3789
    %v3791 = vpop.f32.mrf.mxu0
    %v3792 = vadd.f32 0.0, %v3791
    %v3793 = vpop.f32.mrf.mxu0
    %v3794 = vadd.f32 0.0, %v3793
    %v3795 = vpop.f32.mrf.mxu0
    %v3796 = vadd.f32 0.0, %v3795
    %3797 = vmatprep.mubr.bf16.mxu0 %v3740
    %3798 = vmatmul.mubr.bf16.gmra.mxu0 %v3739
    %v3799 = vpop.f32.mrf.mxu0
    %v3800 = vadd.f32 0.0, %v3799
    %v3801 = vpop.f32.mrf.mxu0
    %v3802 = vadd.f32 0.0, %v3801
    %v3803 = vpop.f32.mrf.mxu0
    %v3804 = vadd.f32 0.0, %v3803
    %v3805 = vpop.f32.mrf.mxu0
    %v3806 = vadd.f32 0.0, %v3805
    %3807 = vmatprep.mubr.bf16.mxu0 %v3742
    %3808 = vmatmul.mubr.bf16.gmra.mxu0 %v3741
    %v3809 = vpop.f32.mrf.mxu0
    %v3810 = vadd.f32 0.0, %v3809
    %v3811 = vpop.f32.mrf.mxu0
    %v3812 = vadd.f32 0.0, %v3811
    %v3813 = vpop.f32.mrf.mxu0
    %v3814 = vadd.f32 0.0, %v3813
    %v3815 = vpop.f32.mrf.mxu0
    %v3816 = vadd.f32 0.0, %v3815
    %3817 = vmatprep.mubr.bf16.mxu0 %v3744
    %3818 = vmatmul.mubr.bf16.gmra.mxu0 %v3743
    %v3819 = vpop.f32.mrf.mxu0
    %v3820 = vadd.f32 0.0, %v3819
    %v3821 = vpop.f32.mrf.mxu0
    %v3822 = vadd.f32 0.0, %v3821
    %v3823 = vpop.f32.mrf.mxu0
    %v3824 = vpop.f32.mrf.mxu0
    %3825 = vdwg.mxu0
    %v3826 = vadd.f32 %v2973, %v3780
    %v3827 = vadd.f32 %v2974, %v3782
    %v3828 = vadd.f32 %v2975, %v3784
    %v3829 = vadd.f32 %v2976, %v3786
    %v3830 = vadd.f32 %v2977, %v3790
    %v3831 = vadd.f32 %v2978, %v3792
    %v3832 = vadd.f32 %v2979, %v3794
    %v3833 = vadd.f32 %v2980, %v3796
    %v3834 = vadd.f32 %v2981, %v3800
    %v3835 = vadd.f32 %v2982, %v3802
    %v3836 = vadd.f32 %v2983, %v3804
    %v3837 = vadd.f32 %v2984, %v3806
    %v3838 = vadd.f32 %v2985, %v3810
    %v3839 = vadd.f32 %v2986, %v3812
    %v3840 = vadd.f32 %v2987, %v3814
    %v3841 = vadd.f32 %v2988, %v3816
    %v3842 = vadd.f32 %v2989, %v3820
    %v3843 = vadd.f32 %v2990, %v3822
    %v3844 = vadd.f32 %v3826, %v2966
    %v3845 = vadd.f32 %v3827, %v2970
    %v3846 = vadd.f32 %v3828, %v2966
    %v3847 = vadd.f32 %v3829, %v2970
    %v3848 = vadd.f32 %v3830, %v2966
    %v3849 = vadd.f32 %v3831, %v2970
    %v3850 = vadd.f32 %v3832, %v2966
    %v3851 = vadd.f32 %v3833, %v2970
    %v3852 = vadd.f32 %v3834, %v2966
    %v3853 = vadd.f32 %v3835, %v2970
    %v3854 = vadd.f32 %v3836, %v2966
    %v3855 = vadd.f32 %v3837, %v2970
    %v3856 = vadd.f32 %v3838, %v2966
    %v3857 = vadd.f32 %v3839, %v2970
    %v3858 = vadd.f32 %v3840, %v2966
    %v3859 = vadd.f32 %v3841, %v2970
    %v3860 = vadd.f32 %v3842, %v2966
    %v3861 = vadd.f32 %v3843, %v2970
    %v3862 = vpack.c.bf16 %v3846, %v3844
    %v3863 = vpack.c.bf16 %v3847, %v3845
    %v3864 = vpack.c.bf16 %v3850, %v3848
    %v3865 = vpack.c.bf16 %v3851, %v3849
    %v3866 = vpack.c.bf16 %v3854, %v3852
    %v3867 = vpack.c.bf16 %v3855, %v3853
    %v3868 = vpack.c.bf16 %v3858, %v3856
    %v3869 = vpack.c.bf16 %v3859, %v3857
    %v3870 = vpack.c.bf16 %v3860, %v3860
    %v3871 = vpack.c.bf16 %v3861, %v3861
    %3872 = vmatprep.subr.bf16.mxu0 %v966
    %3873 = vmatpush1.bf16.msra.mxu0 %v965
    %3874 = vmatprep.subr.bf16.mxu0 %v964
    %3875 = vmatpush1.bf16.msra.mxu0 %v963
    %3876 = vmatprep.subr.bf16.mxu0 %v962
    %3877 = vmatpush1.bf16.msra.mxu0 %v961
    %3878 = vmatprep.subr.bf16.mxu0 %v960
    %3879 = vmatpush1.bf16.msra.mxu0 %v959
    %3880 = vmatprep.subr.bf16.mxu0 %v958
    %3881 = vmatpush1.bf16.msra.mxu0 %v957
    %3882 = vmatprep.subr.bf16.mxu0 %v956
    %3883 = vmatpush1.bf16.msra.mxu0 %v955
    %3884 = vmatprep.subr.bf16.mxu0 %v954
    %3885 = vmatpush1.bf16.msra.mxu0 %v953
    %3886 = vmatprep.subr.bf16.mxu0 %v952
    %3887 = vmatpush1.bf16.msra.mxu0 %v951
    %3888 = vmatprep.subr.bf16.mxu0 %v982
    %3889 = vmatpush2.bf16.msra.mxu0 %v981
    %3890 = vmatprep.subr.bf16.mxu0 %v980
    %3891 = vmatpush2.bf16.msra.mxu0 %v979
    %3892 = vmatprep.subr.bf16.mxu0 %v978
    %3893 = vmatpush2.bf16.msra.mxu0 %v977
    %3894 = vmatprep.subr.bf16.mxu0 %v976
    %3895 = vmatpush2.bf16.msra.mxu0 %v975
    %3896 = vmatprep.subr.bf16.mxu0 %v974
    %3897 = vmatpush2.bf16.msra.mxu0 %v973
    %3898 = vmatprep.subr.bf16.mxu0 %v972
    %3899 = vmatpush2.bf16.msra.mxu0 %v971
    %3900 = vmatprep.subr.bf16.mxu0 %v970
    %3901 = vmatpush2.bf16.msra.mxu0 %v969
    %3902 = vmatprep.subr.bf16.mxu0 %v968
    %3903 = vmatpush2.bf16.msra.mxu0 %v967
    %3904 = vmatprep.mubr.bf16.mxu0 %v3863
    %3905 = vmatmul.mubr.bf16.gmra.mxu0 %v3862
    %v3906 = vpop.f32.mrf.mxu0
    %v3907 = vadd.f32 %v848, %v3906
    %v3908 = vpop.f32.mrf.mxu0
    %v3909 = vadd.f32 %v852, %v3908
    %v3910 = vpop.f32.mrf.mxu0
    %v3911 = vadd.f32 %v848, %v3910
    %v3912 = vpop.f32.mrf.mxu0
    %v3913 = vadd.f32 %v852, %v3912
    %3914 = vmatprep.mubr.bf16.mxu0 %v3865
    %3915 = vmatmul.mubr.bf16.gmra.mxu0 %v3864
    %v3916 = vpop.f32.mrf.mxu0
    %v3917 = vadd.f32 %v848, %v3916
    %v3918 = vpop.f32.mrf.mxu0
    %v3919 = vadd.f32 %v852, %v3918
    %v3920 = vpop.f32.mrf.mxu0
    %v3921 = vadd.f32 %v848, %v3920
    %v3922 = vpop.f32.mrf.mxu0
    %v3923 = vadd.f32 %v852, %v3922
    %3924 = vmatprep.mubr.bf16.mxu0 %v3867
    %3925 = vmatmul.mubr.bf16.gmra.mxu0 %v3866
    %v3926 = vpop.f32.mrf.mxu0
    %v3927 = vadd.f32 %v848, %v3926
    %v3928 = vpop.f32.mrf.mxu0
    %v3929 = vadd.f32 %v852, %v3928
    %v3930 = vpop.f32.mrf.mxu0
    %v3931 = vadd.f32 %v848, %v3930
    %v3932 = vpop.f32.mrf.mxu0
    %v3933 = vadd.f32 %v852, %v3932
    %3934 = vmatprep.mubr.bf16.mxu0 %v3869
    %3935 = vmatmul.mubr.bf16.gmra.mxu0 %v3868
    %v3936 = vpop.f32.mrf.mxu0
    %v3937 = vadd.f32 %v848, %v3936
    %v3938 = vpop.f32.mrf.mxu0
    %v3939 = vadd.f32 %v852, %v3938
    %v3940 = vpop.f32.mrf.mxu0
    %v3941 = vadd.f32 %v848, %v3940
    %v3942 = vpop.f32.mrf.mxu0
    %v3943 = vadd.f32 %v852, %v3942
    %3944 = vmatprep.mubr.bf16.mxu0 %v3871
    %3945 = vmatmul.mubr.bf16.gmra.mxu0 %v3870
    %v3946 = vpop.f32.mrf.mxu0
    %v3947 = vadd.f32 %v848, %v3946
    %v3948 = vpop.f32.mrf.mxu0
    %v3949 = vadd.f32 %v852, %v3948
    %v3950 = vpop.f32.mrf.mxu0
    %v3951 = vpop.f32.mrf.mxu0
    %3952 = vdwg.mxu0
    %v3953 = vmax.f32 %v3907, 0.0
    %v3954 = vmax.f32 %v3909, 0.0
    %v3955 = vmax.f32 %v3911, 0.0
    %v3956 = vmax.f32 %v3913, 0.0
    %v3957 = vmax.f32 %v3917, 0.0
    %v3958 = vmax.f32 %v3919, 0.0
    %v3959 = vmax.f32 %v3921, 0.0
    %v3960 = vmax.f32 %v3923, 0.0
    %v3961 = vmax.f32 %v3927, 0.0
    %v3962 = vmax.f32 %v3929, 0.0
    %v3963 = vmax.f32 %v3931, 0.0
    %v3964 = vmax.f32 %v3933, 0.0
    %v3965 = vmax.f32 %v3937, 0.0
    %v3966 = vmax.f32 %v3939, 0.0
    %v3967 = vmax.f32 %v3941, 0.0
    %v3968 = vmax.f32 %v3943, 0.0
    %v3969 = vmax.f32 %v3947, 0.0
    %v3970 = vmax.f32 %v3949, 0.0
    %v3971 = vrot.slane %v3953, 7
    %v3972 = vrot.slane %v3954, 7
    %v3973 = vrot.slane %v3955, 7
    %v3974 = vrot.slane %v3956, 7
    %v3975 = vrot.slane %v3957, 7
    %v3976 = vrot.slane %v3958, 7
    %v3977 = vrot.slane %v3959, 7
    %v3978 = vrot.slane %v3960, 7
    %v3979 = vrot.slane %v3961, 7
    %v3980 = vrot.slane %v3962, 7
    %v3981 = vrot.slane %v3963, 7
    %v3982 = vrot.slane %v3964, 7
    %v3983 = vrot.slane %v3965, 7
    %v3984 = vrot.slane %v3966, 7
    %v3985 = vrot.slane %v3967, 7
    %v3986 = vrot.slane %v3968, 7
    %v3987 = vrot.slane %v3969, 7
    %v3988 = vrot.slane %v3970, 7
    %v3989 = vsel %vm1134, %v3985, %v3987
    %v3990 = vsel %vm1134, %v3986, %v3988
    %v3991 = vsel %vm1134, %v3983, %v3985
    %v3992 = vsel %vm1134, %v3984, %v3986
    %v3993 = vsel %vm1134, %v3981, %v3983
    %v3994 = vsel %vm1134, %v3982, %v3984
    %v3995 = vsel %vm1134, %v3979, %v3981
    %v3996 = vsel %vm1134, %v3980, %v3982
    %v3997 = vsel %vm1134, %v3977, %v3979
    %v3998 = vsel %vm1134, %v3978, %v3980
    %v3999 = vsel %vm1134, %v3975, %v3977
    %v4000 = vsel %vm1134, %v3976, %v3978
    %v4001 = vsel %vm1134, %v3973, %v3975
    %v4002 = vsel %vm1134, %v3974, %v3976
    %v4003 = vsel %vm1134, %v3971, %v3973
    %v4004 = vsel %vm1134, %v3972, %v3974
    %v4005 = vsel %vm1134, %v3987, %v3971
    %v4006 = vsel %vm1134, %v3988, %v3972
    %v4007 = vmul.f32 %v4005, %v1156
    %v4008 = vmul.f32 %v4006, %v1156
    %v4009 = vmul.f32 %v4003, %v1161
    %v4010 = vmul.f32 %v4004, %v1161
    %v4011 = vmul.f32 %v4001, %v1166
    %v4012 = vmul.f32 %v4002, %v1166
    %v4013 = vmul.f32 %v3999, %v1171
    %v4014 = vmul.f32 %v4000, %v1171
    %v4015 = vmul.f32 %v3997, %v1176
    %v4016 = vmul.f32 %v3998, %v1176
    %v4017 = vmul.f32 %v3995, %v1181
    %v4018 = vmul.f32 %v3996, %v1181
    %v4019 = vmul.f32 %v3993, %v1186
    %v4020 = vmul.f32 %v3994, %v1186
    %v4021 = vmul.f32 %v3991, %v1191
    %v4022 = vmul.f32 %v3992, %v1191
    %v4023 = vmul.f32 %v3989, %v1196
    %v4024 = vmul.f32 %v3990, %v1196
    %v4025 = vrot.slane %v3953, 1
    %v4026 = vrot.slane %v3954, 1
    %v4027 = vrot.slane %v3955, 1
    %v4028 = vrot.slane %v3956, 1
    %v4029 = vrot.slane %v3957, 1
    %v4030 = vrot.slane %v3958, 1
    %v4031 = vrot.slane %v3959, 1
    %v4032 = vrot.slane %v3960, 1
    %v4033 = vrot.slane %v3961, 1
    %v4034 = vrot.slane %v3962, 1
    %v4035 = vrot.slane %v3963, 1
    %v4036 = vrot.slane %v3964, 1
    %v4037 = vrot.slane %v3965, 1
    %v4038 = vrot.slane %v3966, 1
    %v4039 = vrot.slane %v3967, 1
    %v4040 = vrot.slane %v3968, 1
    %v4041 = vrot.slane %v3969, 1
    %v4042 = vrot.slane %v3970, 1
    %v4043 = vsel %vm1234, %v4039, %v4041
    %v4044 = vsel %vm1234, %v4040, %v4042
    %v4045 = vsel %vm1234, %v4037, %v4039
    %v4046 = vsel %vm1234, %v4038, %v4040
    %v4047 = vsel %vm1234, %v4035, %v4037
    %v4048 = vsel %vm1234, %v4036, %v4038
    %v4049 = vsel %vm1234, %v4033, %v4035
    %v4050 = vsel %vm1234, %v4034, %v4036
    %v4051 = vsel %vm1234, %v4031, %v4033
    %v4052 = vsel %vm1234, %v4032, %v4034
    %v4053 = vsel %vm1234, %v4029, %v4031
    %v4054 = vsel %vm1234, %v4030, %v4032
    %v4055 = vsel %vm1234, %v4027, %v4029
    %v4056 = vsel %vm1234, %v4028, %v4030
    %v4057 = vsel %vm1234, %v4025, %v4027
    %v4058 = vsel %vm1234, %v4026, %v4028
    %v4059 = vsel %vm1234, %v4041, %v4025
    %v4060 = vsel %vm1234, %v4042, %v4026
    %v4061 = vmul.f32 %v4057, %v1255
    %v4062 = vmul.f32 %v4058, %v1255
    %v4063 = vmul.f32 %v4055, %v1259
    %v4064 = vmul.f32 %v4056, %v1259
    %v4065 = vmul.f32 %v4053, %v1263
    %v4066 = vmul.f32 %v4054, %v1263
    %v4067 = vmul.f32 %v4051, %v1267
    %v4068 = vmul.f32 %v4052, %v1267
    %v4069 = vmul.f32 %v4049, %v1271
    %v4070 = vmul.f32 %v4050, %v1271
    %v4071 = vmul.f32 %v4047, %v1275
    %v4072 = vmul.f32 %v4048, %v1275
    %v4073 = vmul.f32 %v4045, %v1279
    %v4074 = vmul.f32 %v4046, %v1279
    %v4075 = vmul.f32 %v4043, %v1283
    %v4076 = vmul.f32 %v4044, %v1283
    %v4077 = vmul.f32 %v4059, %v1287
    %v4078 = vmul.f32 %v4060, %v1287
    %v4079 = vpack.c.bf16 %v4009, %v4007
    %v4080 = vpack.c.bf16 %v4010, %v4008
    %v4081 = vpack.c.bf16 %v4013, %v4011
    %v4082 = vpack.c.bf16 %v4014, %v4012
    %v4083 = vpack.c.bf16 %v4017, %v4015
    %v4084 = vpack.c.bf16 %v4018, %v4016
    %v4085 = vpack.c.bf16 %v4021, %v4019
    %v4086 = vpack.c.bf16 %v4022, %v4020
    %v4087 = vpack.c.bf16 %v4023, %v4023
    %v4088 = vpack.c.bf16 %v4024, %v4024
    %v4089 = vpack.c.bf16 %v3955, %v3953
    %v4090 = vpack.c.bf16 %v3956, %v3954
    %v4091 = vpack.c.bf16 %v3959, %v3957
    %v4092 = vpack.c.bf16 %v3960, %v3958
    %v4093 = vpack.c.bf16 %v3963, %v3961
    %v4094 = vpack.c.bf16 %v3964, %v3962
    %v4095 = vpack.c.bf16 %v3967, %v3965
    %v4096 = vpack.c.bf16 %v3968, %v3966
    %v4097 = vpack.c.bf16 %v3969, %v3969
    %v4098 = vpack.c.bf16 %v3970, %v3970
    %v4099 = vpack.c.bf16 %v4063, %v4061
    %v4100 = vpack.c.bf16 %v4064, %v4062
    %v4101 = vpack.c.bf16 %v4067, %v4065
    %v4102 = vpack.c.bf16 %v4068, %v4066
    %v4103 = vpack.c.bf16 %v4071, %v4069
    %v4104 = vpack.c.bf16 %v4072, %v4070
    %v4105 = vpack.c.bf16 %v4075, %v4073
    %v4106 = vpack.c.bf16 %v4076, %v4074
    %v4107 = vpack.c.bf16 %v4077, %v4077
    %v4108 = vpack.c.bf16 %v4078, %v4078
    %4109 = vmatprep.subr.bf16.mxu0 %v1651
    %4110 = vmatpush1.bf16.msra.mxu0 %v1650
    %4111 = vmatprep.subr.bf16.mxu0 %v1649
    %4112 = vmatpush1.bf16.msra.mxu0 %v1648
    %4113 = vmatprep.subr.bf16.mxu0 %v1647
    %4114 = vmatpush1.bf16.msra.mxu0 %v1646
    %4115 = vmatprep.subr.bf16.mxu0 %v1645
    %4116 = vmatpush1.bf16.msra.mxu0 %v1644
    %4117 = vmatprep.subr.bf16.mxu0 %v1643
    %4118 = vmatpush1.bf16.msra.mxu0 %v1642
    %4119 = vmatprep.subr.bf16.mxu0 %v1641
    %4120 = vmatpush1.bf16.msra.mxu0 %v1640
    %4121 = vmatprep.subr.bf16.mxu0 %v1639
    %4122 = vmatpush1.bf16.msra.mxu0 %v1638
    %4123 = vmatprep.subr.bf16.mxu0 %v1637
    %4124 = vmatpush1.bf16.msra.mxu0 %v1636
    %4125 = vmatprep.subr.bf16.mxu0 %v1667
    %4126 = vmatpush2.bf16.msra.mxu0 %v1666
    %4127 = vmatprep.subr.bf16.mxu0 %v1665
    %4128 = vmatpush2.bf16.msra.mxu0 %v1664
    %4129 = vmatprep.subr.bf16.mxu0 %v1663
    %4130 = vmatpush2.bf16.msra.mxu0 %v1662
    %4131 = vmatprep.subr.bf16.mxu0 %v1661
    %4132 = vmatpush2.bf16.msra.mxu0 %v1660
    %4133 = vmatprep.subr.bf16.mxu0 %v1659
    %4134 = vmatpush2.bf16.msra.mxu0 %v1658
    %4135 = vmatprep.subr.bf16.mxu0 %v1657
    %4136 = vmatpush2.bf16.msra.mxu0 %v1656
    %4137 = vmatprep.subr.bf16.mxu0 %v1655
    %4138 = vmatpush2.bf16.msra.mxu0 %v1654
    %4139 = vmatprep.subr.bf16.mxu0 %v1653
    %4140 = vmatpush2.bf16.msra.mxu0 %v1652
    %4141 = vmatprep.mubr.bf16.mxu0 %v4080
    %4142 = vmatmul.mubr.bf16.gmra.mxu0 %v4079
    %v4143 = vpop.f32.mrf.mxu0
    %v4144 = vadd.f32 %v1341, %v4143
    %v4145 = vpop.f32.mrf.mxu0
    %v4146 = vadd.f32 %v1345, %v4145
    %v4147 = vpop.f32.mrf.mxu0
    %v4148 = vadd.f32 %v1341, %v4147
    %v4149 = vpop.f32.mrf.mxu0
    %v4150 = vadd.f32 %v1345, %v4149
    %4151 = vmatprep.mubr.bf16.mxu0 %v4082
    %4152 = vmatmul.mubr.bf16.gmra.mxu0 %v4081
    %v4153 = vpop.f32.mrf.mxu0
    %v4154 = vadd.f32 %v1341, %v4153
    %v4155 = vpop.f32.mrf.mxu0
    %v4156 = vadd.f32 %v1345, %v4155
    %v4157 = vpop.f32.mrf.mxu0
    %v4158 = vadd.f32 %v1341, %v4157
    %v4159 = vpop.f32.mrf.mxu0
    %v4160 = vadd.f32 %v1345, %v4159
    %4161 = vmatprep.mubr.bf16.mxu0 %v4084
    %4162 = vmatmul.mubr.bf16.gmra.mxu0 %v4083
    %v4163 = vpop.f32.mrf.mxu0
    %v4164 = vadd.f32 %v1341, %v4163
    %v4165 = vpop.f32.mrf.mxu0
    %v4166 = vadd.f32 %v1345, %v4165
    %v4167 = vpop.f32.mrf.mxu0
    %v4168 = vadd.f32 %v1341, %v4167
    %v4169 = vpop.f32.mrf.mxu0
    %v4170 = vadd.f32 %v1345, %v4169
    %4171 = vmatprep.mubr.bf16.mxu0 %v4086
    %4172 = vmatmul.mubr.bf16.gmra.mxu0 %v4085
    %v4173 = vpop.f32.mrf.mxu0
    %v4174 = vadd.f32 %v1341, %v4173
    %v4175 = vpop.f32.mrf.mxu0
    %v4176 = vadd.f32 %v1345, %v4175
    %v4177 = vpop.f32.mrf.mxu0
    %v4178 = vadd.f32 %v1341, %v4177
    %v4179 = vpop.f32.mrf.mxu0
    %v4180 = vadd.f32 %v1345, %v4179
    %4181 = vmatprep.mubr.bf16.mxu0 %v4088
    %4182 = vmatmul.mubr.bf16.gmra.mxu0 %v4087
    %v4183 = vpop.f32.mrf.mxu0
    %v4184 = vadd.f32 %v1341, %v4183
    %v4185 = vpop.f32.mrf.mxu0
    %v4186 = vadd.f32 %v1345, %v4185
    %v4187 = vpop.f32.mrf.mxu0
    %v4188 = vpop.f32.mrf.mxu0
    %4189 = vdwg.mxu0
    %4190 = vmatprep.subr.bf16.mxu0 %v1683
    %4191 = vmatpush1.bf16.msra.mxu0 %v1682
    %4192 = vmatprep.subr.bf16.mxu0 %v1681
    %4193 = vmatpush1.bf16.msra.mxu0 %v1680
    %4194 = vmatprep.subr.bf16.mxu0 %v1679
    %4195 = vmatpush1.bf16.msra.mxu0 %v1678
    %4196 = vmatprep.subr.bf16.mxu0 %v1677
    %4197 = vmatpush1.bf16.msra.mxu0 %v1676
    %4198 = vmatprep.subr.bf16.mxu0 %v1675
    %4199 = vmatpush1.bf16.msra.mxu0 %v1674
    %4200 = vmatprep.subr.bf16.mxu0 %v1673
    %4201 = vmatpush1.bf16.msra.mxu0 %v1672
    %4202 = vmatprep.subr.bf16.mxu0 %v1671
    %4203 = vmatpush1.bf16.msra.mxu0 %v1670
    %4204 = vmatprep.subr.bf16.mxu0 %v1669
    %4205 = vmatpush1.bf16.msra.mxu0 %v1668
    %4206 = vmatprep.subr.bf16.mxu0 %v1699
    %4207 = vmatpush2.bf16.msra.mxu0 %v1698
    %4208 = vmatprep.subr.bf16.mxu0 %v1697
    %4209 = vmatpush2.bf16.msra.mxu0 %v1696
    %4210 = vmatprep.subr.bf16.mxu0 %v1695
    %4211 = vmatpush2.bf16.msra.mxu0 %v1694
    %4212 = vmatprep.subr.bf16.mxu0 %v1693
    %4213 = vmatpush2.bf16.msra.mxu0 %v1692
    %4214 = vmatprep.subr.bf16.mxu0 %v1691
    %4215 = vmatpush2.bf16.msra.mxu0 %v1690
    %4216 = vmatprep.subr.bf16.mxu0 %v1689
    %4217 = vmatpush2.bf16.msra.mxu0 %v1688
    %4218 = vmatprep.subr.bf16.mxu0 %v1687
    %4219 = vmatpush2.bf16.msra.mxu0 %v1686
    %4220 = vmatprep.subr.bf16.mxu0 %v1685
    %4221 = vmatpush2.bf16.msra.mxu0 %v1684
    %4222 = vmatprep.mubr.bf16.mxu0 %v4090
    %4223 = vmatmul.mubr.bf16.gmra.mxu0 %v4089
    %v4224 = vpop.f32.mrf.mxu0
    %v4225 = vadd.f32 %v4144, %v4224
    %v4226 = vpop.f32.mrf.mxu0
    %v4227 = vadd.f32 %v4146, %v4226
    %v4228 = vpop.f32.mrf.mxu0
    %v4229 = vadd.f32 %v4148, %v4228
    %v4230 = vpop.f32.mrf.mxu0
    %v4231 = vadd.f32 %v4150, %v4230
    %4232 = vmatprep.mubr.bf16.mxu0 %v4092
    %4233 = vmatmul.mubr.bf16.gmra.mxu0 %v4091
    %v4234 = vpop.f32.mrf.mxu0
    %v4235 = vadd.f32 %v4154, %v4234
    %v4236 = vpop.f32.mrf.mxu0
    %v4237 = vadd.f32 %v4156, %v4236
    %v4238 = vpop.f32.mrf.mxu0
    %v4239 = vadd.f32 %v4158, %v4238
    %v4240 = vpop.f32.mrf.mxu0
    %v4241 = vadd.f32 %v4160, %v4240
    %4242 = vmatprep.mubr.bf16.mxu0 %v4094
    %4243 = vmatmul.mubr.bf16.gmra.mxu0 %v4093
    %v4244 = vpop.f32.mrf.mxu0
    %v4245 = vadd.f32 %v4164, %v4244
    %v4246 = vpop.f32.mrf.mxu0
    %v4247 = vadd.f32 %v4166, %v4246
    %v4248 = vpop.f32.mrf.mxu0
    %v4249 = vadd.f32 %v4168, %v4248
    %v4250 = vpop.f32.mrf.mxu0
    %v4251 = vadd.f32 %v4170, %v4250
    %4252 = vmatprep.mubr.bf16.mxu0 %v4096
    %4253 = vmatmul.mubr.bf16.gmra.mxu0 %v4095
    %v4254 = vpop.f32.mrf.mxu0
    %v4255 = vadd.f32 %v4174, %v4254
    %v4256 = vpop.f32.mrf.mxu0
    %v4257 = vadd.f32 %v4176, %v4256
    %v4258 = vpop.f32.mrf.mxu0
    %v4259 = vadd.f32 %v4178, %v4258
    %v4260 = vpop.f32.mrf.mxu0
    %v4261 = vadd.f32 %v4180, %v4260
    %4262 = vmatprep.mubr.bf16.mxu0 %v4098
    %4263 = vmatmul.mubr.bf16.gmra.mxu0 %v4097
    %v4264 = vpop.f32.mrf.mxu0
    %v4265 = vadd.f32 %v4184, %v4264
    %v4266 = vpop.f32.mrf.mxu0
    %v4267 = vadd.f32 %v4186, %v4266
    %v4268 = vpop.f32.mrf.mxu0
    %v4269 = vpop.f32.mrf.mxu0
    %4270 = vdwg.mxu0
    %4271 = vmatprep.subr.bf16.mxu0 %v1715
    %4272 = vmatpush1.bf16.msra.mxu0 %v1714
    %4273 = vmatprep.subr.bf16.mxu0 %v1713
    %4274 = vmatpush1.bf16.msra.mxu0 %v1712
    %4275 = vmatprep.subr.bf16.mxu0 %v1711
    %4276 = vmatpush1.bf16.msra.mxu0 %v1710
    %4277 = vmatprep.subr.bf16.mxu0 %v1709
    %4278 = vmatpush1.bf16.msra.mxu0 %v1708
    %4279 = vmatprep.subr.bf16.mxu0 %v1707
    %4280 = vmatpush1.bf16.msra.mxu0 %v1706
    %4281 = vmatprep.subr.bf16.mxu0 %v1705
    %4282 = vmatpush1.bf16.msra.mxu0 %v1704
    %4283 = vmatprep.subr.bf16.mxu0 %v1703
    %4284 = vmatpush1.bf16.msra.mxu0 %v1702
    %4285 = vmatprep.subr.bf16.mxu0 %v1701
    %4286 = vmatpush1.bf16.msra.mxu0 %v1700
    %4287 = vmatprep.subr.bf16.mxu0 %v1731
    %4288 = vmatpush2.bf16.msra.mxu0 %v1730
    %4289 = vmatprep.subr.bf16.mxu0 %v1729
    %4290 = vmatpush2.bf16.msra.mxu0 %v1728
    %4291 = vmatprep.subr.bf16.mxu0 %v1727
    %4292 = vmatpush2.bf16.msra.mxu0 %v1726
    %4293 = vmatprep.subr.bf16.mxu0 %v1725
    %4294 = vmatpush2.bf16.msra.mxu0 %v1724
    %4295 = vmatprep.subr.bf16.mxu0 %v1723
    %4296 = vmatpush2.bf16.msra.mxu0 %v1722
    %4297 = vmatprep.subr.bf16.mxu0 %v1721
    %4298 = vmatpush2.bf16.msra.mxu0 %v1720
    %4299 = vmatprep.subr.bf16.mxu0 %v1719
    %4300 = vmatpush2.bf16.msra.mxu0 %v1718
    %4301 = vmatprep.subr.bf16.mxu0 %v1717
    %4302 = vmatpush2.bf16.msra.mxu0 %v1716
    %4303 = vmatprep.mubr.bf16.mxu0 %v4100
    %4304 = vmatmul.mubr.bf16.gmra.mxu0 %v4099
    %v4305 = vpop.f32.mrf.mxu0
    %v4306 = vadd.f32 %v4225, %v4305
    %v4307 = vpop.f32.mrf.mxu0
    %v4308 = vadd.f32 %v4227, %v4307
    %v4309 = vpop.f32.mrf.mxu0
    %v4310 = vadd.f32 %v4229, %v4309
    %v4311 = vpop.f32.mrf.mxu0
    %v4312 = vadd.f32 %v4231, %v4311
    %4313 = vmatprep.mubr.bf16.mxu0 %v4102
    %4314 = vmatmul.mubr.bf16.gmra.mxu0 %v4101
    %v4315 = vpop.f32.mrf.mxu0
    %v4316 = vadd.f32 %v4235, %v4315
    %v4317 = vpop.f32.mrf.mxu0
    %v4318 = vadd.f32 %v4237, %v4317
    %v4319 = vpop.f32.mrf.mxu0
    %v4320 = vadd.f32 %v4239, %v4319
    %v4321 = vpop.f32.mrf.mxu0
    %v4322 = vadd.f32 %v4241, %v4321
    %4323 = vmatprep.mubr.bf16.mxu0 %v4104
    %4324 = vmatmul.mubr.bf16.gmra.mxu0 %v4103
    %v4325 = vpop.f32.mrf.mxu0
    %v4326 = vadd.f32 %v4245, %v4325
    %v4327 = vpop.f32.mrf.mxu0
    %v4328 = vadd.f32 %v4247, %v4327
    %v4329 = vpop.f32.mrf.mxu0
    %v4330 = vadd.f32 %v4249, %v4329
    %v4331 = vpop.f32.mrf.mxu0
    %v4332 = vadd.f32 %v4251, %v4331
    %4333 = vmatprep.mubr.bf16.mxu0 %v4106
    %4334 = vmatmul.mubr.bf16.gmra.mxu0 %v4105
    %v4335 = vpop.f32.mrf.mxu0
    %v4336 = vadd.f32 %v4255, %v4335
    %v4337 = vpop.f32.mrf.mxu0
    %v4338 = vadd.f32 %v4257, %v4337
    %v4339 = vpop.f32.mrf.mxu0
    %v4340 = vadd.f32 %v4259, %v4339
    %v4341 = vpop.f32.mrf.mxu0
    %v4342 = vadd.f32 %v4261, %v4341
    %4343 = vmatprep.mubr.bf16.mxu0 %v4108
    %4344 = vmatmul.mubr.bf16.gmra.mxu0 %v4107
    %v4345 = vpop.f32.mrf.mxu0
    %v4346 = vadd.f32 %v4265, %v4345
    %v4347 = vpop.f32.mrf.mxu0
    %v4348 = vadd.f32 %v4267, %v4347
    %v4349 = vpop.f32.mrf.mxu0
    %v4350 = vpop.f32.mrf.mxu0
    %4351 = vdwg.mxu0
    %v4352 = vrot.slane %v4306, 6
    %v4353 = vrot.slane %v4308, 6
    %v4354 = vrot.slane %v4310, 6
    %v4355 = vrot.slane %v4312, 6
    %v4356 = vrot.slane %v4316, 6
    %v4357 = vrot.slane %v4318, 6
    %v4358 = vrot.slane %v4320, 6
    %v4359 = vrot.slane %v4322, 6
    %v4360 = vrot.slane %v4326, 6
    %v4361 = vrot.slane %v4328, 6
    %v4362 = vrot.slane %v4330, 6
    %v4363 = vrot.slane %v4332, 6
    %v4364 = vrot.slane %v4336, 6
    %v4365 = vrot.slane %v4338, 6
    %v4366 = vrot.slane %v4340, 6
    %v4367 = vrot.slane %v4342, 6
    %v4368 = vrot.slane %v4346, 6
    %v4369 = vrot.slane %v4348, 6
    %v4370 = vsel %vm2089, %v4366, %v4368
    %v4371 = vsel %vm2089, %v4367, %v4369
    %v4372 = vsel %vm2089, %v4364, %v4366
    %v4373 = vsel %vm2089, %v4365, %v4367
    %v4374 = vsel %vm2089, %v4362, %v4364
    %v4375 = vsel %vm2089, %v4363, %v4365
    %v4376 = vsel %vm2089, %v4360, %v4362
    %v4377 = vsel %vm2089, %v4361, %v4363
    %v4378 = vsel %vm2089, %v4358, %v4360
    %v4379 = vsel %vm2089, %v4359, %v4361
    %v4380 = vsel %vm2089, %v4356, %v4358
    %v4381 = vsel %vm2089, %v4357, %v4359
    %v4382 = vsel %vm2089, %v4354, %v4356
    %v4383 = vsel %vm2089, %v4355, %v4357
    %v4384 = vsel %vm2089, %v4352, %v4354
    %v4385 = vsel %vm2089, %v4353, %v4355
    %v4386 = vsel %vm2089, %v4368, %v4352
    %v4387 = vsel %vm2089, %v4369, %v4353
    %v4388 = vmul.f32 %v4384, %v2110
    %v4389 = vmul.f32 %v4385, %v2110
    %v4390 = vmul.f32 %v4382, %v2114
    %v4391 = vmul.f32 %v4383, %v2114
    %v4392 = vmul.f32 %v4380, %v2118
    %v4393 = vmul.f32 %v4381, %v2118
    %v4394 = vmul.f32 %v4378, %v2122
    %v4395 = vmul.f32 %v4379, %v2122
    %v4396 = vmul.f32 %v4376, %v2126
    %v4397 = vmul.f32 %v4377, %v2126
    %v4398 = vmul.f32 %v4374, %v2130
    %v4399 = vmul.f32 %v4375, %v2130
    %v4400 = vmul.f32 %v4372, %v2134
    %v4401 = vmul.f32 %v4373, %v2134
    %v4402 = vmul.f32 %v4370, %v2138
    %v4403 = vmul.f32 %v4371, %v2138
    %v4404 = vmul.f32 %v4386, %v2142
    %v4405 = vmul.f32 %v4387, %v2142
    %v4406 = vpack.c.bf16 %v4310, %v4306
    %v4407 = vpack.c.bf16 %v4312, %v4308
    %v4408 = vpack.c.bf16 %v4320, %v4316
    %v4409 = vpack.c.bf16 %v4322, %v4318
    %v4410 = vpack.c.bf16 %v4330, %v4326
    %v4411 = vpack.c.bf16 %v4332, %v4328
    %v4412 = vpack.c.bf16 %v4340, %v4336
    %v4413 = vpack.c.bf16 %v4342, %v4338
    %v4414 = vpack.c.bf16 %v4346, %v4346
    %v4415 = vpack.c.bf16 %v4348, %v4348
    %v4416 = vpack.c.bf16 %v4390, %v4388
    %v4417 = vpack.c.bf16 %v4391, %v4389
    %v4418 = vpack.c.bf16 %v4394, %v4392
    %v4419 = vpack.c.bf16 %v4395, %v4393
    %v4420 = vpack.c.bf16 %v4398, %v4396
    %v4421 = vpack.c.bf16 %v4399, %v4397
    %v4422 = vpack.c.bf16 %v4402, %v4400
    %v4423 = vpack.c.bf16 %v4403, %v4401
    %v4424 = vpack.c.bf16 %v4404, %v4404
    %v4425 = vpack.c.bf16 %v4405, %v4405
    %4426 = vmatprep.subr.bf16.mxu0 %v2400
    %4427 = vmatpush1.bf16.msra.mxu0 %v2399
    %4428 = vmatprep.subr.bf16.mxu0 %v2398
    %4429 = vmatpush1.bf16.msra.mxu0 %v2397
    %4430 = vmatprep.subr.bf16.mxu0 %v2396
    %4431 = vmatpush1.bf16.msra.mxu0 %v2395
    %4432 = vmatprep.subr.bf16.mxu0 %v2394
    %4433 = vmatpush1.bf16.msra.mxu0 %v2393
    %4434 = vmatprep.subr.bf16.mxu0 %v2392
    %4435 = vmatpush1.bf16.msra.mxu0 %v2391
    %4436 = vmatprep.subr.bf16.mxu0 %v2390
    %4437 = vmatpush1.bf16.msra.mxu0 %v2389
    %4438 = vmatprep.subr.bf16.mxu0 %v2388
    %4439 = vmatpush1.bf16.msra.mxu0 %v2387
    %4440 = vmatprep.subr.bf16.mxu0 %v2386
    %4441 = vmatpush1.bf16.msra.mxu0 %v2385
    %4442 = vmatprep.subr.bf16.mxu0 %v2416
    %4443 = vmatpush2.bf16.msra.mxu0 %v2415
    %4444 = vmatprep.subr.bf16.mxu0 %v2414
    %4445 = vmatpush2.bf16.msra.mxu0 %v2413
    %4446 = vmatprep.subr.bf16.mxu0 %v2412
    %4447 = vmatpush2.bf16.msra.mxu0 %v2411
    %4448 = vmatprep.subr.bf16.mxu0 %v2410
    %4449 = vmatpush2.bf16.msra.mxu0 %v2409
    %4450 = vmatprep.subr.bf16.mxu0 %v2408
    %4451 = vmatpush2.bf16.msra.mxu0 %v2407
    %4452 = vmatprep.subr.bf16.mxu0 %v2406
    %4453 = vmatpush2.bf16.msra.mxu0 %v2405
    %4454 = vmatprep.subr.bf16.mxu0 %v2404
    %4455 = vmatpush2.bf16.msra.mxu0 %v2403
    %4456 = vmatprep.subr.bf16.mxu0 %v2402
    %4457 = vmatpush2.bf16.msra.mxu0 %v2401
    %4458 = vmatprep.mubr.bf16.mxu0 %v4407
    %4459 = vmatmul.mubr.bf16.gmra.mxu0 %v4406
    %v4460 = vpop.f32.mrf.mxu0
    %v4461 = vadd.f32 %v2186, %v4460
    %v4462 = vpop.f32.mrf.mxu0
    %v4463 = vadd.f32 %v2190, %v4462
    %v4464 = vpop.f32.mrf.mxu0
    %v4465 = vadd.f32 %v2186, %v4464
    %v4466 = vpop.f32.mrf.mxu0
    %v4467 = vadd.f32 %v2190, %v4466
    %4468 = vmatprep.mubr.bf16.mxu0 %v4409
    %4469 = vmatmul.mubr.bf16.gmra.mxu0 %v4408
    %v4470 = vpop.f32.mrf.mxu0
    %v4471 = vadd.f32 %v2186, %v4470
    %v4472 = vpop.f32.mrf.mxu0
    %v4473 = vadd.f32 %v2190, %v4472
    %v4474 = vpop.f32.mrf.mxu0
    %v4475 = vadd.f32 %v2186, %v4474
    %v4476 = vpop.f32.mrf.mxu0
    %v4477 = vadd.f32 %v2190, %v4476
    %4478 = vmatprep.mubr.bf16.mxu0 %v4411
    %4479 = vmatmul.mubr.bf16.gmra.mxu0 %v4410
    %v4480 = vpop.f32.mrf.mxu0
    %v4481 = vadd.f32 %v2186, %v4480
    %v4482 = vpop.f32.mrf.mxu0
    %v4483 = vadd.f32 %v2190, %v4482
    %v4484 = vpop.f32.mrf.mxu0
    %v4485 = vadd.f32 %v2186, %v4484
    %v4486 = vpop.f32.mrf.mxu0
    %v4487 = vadd.f32 %v2190, %v4486
    %4488 = vmatprep.mubr.bf16.mxu0 %v4413
    %4489 = vmatmul.mubr.bf16.gmra.mxu0 %v4412
    %v4490 = vpop.f32.mrf.mxu0
    %v4491 = vadd.f32 %v2186, %v4490
    %v4492 = vpop.f32.mrf.mxu0
    %v4493 = vadd.f32 %v2190, %v4492
    %v4494 = vpop.f32.mrf.mxu0
    %v4495 = vadd.f32 %v2186, %v4494
    %v4496 = vpop.f32.mrf.mxu0
    %v4497 = vadd.f32 %v2190, %v4496
    %4498 = vmatprep.mubr.bf16.mxu0 %v4415
    %4499 = vmatmul.mubr.bf16.gmra.mxu0 %v4414
    %v4500 = vpop.f32.mrf.mxu0
    %v4501 = vadd.f32 %v2186, %v4500
    %v4502 = vpop.f32.mrf.mxu0
    %v4503 = vadd.f32 %v2190, %v4502
    %v4504 = vpop.f32.mrf.mxu0
    %v4505 = vpop.f32.mrf.mxu0
    %4506 = vdwg.mxu0
    %4507 = vmatprep.subr.bf16.mxu0 %v2432
    %4508 = vmatpush1.bf16.msra.mxu0 %v2431
    %4509 = vmatprep.subr.bf16.mxu0 %v2430
    %4510 = vmatpush1.bf16.msra.mxu0 %v2429
    %4511 = vmatprep.subr.bf16.mxu0 %v2428
    %4512 = vmatpush1.bf16.msra.mxu0 %v2427
    %4513 = vmatprep.subr.bf16.mxu0 %v2426
    %4514 = vmatpush1.bf16.msra.mxu0 %v2425
    %4515 = vmatprep.subr.bf16.mxu0 %v2424
    %4516 = vmatpush1.bf16.msra.mxu0 %v2423
    %4517 = vmatprep.subr.bf16.mxu0 %v2422
    %4518 = vmatpush1.bf16.msra.mxu0 %v2421
    %4519 = vmatprep.subr.bf16.mxu0 %v2420
    %4520 = vmatpush1.bf16.msra.mxu0 %v2419
    %4521 = vmatprep.subr.bf16.mxu0 %v2418
    %4522 = vmatpush1.bf16.msra.mxu0 %v2417
    %4523 = vmatprep.subr.bf16.mxu0 %v2448
    %4524 = vmatpush2.bf16.msra.mxu0 %v2447
    %4525 = vmatprep.subr.bf16.mxu0 %v2446
    %4526 = vmatpush2.bf16.msra.mxu0 %v2445
    %4527 = vmatprep.subr.bf16.mxu0 %v2444
    %4528 = vmatpush2.bf16.msra.mxu0 %v2443
    %4529 = vmatprep.subr.bf16.mxu0 %v2442
    %4530 = vmatpush2.bf16.msra.mxu0 %v2441
    %4531 = vmatprep.subr.bf16.mxu0 %v2440
    %4532 = vmatpush2.bf16.msra.mxu0 %v2439
    %4533 = vmatprep.subr.bf16.mxu0 %v2438
    %4534 = vmatpush2.bf16.msra.mxu0 %v2437
    %4535 = vmatprep.subr.bf16.mxu0 %v2436
    %4536 = vmatpush2.bf16.msra.mxu0 %v2435
    %4537 = vmatprep.subr.bf16.mxu0 %v2434
    %4538 = vmatpush2.bf16.msra.mxu0 %v2433
    %4539 = vmatprep.mubr.bf16.mxu0 %v4417
    %4540 = vmatmul.mubr.bf16.gmra.mxu0 %v4416
    %v4541 = vpop.f32.mrf.mxu0
    %v4542 = vadd.f32 %v4461, %v4541
    %v4543 = vpop.f32.mrf.mxu0
    %v4544 = vadd.f32 %v4463, %v4543
    %v4545 = vpop.f32.mrf.mxu0
    %v4546 = vadd.f32 %v4465, %v4545
    %v4547 = vpop.f32.mrf.mxu0
    %v4548 = vadd.f32 %v4467, %v4547
    %4549 = vmatprep.mubr.bf16.mxu0 %v4419
    %4550 = vmatmul.mubr.bf16.gmra.mxu0 %v4418
    %v4551 = vpop.f32.mrf.mxu0
    %v4552 = vadd.f32 %v4471, %v4551
    %v4553 = vpop.f32.mrf.mxu0
    %v4554 = vadd.f32 %v4473, %v4553
    %v4555 = vpop.f32.mrf.mxu0
    %v4556 = vadd.f32 %v4475, %v4555
    %v4557 = vpop.f32.mrf.mxu0
    %v4558 = vadd.f32 %v4477, %v4557
    %4559 = vmatprep.mubr.bf16.mxu0 %v4421
    %4560 = vmatmul.mubr.bf16.gmra.mxu0 %v4420
    %v4561 = vpop.f32.mrf.mxu0
    %v4562 = vadd.f32 %v4481, %v4561
    %v4563 = vpop.f32.mrf.mxu0
    %v4564 = vadd.f32 %v4483, %v4563
    %v4565 = vpop.f32.mrf.mxu0
    %v4566 = vadd.f32 %v4485, %v4565
    %v4567 = vpop.f32.mrf.mxu0
    %v4568 = vadd.f32 %v4487, %v4567
    %4569 = vmatprep.mubr.bf16.mxu0 %v4423
    %4570 = vmatmul.mubr.bf16.gmra.mxu0 %v4422
    %v4571 = vpop.f32.mrf.mxu0
    %v4572 = vadd.f32 %v4491, %v4571
    %v4573 = vpop.f32.mrf.mxu0
    %v4574 = vadd.f32 %v4493, %v4573
    %v4575 = vpop.f32.mrf.mxu0
    %v4576 = vadd.f32 %v4495, %v4575
    %v4577 = vpop.f32.mrf.mxu0
    %v4578 = vadd.f32 %v4497, %v4577
    %4579 = vmatprep.mubr.bf16.mxu0 %v4425
    %4580 = vmatmul.mubr.bf16.gmra.mxu0 %v4424
    %v4581 = vpop.f32.mrf.mxu0
    %v4582 = vadd.f32 %v4501, %v4581
    %v4583 = vpop.f32.mrf.mxu0
    %v4584 = vadd.f32 %v4503, %v4583
    %v4585 = vpop.f32.mrf.mxu0
    %v4586 = vpop.f32.mrf.mxu0
    %4587 = vdwg.mxu0
    %v4588 = vmax.f32 %v4542, 0.0
    %v4589 = vmax.f32 %v4544, 0.0
    %v4590 = vmax.f32 %v4546, 0.0
    %v4591 = vmax.f32 %v4548, 0.0
    %v4592 = vmax.f32 %v4552, 0.0
    %v4593 = vmax.f32 %v4554, 0.0
    %v4594 = vmax.f32 %v4556, 0.0
    %v4595 = vmax.f32 %v4558, 0.0
    %v4596 = vmax.f32 %v4562, 0.0
    %v4597 = vmax.f32 %v4564, 0.0
    %v4598 = vmax.f32 %v4566, 0.0
    %v4599 = vmax.f32 %v4568, 0.0
    %v4600 = vmax.f32 %v4572, 0.0
    %v4601 = vmax.f32 %v4574, 0.0
    %v4602 = vmax.f32 %v4576, 0.0
    %v4603 = vmax.f32 %v4578, 0.0
    %v4604 = vmax.f32 %v4582, 0.0
    %v4605 = vmax.f32 %v4584, 0.0
    %v4606 = vpack.c.bf16 %v4590, %v4588
    %v4607 = vpack.c.bf16 %v4591, %v4589
    %v4608 = vpack.c.bf16 %v4594, %v4592
    %v4609 = vpack.c.bf16 %v4595, %v4593
    %v4610 = vpack.c.bf16 %v4598, %v4596
    %v4611 = vpack.c.bf16 %v4599, %v4597
    %v4612 = vpack.c.bf16 %v4602, %v4600
    %v4613 = vpack.c.bf16 %v4603, %v4601
    %v4614 = vpack.c.bf16 %v4604, %v4604
    %v4615 = vpack.c.bf16 %v4605, %v4605
    %4616 = vmatprep.subr.bf16.mxu0 %v2814
    %4617 = vmatpush1.bf16.msra.mxu0 %v2813
    %4618 = vmatprep.subr.bf16.mxu0 %v2812
    %4619 = vmatpush1.bf16.msra.mxu0 %v2811
    %4620 = vmatprep.subr.bf16.mxu0 %v2810
    %4621 = vmatpush1.bf16.msra.mxu0 %v2809
    %4622 = vmatprep.subr.bf16.mxu0 %v2808
    %4623 = vmatpush1.bf16.msra.mxu0 %v2807
    %4624 = vmatprep.subr.bf16.mxu0 %v2806
    %4625 = vmatpush1.bf16.msra.mxu0 %v2805
    %4626 = vmatprep.subr.bf16.mxu0 %v2804
    %4627 = vmatpush1.bf16.msra.mxu0 %v2803
    %4628 = vmatprep.subr.bf16.mxu0 %v2802
    %4629 = vmatpush1.bf16.msra.mxu0 %v2801
    %4630 = vmatprep.subr.bf16.mxu0 %v2800
    %4631 = vmatpush1.bf16.msra.mxu0 %v2799
    %4632 = vmatprep.subr.bf16.mxu0 %v2830
    %4633 = vmatpush2.bf16.msra.mxu0 %v2829
    %4634 = vmatprep.subr.bf16.mxu0 %v2828
    %4635 = vmatpush2.bf16.msra.mxu0 %v2827
    %4636 = vmatprep.subr.bf16.mxu0 %v2826
    %4637 = vmatpush2.bf16.msra.mxu0 %v2825
    %4638 = vmatprep.subr.bf16.mxu0 %v2824
    %4639 = vmatpush2.bf16.msra.mxu0 %v2823
    %4640 = vmatprep.subr.bf16.mxu0 %v2822
    %4641 = vmatpush2.bf16.msra.mxu0 %v2821
    %4642 = vmatprep.subr.bf16.mxu0 %v2820
    %4643 = vmatpush2.bf16.msra.mxu0 %v2819
    %4644 = vmatprep.subr.bf16.mxu0 %v2818
    %4645 = vmatpush2.bf16.msra.mxu0 %v2817
    %4646 = vmatprep.subr.bf16.mxu0 %v2816
    %4647 = vmatpush2.bf16.msra.mxu0 %v2815
    %4648 = vmatprep.mubr.bf16.mxu0 %v4607
    %4649 = vmatmul.mubr.bf16.gmra.mxu0 %v4606
    %v4650 = vpop.f32.mrf.mxu0
    %v4651 = vadd.f32 0.0, %v4650
    %v4652 = vpop.f32.mrf.mxu0
    %v4653 = vadd.f32 0.0, %v4652
    %v4654 = vpop.f32.mrf.mxu0
    %v4655 = vadd.f32 0.0, %v4654
    %v4656 = vpop.f32.mrf.mxu0
    %v4657 = vadd.f32 0.0, %v4656
    %4658 = vmatprep.mubr.bf16.mxu0 %v4609
    %4659 = vmatmul.mubr.bf16.gmra.mxu0 %v4608
    %v4660 = vpop.f32.mrf.mxu0
    %v4661 = vadd.f32 0.0, %v4660
    %v4662 = vpop.f32.mrf.mxu0
    %v4663 = vadd.f32 0.0, %v4662
    %v4664 = vpop.f32.mrf.mxu0
    %v4665 = vadd.f32 0.0, %v4664
    %v4666 = vpop.f32.mrf.mxu0
    %v4667 = vadd.f32 0.0, %v4666
    %4668 = vmatprep.mubr.bf16.mxu0 %v4611
    %4669 = vmatmul.mubr.bf16.gmra.mxu0 %v4610
    %v4670 = vpop.f32.mrf.mxu0
    %v4671 = vadd.f32 0.0, %v4670
    %v4672 = vpop.f32.mrf.mxu0
    %v4673 = vadd.f32 0.0, %v4672
    %v4674 = vpop.f32.mrf.mxu0
    %v4675 = vadd.f32 0.0, %v4674
    %v4676 = vpop.f32.mrf.mxu0
    %v4677 = vadd.f32 0.0, %v4676
    %4678 = vmatprep.mubr.bf16.mxu0 %v4613
    %4679 = vmatmul.mubr.bf16.gmra.mxu0 %v4612
    %v4680 = vpop.f32.mrf.mxu0
    %v4681 = vadd.f32 0.0, %v4680
    %v4682 = vpop.f32.mrf.mxu0
    %v4683 = vadd.f32 0.0, %v4682
    %v4684 = vpop.f32.mrf.mxu0
    %v4685 = vadd.f32 0.0, %v4684
    %v4686 = vpop.f32.mrf.mxu0
    %v4687 = vadd.f32 0.0, %v4686
    %4688 = vmatprep.mubr.bf16.mxu0 %v4615
    %4689 = vmatmul.mubr.bf16.gmra.mxu0 %v4614
    %v4690 = vpop.f32.mrf.mxu0
    %v4691 = vadd.f32 0.0, %v4690
    %v4692 = vpop.f32.mrf.mxu0
    %v4693 = vadd.f32 0.0, %v4692
    %v4694 = vpop.f32.mrf.mxu0
    %v4695 = vpop.f32.mrf.mxu0
    %4696 = vdwg.mxu0
    %v4697 = vadd.f32 %v3844, %v4651
    %v4698 = vadd.f32 %v3845, %v4653
    %v4699 = vadd.f32 %v3846, %v4655
    %v4700 = vadd.f32 %v3847, %v4657
    %v4701 = vadd.f32 %v3848, %v4661
    %v4702 = vadd.f32 %v3849, %v4663
    %v4703 = vadd.f32 %v3850, %v4665
    %v4704 = vadd.f32 %v3851, %v4667
    %v4705 = vadd.f32 %v3852, %v4671
    %v4706 = vadd.f32 %v3853, %v4673
    %v4707 = vadd.f32 %v3854, %v4675
    %v4708 = vadd.f32 %v3855, %v4677
    %v4709 = vadd.f32 %v3856, %v4681
    %v4710 = vadd.f32 %v3857, %v4683
    %v4711 = vadd.f32 %v3858, %v4685
    %v4712 = vadd.f32 %v3859, %v4687
    %v4713 = vadd.f32 %v3860, %v4691
    %v4714 = vadd.f32 %v3861, %v4693
    %v4715 = vadd.f32 %v4697, %v2966
    %v4716 = vadd.f32 %v4698, %v2970
    %v4717 = vadd.f32 %v4699, %v2966
    %v4718 = vadd.f32 %v4700, %v2970
    %v4719 = vadd.f32 %v4701, %v2966
    %v4720 = vadd.f32 %v4702, %v2970
    %v4721 = vadd.f32 %v4703, %v2966
    %v4722 = vadd.f32 %v4704, %v2970
    %v4723 = vadd.f32 %v4705, %v2966
    %v4724 = vadd.f32 %v4706, %v2970
    %v4725 = vadd.f32 %v4707, %v2966
    %v4726 = vadd.f32 %v4708, %v2970
    %v4727 = vadd.f32 %v4709, %v2966
    %v4728 = vadd.f32 %v4710, %v2970
    %v4729 = vadd.f32 %v4711, %v2966
    %v4730 = vadd.f32 %v4712, %v2970
    %v4731 = vadd.f32 %v4713, %v2966
    %v4732 = vadd.f32 %v4714, %v2970
    %v4733 = vpack.c.bf16 %v4717, %v4715
    %v4734 = vpack.c.bf16 %v4718, %v4716
    %v4735 = vpack.c.bf16 %v4721, %v4719
    %v4736 = vpack.c.bf16 %v4722, %v4720
    %v4737 = vpack.c.bf16 %v4725, %v4723
    %v4738 = vpack.c.bf16 %v4726, %v4724
    %v4739 = vpack.c.bf16 %v4729, %v4727
    %v4740 = vpack.c.bf16 %v4730, %v4728
    %v4741 = vpack.c.bf16 %v4731, %v4731
    %v4742 = vpack.c.bf16 %v4732, %v4732
    %4743 = vmatprep.subr.bf16.mxu0 %v966
    %4744 = vmatpush1.bf16.msra.mxu0 %v965
    %4745 = vmatprep.subr.bf16.mxu0 %v964
    %4746 = vmatpush1.bf16.msra.mxu0 %v963
    %4747 = vmatprep.subr.bf16.mxu0 %v962
    %4748 = vmatpush1.bf16.msra.mxu0 %v961
    %4749 = vmatprep.subr.bf16.mxu0 %v960
    %4750 = vmatpush1.bf16.msra.mxu0 %v959
    %4751 = vmatprep.subr.bf16.mxu0 %v958
    %4752 = vmatpush1.bf16.msra.mxu0 %v957
    %4753 = vmatprep.subr.bf16.mxu0 %v956
    %4754 = vmatpush1.bf16.msra.mxu0 %v955
    %4755 = vmatprep.subr.bf16.mxu0 %v954
    %4756 = vmatpush1.bf16.msra.mxu0 %v953
    %4757 = vmatprep.subr.bf16.mxu0 %v952
    %4758 = vmatpush1.bf16.msra.mxu0 %v951
    %4759 = vmatprep.subr.bf16.mxu0 %v982
    %4760 = vmatpush2.bf16.msra.mxu0 %v981
    %4761 = vmatprep.subr.bf16.mxu0 %v980
    %4762 = vmatpush2.bf16.msra.mxu0 %v979
    %4763 = vmatprep.subr.bf16.mxu0 %v978
    %4764 = vmatpush2.bf16.msra.mxu0 %v977
    %4765 = vmatprep.subr.bf16.mxu0 %v976
    %4766 = vmatpush2.bf16.msra.mxu0 %v975
    %4767 = vmatprep.subr.bf16.mxu0 %v974
    %4768 = vmatpush2.bf16.msra.mxu0 %v973
    %4769 = vmatprep.subr.bf16.mxu0 %v972
    %4770 = vmatpush2.bf16.msra.mxu0 %v971
    %4771 = vmatprep.subr.bf16.mxu0 %v970
    %4772 = vmatpush2.bf16.msra.mxu0 %v969
    %4773 = vmatprep.subr.bf16.mxu0 %v968
    %4774 = vmatpush2.bf16.msra.mxu0 %v967
    %4775 = vmatprep.mubr.bf16.mxu0 %v4734
    %4776 = vmatmul.mubr.bf16.gmra.mxu0 %v4733
    %v4777 = vpop.f32.mrf.mxu0
    %v4778 = vadd.f32 %v848, %v4777
    %v4779 = vpop.f32.mrf.mxu0
    %v4780 = vadd.f32 %v852, %v4779
    %v4781 = vpop.f32.mrf.mxu0
    %v4782 = vadd.f32 %v848, %v4781
    %v4783 = vpop.f32.mrf.mxu0
    %v4784 = vadd.f32 %v852, %v4783
    %4785 = vmatprep.mubr.bf16.mxu0 %v4736
    %4786 = vmatmul.mubr.bf16.gmra.mxu0 %v4735
    %v4787 = vpop.f32.mrf.mxu0
    %v4788 = vadd.f32 %v848, %v4787
    %v4789 = vpop.f32.mrf.mxu0
    %v4790 = vadd.f32 %v852, %v4789
    %v4791 = vpop.f32.mrf.mxu0
    %v4792 = vadd.f32 %v848, %v4791
    %v4793 = vpop.f32.mrf.mxu0
    %v4794 = vadd.f32 %v852, %v4793
    %4795 = vmatprep.mubr.bf16.mxu0 %v4738
    %4796 = vmatmul.mubr.bf16.gmra.mxu0 %v4737
    %v4797 = vpop.f32.mrf.mxu0
    %v4798 = vadd.f32 %v848, %v4797
    %v4799 = vpop.f32.mrf.mxu0
    %v4800 = vadd.f32 %v852, %v4799
    %v4801 = vpop.f32.mrf.mxu0
    %v4802 = vadd.f32 %v848, %v4801
    %v4803 = vpop.f32.mrf.mxu0
    %v4804 = vadd.f32 %v852, %v4803
    %4805 = vmatprep.mubr.bf16.mxu0 %v4740
    %4806 = vmatmul.mubr.bf16.gmra.mxu0 %v4739
    %v4807 = vpop.f32.mrf.mxu0
    %v4808 = vadd.f32 %v848, %v4807
    %v4809 = vpop.f32.mrf.mxu0
    %v4810 = vadd.f32 %v852, %v4809
    %v4811 = vpop.f32.mrf.mxu0
    %v4812 = vadd.f32 %v848, %v4811
    %v4813 = vpop.f32.mrf.mxu0
    %v4814 = vadd.f32 %v852, %v4813
    %4815 = vmatprep.mubr.bf16.mxu0 %v4742
    %4816 = vmatmul.mubr.bf16.gmra.mxu0 %v4741
    %v4817 = vpop.f32.mrf.mxu0
    %v4818 = vadd.f32 %v848, %v4817
    %v4819 = vpop.f32.mrf.mxu0
    %v4820 = vadd.f32 %v852, %v4819
    %v4821 = vpop.f32.mrf.mxu0
    %v4822 = vpop.f32.mrf.mxu0
    %4823 = vdwg.mxu0
    %v4824 = vmax.f32 %v4778, 0.0
    %v4825 = vmax.f32 %v4780, 0.0
    %v4826 = vmax.f32 %v4782, 0.0
    %v4827 = vmax.f32 %v4784, 0.0
    %v4828 = vmax.f32 %v4788, 0.0
    %v4829 = vmax.f32 %v4790, 0.0
    %v4830 = vmax.f32 %v4792, 0.0
    %v4831 = vmax.f32 %v4794, 0.0
    %v4832 = vmax.f32 %v4798, 0.0
    %v4833 = vmax.f32 %v4800, 0.0
    %v4834 = vmax.f32 %v4802, 0.0
    %v4835 = vmax.f32 %v4804, 0.0
    %v4836 = vmax.f32 %v4808, 0.0
    %v4837 = vmax.f32 %v4810, 0.0
    %v4838 = vmax.f32 %v4812, 0.0
    %v4839 = vmax.f32 %v4814, 0.0
    %v4840 = vmax.f32 %v4818, 0.0
    %v4841 = vmax.f32 %v4820, 0.0
    %v4842 = vrot.slane %v4824, 7
    %v4843 = vrot.slane %v4825, 7
    %v4844 = vrot.slane %v4826, 7
    %v4845 = vrot.slane %v4827, 7
    %v4846 = vrot.slane %v4828, 7
    %v4847 = vrot.slane %v4829, 7
    %v4848 = vrot.slane %v4830, 7
    %v4849 = vrot.slane %v4831, 7
    %v4850 = vrot.slane %v4832, 7
    %v4851 = vrot.slane %v4833, 7
    %v4852 = vrot.slane %v4834, 7
    %v4853 = vrot.slane %v4835, 7
    %v4854 = vrot.slane %v4836, 7
    %v4855 = vrot.slane %v4837, 7
    %v4856 = vrot.slane %v4838, 7
    %v4857 = vrot.slane %v4839, 7
    %v4858 = vrot.slane %v4840, 7
    %v4859 = vrot.slane %v4841, 7
    %v4860 = vsel %vm1134, %v4856, %v4858
    %v4861 = vsel %vm1134, %v4857, %v4859
    %v4862 = vsel %vm1134, %v4854, %v4856
    %v4863 = vsel %vm1134, %v4855, %v4857
    %v4864 = vsel %vm1134, %v4852, %v4854
    %v4865 = vsel %vm1134, %v4853, %v4855
    %v4866 = vsel %vm1134, %v4850, %v4852
    %v4867 = vsel %vm1134, %v4851, %v4853
    %v4868 = vsel %vm1134, %v4848, %v4850
    %v4869 = vsel %vm1134, %v4849, %v4851
    %v4870 = vsel %vm1134, %v4846, %v4848
    %v4871 = vsel %vm1134, %v4847, %v4849
    %v4872 = vsel %vm1134, %v4844, %v4846
    %v4873 = vsel %vm1134, %v4845, %v4847
    %v4874 = vsel %vm1134, %v4842, %v4844
    %v4875 = vsel %vm1134, %v4843, %v4845
    %v4876 = vsel %vm1134, %v4858, %v4842
    %v4877 = vsel %vm1134, %v4859, %v4843
    %v4878 = vmul.f32 %v4876, %v1156
    %v4879 = vmul.f32 %v4877, %v1156
    %v4880 = vmul.f32 %v4874, %v1161
    %v4881 = vmul.f32 %v4875, %v1161
    %v4882 = vmul.f32 %v4872, %v1166
    %v4883 = vmul.f32 %v4873, %v1166
    %v4884 = vmul.f32 %v4870, %v1171
    %v4885 = vmul.f32 %v4871, %v1171
    %v4886 = vmul.f32 %v4868, %v1176
    %v4887 = vmul.f32 %v4869, %v1176
    %v4888 = vmul.f32 %v4866, %v1181
    %v4889 = vmul.f32 %v4867, %v1181
    %v4890 = vmul.f32 %v4864, %v1186
    %v4891 = vmul.f32 %v4865, %v1186
    %v4892 = vmul.f32 %v4862, %v1191
    %v4893 = vmul.f32 %v4863, %v1191
    %v4894 = vmul.f32 %v4860, %v1196
    %v4895 = vmul.f32 %v4861, %v1196
    %v4896 = vrot.slane %v4824, 1
    %v4897 = vrot.slane %v4825, 1
    %v4898 = vrot.slane %v4826, 1
    %v4899 = vrot.slane %v4827, 1
    %v4900 = vrot.slane %v4828, 1
    %v4901 = vrot.slane %v4829, 1
    %v4902 = vrot.slane %v4830, 1
    %v4903 = vrot.slane %v4831, 1
    %v4904 = vrot.slane %v4832, 1
    %v4905 = vrot.slane %v4833, 1
    %v4906 = vrot.slane %v4834, 1
    %v4907 = vrot.slane %v4835, 1
    %v4908 = vrot.slane %v4836, 1
    %v4909 = vrot.slane %v4837, 1
    %v4910 = vrot.slane %v4838, 1
    %v4911 = vrot.slane %v4839, 1
    %v4912 = vrot.slane %v4840, 1
    %v4913 = vrot.slane %v4841, 1
    %v4914 = vsel %vm1234, %v4910, %v4912
    %v4915 = vsel %vm1234, %v4911, %v4913
    %v4916 = vsel %vm1234, %v4908, %v4910
    %v4917 = vsel %vm1234, %v4909, %v4911
    %v4918 = vsel %vm1234, %v4906, %v4908
    %v4919 = vsel %vm1234, %v4907, %v4909
    %v4920 = vsel %vm1234, %v4904, %v4906
    %v4921 = vsel %vm1234, %v4905, %v4907
    %v4922 = vsel %vm1234, %v4902, %v4904
    %v4923 = vsel %vm1234, %v4903, %v4905
    %v4924 = vsel %vm1234, %v4900, %v4902
    %v4925 = vsel %vm1234, %v4901, %v4903
    %v4926 = vsel %vm1234, %v4898, %v4900
    %v4927 = vsel %vm1234, %v4899, %v4901
    %v4928 = vsel %vm1234, %v4896, %v4898
    %v4929 = vsel %vm1234, %v4897, %v4899
    %v4930 = vsel %vm1234, %v4912, %v4896
    %v4931 = vsel %vm1234, %v4913, %v4897
    %v4932 = vmul.f32 %v4928, %v1255
    %v4933 = vmul.f32 %v4929, %v1255
    %v4934 = vmul.f32 %v4926, %v1259
    %v4935 = vmul.f32 %v4927, %v1259
    %v4936 = vmul.f32 %v4924, %v1263
    %v4937 = vmul.f32 %v4925, %v1263
    %v4938 = vmul.f32 %v4922, %v1267
    %v4939 = vmul.f32 %v4923, %v1267
    %v4940 = vmul.f32 %v4920, %v1271
    %v4941 = vmul.f32 %v4921, %v1271
    %v4942 = vmul.f32 %v4918, %v1275
    %v4943 = vmul.f32 %v4919, %v1275
    %v4944 = vmul.f32 %v4916, %v1279
    %v4945 = vmul.f32 %v4917, %v1279
    %v4946 = vmul.f32 %v4914, %v1283
    %v4947 = vmul.f32 %v4915, %v1283
    %v4948 = vmul.f32 %v4930, %v1287
    %v4949 = vmul.f32 %v4931, %v1287
    %v4950 = vpack.c.bf16 %v4880, %v4878
    %v4951 = vpack.c.bf16 %v4881, %v4879
    %v4952 = vpack.c.bf16 %v4884, %v4882
    %v4953 = vpack.c.bf16 %v4885, %v4883
    %v4954 = vpack.c.bf16 %v4888, %v4886
    %v4955 = vpack.c.bf16 %v4889, %v4887
    %v4956 = vpack.c.bf16 %v4892, %v4890
    %v4957 = vpack.c.bf16 %v4893, %v4891
    %v4958 = vpack.c.bf16 %v4894, %v4894
    %v4959 = vpack.c.bf16 %v4895, %v4895
    %v4960 = vpack.c.bf16 %v4826, %v4824
    %v4961 = vpack.c.bf16 %v4827, %v4825
    %v4962 = vpack.c.bf16 %v4830, %v4828
    %v4963 = vpack.c.bf16 %v4831, %v4829
    %v4964 = vpack.c.bf16 %v4834, %v4832
    %v4965 = vpack.c.bf16 %v4835, %v4833
    %v4966 = vpack.c.bf16 %v4838, %v4836
    %v4967 = vpack.c.bf16 %v4839, %v4837
    %v4968 = vpack.c.bf16 %v4840, %v4840
    %v4969 = vpack.c.bf16 %v4841, %v4841
    %v4970 = vpack.c.bf16 %v4934, %v4932
    %v4971 = vpack.c.bf16 %v4935, %v4933
    %v4972 = vpack.c.bf16 %v4938, %v4936
    %v4973 = vpack.c.bf16 %v4939, %v4937
    %v4974 = vpack.c.bf16 %v4942, %v4940
    %v4975 = vpack.c.bf16 %v4943, %v4941
    %v4976 = vpack.c.bf16 %v4946, %v4944
    %v4977 = vpack.c.bf16 %v4947, %v4945
    %v4978 = vpack.c.bf16 %v4948, %v4948
    %v4979 = vpack.c.bf16 %v4949, %v4949
    %4980 = vmatprep.subr.bf16.mxu0 %v1651
    %4981 = vmatpush1.bf16.msra.mxu0 %v1650
    %4982 = vmatprep.subr.bf16.mxu0 %v1649
    %4983 = vmatpush1.bf16.msra.mxu0 %v1648
    %4984 = vmatprep.subr.bf16.mxu0 %v1647
    %4985 = vmatpush1.bf16.msra.mxu0 %v1646
    %4986 = vmatprep.subr.bf16.mxu0 %v1645
    %4987 = vmatpush1.bf16.msra.mxu0 %v1644
    %4988 = vmatprep.subr.bf16.mxu0 %v1643
    %4989 = vmatpush1.bf16.msra.mxu0 %v1642
    %4990 = vmatprep.subr.bf16.mxu0 %v1641
    %4991 = vmatpush1.bf16.msra.mxu0 %v1640
    %4992 = vmatprep.subr.bf16.mxu0 %v1639
    %4993 = vmatpush1.bf16.msra.mxu0 %v1638
    %4994 = vmatprep.subr.bf16.mxu0 %v1637
    %4995 = vmatpush1.bf16.msra.mxu0 %v1636
    %4996 = vmatprep.subr.bf16.mxu0 %v1667
    %4997 = vmatpush2.bf16.msra.mxu0 %v1666
    %4998 = vmatprep.subr.bf16.mxu0 %v1665
    %4999 = vmatpush2.bf16.msra.mxu0 %v1664
    %5000 = vmatprep.subr.bf16.mxu0 %v1663
    %5001 = vmatpush2.bf16.msra.mxu0 %v1662
    %5002 = vmatprep.subr.bf16.mxu0 %v1661
    %5003 = vmatpush2.bf16.msra.mxu0 %v1660
    %5004 = vmatprep.subr.bf16.mxu0 %v1659
    %5005 = vmatpush2.bf16.msra.mxu0 %v1658
    %5006 = vmatprep.subr.bf16.mxu0 %v1657
    %5007 = vmatpush2.bf16.msra.mxu0 %v1656
    %5008 = vmatprep.subr.bf16.mxu0 %v1655
    %5009 = vmatpush2.bf16.msra.mxu0 %v1654
    %5010 = vmatprep.subr.bf16.mxu0 %v1653
    %5011 = vmatpush2.bf16.msra.mxu0 %v1652
    %5012 = vmatprep.mubr.bf16.mxu0 %v4951
    %5013 = vmatmul.mubr.bf16.gmra.mxu0 %v4950
    %v5014 = vpop.f32.mrf.mxu0
    %v5015 = vadd.f32 %v1341, %v5014
    %v5016 = vpop.f32.mrf.mxu0
    %v5017 = vadd.f32 %v1345, %v5016
    %v5018 = vpop.f32.mrf.mxu0
    %v5019 = vadd.f32 %v1341, %v5018
    %v5020 = vpop.f32.mrf.mxu0
    %v5021 = vadd.f32 %v1345, %v5020
    %5022 = vmatprep.mubr.bf16.mxu0 %v4953
    %5023 = vmatmul.mubr.bf16.gmra.mxu0 %v4952
    %v5024 = vpop.f32.mrf.mxu0
    %v5025 = vadd.f32 %v1341, %v5024
    %v5026 = vpop.f32.mrf.mxu0
    %v5027 = vadd.f32 %v1345, %v5026
    %v5028 = vpop.f32.mrf.mxu0
    %v5029 = vadd.f32 %v1341, %v5028
    %v5030 = vpop.f32.mrf.mxu0
    %v5031 = vadd.f32 %v1345, %v5030
    %5032 = vmatprep.mubr.bf16.mxu0 %v4955
    %5033 = vmatmul.mubr.bf16.gmra.mxu0 %v4954
    %v5034 = vpop.f32.mrf.mxu0
    %v5035 = vadd.f32 %v1341, %v5034
    %v5036 = vpop.f32.mrf.mxu0
    %v5037 = vadd.f32 %v1345, %v5036
    %v5038 = vpop.f32.mrf.mxu0
    %v5039 = vadd.f32 %v1341, %v5038
    %v5040 = vpop.f32.mrf.mxu0
    %v5041 = vadd.f32 %v1345, %v5040
    %5042 = vmatprep.mubr.bf16.mxu0 %v4957
    %5043 = vmatmul.mubr.bf16.gmra.mxu0 %v4956
    %v5044 = vpop.f32.mrf.mxu0
    %v5045 = vadd.f32 %v1341, %v5044
    %v5046 = vpop.f32.mrf.mxu0
    %v5047 = vadd.f32 %v1345, %v5046
    %v5048 = vpop.f32.mrf.mxu0
    %v5049 = vadd.f32 %v1341, %v5048
    %v5050 = vpop.f32.mrf.mxu0
    %v5051 = vadd.f32 %v1345, %v5050
    %5052 = vmatprep.mubr.bf16.mxu0 %v4959
    %5053 = vmatmul.mubr.bf16.gmra.mxu0 %v4958
    %v5054 = vpop.f32.mrf.mxu0
    %v5055 = vadd.f32 %v1341, %v5054
    %v5056 = vpop.f32.mrf.mxu0
    %v5057 = vadd.f32 %v1345, %v5056
    %v5058 = vpop.f32.mrf.mxu0
    %v5059 = vpop.f32.mrf.mxu0
    %5060 = vdwg.mxu0
    %5061 = vmatprep.subr.bf16.mxu0 %v1683
    %5062 = vmatpush1.bf16.msra.mxu0 %v1682
    %5063 = vmatprep.subr.bf16.mxu0 %v1681
    %5064 = vmatpush1.bf16.msra.mxu0 %v1680
    %5065 = vmatprep.subr.bf16.mxu0 %v1679
    %5066 = vmatpush1.bf16.msra.mxu0 %v1678
    %5067 = vmatprep.subr.bf16.mxu0 %v1677
    %5068 = vmatpush1.bf16.msra.mxu0 %v1676
    %5069 = vmatprep.subr.bf16.mxu0 %v1675
    %5070 = vmatpush1.bf16.msra.mxu0 %v1674
    %5071 = vmatprep.subr.bf16.mxu0 %v1673
    %5072 = vmatpush1.bf16.msra.mxu0 %v1672
    %5073 = vmatprep.subr.bf16.mxu0 %v1671
    %5074 = vmatpush1.bf16.msra.mxu0 %v1670
    %5075 = vmatprep.subr.bf16.mxu0 %v1669
    %5076 = vmatpush1.bf16.msra.mxu0 %v1668
    %5077 = vmatprep.subr.bf16.mxu0 %v1699
    %5078 = vmatpush2.bf16.msra.mxu0 %v1698
    %5079 = vmatprep.subr.bf16.mxu0 %v1697
    %5080 = vmatpush2.bf16.msra.mxu0 %v1696
    %5081 = vmatprep.subr.bf16.mxu0 %v1695
    %5082 = vmatpush2.bf16.msra.mxu0 %v1694
    %5083 = vmatprep.subr.bf16.mxu0 %v1693
    %5084 = vmatpush2.bf16.msra.mxu0 %v1692
    %5085 = vmatprep.subr.bf16.mxu0 %v1691
    %5086 = vmatpush2.bf16.msra.mxu0 %v1690
    %5087 = vmatprep.subr.bf16.mxu0 %v1689
    %5088 = vmatpush2.bf16.msra.mxu0 %v1688
    %5089 = vmatprep.subr.bf16.mxu0 %v1687
    %5090 = vmatpush2.bf16.msra.mxu0 %v1686
    %5091 = vmatprep.subr.bf16.mxu0 %v1685
    %5092 = vmatpush2.bf16.msra.mxu0 %v1684
    %5093 = vmatprep.mubr.bf16.mxu0 %v4961
    %5094 = vmatmul.mubr.bf16.gmra.mxu0 %v4960
    %v5095 = vpop.f32.mrf.mxu0
    %v5096 = vadd.f32 %v5015, %v5095
    %v5097 = vpop.f32.mrf.mxu0
    %v5098 = vadd.f32 %v5017, %v5097
    %v5099 = vpop.f32.mrf.mxu0
    %v5100 = vadd.f32 %v5019, %v5099
    %v5101 = vpop.f32.mrf.mxu0
    %v5102 = vadd.f32 %v5021, %v5101
    %5103 = vmatprep.mubr.bf16.mxu0 %v4963
    %5104 = vmatmul.mubr.bf16.gmra.mxu0 %v4962
    %v5105 = vpop.f32.mrf.mxu0
    %v5106 = vadd.f32 %v5025, %v5105
    %v5107 = vpop.f32.mrf.mxu0
    %v5108 = vadd.f32 %v5027, %v5107
    %v5109 = vpop.f32.mrf.mxu0
    %v5110 = vadd.f32 %v5029, %v5109
    %v5111 = vpop.f32.mrf.mxu0
    %v5112 = vadd.f32 %v5031, %v5111
    %5113 = vmatprep.mubr.bf16.mxu0 %v4965
    %5114 = vmatmul.mubr.bf16.gmra.mxu0 %v4964
    %v5115 = vpop.f32.mrf.mxu0
    %v5116 = vadd.f32 %v5035, %v5115
    %v5117 = vpop.f32.mrf.mxu0
    %v5118 = vadd.f32 %v5037, %v5117
    %v5119 = vpop.f32.mrf.mxu0
    %v5120 = vadd.f32 %v5039, %v5119
    %v5121 = vpop.f32.mrf.mxu0
    %v5122 = vadd.f32 %v5041, %v5121
    %5123 = vmatprep.mubr.bf16.mxu0 %v4967
    %5124 = vmatmul.mubr.bf16.gmra.mxu0 %v4966
    %v5125 = vpop.f32.mrf.mxu0
    %v5126 = vadd.f32 %v5045, %v5125
    %v5127 = vpop.f32.mrf.mxu0
    %v5128 = vadd.f32 %v5047, %v5127
    %v5129 = vpop.f32.mrf.mxu0
    %v5130 = vadd.f32 %v5049, %v5129
    %v5131 = vpop.f32.mrf.mxu0
    %v5132 = vadd.f32 %v5051, %v5131
    %5133 = vmatprep.mubr.bf16.mxu0 %v4969
    %5134 = vmatmul.mubr.bf16.gmra.mxu0 %v4968
    %v5135 = vpop.f32.mrf.mxu0
    %v5136 = vadd.f32 %v5055, %v5135
    %v5137 = vpop.f32.mrf.mxu0
    %v5138 = vadd.f32 %v5057, %v5137
    %v5139 = vpop.f32.mrf.mxu0
    %v5140 = vpop.f32.mrf.mxu0
    %5141 = vdwg.mxu0
    %5142 = vmatprep.subr.bf16.mxu0 %v1715
    %5143 = vmatpush1.bf16.msra.mxu0 %v1714
    %5144 = vmatprep.subr.bf16.mxu0 %v1713
    %5145 = vmatpush1.bf16.msra.mxu0 %v1712
    %5146 = vmatprep.subr.bf16.mxu0 %v1711
    %5147 = vmatpush1.bf16.msra.mxu0 %v1710
    %5148 = vmatprep.subr.bf16.mxu0 %v1709
    %5149 = vmatpush1.bf16.msra.mxu0 %v1708
    %5150 = vmatprep.subr.bf16.mxu0 %v1707
    %5151 = vmatpush1.bf16.msra.mxu0 %v1706
    %5152 = vmatprep.subr.bf16.mxu0 %v1705
    %5153 = vmatpush1.bf16.msra.mxu0 %v1704
    %5154 = vmatprep.subr.bf16.mxu0 %v1703
    %5155 = vmatpush1.bf16.msra.mxu0 %v1702
    %5156 = vmatprep.subr.bf16.mxu0 %v1701
    %5157 = vmatpush1.bf16.msra.mxu0 %v1700
    %5158 = vmatprep.subr.bf16.mxu0 %v1731
    %5159 = vmatpush2.bf16.msra.mxu0 %v1730
    %5160 = vmatprep.subr.bf16.mxu0 %v1729
    %5161 = vmatpush2.bf16.msra.mxu0 %v1728
    %5162 = vmatprep.subr.bf16.mxu0 %v1727
    %5163 = vmatpush2.bf16.msra.mxu0 %v1726
    %5164 = vmatprep.subr.bf16.mxu0 %v1725
    %5165 = vmatpush2.bf16.msra.mxu0 %v1724
    %5166 = vmatprep.subr.bf16.mxu0 %v1723
    %5167 = vmatpush2.bf16.msra.mxu0 %v1722
    %5168 = vmatprep.subr.bf16.mxu0 %v1721
    %5169 = vmatpush2.bf16.msra.mxu0 %v1720
    %5170 = vmatprep.subr.bf16.mxu0 %v1719
    %5171 = vmatpush2.bf16.msra.mxu0 %v1718
    %5172 = vmatprep.subr.bf16.mxu0 %v1717
    %5173 = vmatpush2.bf16.msra.mxu0 %v1716
    %5174 = vmatprep.mubr.bf16.mxu0 %v4971
    %5175 = vmatmul.mubr.bf16.gmra.mxu0 %v4970
    %v5176 = vpop.f32.mrf.mxu0
    %v5177 = vadd.f32 %v5096, %v5176
    %v5178 = vpop.f32.mrf.mxu0
    %v5179 = vadd.f32 %v5098, %v5178
    %v5180 = vpop.f32.mrf.mxu0
    %v5181 = vadd.f32 %v5100, %v5180
    %v5182 = vpop.f32.mrf.mxu0
    %v5183 = vadd.f32 %v5102, %v5182
    %5184 = vmatprep.mubr.bf16.mxu0 %v4973
    %5185 = vmatmul.mubr.bf16.gmra.mxu0 %v4972
    %v5186 = vpop.f32.mrf.mxu0
    %v5187 = vadd.f32 %v5106, %v5186
    %v5188 = vpop.f32.mrf.mxu0
    %v5189 = vadd.f32 %v5108, %v5188
    %v5190 = vpop.f32.mrf.mxu0
    %v5191 = vadd.f32 %v5110, %v5190
    %v5192 = vpop.f32.mrf.mxu0
    %v5193 = vadd.f32 %v5112, %v5192
    %5194 = vmatprep.mubr.bf16.mxu0 %v4975
    %5195 = vmatmul.mubr.bf16.gmra.mxu0 %v4974
    %v5196 = vpop.f32.mrf.mxu0
    %v5197 = vadd.f32 %v5116, %v5196
    %v5198 = vpop.f32.mrf.mxu0
    %v5199 = vadd.f32 %v5118, %v5198
    %v5200 = vpop.f32.mrf.mxu0
    %v5201 = vadd.f32 %v5120, %v5200
    %v5202 = vpop.f32.mrf.mxu0
    %v5203 = vadd.f32 %v5122, %v5202
    %5204 = vmatprep.mubr.bf16.mxu0 %v4977
    %5205 = vmatmul.mubr.bf16.gmra.mxu0 %v4976
    %v5206 = vpop.f32.mrf.mxu0
    %v5207 = vadd.f32 %v5126, %v5206
    %v5208 = vpop.f32.mrf.mxu0
    %v5209 = vadd.f32 %v5128, %v5208
    %v5210 = vpop.f32.mrf.mxu0
    %v5211 = vadd.f32 %v5130, %v5210
    %v5212 = vpop.f32.mrf.mxu0
    %v5213 = vadd.f32 %v5132, %v5212
    %5214 = vmatprep.mubr.bf16.mxu0 %v4979
    %5215 = vmatmul.mubr.bf16.gmra.mxu0 %v4978
    %v5216 = vpop.f32.mrf.mxu0
    %v5217 = vadd.f32 %v5136, %v5216
    %v5218 = vpop.f32.mrf.mxu0
    %v5219 = vadd.f32 %v5138, %v5218
    %v5220 = vpop.f32.mrf.mxu0
    %v5221 = vpop.f32.mrf.mxu0
    %5222 = vdwg.mxu0
    %v5223 = vrot.slane %v5177, 6
    %v5224 = vrot.slane %v5179, 6
    %v5225 = vrot.slane %v5181, 6
    %v5226 = vrot.slane %v5183, 6
    %v5227 = vrot.slane %v5187, 6
    %v5228 = vrot.slane %v5189, 6
    %v5229 = vrot.slane %v5191, 6
    %v5230 = vrot.slane %v5193, 6
    %v5231 = vrot.slane %v5197, 6
    %v5232 = vrot.slane %v5199, 6
    %v5233 = vrot.slane %v5201, 6
    %v5234 = vrot.slane %v5203, 6
    %v5235 = vrot.slane %v5207, 6
    %v5236 = vrot.slane %v5209, 6
    %v5237 = vrot.slane %v5211, 6
    %v5238 = vrot.slane %v5213, 6
    %v5239 = vrot.slane %v5217, 6
    %v5240 = vrot.slane %v5219, 6
    %v5241 = vsel %vm2089, %v5237, %v5239
    %v5242 = vsel %vm2089, %v5238, %v5240
    %v5243 = vsel %vm2089, %v5235, %v5237
    %v5244 = vsel %vm2089, %v5236, %v5238
    %v5245 = vsel %vm2089, %v5233, %v5235
    %v5246 = vsel %vm2089, %v5234, %v5236
    %v5247 = vsel %vm2089, %v5231, %v5233
    %v5248 = vsel %vm2089, %v5232, %v5234
    %v5249 = vsel %vm2089, %v5229, %v5231
    %v5250 = vsel %vm2089, %v5230, %v5232
    %v5251 = vsel %vm2089, %v5227, %v5229
    %v5252 = vsel %vm2089, %v5228, %v5230
    %v5253 = vsel %vm2089, %v5225, %v5227
    %v5254 = vsel %vm2089, %v5226, %v5228
    %v5255 = vsel %vm2089, %v5223, %v5225
    %v5256 = vsel %vm2089, %v5224, %v5226
    %v5257 = vsel %vm2089, %v5239, %v5223
    %v5258 = vsel %vm2089, %v5240, %v5224
    %v5259 = vmul.f32 %v5255, %v2110
    %v5260 = vmul.f32 %v5256, %v2110
    %v5261 = vmul.f32 %v5253, %v2114
    %v5262 = vmul.f32 %v5254, %v2114
    %v5263 = vmul.f32 %v5251, %v2118
    %v5264 = vmul.f32 %v5252, %v2118
    %v5265 = vmul.f32 %v5249, %v2122
    %v5266 = vmul.f32 %v5250, %v2122
    %v5267 = vmul.f32 %v5247, %v2126
    %v5268 = vmul.f32 %v5248, %v2126
    %v5269 = vmul.f32 %v5245, %v2130
    %v5270 = vmul.f32 %v5246, %v2130
    %v5271 = vmul.f32 %v5243, %v2134
    %v5272 = vmul.f32 %v5244, %v2134
    %v5273 = vmul.f32 %v5241, %v2138
    %v5274 = vmul.f32 %v5242, %v2138
    %v5275 = vmul.f32 %v5257, %v2142
    %v5276 = vmul.f32 %v5258, %v2142
    %v5277 = vpack.c.bf16 %v5181, %v5177
    %v5278 = vpack.c.bf16 %v5183, %v5179
    %v5279 = vpack.c.bf16 %v5191, %v5187
    %v5280 = vpack.c.bf16 %v5193, %v5189
    %v5281 = vpack.c.bf16 %v5201, %v5197
    %v5282 = vpack.c.bf16 %v5203, %v5199
    %v5283 = vpack.c.bf16 %v5211, %v5207
    %v5284 = vpack.c.bf16 %v5213, %v5209
    %v5285 = vpack.c.bf16 %v5217, %v5217
    %v5286 = vpack.c.bf16 %v5219, %v5219
    %v5287 = vpack.c.bf16 %v5261, %v5259
    %v5288 = vpack.c.bf16 %v5262, %v5260
    %v5289 = vpack.c.bf16 %v5265, %v5263
    %v5290 = vpack.c.bf16 %v5266, %v5264
    %v5291 = vpack.c.bf16 %v5269, %v5267
    %v5292 = vpack.c.bf16 %v5270, %v5268
    %v5293 = vpack.c.bf16 %v5273, %v5271
    %v5294 = vpack.c.bf16 %v5274, %v5272
    %v5295 = vpack.c.bf16 %v5275, %v5275
    %v5296 = vpack.c.bf16 %v5276, %v5276
    %5297 = vmatprep.subr.bf16.mxu0 %v2400
    %5298 = vmatpush1.bf16.msra.mxu0 %v2399
    %5299 = vmatprep.subr.bf16.mxu0 %v2398
    %5300 = vmatpush1.bf16.msra.mxu0 %v2397
    %5301 = vmatprep.subr.bf16.mxu0 %v2396
    %5302 = vmatpush1.bf16.msra.mxu0 %v2395
    %5303 = vmatprep.subr.bf16.mxu0 %v2394
    %5304 = vmatpush1.bf16.msra.mxu0 %v2393
    %5305 = vmatprep.subr.bf16.mxu0 %v2392
    %5306 = vmatpush1.bf16.msra.mxu0 %v2391
    %5307 = vmatprep.subr.bf16.mxu0 %v2390
    %5308 = vmatpush1.bf16.msra.mxu0 %v2389
    %5309 = vmatprep.subr.bf16.mxu0 %v2388
    %5310 = vmatpush1.bf16.msra.mxu0 %v2387
    %5311 = vmatprep.subr.bf16.mxu0 %v2386
    %5312 = vmatpush1.bf16.msra.mxu0 %v2385
    %5313 = vmatprep.subr.bf16.mxu0 %v2416
    %5314 = vmatpush2.bf16.msra.mxu0 %v2415
    %5315 = vmatprep.subr.bf16.mxu0 %v2414
    %5316 = vmatpush2.bf16.msra.mxu0 %v2413
    %5317 = vmatprep.subr.bf16.mxu0 %v2412
    %5318 = vmatpush2.bf16.msra.mxu0 %v2411
    %5319 = vmatprep.subr.bf16.mxu0 %v2410
    %5320 = vmatpush2.bf16.msra.mxu0 %v2409
    %5321 = vmatprep.subr.bf16.mxu0 %v2408
    %5322 = vmatpush2.bf16.msra.mxu0 %v2407
    %5323 = vmatprep.subr.bf16.mxu0 %v2406
    %5324 = vmatpush2.bf16.msra.mxu0 %v2405
    %5325 = vmatprep.subr.bf16.mxu0 %v2404
    %5326 = vmatpush2.bf16.msra.mxu0 %v2403
    %5327 = vmatprep.subr.bf16.mxu0 %v2402
    %5328 = vmatpush2.bf16.msra.mxu0 %v2401
    %5329 = vmatprep.mubr.bf16.mxu0 %v5278
    %5330 = vmatmul.mubr.bf16.gmra.mxu0 %v5277
    %v5331 = vpop.f32.mrf.mxu0
    %v5332 = vadd.f32 %v2186, %v5331
    %v5333 = vpop.f32.mrf.mxu0
    %v5334 = vadd.f32 %v2190, %v5333
    %v5335 = vpop.f32.mrf.mxu0
    %v5336 = vadd.f32 %v2186, %v5335
    %v5337 = vpop.f32.mrf.mxu0
    %v5338 = vadd.f32 %v2190, %v5337
    %5339 = vmatprep.mubr.bf16.mxu0 %v5280
    %5340 = vmatmul.mubr.bf16.gmra.mxu0 %v5279
    %v5341 = vpop.f32.mrf.mxu0
    %v5342 = vadd.f32 %v2186, %v5341
    %v5343 = vpop.f32.mrf.mxu0
    %v5344 = vadd.f32 %v2190, %v5343
    %v5345 = vpop.f32.mrf.mxu0
    %v5346 = vadd.f32 %v2186, %v5345
    %v5347 = vpop.f32.mrf.mxu0
    %v5348 = vadd.f32 %v2190, %v5347
    %5349 = vmatprep.mubr.bf16.mxu0 %v5282
    %5350 = vmatmul.mubr.bf16.gmra.mxu0 %v5281
    %v5351 = vpop.f32.mrf.mxu0
    %v5352 = vadd.f32 %v2186, %v5351
    %v5353 = vpop.f32.mrf.mxu0
    %v5354 = vadd.f32 %v2190, %v5353
    %v5355 = vpop.f32.mrf.mxu0
    %v5356 = vadd.f32 %v2186, %v5355
    %v5357 = vpop.f32.mrf.mxu0
    %v5358 = vadd.f32 %v2190, %v5357
    %5359 = vmatprep.mubr.bf16.mxu0 %v5284
    %5360 = vmatmul.mubr.bf16.gmra.mxu0 %v5283
    %v5361 = vpop.f32.mrf.mxu0
    %v5362 = vadd.f32 %v2186, %v5361
    %v5363 = vpop.f32.mrf.mxu0
    %v5364 = vadd.f32 %v2190, %v5363
    %v5365 = vpop.f32.mrf.mxu0
    %v5366 = vadd.f32 %v2186, %v5365
    %v5367 = vpop.f32.mrf.mxu0
    %v5368 = vadd.f32 %v2190, %v5367
    %5369 = vmatprep.mubr.bf16.mxu0 %v5286
    %5370 = vmatmul.mubr.bf16.gmra.mxu0 %v5285
    %v5371 = vpop.f32.mrf.mxu0
    %v5372 = vadd.f32 %v2186, %v5371
    %v5373 = vpop.f32.mrf.mxu0
    %v5374 = vadd.f32 %v2190, %v5373
    %v5375 = vpop.f32.mrf.mxu0
    %v5376 = vpop.f32.mrf.mxu0
    %5377 = vdwg.mxu0
    %5378 = vmatprep.subr.bf16.mxu0 %v2432
    %5379 = vmatpush1.bf16.msra.mxu0 %v2431
    %5380 = vmatprep.subr.bf16.mxu0 %v2430
    %5381 = vmatpush1.bf16.msra.mxu0 %v2429
    %5382 = vmatprep.subr.bf16.mxu0 %v2428
    %5383 = vmatpush1.bf16.msra.mxu0 %v2427
    %5384 = vmatprep.subr.bf16.mxu0 %v2426
    %5385 = vmatpush1.bf16.msra.mxu0 %v2425
    %5386 = vmatprep.subr.bf16.mxu0 %v2424
    %5387 = vmatpush1.bf16.msra.mxu0 %v2423
    %5388 = vmatprep.subr.bf16.mxu0 %v2422
    %5389 = vmatpush1.bf16.msra.mxu0 %v2421
    %5390 = vmatprep.subr.bf16.mxu0 %v2420
    %5391 = vmatpush1.bf16.msra.mxu0 %v2419
    %5392 = vmatprep.subr.bf16.mxu0 %v2418
    %5393 = vmatpush1.bf16.msra.mxu0 %v2417
    %5394 = vmatprep.subr.bf16.mxu0 %v2448
    %5395 = vmatpush2.bf16.msra.mxu0 %v2447
    %5396 = vmatprep.subr.bf16.mxu0 %v2446
    %5397 = vmatpush2.bf16.msra.mxu0 %v2445
    %5398 = vmatprep.subr.bf16.mxu0 %v2444
    %5399 = vmatpush2.bf16.msra.mxu0 %v2443
    %5400 = vmatprep.subr.bf16.mxu0 %v2442
    %5401 = vmatpush2.bf16.msra.mxu0 %v2441
    %5402 = vmatprep.subr.bf16.mxu0 %v2440
    %5403 = vmatpush2.bf16.msra.mxu0 %v2439
    %5404 = vmatprep.subr.bf16.mxu0 %v2438
    %5405 = vmatpush2.bf16.msra.mxu0 %v2437
    %5406 = vmatprep.subr.bf16.mxu0 %v2436
    %5407 = vmatpush2.bf16.msra.mxu0 %v2435
    %5408 = vmatprep.subr.bf16.mxu0 %v2434
    %5409 = vmatpush2.bf16.msra.mxu0 %v2433
    %5410 = vmatprep.mubr.bf16.mxu0 %v5288
    %5411 = vmatmul.mubr.bf16.gmra.mxu0 %v5287
    %v5412 = vpop.f32.mrf.mxu0
    %v5413 = vadd.f32 %v5332, %v5412
    %v5414 = vpop.f32.mrf.mxu0
    %v5415 = vadd.f32 %v5334, %v5414
    %v5416 = vpop.f32.mrf.mxu0
    %v5417 = vadd.f32 %v5336, %v5416
    %v5418 = vpop.f32.mrf.mxu0
    %v5419 = vadd.f32 %v5338, %v5418
    %5420 = vmatprep.mubr.bf16.mxu0 %v5290
    %5421 = vmatmul.mubr.bf16.gmra.mxu0 %v5289
    %v5422 = vpop.f32.mrf.mxu0
    %v5423 = vadd.f32 %v5342, %v5422
    %v5424 = vpop.f32.mrf.mxu0
    %v5425 = vadd.f32 %v5344, %v5424
    %v5426 = vpop.f32.mrf.mxu0
    %v5427 = vadd.f32 %v5346, %v5426
    %v5428 = vpop.f32.mrf.mxu0
    %v5429 = vadd.f32 %v5348, %v5428
    %5430 = vmatprep.mubr.bf16.mxu0 %v5292
    %5431 = vmatmul.mubr.bf16.gmra.mxu0 %v5291
    %v5432 = vpop.f32.mrf.mxu0
    %v5433 = vadd.f32 %v5352, %v5432
    %v5434 = vpop.f32.mrf.mxu0
    %v5435 = vadd.f32 %v5354, %v5434
    %v5436 = vpop.f32.mrf.mxu0
    %v5437 = vadd.f32 %v5356, %v5436
    %v5438 = vpop.f32.mrf.mxu0
    %v5439 = vadd.f32 %v5358, %v5438
    %5440 = vmatprep.mubr.bf16.mxu0 %v5294
    %5441 = vmatmul.mubr.bf16.gmra.mxu0 %v5293
    %v5442 = vpop.f32.mrf.mxu0
    %v5443 = vadd.f32 %v5362, %v5442
    %v5444 = vpop.f32.mrf.mxu0
    %v5445 = vadd.f32 %v5364, %v5444
    %v5446 = vpop.f32.mrf.mxu0
    %v5447 = vadd.f32 %v5366, %v5446
    %v5448 = vpop.f32.mrf.mxu0
    %v5449 = vadd.f32 %v5368, %v5448
    %5450 = vmatprep.mubr.bf16.mxu0 %v5296
    %5451 = vmatmul.mubr.bf16.gmra.mxu0 %v5295
    %v5452 = vpop.f32.mrf.mxu0
    %v5453 = vadd.f32 %v5372, %v5452
    %v5454 = vpop.f32.mrf.mxu0
    %v5455 = vadd.f32 %v5374, %v5454
    %v5456 = vpop.f32.mrf.mxu0
    %v5457 = vpop.f32.mrf.mxu0
    %5458 = vdwg.mxu0
    %v5459 = vmax.f32 %v5413, 0.0
    %v5460 = vmax.f32 %v5415, 0.0
    %v5461 = vmax.f32 %v5417, 0.0
    %v5462 = vmax.f32 %v5419, 0.0
    %v5463 = vmax.f32 %v5423, 0.0
    %v5464 = vmax.f32 %v5425, 0.0
    %v5465 = vmax.f32 %v5427, 0.0
    %v5466 = vmax.f32 %v5429, 0.0
    %v5467 = vmax.f32 %v5433, 0.0
    %v5468 = vmax.f32 %v5435, 0.0
    %v5469 = vmax.f32 %v5437, 0.0
    %v5470 = vmax.f32 %v5439, 0.0
    %v5471 = vmax.f32 %v5443, 0.0
    %v5472 = vmax.f32 %v5445, 0.0
    %v5473 = vmax.f32 %v5447, 0.0
    %v5474 = vmax.f32 %v5449, 0.0
    %v5475 = vmax.f32 %v5453, 0.0
    %v5476 = vmax.f32 %v5455, 0.0
    %v5477 = vpack.c.bf16 %v5461, %v5459
    %v5478 = vpack.c.bf16 %v5462, %v5460
    %v5479 = vpack.c.bf16 %v5465, %v5463
    %v5480 = vpack.c.bf16 %v5466, %v5464
    %v5481 = vpack.c.bf16 %v5469, %v5467
    %v5482 = vpack.c.bf16 %v5470, %v5468
    %v5483 = vpack.c.bf16 %v5473, %v5471
    %v5484 = vpack.c.bf16 %v5474, %v5472
    %v5485 = vpack.c.bf16 %v5475, %v5475
    %v5486 = vpack.c.bf16 %v5476, %v5476
    %5487 = vmatprep.subr.bf16.mxu0 %v2814
    %5488 = vmatpush1.bf16.msra.mxu0 %v2813
    %5489 = vmatprep.subr.bf16.mxu0 %v2812
    %5490 = vmatpush1.bf16.msra.mxu0 %v2811
    %5491 = vmatprep.subr.bf16.mxu0 %v2810
    %5492 = vmatpush1.bf16.msra.mxu0 %v2809
    %5493 = vmatprep.subr.bf16.mxu0 %v2808
    %5494 = vmatpush1.bf16.msra.mxu0 %v2807
    %5495 = vmatprep.subr.bf16.mxu0 %v2806
    %5496 = vmatpush1.bf16.msra.mxu0 %v2805
    %5497 = vmatprep.subr.bf16.mxu0 %v2804
    %5498 = vmatpush1.bf16.msra.mxu0 %v2803
    %5499 = vmatprep.subr.bf16.mxu0 %v2802
    %5500 = vmatpush1.bf16.msra.mxu0 %v2801
    %5501 = vmatprep.subr.bf16.mxu0 %v2800
    %5502 = vmatpush1.bf16.msra.mxu0 %v2799
    %5503 = vmatprep.subr.bf16.mxu0 %v2830
    %5504 = vmatpush2.bf16.msra.mxu0 %v2829
    %5505 = vmatprep.subr.bf16.mxu0 %v2828
    %5506 = vmatpush2.bf16.msra.mxu0 %v2827
    %5507 = vmatprep.subr.bf16.mxu0 %v2826
    %5508 = vmatpush2.bf16.msra.mxu0 %v2825
    %5509 = vmatprep.subr.bf16.mxu0 %v2824
    %5510 = vmatpush2.bf16.msra.mxu0 %v2823
    %5511 = vmatprep.subr.bf16.mxu0 %v2822
    %5512 = vmatpush2.bf16.msra.mxu0 %v2821
    %5513 = vmatprep.subr.bf16.mxu0 %v2820
    %5514 = vmatpush2.bf16.msra.mxu0 %v2819
    %5515 = vmatprep.subr.bf16.mxu0 %v2818
    %5516 = vmatpush2.bf16.msra.mxu0 %v2817
    %5517 = vmatprep.subr.bf16.mxu0 %v2816
    %5518 = vmatpush2.bf16.msra.mxu0 %v2815
    %5519 = vmatprep.mubr.bf16.mxu0 %v5478
    %5520 = vmatmul.mubr.bf16.gmra.mxu0 %v5477
    %v5521 = vpop.f32.mrf.mxu0
    %v5522 = vadd.f32 0.0, %v5521
    %v5523 = vpop.f32.mrf.mxu0
    %v5524 = vadd.f32 0.0, %v5523
    %v5525 = vpop.f32.mrf.mxu0
    %v5526 = vadd.f32 0.0, %v5525
    %v5527 = vpop.f32.mrf.mxu0
    %v5528 = vadd.f32 0.0, %v5527
    %5529 = vmatprep.mubr.bf16.mxu0 %v5480
    %5530 = vmatmul.mubr.bf16.gmra.mxu0 %v5479
    %v5531 = vpop.f32.mrf.mxu0
    %v5532 = vadd.f32 0.0, %v5531
    %v5533 = vpop.f32.mrf.mxu0
    %v5534 = vadd.f32 0.0, %v5533
    %v5535 = vpop.f32.mrf.mxu0
    %v5536 = vadd.f32 0.0, %v5535
    %v5537 = vpop.f32.mrf.mxu0
    %v5538 = vadd.f32 0.0, %v5537
    %5539 = vmatprep.mubr.bf16.mxu0 %v5482
    %5540 = vmatmul.mubr.bf16.gmra.mxu0 %v5481
    %v5541 = vpop.f32.mrf.mxu0
    %v5542 = vadd.f32 0.0, %v5541
    %v5543 = vpop.f32.mrf.mxu0
    %v5544 = vadd.f32 0.0, %v5543
    %v5545 = vpop.f32.mrf.mxu0
    %v5546 = vadd.f32 0.0, %v5545
    %v5547 = vpop.f32.mrf.mxu0
    %v5548 = vadd.f32 0.0, %v5547
    %5549 = vmatprep.mubr.bf16.mxu0 %v5484
    %5550 = vmatmul.mubr.bf16.gmra.mxu0 %v5483
    %v5551 = vpop.f32.mrf.mxu0
    %v5552 = vadd.f32 0.0, %v5551
    %v5553 = vpop.f32.mrf.mxu0
    %v5554 = vadd.f32 0.0, %v5553
    %v5555 = vpop.f32.mrf.mxu0
    %v5556 = vadd.f32 0.0, %v5555
    %v5557 = vpop.f32.mrf.mxu0
    %v5558 = vadd.f32 0.0, %v5557
    %5559 = vmatprep.mubr.bf16.mxu0 %v5486
    %5560 = vmatmul.mubr.bf16.gmra.mxu0 %v5485
    %v5561 = vpop.f32.mrf.mxu0
    %v5562 = vadd.f32 0.0, %v5561
    %v5563 = vpop.f32.mrf.mxu0
    %v5564 = vadd.f32 0.0, %v5563
    %v5565 = vpop.f32.mrf.mxu0
    %v5566 = vpop.f32.mrf.mxu0
    %5567 = vdwg.mxu0
    %v5568 = vadd.f32 %v4715, %v5522
    %v5569 = vadd.f32 %v4716, %v5524
    %v5570 = vadd.f32 %v4717, %v5526
    %v5571 = vadd.f32 %v4718, %v5528
    %v5572 = vadd.f32 %v4719, %v5532
    %v5573 = vadd.f32 %v4720, %v5534
    %v5574 = vadd.f32 %v4721, %v5536
    %v5575 = vadd.f32 %v4722, %v5538
    %v5576 = vadd.f32 %v4723, %v5542
    %v5577 = vadd.f32 %v4724, %v5544
    %v5578 = vadd.f32 %v4725, %v5546
    %v5579 = vadd.f32 %v4726, %v5548
    %v5580 = vadd.f32 %v4727, %v5552
    %v5581 = vadd.f32 %v4728, %v5554
    %v5582 = vadd.f32 %v4729, %v5556
    %v5583 = vadd.f32 %v4730, %v5558
    %v5584 = vadd.f32 %v4731, %v5562
    %v5585 = vadd.f32 %v4732, %v5564
    %v5586 = vadd.f32 %v5568, %v2966
    %v5587 = vadd.f32 %v5569, %v2970
    %v5588 = vadd.f32 %v5570, %v2966
    %v5589 = vadd.f32 %v5571, %v2970
    %v5590 = vadd.f32 %v5572, %v2966
    %v5591 = vadd.f32 %v5573, %v2970
    %v5592 = vadd.f32 %v5574, %v2966
    %v5593 = vadd.f32 %v5575, %v2970
    %v5594 = vadd.f32 %v5576, %v2966
    %v5595 = vadd.f32 %v5577, %v2970
    %v5596 = vadd.f32 %v5578, %v2966
    %v5597 = vadd.f32 %v5579, %v2970
    %v5598 = vadd.f32 %v5580, %v2966
    %v5599 = vadd.f32 %v5581, %v2970
    %v5600 = vadd.f32 %v5582, %v2966
    %v5601 = vadd.f32 %v5583, %v2970
    %v5602 = vadd.f32 %v5584, %v2966
    %v5603 = vadd.f32 %v5585, %v2970
    %v5604 = vpack.c.bf16 %v5588, %v5586
    %v5605 = vpack.c.bf16 %v5589, %v5587
    %v5606 = vpack.c.bf16 %v5592, %v5590
    %v5607 = vpack.c.bf16 %v5593, %v5591
    %v5608 = vpack.c.bf16 %v5596, %v5594
    %v5609 = vpack.c.bf16 %v5597, %v5595
    %v5610 = vpack.c.bf16 %v5600, %v5598
    %v5611 = vpack.c.bf16 %v5601, %v5599
    %v5612 = vpack.c.bf16 %v5602, %v5602
    %v5613 = vpack.c.bf16 %v5603, %v5603
    %5614 = vmatprep.subr.bf16.mxu0 %v966
    %5615 = vmatpush1.bf16.msra.mxu0 %v965
    %5616 = vmatprep.subr.bf16.mxu0 %v964
    %5617 = vmatpush1.bf16.msra.mxu0 %v963
    %5618 = vmatprep.subr.bf16.mxu0 %v962
    %5619 = vmatpush1.bf16.msra.mxu0 %v961
    %5620 = vmatprep.subr.bf16.mxu0 %v960
    %5621 = vmatpush1.bf16.msra.mxu0 %v959
    %5622 = vmatprep.subr.bf16.mxu0 %v958
    %5623 = vmatpush1.bf16.msra.mxu0 %v957
    %5624 = vmatprep.subr.bf16.mxu0 %v956
    %5625 = vmatpush1.bf16.msra.mxu0 %v955
    %5626 = vmatprep.subr.bf16.mxu0 %v954
    %5627 = vmatpush1.bf16.msra.mxu0 %v953
    %5628 = vmatprep.subr.bf16.mxu0 %v952
    %5629 = vmatpush1.bf16.msra.mxu0 %v951
    %5630 = vmatprep.subr.bf16.mxu0 %v982
    %5631 = vmatpush2.bf16.msra.mxu0 %v981
    %5632 = vmatprep.subr.bf16.mxu0 %v980
    %5633 = vmatpush2.bf16.msra.mxu0 %v979
    %5634 = vmatprep.subr.bf16.mxu0 %v978
    %5635 = vmatpush2.bf16.msra.mxu0 %v977
    %5636 = vmatprep.subr.bf16.mxu0 %v976
    %5637 = vmatpush2.bf16.msra.mxu0 %v975
    %5638 = vmatprep.subr.bf16.mxu0 %v974
    %5639 = vmatpush2.bf16.msra.mxu0 %v973
    %5640 = vmatprep.subr.bf16.mxu0 %v972
    %5641 = vmatpush2.bf16.msra.mxu0 %v971
    %5642 = vmatprep.subr.bf16.mxu0 %v970
    %5643 = vmatpush2.bf16.msra.mxu0 %v969
    %5644 = vmatprep.subr.bf16.mxu0 %v968
    %5645 = vmatpush2.bf16.msra.mxu0 %v967
    %5646 = vmatprep.mubr.bf16.mxu0 %v5605
    %5647 = vmatmul.mubr.bf16.gmra.mxu0 %v5604
    %v5648 = vpop.f32.mrf.mxu0
    %v5649 = vadd.f32 %v848, %v5648
    %v5650 = vpop.f32.mrf.mxu0
    %v5651 = vadd.f32 %v852, %v5650
    %v5652 = vpop.f32.mrf.mxu0
    %v5653 = vadd.f32 %v848, %v5652
    %v5654 = vpop.f32.mrf.mxu0
    %v5655 = vadd.f32 %v852, %v5654
    %5656 = vmatprep.mubr.bf16.mxu0 %v5607
    %5657 = vmatmul.mubr.bf16.gmra.mxu0 %v5606
    %v5658 = vpop.f32.mrf.mxu0
    %v5659 = vadd.f32 %v848, %v5658
    %v5660 = vpop.f32.mrf.mxu0
    %v5661 = vadd.f32 %v852, %v5660
    %v5662 = vpop.f32.mrf.mxu0
    %v5663 = vadd.f32 %v848, %v5662
    %v5664 = vpop.f32.mrf.mxu0
    %v5665 = vadd.f32 %v852, %v5664
    %5666 = vmatprep.mubr.bf16.mxu0 %v5609
    %5667 = vmatmul.mubr.bf16.gmra.mxu0 %v5608
    %v5668 = vpop.f32.mrf.mxu0
    %v5669 = vadd.f32 %v848, %v5668
    %v5670 = vpop.f32.mrf.mxu0
    %v5671 = vadd.f32 %v852, %v5670
    %v5672 = vpop.f32.mrf.mxu0
    %v5673 = vadd.f32 %v848, %v5672
    %v5674 = vpop.f32.mrf.mxu0
    %v5675 = vadd.f32 %v852, %v5674
    %5676 = vmatprep.mubr.bf16.mxu0 %v5611
    %5677 = vmatmul.mubr.bf16.gmra.mxu0 %v5610
    %v5678 = vpop.f32.mrf.mxu0
    %v5679 = vadd.f32 %v848, %v5678
    %v5680 = vpop.f32.mrf.mxu0
    %v5681 = vadd.f32 %v852, %v5680
    %v5682 = vpop.f32.mrf.mxu0
    %v5683 = vadd.f32 %v848, %v5682
    %v5684 = vpop.f32.mrf.mxu0
    %v5685 = vadd.f32 %v852, %v5684
    %5686 = vmatprep.mubr.bf16.mxu0 %v5613
    %5687 = vmatmul.mubr.bf16.gmra.mxu0 %v5612
    %v5688 = vpop.f32.mrf.mxu0
    %v5689 = vadd.f32 %v848, %v5688
    %v5690 = vpop.f32.mrf.mxu0
    %v5691 = vadd.f32 %v852, %v5690
    %v5692 = vpop.f32.mrf.mxu0
    %v5693 = vpop.f32.mrf.mxu0
    %5694 = vdwg.mxu0
    %v5695 = vmax.f32 %v5649, 0.0
    %v5696 = vmax.f32 %v5651, 0.0
    %v5697 = vmax.f32 %v5653, 0.0
    %v5698 = vmax.f32 %v5655, 0.0
    %v5699 = vmax.f32 %v5659, 0.0
    %v5700 = vmax.f32 %v5661, 0.0
    %v5701 = vmax.f32 %v5663, 0.0
    %v5702 = vmax.f32 %v5665, 0.0
    %v5703 = vmax.f32 %v5669, 0.0
    %v5704 = vmax.f32 %v5671, 0.0
    %v5705 = vmax.f32 %v5673, 0.0
    %v5706 = vmax.f32 %v5675, 0.0
    %v5707 = vmax.f32 %v5679, 0.0
    %v5708 = vmax.f32 %v5681, 0.0
    %v5709 = vmax.f32 %v5683, 0.0
    %v5710 = vmax.f32 %v5685, 0.0
    %v5711 = vmax.f32 %v5689, 0.0
    %v5712 = vmax.f32 %v5691, 0.0
    %v5713 = vrot.slane %v5695, 7
    %v5714 = vrot.slane %v5696, 7
    %v5715 = vrot.slane %v5697, 7
    %v5716 = vrot.slane %v5698, 7
    %v5717 = vrot.slane %v5699, 7
    %v5718 = vrot.slane %v5700, 7
    %v5719 = vrot.slane %v5701, 7
    %v5720 = vrot.slane %v5702, 7
    %v5721 = vrot.slane %v5703, 7
    %v5722 = vrot.slane %v5704, 7
    %v5723 = vrot.slane %v5705, 7
    %v5724 = vrot.slane %v5706, 7
    %v5725 = vrot.slane %v5707, 7
    %v5726 = vrot.slane %v5708, 7
    %v5727 = vrot.slane %v5709, 7
    %v5728 = vrot.slane %v5710, 7
    %v5729 = vrot.slane %v5711, 7
    %v5730 = vrot.slane %v5712, 7
    %v5731 = vsel %vm1134, %v5727, %v5729
    %v5732 = vsel %vm1134, %v5728, %v5730
    %v5733 = vsel %vm1134, %v5725, %v5727
    %v5734 = vsel %vm1134, %v5726, %v5728
    %v5735 = vsel %vm1134, %v5723, %v5725
    %v5736 = vsel %vm1134, %v5724, %v5726
    %v5737 = vsel %vm1134, %v5721, %v5723
    %v5738 = vsel %vm1134, %v5722, %v5724
    %v5739 = vsel %vm1134, %v5719, %v5721
    %v5740 = vsel %vm1134, %v5720, %v5722
    %v5741 = vsel %vm1134, %v5717, %v5719
    %v5742 = vsel %vm1134, %v5718, %v5720
    %v5743 = vsel %vm1134, %v5715, %v5717
    %v5744 = vsel %vm1134, %v5716, %v5718
    %v5745 = vsel %vm1134, %v5713, %v5715
    %v5746 = vsel %vm1134, %v5714, %v5716
    %v5747 = vsel %vm1134, %v5729, %v5713
    %v5748 = vsel %vm1134, %v5730, %v5714
    %v5749 = vmul.f32 %v5747, %v1156
    %v5750 = vmul.f32 %v5748, %v1156
    %v5751 = vmul.f32 %v5745, %v1161
    %v5752 = vmul.f32 %v5746, %v1161
    %v5753 = vmul.f32 %v5743, %v1166
    %v5754 = vmul.f32 %v5744, %v1166
    %v5755 = vmul.f32 %v5741, %v1171
    %v5756 = vmul.f32 %v5742, %v1171
    %v5757 = vmul.f32 %v5739, %v1176
    %v5758 = vmul.f32 %v5740, %v1176
    %v5759 = vmul.f32 %v5737, %v1181
    %v5760 = vmul.f32 %v5738, %v1181
    %v5761 = vmul.f32 %v5735, %v1186
    %v5762 = vmul.f32 %v5736, %v1186
    %v5763 = vmul.f32 %v5733, %v1191
    %v5764 = vmul.f32 %v5734, %v1191
    %v5765 = vmul.f32 %v5731, %v1196
    %v5766 = vmul.f32 %v5732, %v1196
    %v5767 = vrot.slane %v5695, 1
    %v5768 = vrot.slane %v5696, 1
    %v5769 = vrot.slane %v5697, 1
    %v5770 = vrot.slane %v5698, 1
    %v5771 = vrot.slane %v5699, 1
    %v5772 = vrot.slane %v5700, 1
    %v5773 = vrot.slane %v5701, 1
    %v5774 = vrot.slane %v5702, 1
    %v5775 = vrot.slane %v5703, 1
    %v5776 = vrot.slane %v5704, 1
    %v5777 = vrot.slane %v5705, 1
    %v5778 = vrot.slane %v5706, 1
    %v5779 = vrot.slane %v5707, 1
    %v5780 = vrot.slane %v5708, 1
    %v5781 = vrot.slane %v5709, 1
    %v5782 = vrot.slane %v5710, 1
    %v5783 = vrot.slane %v5711, 1
    %v5784 = vrot.slane %v5712, 1
    %v5785 = vsel %vm1234, %v5781, %v5783
    %v5786 = vsel %vm1234, %v5782, %v5784
    %v5787 = vsel %vm1234, %v5779, %v5781
    %v5788 = vsel %vm1234, %v5780, %v5782
    %v5789 = vsel %vm1234, %v5777, %v5779
    %v5790 = vsel %vm1234, %v5778, %v5780
    %v5791 = vsel %vm1234, %v5775, %v5777
    %v5792 = vsel %vm1234, %v5776, %v5778
    %v5793 = vsel %vm1234, %v5773, %v5775
    %v5794 = vsel %vm1234, %v5774, %v5776
    %v5795 = vsel %vm1234, %v5771, %v5773
    %v5796 = vsel %vm1234, %v5772, %v5774
    %v5797 = vsel %vm1234, %v5769, %v5771
    %v5798 = vsel %vm1234, %v5770, %v5772
    %v5799 = vsel %vm1234, %v5767, %v5769
    %v5800 = vsel %vm1234, %v5768, %v5770
    %v5801 = vsel %vm1234, %v5783, %v5767
    %v5802 = vsel %vm1234, %v5784, %v5768
    %v5803 = vmul.f32 %v5799, %v1255
    %v5804 = vmul.f32 %v5800, %v1255
    %v5805 = vmul.f32 %v5797, %v1259
    %v5806 = vmul.f32 %v5798, %v1259
    %v5807 = vmul.f32 %v5795, %v1263
    %v5808 = vmul.f32 %v5796, %v1263
    %v5809 = vmul.f32 %v5793, %v1267
    %v5810 = vmul.f32 %v5794, %v1267
    %v5811 = vmul.f32 %v5791, %v1271
    %v5812 = vmul.f32 %v5792, %v1271
    %v5813 = vmul.f32 %v5789, %v1275
    %v5814 = vmul.f32 %v5790, %v1275
    %v5815 = vmul.f32 %v5787, %v1279
    %v5816 = vmul.f32 %v5788, %v1279
    %v5817 = vmul.f32 %v5785, %v1283
    %v5818 = vmul.f32 %v5786, %v1283
    %v5819 = vmul.f32 %v5801, %v1287
    %v5820 = vmul.f32 %v5802, %v1287
    %v5821 = vpack.c.bf16 %v5751, %v5749
    %v5822 = vpack.c.bf16 %v5752, %v5750
    %v5823 = vpack.c.bf16 %v5755, %v5753
    %v5824 = vpack.c.bf16 %v5756, %v5754
    %v5825 = vpack.c.bf16 %v5759, %v5757
    %v5826 = vpack.c.bf16 %v5760, %v5758
    %v5827 = vpack.c.bf16 %v5763, %v5761
    %v5828 = vpack.c.bf16 %v5764, %v5762
    %v5829 = vpack.c.bf16 %v5765, %v5765
    %v5830 = vpack.c.bf16 %v5766, %v5766
    %v5831 = vpack.c.bf16 %v5697, %v5695
    %v5832 = vpack.c.bf16 %v5698, %v5696
    %v5833 = vpack.c.bf16 %v5701, %v5699
    %v5834 = vpack.c.bf16 %v5702, %v5700
    %v5835 = vpack.c.bf16 %v5705, %v5703
    %v5836 = vpack.c.bf16 %v5706, %v5704
    %v5837 = vpack.c.bf16 %v5709, %v5707
    %v5838 = vpack.c.bf16 %v5710, %v5708
    %v5839 = vpack.c.bf16 %v5711, %v5711
    %v5840 = vpack.c.bf16 %v5712, %v5712
    %v5841 = vpack.c.bf16 %v5805, %v5803
    %v5842 = vpack.c.bf16 %v5806, %v5804
    %v5843 = vpack.c.bf16 %v5809, %v5807
    %v5844 = vpack.c.bf16 %v5810, %v5808
    %v5845 = vpack.c.bf16 %v5813, %v5811
    %v5846 = vpack.c.bf16 %v5814, %v5812
    %v5847 = vpack.c.bf16 %v5817, %v5815
    %v5848 = vpack.c.bf16 %v5818, %v5816
    %v5849 = vpack.c.bf16 %v5819, %v5819
    %v5850 = vpack.c.bf16 %v5820, %v5820
    %5851 = vmatprep.subr.bf16.mxu0 %v1651
    %5852 = vmatpush1.bf16.msra.mxu0 %v1650
    %5853 = vmatprep.subr.bf16.mxu0 %v1649
    %5854 = vmatpush1.bf16.msra.mxu0 %v1648
    %5855 = vmatprep.subr.bf16.mxu0 %v1647
    %5856 = vmatpush1.bf16.msra.mxu0 %v1646
    %5857 = vmatprep.subr.bf16.mxu0 %v1645
    %5858 = vmatpush1.bf16.msra.mxu0 %v1644
    %5859 = vmatprep.subr.bf16.mxu0 %v1643
    %5860 = vmatpush1.bf16.msra.mxu0 %v1642
    %5861 = vmatprep.subr.bf16.mxu0 %v1641
    %5862 = vmatpush1.bf16.msra.mxu0 %v1640
    %5863 = vmatprep.subr.bf16.mxu0 %v1639
    %5864 = vmatpush1.bf16.msra.mxu0 %v1638
    %5865 = vmatprep.subr.bf16.mxu0 %v1637
    %5866 = vmatpush1.bf16.msra.mxu0 %v1636
    %5867 = vmatprep.subr.bf16.mxu0 %v1667
    %5868 = vmatpush2.bf16.msra.mxu0 %v1666
    %5869 = vmatprep.subr.bf16.mxu0 %v1665
    %5870 = vmatpush2.bf16.msra.mxu0 %v1664
    %5871 = vmatprep.subr.bf16.mxu0 %v1663
    %5872 = vmatpush2.bf16.msra.mxu0 %v1662
    %5873 = vmatprep.subr.bf16.mxu0 %v1661
    %5874 = vmatpush2.bf16.msra.mxu0 %v1660
    %5875 = vmatprep.subr.bf16.mxu0 %v1659
    %5876 = vmatpush2.bf16.msra.mxu0 %v1658
    %5877 = vmatprep.subr.bf16.mxu0 %v1657
    %5878 = vmatpush2.bf16.msra.mxu0 %v1656
    %5879 = vmatprep.subr.bf16.mxu0 %v1655
    %5880 = vmatpush2.bf16.msra.mxu0 %v1654
    %5881 = vmatprep.subr.bf16.mxu0 %v1653
    %5882 = vmatpush2.bf16.msra.mxu0 %v1652
    %5883 = vmatprep.mubr.bf16.mxu0 %v5822
    %5884 = vmatmul.mubr.bf16.gmra.mxu0 %v5821
    %v5885 = vpop.f32.mrf.mxu0
    %v5886 = vadd.f32 %v1341, %v5885
    %v5887 = vpop.f32.mrf.mxu0
    %v5888 = vadd.f32 %v1345, %v5887
    %v5889 = vpop.f32.mrf.mxu0
    %v5890 = vadd.f32 %v1341, %v5889
    %v5891 = vpop.f32.mrf.mxu0
    %v5892 = vadd.f32 %v1345, %v5891
    %5893 = vmatprep.mubr.bf16.mxu0 %v5824
    %5894 = vmatmul.mubr.bf16.gmra.mxu0 %v5823
    %v5895 = vpop.f32.mrf.mxu0
    %v5896 = vadd.f32 %v1341, %v5895
    %v5897 = vpop.f32.mrf.mxu0
    %v5898 = vadd.f32 %v1345, %v5897
    %v5899 = vpop.f32.mrf.mxu0
    %v5900 = vadd.f32 %v1341, %v5899
    %v5901 = vpop.f32.mrf.mxu0
    %v5902 = vadd.f32 %v1345, %v5901
    %5903 = vmatprep.mubr.bf16.mxu0 %v5826
    %5904 = vmatmul.mubr.bf16.gmra.mxu0 %v5825
    %v5905 = vpop.f32.mrf.mxu0
    %v5906 = vadd.f32 %v1341, %v5905
    %v5907 = vpop.f32.mrf.mxu0
    %v5908 = vadd.f32 %v1345, %v5907
    %v5909 = vpop.f32.mrf.mxu0
    %v5910 = vadd.f32 %v1341, %v5909
    %v5911 = vpop.f32.mrf.mxu0
    %v5912 = vadd.f32 %v1345, %v5911
    %5913 = vmatprep.mubr.bf16.mxu0 %v5828
    %5914 = vmatmul.mubr.bf16.gmra.mxu0 %v5827
    %v5915 = vpop.f32.mrf.mxu0
    %v5916 = vadd.f32 %v1341, %v5915
    %v5917 = vpop.f32.mrf.mxu0
    %v5918 = vadd.f32 %v1345, %v5917
    %v5919 = vpop.f32.mrf.mxu0
    %v5920 = vadd.f32 %v1341, %v5919
    %v5921 = vpop.f32.mrf.mxu0
    %v5922 = vadd.f32 %v1345, %v5921
    %5923 = vmatprep.mubr.bf16.mxu0 %v5830
    %5924 = vmatmul.mubr.bf16.gmra.mxu0 %v5829
    %v5925 = vpop.f32.mrf.mxu0
    %v5926 = vadd.f32 %v1341, %v5925
    %v5927 = vpop.f32.mrf.mxu0
    %v5928 = vadd.f32 %v1345, %v5927
    %v5929 = vpop.f32.mrf.mxu0
    %v5930 = vpop.f32.mrf.mxu0
    %5931 = vdwg.mxu0
    %5932 = vmatprep.subr.bf16.mxu0 %v1683
    %5933 = vmatpush1.bf16.msra.mxu0 %v1682
    %5934 = vmatprep.subr.bf16.mxu0 %v1681
    %5935 = vmatpush1.bf16.msra.mxu0 %v1680
    %5936 = vmatprep.subr.bf16.mxu0 %v1679
    %5937 = vmatpush1.bf16.msra.mxu0 %v1678
    %5938 = vmatprep.subr.bf16.mxu0 %v1677
    %5939 = vmatpush1.bf16.msra.mxu0 %v1676
    %5940 = vmatprep.subr.bf16.mxu0 %v1675
    %5941 = vmatpush1.bf16.msra.mxu0 %v1674
    %5942 = vmatprep.subr.bf16.mxu0 %v1673
    %5943 = vmatpush1.bf16.msra.mxu0 %v1672
    %5944 = vmatprep.subr.bf16.mxu0 %v1671
    %5945 = vmatpush1.bf16.msra.mxu0 %v1670
    %5946 = vmatprep.subr.bf16.mxu0 %v1669
    %5947 = vmatpush1.bf16.msra.mxu0 %v1668
    %5948 = vmatprep.subr.bf16.mxu0 %v1699
    %5949 = vmatpush2.bf16.msra.mxu0 %v1698
    %5950 = vmatprep.subr.bf16.mxu0 %v1697
    %5951 = vmatpush2.bf16.msra.mxu0 %v1696
    %5952 = vmatprep.subr.bf16.mxu0 %v1695
    %5953 = vmatpush2.bf16.msra.mxu0 %v1694
    %5954 = vmatprep.subr.bf16.mxu0 %v1693
    %5955 = vmatpush2.bf16.msra.mxu0 %v1692
    %5956 = vmatprep.subr.bf16.mxu0 %v1691
    %5957 = vmatpush2.bf16.msra.mxu0 %v1690
    %5958 = vmatprep.subr.bf16.mxu0 %v1689
    %5959 = vmatpush2.bf16.msra.mxu0 %v1688
    %5960 = vmatprep.subr.bf16.mxu0 %v1687
    %5961 = vmatpush2.bf16.msra.mxu0 %v1686
    %5962 = vmatprep.subr.bf16.mxu0 %v1685
    %5963 = vmatpush2.bf16.msra.mxu0 %v1684
    %5964 = vmatprep.mubr.bf16.mxu0 %v5832
    %5965 = vmatmul.mubr.bf16.gmra.mxu0 %v5831
    %v5966 = vpop.f32.mrf.mxu0
    %v5967 = vadd.f32 %v5886, %v5966
    %v5968 = vpop.f32.mrf.mxu0
    %v5969 = vadd.f32 %v5888, %v5968
    %v5970 = vpop.f32.mrf.mxu0
    %v5971 = vadd.f32 %v5890, %v5970
    %v5972 = vpop.f32.mrf.mxu0
    %v5973 = vadd.f32 %v5892, %v5972
    %5974 = vmatprep.mubr.bf16.mxu0 %v5834
    %5975 = vmatmul.mubr.bf16.gmra.mxu0 %v5833
    %v5976 = vpop.f32.mrf.mxu0
    %v5977 = vadd.f32 %v5896, %v5976
    %v5978 = vpop.f32.mrf.mxu0
    %v5979 = vadd.f32 %v5898, %v5978
    %v5980 = vpop.f32.mrf.mxu0
    %v5981 = vadd.f32 %v5900, %v5980
    %v5982 = vpop.f32.mrf.mxu0
    %v5983 = vadd.f32 %v5902, %v5982
    %5984 = vmatprep.mubr.bf16.mxu0 %v5836
    %5985 = vmatmul.mubr.bf16.gmra.mxu0 %v5835
    %v5986 = vpop.f32.mrf.mxu0
    %v5987 = vadd.f32 %v5906, %v5986
    %v5988 = vpop.f32.mrf.mxu0
    %v5989 = vadd.f32 %v5908, %v5988
    %v5990 = vpop.f32.mrf.mxu0
    %v5991 = vadd.f32 %v5910, %v5990
    %v5992 = vpop.f32.mrf.mxu0
    %v5993 = vadd.f32 %v5912, %v5992
    %5994 = vmatprep.mubr.bf16.mxu0 %v5838
    %5995 = vmatmul.mubr.bf16.gmra.mxu0 %v5837
    %v5996 = vpop.f32.mrf.mxu0
    %v5997 = vadd.f32 %v5916, %v5996
    %v5998 = vpop.f32.mrf.mxu0
    %v5999 = vadd.f32 %v5918, %v5998
    %v6000 = vpop.f32.mrf.mxu0
    %v6001 = vadd.f32 %v5920, %v6000
    %v6002 = vpop.f32.mrf.mxu0
    %v6003 = vadd.f32 %v5922, %v6002
    %6004 = vmatprep.mubr.bf16.mxu0 %v5840
    %6005 = vmatmul.mubr.bf16.gmra.mxu0 %v5839
    %v6006 = vpop.f32.mrf.mxu0
    %v6007 = vadd.f32 %v5926, %v6006
    %v6008 = vpop.f32.mrf.mxu0
    %v6009 = vadd.f32 %v5928, %v6008
    %v6010 = vpop.f32.mrf.mxu0
    %v6011 = vpop.f32.mrf.mxu0
    %6012 = vdwg.mxu0
    %6013 = vmatprep.subr.bf16.mxu0 %v1715
    %6014 = vmatpush1.bf16.msra.mxu0 %v1714
    %6015 = vmatprep.subr.bf16.mxu0 %v1713
    %6016 = vmatpush1.bf16.msra.mxu0 %v1712
    %6017 = vmatprep.subr.bf16.mxu0 %v1711
    %6018 = vmatpush1.bf16.msra.mxu0 %v1710
    %6019 = vmatprep.subr.bf16.mxu0 %v1709
    %6020 = vmatpush1.bf16.msra.mxu0 %v1708
    %6021 = vmatprep.subr.bf16.mxu0 %v1707
    %6022 = vmatpush1.bf16.msra.mxu0 %v1706
    %6023 = vmatprep.subr.bf16.mxu0 %v1705
    %6024 = vmatpush1.bf16.msra.mxu0 %v1704
    %6025 = vmatprep.subr.bf16.mxu0 %v1703
    %6026 = vmatpush1.bf16.msra.mxu0 %v1702
    %6027 = vmatprep.subr.bf16.mxu0 %v1701
    %6028 = vmatpush1.bf16.msra.mxu0 %v1700
    %6029 = vmatprep.subr.bf16.mxu0 %v1731
    %6030 = vmatpush2.bf16.msra.mxu0 %v1730
    %6031 = vmatprep.subr.bf16.mxu0 %v1729
    %6032 = vmatpush2.bf16.msra.mxu0 %v1728
    %6033 = vmatprep.subr.bf16.mxu0 %v1727
    %6034 = vmatpush2.bf16.msra.mxu0 %v1726
    %6035 = vmatprep.subr.bf16.mxu0 %v1725
    %6036 = vmatpush2.bf16.msra.mxu0 %v1724
    %6037 = vmatprep.subr.bf16.mxu0 %v1723
    %6038 = vmatpush2.bf16.msra.mxu0 %v1722
    %6039 = vmatprep.subr.bf16.mxu0 %v1721
    %6040 = vmatpush2.bf16.msra.mxu0 %v1720
    %6041 = vmatprep.subr.bf16.mxu0 %v1719
    %6042 = vmatpush2.bf16.msra.mxu0 %v1718
    %6043 = vmatprep.subr.bf16.mxu0 %v1717
    %6044 = vmatpush2.bf16.msra.mxu0 %v1716
    %6045 = vmatprep.mubr.bf16.mxu0 %v5842
    %6046 = vmatmul.mubr.bf16.gmra.mxu0 %v5841
    %v6047 = vpop.f32.mrf.mxu0
    %v6048 = vadd.f32 %v5967, %v6047
    %v6049 = vpop.f32.mrf.mxu0
    %v6050 = vadd.f32 %v5969, %v6049
    %v6051 = vpop.f32.mrf.mxu0
    %v6052 = vadd.f32 %v5971, %v6051
    %v6053 = vpop.f32.mrf.mxu0
    %v6054 = vadd.f32 %v5973, %v6053
    %6055 = vmatprep.mubr.bf16.mxu0 %v5844
    %6056 = vmatmul.mubr.bf16.gmra.mxu0 %v5843
    %v6057 = vpop.f32.mrf.mxu0
    %v6058 = vadd.f32 %v5977, %v6057
    %v6059 = vpop.f32.mrf.mxu0
    %v6060 = vadd.f32 %v5979, %v6059
    %v6061 = vpop.f32.mrf.mxu0
    %v6062 = vadd.f32 %v5981, %v6061
    %v6063 = vpop.f32.mrf.mxu0
    %v6064 = vadd.f32 %v5983, %v6063
    %6065 = vmatprep.mubr.bf16.mxu0 %v5846
    %6066 = vmatmul.mubr.bf16.gmra.mxu0 %v5845
    %v6067 = vpop.f32.mrf.mxu0
    %v6068 = vadd.f32 %v5987, %v6067
    %v6069 = vpop.f32.mrf.mxu0
    %v6070 = vadd.f32 %v5989, %v6069
    %v6071 = vpop.f32.mrf.mxu0
    %v6072 = vadd.f32 %v5991, %v6071
    %v6073 = vpop.f32.mrf.mxu0
    %v6074 = vadd.f32 %v5993, %v6073
    %6075 = vmatprep.mubr.bf16.mxu0 %v5848
    %6076 = vmatmul.mubr.bf16.gmra.mxu0 %v5847
    %v6077 = vpop.f32.mrf.mxu0
    %v6078 = vadd.f32 %v5997, %v6077
    %v6079 = vpop.f32.mrf.mxu0
    %v6080 = vadd.f32 %v5999, %v6079
    %v6081 = vpop.f32.mrf.mxu0
    %v6082 = vadd.f32 %v6001, %v6081
    %v6083 = vpop.f32.mrf.mxu0
    %v6084 = vadd.f32 %v6003, %v6083
    %6085 = vmatprep.mubr.bf16.mxu0 %v5850
    %6086 = vmatmul.mubr.bf16.gmra.mxu0 %v5849
    %v6087 = vpop.f32.mrf.mxu0
    %v6088 = vadd.f32 %v6007, %v6087
    %v6089 = vpop.f32.mrf.mxu0
    %v6090 = vadd.f32 %v6009, %v6089
    %v6091 = vpop.f32.mrf.mxu0
    %v6092 = vpop.f32.mrf.mxu0
    %6093 = vdwg.mxu0
    %v6094 = vrot.slane %v6048, 6
    %v6095 = vrot.slane %v6050, 6
    %v6096 = vrot.slane %v6052, 6
    %v6097 = vrot.slane %v6054, 6
    %v6098 = vrot.slane %v6058, 6
    %v6099 = vrot.slane %v6060, 6
    %v6100 = vrot.slane %v6062, 6
    %v6101 = vrot.slane %v6064, 6
    %v6102 = vrot.slane %v6068, 6
    %v6103 = vrot.slane %v6070, 6
    %v6104 = vrot.slane %v6072, 6
    %v6105 = vrot.slane %v6074, 6
    %v6106 = vrot.slane %v6078, 6
    %v6107 = vrot.slane %v6080, 6
    %v6108 = vrot.slane %v6082, 6
    %v6109 = vrot.slane %v6084, 6
    %v6110 = vrot.slane %v6088, 6
    %v6111 = vrot.slane %v6090, 6
    %v6112 = vsel %vm2089, %v6108, %v6110
    %v6113 = vsel %vm2089, %v6109, %v6111
    %v6114 = vsel %vm2089, %v6106, %v6108
    %v6115 = vsel %vm2089, %v6107, %v6109
    %v6116 = vsel %vm2089, %v6104, %v6106
    %v6117 = vsel %vm2089, %v6105, %v6107
    %v6118 = vsel %vm2089, %v6102, %v6104
    %v6119 = vsel %vm2089, %v6103, %v6105
    %v6120 = vsel %vm2089, %v6100, %v6102
    %v6121 = vsel %vm2089, %v6101, %v6103
    %v6122 = vsel %vm2089, %v6098, %v6100
    %v6123 = vsel %vm2089, %v6099, %v6101
    %v6124 = vsel %vm2089, %v6096, %v6098
    %v6125 = vsel %vm2089, %v6097, %v6099
    %v6126 = vsel %vm2089, %v6094, %v6096
    %v6127 = vsel %vm2089, %v6095, %v6097
    %v6128 = vsel %vm2089, %v6110, %v6094
    %v6129 = vsel %vm2089, %v6111, %v6095
    %v6130 = vmul.f32 %v6126, %v2110
    %v6131 = vmul.f32 %v6127, %v2110
    %v6132 = vmul.f32 %v6124, %v2114
    %v6133 = vmul.f32 %v6125, %v2114
    %v6134 = vmul.f32 %v6122, %v2118
    %v6135 = vmul.f32 %v6123, %v2118
    %v6136 = vmul.f32 %v6120, %v2122
    %v6137 = vmul.f32 %v6121, %v2122
    %v6138 = vmul.f32 %v6118, %v2126
    %v6139 = vmul.f32 %v6119, %v2126
    %v6140 = vmul.f32 %v6116, %v2130
    %v6141 = vmul.f32 %v6117, %v2130
    %v6142 = vmul.f32 %v6114, %v2134
    %v6143 = vmul.f32 %v6115, %v2134
    %v6144 = vmul.f32 %v6112, %v2138
    %v6145 = vmul.f32 %v6113, %v2138
    %v6146 = vmul.f32 %v6128, %v2142
    %v6147 = vmul.f32 %v6129, %v2142
    %v6148 = vpack.c.bf16 %v6052, %v6048
    %v6149 = vpack.c.bf16 %v6054, %v6050
    %v6150 = vpack.c.bf16 %v6062, %v6058
    %v6151 = vpack.c.bf16 %v6064, %v6060
    %v6152 = vpack.c.bf16 %v6072, %v6068
    %v6153 = vpack.c.bf16 %v6074, %v6070
    %v6154 = vpack.c.bf16 %v6082, %v6078
    %v6155 = vpack.c.bf16 %v6084, %v6080
    %v6156 = vpack.c.bf16 %v6088, %v6088
    %v6157 = vpack.c.bf16 %v6090, %v6090
    %v6158 = vpack.c.bf16 %v6132, %v6130
    %v6159 = vpack.c.bf16 %v6133, %v6131
    %v6160 = vpack.c.bf16 %v6136, %v6134
    %v6161 = vpack.c.bf16 %v6137, %v6135
    %v6162 = vpack.c.bf16 %v6140, %v6138
    %v6163 = vpack.c.bf16 %v6141, %v6139
    %v6164 = vpack.c.bf16 %v6144, %v6142
    %v6165 = vpack.c.bf16 %v6145, %v6143
    %v6166 = vpack.c.bf16 %v6146, %v6146
    %v6167 = vpack.c.bf16 %v6147, %v6147
    %6168 = vmatprep.subr.bf16.mxu0 %v2400
    %6169 = vmatpush1.bf16.msra.mxu0 %v2399
    %6170 = vmatprep.subr.bf16.mxu0 %v2398
    %6171 = vmatpush1.bf16.msra.mxu0 %v2397
    %6172 = vmatprep.subr.bf16.mxu0 %v2396
    %6173 = vmatpush1.bf16.msra.mxu0 %v2395
    %6174 = vmatprep.subr.bf16.mxu0 %v2394
    %6175 = vmatpush1.bf16.msra.mxu0 %v2393
    %6176 = vmatprep.subr.bf16.mxu0 %v2392
    %6177 = vmatpush1.bf16.msra.mxu0 %v2391
    %6178 = vmatprep.subr.bf16.mxu0 %v2390
    %6179 = vmatpush1.bf16.msra.mxu0 %v2389
    %6180 = vmatprep.subr.bf16.mxu0 %v2388
    %6181 = vmatpush1.bf16.msra.mxu0 %v2387
    %6182 = vmatprep.subr.bf16.mxu0 %v2386
    %6183 = vmatpush1.bf16.msra.mxu0 %v2385
    %6184 = vmatprep.subr.bf16.mxu0 %v2416
    %6185 = vmatpush2.bf16.msra.mxu0 %v2415
    %6186 = vmatprep.subr.bf16.mxu0 %v2414
    %6187 = vmatpush2.bf16.msra.mxu0 %v2413
    %6188 = vmatprep.subr.bf16.mxu0 %v2412
    %6189 = vmatpush2.bf16.msra.mxu0 %v2411
    %6190 = vmatprep.subr.bf16.mxu0 %v2410
    %6191 = vmatpush2.bf16.msra.mxu0 %v2409
    %6192 = vmatprep.subr.bf16.mxu0 %v2408
    %6193 = vmatpush2.bf16.msra.mxu0 %v2407
    %6194 = vmatprep.subr.bf16.mxu0 %v2406
    %6195 = vmatpush2.bf16.msra.mxu0 %v2405
    %6196 = vmatprep.subr.bf16.mxu0 %v2404
    %6197 = vmatpush2.bf16.msra.mxu0 %v2403
    %6198 = vmatprep.subr.bf16.mxu0 %v2402
    %6199 = vmatpush2.bf16.msra.mxu0 %v2401
    %6200 = vmatprep.mubr.bf16.mxu0 %v6149
    %6201 = vmatmul.mubr.bf16.gmra.mxu0 %v6148
    %v6202 = vpop.f32.mrf.mxu0
    %v6203 = vadd.f32 %v2186, %v6202
    %v6204 = vpop.f32.mrf.mxu0
    %v6205 = vadd.f32 %v2190, %v6204
    %v6206 = vpop.f32.mrf.mxu0
    %v6207 = vadd.f32 %v2186, %v6206
    %v6208 = vpop.f32.mrf.mxu0
    %v6209 = vadd.f32 %v2190, %v6208
    %6210 = vmatprep.mubr.bf16.mxu0 %v6151
    %6211 = vmatmul.mubr.bf16.gmra.mxu0 %v6150
    %v6212 = vpop.f32.mrf.mxu0
    %v6213 = vadd.f32 %v2186, %v6212
    %v6214 = vpop.f32.mrf.mxu0
    %v6215 = vadd.f32 %v2190, %v6214
    %v6216 = vpop.f32.mrf.mxu0
    %v6217 = vadd.f32 %v2186, %v6216
    %v6218 = vpop.f32.mrf.mxu0
    %v6219 = vadd.f32 %v2190, %v6218
    %6220 = vmatprep.mubr.bf16.mxu0 %v6153
    %6221 = vmatmul.mubr.bf16.gmra.mxu0 %v6152
    %v6222 = vpop.f32.mrf.mxu0
    %v6223 = vadd.f32 %v2186, %v6222
    %v6224 = vpop.f32.mrf.mxu0
    %v6225 = vadd.f32 %v2190, %v6224
    %v6226 = vpop.f32.mrf.mxu0
    %v6227 = vadd.f32 %v2186, %v6226
    %v6228 = vpop.f32.mrf.mxu0
    %v6229 = vadd.f32 %v2190, %v6228
    %6230 = vmatprep.mubr.bf16.mxu0 %v6155
    %6231 = vmatmul.mubr.bf16.gmra.mxu0 %v6154
    %v6232 = vpop.f32.mrf.mxu0
    %v6233 = vadd.f32 %v2186, %v6232
    %v6234 = vpop.f32.mrf.mxu0
    %v6235 = vadd.f32 %v2190, %v6234
    %v6236 = vpop.f32.mrf.mxu0
    %v6237 = vadd.f32 %v2186, %v6236
    %v6238 = vpop.f32.mrf.mxu0
    %v6239 = vadd.f32 %v2190, %v6238
    %6240 = vmatprep.mubr.bf16.mxu0 %v6157
    %6241 = vmatmul.mubr.bf16.gmra.mxu0 %v6156
    %v6242 = vpop.f32.mrf.mxu0
    %v6243 = vadd.f32 %v2186, %v6242
    %v6244 = vpop.f32.mrf.mxu0
    %v6245 = vadd.f32 %v2190, %v6244
    %v6246 = vpop.f32.mrf.mxu0
    %v6247 = vpop.f32.mrf.mxu0
    %6248 = vdwg.mxu0
    %6249 = vmatprep.subr.bf16.mxu0 %v2432
    %6250 = vmatpush1.bf16.msra.mxu0 %v2431
    %6251 = vmatprep.subr.bf16.mxu0 %v2430
    %6252 = vmatpush1.bf16.msra.mxu0 %v2429
    %6253 = vmatprep.subr.bf16.mxu0 %v2428
    %6254 = vmatpush1.bf16.msra.mxu0 %v2427
    %6255 = vmatprep.subr.bf16.mxu0 %v2426
    %6256 = vmatpush1.bf16.msra.mxu0 %v2425
    %6257 = vmatprep.subr.bf16.mxu0 %v2424
    %6258 = vmatpush1.bf16.msra.mxu0 %v2423
    %6259 = vmatprep.subr.bf16.mxu0 %v2422
    %6260 = vmatpush1.bf16.msra.mxu0 %v2421
    %6261 = vmatprep.subr.bf16.mxu0 %v2420
    %6262 = vmatpush1.bf16.msra.mxu0 %v2419
    %6263 = vmatprep.subr.bf16.mxu0 %v2418
    %6264 = vmatpush1.bf16.msra.mxu0 %v2417
    %6265 = vmatprep.subr.bf16.mxu0 %v2448
    %6266 = vmatpush2.bf16.msra.mxu0 %v2447
    %6267 = vmatprep.subr.bf16.mxu0 %v2446
    %6268 = vmatpush2.bf16.msra.mxu0 %v2445
    %6269 = vmatprep.subr.bf16.mxu0 %v2444
    %6270 = vmatpush2.bf16.msra.mxu0 %v2443
    %6271 = vmatprep.subr.bf16.mxu0 %v2442
    %6272 = vmatpush2.bf16.msra.mxu0 %v2441
    %6273 = vmatprep.subr.bf16.mxu0 %v2440
    %6274 = vmatpush2.bf16.msra.mxu0 %v2439
    %6275 = vmatprep.subr.bf16.mxu0 %v2438
    %6276 = vmatpush2.bf16.msra.mxu0 %v2437
    %6277 = vmatprep.subr.bf16.mxu0 %v2436
    %6278 = vmatpush2.bf16.msra.mxu0 %v2435
    %6279 = vmatprep.subr.bf16.mxu0 %v2434
    %6280 = vmatpush2.bf16.msra.mxu0 %v2433
    %6281 = vmatprep.mubr.bf16.mxu0 %v6159
    %6282 = vmatmul.mubr.bf16.gmra.mxu0 %v6158
    %v6283 = vpop.f32.mrf.mxu0
    %v6284 = vadd.f32 %v6203, %v6283
    %v6285 = vpop.f32.mrf.mxu0
    %v6286 = vadd.f32 %v6205, %v6285
    %v6287 = vpop.f32.mrf.mxu0
    %v6288 = vadd.f32 %v6207, %v6287
    %v6289 = vpop.f32.mrf.mxu0
    %v6290 = vadd.f32 %v6209, %v6289
    %6291 = vmatprep.mubr.bf16.mxu0 %v6161
    %6292 = vmatmul.mubr.bf16.gmra.mxu0 %v6160
    %v6293 = vpop.f32.mrf.mxu0
    %v6294 = vadd.f32 %v6213, %v6293
    %v6295 = vpop.f32.mrf.mxu0
    %v6296 = vadd.f32 %v6215, %v6295
    %v6297 = vpop.f32.mrf.mxu0
    %v6298 = vadd.f32 %v6217, %v6297
    %v6299 = vpop.f32.mrf.mxu0
    %v6300 = vadd.f32 %v6219, %v6299
    %6301 = vmatprep.mubr.bf16.mxu0 %v6163
    %6302 = vmatmul.mubr.bf16.gmra.mxu0 %v6162
    %v6303 = vpop.f32.mrf.mxu0
    %v6304 = vadd.f32 %v6223, %v6303
    %v6305 = vpop.f32.mrf.mxu0
    %v6306 = vadd.f32 %v6225, %v6305
    %v6307 = vpop.f32.mrf.mxu0
    %v6308 = vadd.f32 %v6227, %v6307
    %v6309 = vpop.f32.mrf.mxu0
    %v6310 = vadd.f32 %v6229, %v6309
    %6311 = vmatprep.mubr.bf16.mxu0 %v6165
    %6312 = vmatmul.mubr.bf16.gmra.mxu0 %v6164
    %v6313 = vpop.f32.mrf.mxu0
    %v6314 = vadd.f32 %v6233, %v6313
    %v6315 = vpop.f32.mrf.mxu0
    %v6316 = vadd.f32 %v6235, %v6315
    %v6317 = vpop.f32.mrf.mxu0
    %v6318 = vadd.f32 %v6237, %v6317
    %v6319 = vpop.f32.mrf.mxu0
    %v6320 = vadd.f32 %v6239, %v6319
    %6321 = vmatprep.mubr.bf16.mxu0 %v6167
    %6322 = vmatmul.mubr.bf16.gmra.mxu0 %v6166
    %v6323 = vpop.f32.mrf.mxu0
    %v6324 = vadd.f32 %v6243, %v6323
    %v6325 = vpop.f32.mrf.mxu0
    %v6326 = vadd.f32 %v6245, %v6325
    %v6327 = vpop.f32.mrf.mxu0
    %v6328 = vpop.f32.mrf.mxu0
    %6329 = vdwg.mxu0
    %v6330 = vmax.f32 %v6284, 0.0
    %v6331 = vmax.f32 %v6286, 0.0
    %v6332 = vmax.f32 %v6288, 0.0
    %v6333 = vmax.f32 %v6290, 0.0
    %v6334 = vmax.f32 %v6294, 0.0
    %v6335 = vmax.f32 %v6296, 0.0
    %v6336 = vmax.f32 %v6298, 0.0
    %v6337 = vmax.f32 %v6300, 0.0
    %v6338 = vmax.f32 %v6304, 0.0
    %v6339 = vmax.f32 %v6306, 0.0
    %v6340 = vmax.f32 %v6308, 0.0
    %v6341 = vmax.f32 %v6310, 0.0
    %v6342 = vmax.f32 %v6314, 0.0
    %v6343 = vmax.f32 %v6316, 0.0
    %v6344 = vmax.f32 %v6318, 0.0
    %v6345 = vmax.f32 %v6320, 0.0
    %v6346 = vmax.f32 %v6324, 0.0
    %v6347 = vmax.f32 %v6326, 0.0
    %v6348 = vpack.c.bf16 %v6332, %v6330
    %v6349 = vpack.c.bf16 %v6333, %v6331
    %v6350 = vpack.c.bf16 %v6336, %v6334
    %v6351 = vpack.c.bf16 %v6337, %v6335
    %v6352 = vpack.c.bf16 %v6340, %v6338
    %v6353 = vpack.c.bf16 %v6341, %v6339
    %v6354 = vpack.c.bf16 %v6344, %v6342
    %v6355 = vpack.c.bf16 %v6345, %v6343
    %v6356 = vpack.c.bf16 %v6346, %v6346
    %v6357 = vpack.c.bf16 %v6347, %v6347
    %6358 = vmatprep.subr.bf16.mxu0 %v2814
    %6359 = vmatpush1.bf16.msra.mxu0 %v2813
    %6360 = vmatprep.subr.bf16.mxu0 %v2812
    %6361 = vmatpush1.bf16.msra.mxu0 %v2811
    %6362 = vmatprep.subr.bf16.mxu0 %v2810
    %6363 = vmatpush1.bf16.msra.mxu0 %v2809
    %6364 = vmatprep.subr.bf16.mxu0 %v2808
    %6365 = vmatpush1.bf16.msra.mxu0 %v2807
    %6366 = vmatprep.subr.bf16.mxu0 %v2806
    %6367 = vmatpush1.bf16.msra.mxu0 %v2805
    %6368 = vmatprep.subr.bf16.mxu0 %v2804
    %6369 = vmatpush1.bf16.msra.mxu0 %v2803
    %6370 = vmatprep.subr.bf16.mxu0 %v2802
    %6371 = vmatpush1.bf16.msra.mxu0 %v2801
    %6372 = vmatprep.subr.bf16.mxu0 %v2800
    %6373 = vmatpush1.bf16.msra.mxu0 %v2799
    %6374 = vmatprep.subr.bf16.mxu0 %v2830
    %6375 = vmatpush2.bf16.msra.mxu0 %v2829
    %6376 = vmatprep.subr.bf16.mxu0 %v2828
    %6377 = vmatpush2.bf16.msra.mxu0 %v2827
    %6378 = vmatprep.subr.bf16.mxu0 %v2826
    %6379 = vmatpush2.bf16.msra.mxu0 %v2825
    %6380 = vmatprep.subr.bf16.mxu0 %v2824
    %6381 = vmatpush2.bf16.msra.mxu0 %v2823
    %6382 = vmatprep.subr.bf16.mxu0 %v2822
    %6383 = vmatpush2.bf16.msra.mxu0 %v2821
    %6384 = vmatprep.subr.bf16.mxu0 %v2820
    %6385 = vmatpush2.bf16.msra.mxu0 %v2819
    %6386 = vmatprep.subr.bf16.mxu0 %v2818
    %6387 = vmatpush2.bf16.msra.mxu0 %v2817
    %6388 = vmatprep.subr.bf16.mxu0 %v2816
    %6389 = vmatpush2.bf16.msra.mxu0 %v2815
    %6390 = vmatprep.mubr.bf16.mxu0 %v6349
    %6391 = vmatmul.mubr.bf16.gmra.mxu0 %v6348
    %v6392 = vpop.f32.mrf.mxu0
    %v6393 = vadd.f32 0.0, %v6392
    %v6394 = vpop.f32.mrf.mxu0
    %v6395 = vadd.f32 0.0, %v6394
    %v6396 = vpop.f32.mrf.mxu0
    %v6397 = vadd.f32 0.0, %v6396
    %v6398 = vpop.f32.mrf.mxu0
    %v6399 = vadd.f32 0.0, %v6398
    %6400 = vmatprep.mubr.bf16.mxu0 %v6351
    %6401 = vmatmul.mubr.bf16.gmra.mxu0 %v6350
    %v6402 = vpop.f32.mrf.mxu0
    %v6403 = vadd.f32 0.0, %v6402
    %v6404 = vpop.f32.mrf.mxu0
    %v6405 = vadd.f32 0.0, %v6404
    %v6406 = vpop.f32.mrf.mxu0
    %v6407 = vadd.f32 0.0, %v6406
    %v6408 = vpop.f32.mrf.mxu0
    %v6409 = vadd.f32 0.0, %v6408
    %6410 = vmatprep.mubr.bf16.mxu0 %v6353
    %6411 = vmatmul.mubr.bf16.gmra.mxu0 %v6352
    %v6412 = vpop.f32.mrf.mxu0
    %v6413 = vadd.f32 0.0, %v6412
    %v6414 = vpop.f32.mrf.mxu0
    %v6415 = vadd.f32 0.0, %v6414
    %v6416 = vpop.f32.mrf.mxu0
    %v6417 = vadd.f32 0.0, %v6416
    %v6418 = vpop.f32.mrf.mxu0
    %v6419 = vadd.f32 0.0, %v6418
    %6420 = vmatprep.mubr.bf16.mxu0 %v6355
    %6421 = vmatmul.mubr.bf16.gmra.mxu0 %v6354
    %v6422 = vpop.f32.mrf.mxu0
    %v6423 = vadd.f32 0.0, %v6422
    %v6424 = vpop.f32.mrf.mxu0
    %v6425 = vadd.f32 0.0, %v6424
    %v6426 = vpop.f32.mrf.mxu0
    %v6427 = vadd.f32 0.0, %v6426
    %v6428 = vpop.f32.mrf.mxu0
    %v6429 = vadd.f32 0.0, %v6428
    %6430 = vmatprep.mubr.bf16.mxu0 %v6357
    %6431 = vmatmul.mubr.bf16.gmra.mxu0 %v6356
    %v6432 = vpop.f32.mrf.mxu0
    %v6433 = vadd.f32 0.0, %v6432
    %v6434 = vpop.f32.mrf.mxu0
    %v6435 = vadd.f32 0.0, %v6434
    %v6436 = vpop.f32.mrf.mxu0
    %v6437 = vpop.f32.mrf.mxu0
    %6438 = vdwg.mxu0
    %v6439 = vadd.f32 %v5586, %v6393
    %v6440 = vadd.f32 %v5587, %v6395
    %v6441 = vadd.f32 %v5588, %v6397
    %v6442 = vadd.f32 %v5589, %v6399
    %v6443 = vadd.f32 %v5590, %v6403
    %v6444 = vadd.f32 %v5591, %v6405
    %v6445 = vadd.f32 %v5592, %v6407
    %v6446 = vadd.f32 %v5593, %v6409
    %v6447 = vadd.f32 %v5594, %v6413
    %v6448 = vadd.f32 %v5595, %v6415
    %v6449 = vadd.f32 %v5596, %v6417
    %v6450 = vadd.f32 %v5597, %v6419
    %v6451 = vadd.f32 %v5598, %v6423
    %v6452 = vadd.f32 %v5599, %v6425
    %v6453 = vadd.f32 %v5600, %v6427
    %v6454 = vadd.f32 %v5601, %v6429
    %v6455 = vadd.f32 %v5602, %v6433
    %v6456 = vadd.f32 %v5603, %v6435
    %v6457 = vadd.f32 %v6439, %v2966
    %v6458 = vadd.f32 %v6440, %v2970
    %v6459 = vadd.f32 %v6441, %v2966
    %v6460 = vadd.f32 %v6442, %v2970
    %v6461 = vadd.f32 %v6443, %v2966
    %v6462 = vadd.f32 %v6444, %v2970
    %v6463 = vadd.f32 %v6445, %v2966
    %v6464 = vadd.f32 %v6446, %v2970
    %v6465 = vadd.f32 %v6447, %v2966
    %v6466 = vadd.f32 %v6448, %v2970
    %v6467 = vadd.f32 %v6449, %v2966
    %v6468 = vadd.f32 %v6450, %v2970
    %v6469 = vadd.f32 %v6451, %v2966
    %v6470 = vadd.f32 %v6452, %v2970
    %v6471 = vadd.f32 %v6453, %v2966
    %v6472 = vadd.f32 %v6454, %v2970
    %v6473 = vadd.f32 %v6455, %v2966
    %v6474 = vadd.f32 %v6456, %v2970
    %v6475 = vmax.f32 %v6457, 0.0
    %v6476 = vmax.f32 %v6458, 0.0
    %v6477 = vmax.f32 %v6459, 0.0
    %v6478 = vmax.f32 %v6460, 0.0
    %v6479 = vmax.f32 %v6461, 0.0
    %v6480 = vmax.f32 %v6462, 0.0
    %v6481 = vmax.f32 %v6463, 0.0
    %v6482 = vmax.f32 %v6464, 0.0
    %v6483 = vmax.f32 %v6465, 0.0
    %v6484 = vmax.f32 %v6466, 0.0
    %v6485 = vmax.f32 %v6467, 0.0
    %v6486 = vmax.f32 %v6468, 0.0
    %v6487 = vmax.f32 %v6469, 0.0
    %v6488 = vmax.f32 %v6470, 0.0
    %v6489 = vmax.f32 %v6471, 0.0
    %v6490 = vmax.f32 %v6472, 0.0
    %v6491 = vmax.f32 %v6473, 0.0
    %v6492 = vmax.f32 %v6474, 0.0
    %v6493 = vld [vmem:[%s15] sm:$0xff]
    %v6494 = vld [vmem:[%s15 + $0x8] sm:$0xff]
    %v6495 = vld [vmem:[%s15 + $0x10] sm:$0xff]
    %v6496 = vld [vmem:[%s15 + $0x18] sm:$0xff]
    %v6497 = vld [vmem:[%s15 + $0x20] sm:$0xff]
    %v6498 = vld [vmem:[%s15 + $0x28] sm:$0xff]
    %v6499 = vld [vmem:[%s15 + $0x30] sm:$0xff]
    %v6500 = vld [vmem:[%s15 + $0x38] sm:$0xff]
    %v6501 = vld [vmem:[%s15 + $0x40] sm:$0xff]
    %v6502 = vld [vmem:[%s12] sm:$0xf]
    %v6503 = vld [vmem:[%s12 + $0x4] sm:$0xf]
    %v6504 = vld [vmem:[%s12 + $0x8] sm:$0xf]
    %v6505 = vld [vmem:[%s12 + $0xc] sm:$0xf]
    %v6506 = vld [vmem:[%s12 + $0x10] sm:$0xf]
    %v6507 = vld [vmem:[%s12 + $0x14] sm:$0xf]
    %v6508 = vld [vmem:[%s12 + $0x18] sm:$0xf]
    %v6509 = vld [vmem:[%s12 + $0x1c] sm:$0xf]
    %v6510 = vld [vmem:[%s12 + $0x20] sm:$0xf]
    %v6511 = vld [vmem:[%s12 + $0x24] sm:$0xf]
    %v6512 = vld [vmem:[%s12 + $0x28] sm:$0xf]
    %v6513 = vld [vmem:[%s12 + $0x2c] sm:$0xf]
    %v6514 = vld [vmem:[%s12 + $0x30] sm:$0xf]
    %v6515 = vld [vmem:[%s12 + $0x34] sm:$0xf]
    %v6516 = vld [vmem:[%s12 + $0x38] sm:$0xf]
    %v6517 = vld [vmem:[%s12 + $0x3c] sm:$0xf]
    %v6518 = vld [vmem:[%s12 + $0x40] sm:$0xf]
    %v6519 = vld [vmem:[%s12 + $0x44] sm:$0xf]
    %v6520 = vld [vmem:[%s12 + $0x48] sm:$0xf]
    %v6521 = vld [vmem:[%s12 + $0x4c] sm:$0xf]
    %v6522 = vld [vmem:[%s12 + $0x50] sm:$0xf]
    %v6523 = vld [vmem:[%s12 + $0x54] sm:$0xf]
    %v6524 = vld [vmem:[%s12 + $0x58] sm:$0xf]
    %v6525 = vld [vmem:[%s12 + $0x5c] sm:$0xf]
    %v6526 = vld [vmem:[%s12 + $0x60] sm:$0xf]
    %v6527 = vld [vmem:[%s12 + $0x64] sm:$0xf]
    %v6528 = vld [vmem:[%s12 + $0x68] sm:$0xf]
    %v6529 = vld [vmem:[%s12 + $0x6c] sm:$0xf]
    %v6530 = vld [vmem:[%s12 + $0x70] sm:$0xf]
    %v6531 = vld [vmem:[%s12 + $0x74] sm:$0xf]
    %v6532 = vld [vmem:[%s12 + $0x78] sm:$0xf]
    %v6533 = vld [vmem:[%s12 + $0x7c] sm:$0xf]
    %v6534 = vpack.c.bf16 %v6477, %v6475
    %v6535 = vpack.c.bf16 %v6478, %v6476
    %v6536 = vpack.c.bf16 %v6481, %v6479
    %v6537 = vpack.c.bf16 %v6482, %v6480
    %v6538 = vpack.c.bf16 %v6485, %v6483
    %v6539 = vpack.c.bf16 %v6486, %v6484
    %v6540 = vpack.c.bf16 %v6489, %v6487
    %v6541 = vpack.c.bf16 %v6490, %v6488
    %v6542 = vpack.c.bf16 %v6491, %v6491
    %v6543 = vpack.c.bf16 %v6492, %v6492
    %v6576 = vunpack.c.l.b16 %v6502
    %v6577 = vunpack.c.l.b16 %v6503
    %v6578 = vunpack.c.l.b16 %v6504
    %v6579 = vunpack.c.l.b16 %v6505
    %v6580 = vunpack.c.l.b16 %v6506
    %v6581 = vunpack.c.l.b16 %v6507
    %v6582 = vunpack.c.l.b16 %v6508
    %v6583 = vunpack.c.l.b16 %v6509
    %v6584 = vunpack.c.l.b16 %v6510
    %v6585 = vunpack.c.l.b16 %v6511
    %v6586 = vunpack.c.l.b16 %v6512
    %v6587 = vunpack.c.l.b16 %v6513
    %v6588 = vunpack.c.l.b16 %v6514
    %v6589 = vunpack.c.l.b16 %v6515
    %v6590 = vunpack.c.l.b16 %v6516
    %v6591 = vunpack.c.l.b16 %v6517
    %v6592 = vunpack.c.l.b16 %v6518
    %v6593 = vunpack.c.l.b16 %v6519
    %v6594 = vunpack.c.l.b16 %v6520
    %v6595 = vunpack.c.l.b16 %v6521
    %v6596 = vunpack.c.l.b16 %v6522
    %v6597 = vunpack.c.l.b16 %v6523
    %v6598 = vunpack.c.l.b16 %v6524
    %v6599 = vunpack.c.l.b16 %v6525
    %v6600 = vunpack.c.l.b16 %v6526
    %v6601 = vunpack.c.l.b16 %v6527
    %v6602 = vunpack.c.l.b16 %v6528
    %v6603 = vunpack.c.l.b16 %v6529
    %v6604 = vunpack.c.l.b16 %v6530
    %v6605 = vunpack.c.l.b16 %v6531
    %v6606 = vunpack.c.l.b16 %v6532
    %v6607 = vunpack.c.l.b16 %v6533
    %v6608 = vpack.c.b16 %v6577, %v6576
    %v6609 = vpack.c.b16 %v6579, %v6578
    %v6610 = vpack.c.b16 %v6581, %v6580
    %v6611 = vpack.c.b16 %v6583, %v6582
    %v6612 = vpack.c.b16 %v6585, %v6584
    %v6613 = vpack.c.b16 %v6587, %v6586
    %v6614 = vpack.c.b16 %v6589, %v6588
    %v6615 = vpack.c.b16 %v6591, %v6590
    %v6616 = vpack.c.b16 %v6593, %v6592
    %v6617 = vpack.c.b16 %v6595, %v6594
    %v6618 = vpack.c.b16 %v6597, %v6596
    %v6619 = vpack.c.b16 %v6599, %v6598
    %v6620 = vpack.c.b16 %v6601, %v6600
    %v6621 = vpack.c.b16 %v6603, %v6602
    %v6622 = vpack.c.b16 %v6605, %v6604
    %v6623 = vpack.c.b16 %v6607, %v6606
    %6640 = vmatprep.subr.bf16.mxu0 0
    %6641 = vmatpush1.bf16.msra.mxu0 %v6615
    %6642 = vmatprep.subr.bf16.mxu0 0
    %6643 = vmatpush1.bf16.msra.mxu0 %v6614
    %6644 = vmatprep.subr.bf16.mxu0 0
    %6645 = vmatpush1.bf16.msra.mxu0 %v6613
    %6646 = vmatprep.subr.bf16.mxu0 0
    %6647 = vmatpush1.bf16.msra.mxu0 %v6612
    %6648 = vmatprep.subr.bf16.mxu0 0
    %6649 = vmatpush1.bf16.msra.mxu0 %v6611
    %6650 = vmatprep.subr.bf16.mxu0 0
    %6651 = vmatpush1.bf16.msra.mxu0 %v6610
    %6652 = vmatprep.subr.bf16.mxu0 0
    %6653 = vmatpush1.bf16.msra.mxu0 %v6609
    %6654 = vmatprep.subr.bf16.mxu0 0
    %6655 = vmatpush1.bf16.msra.mxu0 %v6608
    %6656 = vmatprep.subr.bf16.mxu0 0
    %6657 = vmatpush2.bf16.msra.mxu0 %v6623
    %6658 = vmatprep.subr.bf16.mxu0 0
    %6659 = vmatpush2.bf16.msra.mxu0 %v6622
    %6660 = vmatprep.subr.bf16.mxu0 0
    %6661 = vmatpush2.bf16.msra.mxu0 %v6621
    %6662 = vmatprep.subr.bf16.mxu0 0
    %6663 = vmatpush2.bf16.msra.mxu0 %v6620
    %6664 = vmatprep.subr.bf16.mxu0 0
    %6665 = vmatpush2.bf16.msra.mxu0 %v6619
    %6666 = vmatprep.subr.bf16.mxu0 0
    %6667 = vmatpush2.bf16.msra.mxu0 %v6618
    %6668 = vmatprep.subr.bf16.mxu0 0
    %6669 = vmatpush2.bf16.msra.mxu0 %v6617
    %6670 = vmatprep.subr.bf16.mxu0 0
    %6671 = vmatpush2.bf16.msra.mxu0 %v6616
    %6672 = vmatprep.mubr.bf16.mxu0 %v6535
    %6673 = vmatmul.mubr.bf16.gmra.mxu0 %v6534
    %v6674 = vpop.f32.mrf.mxu0
    %v6675 = vadd.f32 0.0, %v6674
    %v6676 = vpop.f32.mrf.mxu0
    %v6677 = vpop.f32.mrf.mxu0
    %v6678 = vadd.f32 0.0, %v6677
    %v6679 = vpop.f32.mrf.mxu0
    %6680 = vmatprep.mubr.bf16.mxu0 %v6537
    %6681 = vmatmul.mubr.bf16.gmra.mxu0 %v6536
    %v6682 = vpop.f32.mrf.mxu0
    %v6683 = vadd.f32 0.0, %v6682
    %v6684 = vpop.f32.mrf.mxu0
    %v6685 = vpop.f32.mrf.mxu0
    %v6686 = vadd.f32 0.0, %v6685
    %v6687 = vpop.f32.mrf.mxu0
    %6688 = vmatprep.mubr.bf16.mxu0 %v6539
    %6689 = vmatmul.mubr.bf16.gmra.mxu0 %v6538
    %v6690 = vpop.f32.mrf.mxu0
    %v6691 = vadd.f32 0.0, %v6690
    %v6692 = vpop.f32.mrf.mxu0
    %v6693 = vpop.f32.mrf.mxu0
    %v6694 = vadd.f32 0.0, %v6693
    %v6695 = vpop.f32.mrf.mxu0
    %6696 = vmatprep.mubr.bf16.mxu0 %v6541
    %6697 = vmatmul.mubr.bf16.gmra.mxu0 %v6540
    %v6698 = vpop.f32.mrf.mxu0
    %v6699 = vadd.f32 0.0, %v6698
    %v6700 = vpop.f32.mrf.mxu0
    %v6701 = vpop.f32.mrf.mxu0
    %v6702 = vadd.f32 0.0, %v6701
    %v6703 = vpop.f32.mrf.mxu0
    %6704 = vmatprep.mubr.bf16.mxu0 %v6543
    %6705 = vmatmul.mubr.bf16.gmra.mxu0 %v6542
    %v6706 = vpop.f32.mrf.mxu0
    %v6707 = vadd.f32 0.0, %v6706
    %v6708 = vpop.f32.mrf.mxu0
    %v6709 = vpop.f32.mrf.mxu0
    %v6710 = vpop.f32.mrf.mxu0
    %6711 = vdwg.mxu0
    %v6712 = vadd.f32 %v6493, %v6675
    %v6713 = vadd.f32 %v6494, %v6678
    %v6714 = vadd.f32 %v6495, %v6683
    %v6715 = vadd.f32 %v6496, %v6686
    %v6716 = vadd.f32 %v6497, %v6691
    %v6717 = vadd.f32 %v6498, %v6694
    %v6718 = vadd.f32 %v6499, %v6699
    %v6719 = vadd.f32 %v6500, %v6702
    %v6720 = vadd.f32 %v6501, %v6707
    %v6721 = vld [vmem:[%s13] sm:$0x1]
    %v6723 = vlaneseq
    %v6724 = vshrl.u32 %v6723, 7
    %v6725 = vsub.s32 0, %v6724
    %v6726 = vrot.slane %v6721, %v6725
    %v6728 = vadd.f32 %v6712, %v6726
    %v6729 = vadd.f32 %v6713, %v6726
    %v6730 = vadd.f32 %v6714, %v6726
    %v6731 = vadd.f32 %v6715, %v6726
    %v6732 = vadd.f32 %v6716, %v6726
    %v6733 = vadd.f32 %v6717, %v6726
    %v6734 = vadd.f32 %v6718, %v6726
    %v6735 = vadd.f32 %v6719, %v6726
    %v6736 = vadd.f32 %v6720, %v6726
    %6737 = vst.msk [vmem:[%s15] sm:$0xff] %vm597, %v6728
    %6738 = vst.msk [vmem:[%s15 + $0x8] sm:$0xff] %vm597, %v6729
    %6739 = vst.msk [vmem:[%s15 + $0x10] sm:$0xff] %vm597, %v6730
    %6740 = vst.msk [vmem:[%s15 + $0x18] sm:$0xff] %vm597, %v6731
    %6741 = vst.msk [vmem:[%s15 + $0x20] sm:$0xff] %vm597, %v6732
    %6742 = vst.msk [vmem:[%s15 + $0x28] sm:$0xff] %vm597, %v6733
    %6743 = vst.msk [vmem:[%s15 + $0x30] sm:$0xff] %vm597, %v6734
    %6744 = vst.msk [vmem:[%s15 + $0x38] sm:$0xff] %vm597, %v6735
    %6745 = vst.msk [vmem:[%s15 + $0x40] sm:$0xff] %vm597, %v6736
    // Predicated region
    $region78: #{_lambda_.2} parent=1 // pred_check
      _
    $region79: #{_lambda_.2} parent=1 // pred_check_branch
      %6747 = sbr.rel (0) target = $region81
    $region80: #{_lambda_.2} parent=1 // pred_region
      _
    $region81: #{_lambda_.2} parent=1 // pred_fallthru
      _
    // Predicated region
    $region82: #{_lambda_.2} parent=1 // pred_check
      _
    $region83: #{_lambda_.2} parent=1 // pred_check_branch
      %6749 = sbr.rel (0) target = $region85
    $region84: #{_lambda_.2} parent=1 // pred_region
      _
    $region85: #{_lambda_.2} parent=1 // pred_fallthru
      _
    %6750 = vsyncpa [#allocation3], 1
    %6751 = vsyncpa [#allocation5], 1
    %6752 = vsyncpa [#allocation8], 1

</llo_original>
